<compile_context>
chip_gen: v6e
topology: v6e:2x2x1
jax: 0.10.0
libtpu: 0.0.40
codegen_flags: <defaults>
</compile_context>

<pallas_src>
import math
import functools

import jax
import jax.numpy as jnp
from jax.experimental import pallas as pl
from jax.experimental.pallas import tpu as pltpu

SQRT_2_OVER_PI = math.sqrt(2.0 / math.pi)
LN_EPS = 1e-5  # PyTorch nn.LayerNorm default eps


def _round_up(n, m):
    return (n + m - 1) // m * m


def _new_gelu(x):
    # NewGELU: 0.5*x*(1+tanh(sqrt(2/pi)*(x+0.044715*x^3)))
    return 0.5 * x * (1.0 + jnp.tanh(SQRT_2_OVER_PI * (x + 0.044715 * x * x * x)))


def _attention_block_kernel(num_blocks, w_real, s_real, s_pad,
                            x_ref,
                            attn_w_ref, attn_b_ref,
                            ln1_g_ref, ln1_b_ref,
                            ln2_g_ref, ln2_b_ref,
                            mlp_w1_ref, mlp_b1_ref,
                            mlp_w2_ref, mlp_b2_ref,
                            rw_ref, rb_ref,
                            o_ref,
                            xc_ref):
    """One AttentionBlock per grid step along axis 1; x carried in VMEM scratch."""
    k = pl.program_id(1)
    rows, w_pad = xc_ref.shape          # rows = bt * s_pad
    bt = rows // s_pad

    # ---- k == 0: widen the narrow bf16 x slab into the zero-padded f32 carry ----
    @pl.when(k == 0)
    def _():
        if w_pad != w_real:
            xc_ref[...] = jnp.zeros_like(xc_ref)
        xc_ref[:, :w_real] = x_ref[...].astype(jnp.float32)

    x = xc_ref[...]                     # (rows, w_pad) f32

    lane_mask = None
    if w_pad != w_real:                 # lanes >= w_real are zero-padding
        lane_mask = jax.lax.broadcasted_iota(jnp.int32, (1, w_pad), 1) < w_real
    seq_bias = None
    if s_pad != s_real:                 # padded seq rows must not join the softmax
        seq_bias = jnp.where(
            jax.lax.broadcasted_iota(jnp.int32, (1, s_pad, 1), 1) < s_real,
            0.0, -1e30)
    inv_w = 1.0 / float(w_real)

    def layernorm(v, g, b):
        # PyTorch LayerNorm over the (real) last dim, biased variance.
        mu = jnp.sum(v, axis=-1, keepdims=True) * inv_w      # padded lanes of v are 0
        d = v - mu
        if lane_mask is not None:
            d = jnp.where(lane_mask, d, 0.0)                 # keep variance exact; padded lanes -> 0
        var = jnp.sum(d * d, axis=-1, keepdims=True) * inv_w
        return d * jax.lax.rsqrt(var + LN_EPS) * g + b       # padded g,b are 0

    def mm(a, w):  # bf16 operands, f32 accumulation on the MXU
        return jnp.dot(a.astype(w.dtype), w, preferred_element_type=jnp.float32)

    # ---- ln1 ----
    x = layernorm(x, ln1_g_ref[...], ln1_b_ref[...])

    # ---- LiteAttention: x + x * softmax(Linear(x), dim=seq) ----
    logits = mm(x, attn_w_ref[...]) + attn_b_ref[...]        # (rows, w_pad) f32
    lg = logits.reshape(bt, s_pad, w_pad)                    # per-batch seq view
    if seq_bias is not None:
        lg = lg + seq_bias
    m = jnp.max(lg, axis=1, keepdims=True)                   # softmax over seq axis
    e = jnp.exp(lg - m)
    denom = jnp.sum(e, axis=1, keepdims=True)
    attn = (e * pl.reciprocal(denom, approx=True)).reshape(rows, w_pad)
    x = x + x * attn

    # ---- ln2 ----
    x = layernorm(x, ln2_g_ref[...], ln2_b_ref[...])

    # ---- MLP: Linear -> NewGELU -> Linear -> Dropout(identity) ----
    # TODO(synk): nn.Dropout(drop_rate) is identity in eval mode; training-mode dropout not implemented.
    # GELU of h on bf16: result feeds a bf16 matmul anyway (halves VPU/EUP work on v6e/v7x).
    h = _new_gelu((mm(x, mlp_w1_ref[...]) + mlp_b1_ref[...]).astype(mlp_w2_ref.dtype))
    mlp_out = mm(h, mlp_w2_ref[...]) + mlp_b2_ref[...]

    # ---- residual + block output activation (f32, feeds next block's LayerNorm) ----
    x = _new_gelu(x + mlp_out)
    xc_ref[...] = x

    # ---- last block: recall head gelu(reshape_layer(x)) -> lane-dense bf16 store ----
    @pl.when(k == num_blocks - 1)
    def _():
        y = mm(x, rw_ref[...]) + rb_ref[...]
        o_ref[...] = _new_gelu(y.astype(o_ref.dtype))


def recurrent_module_forward(x, params, *, num_blocks, block_batch=None,
                             matmul_dtype=jnp.bfloat16, io_dtype=jnp.bfloat16):
    B, S, W = x.shape
    bottleneck = params["reshape_w"].shape[1]
    nb = num_blocks

    # TPU-friendly padded sizes (activations are padded in-kernel, weights here).
    w_pad = _round_up(W, 128)
    s_pad = _round_up(S, 8)
    bn_pad = _round_up(bottleneck, 128)

    # Rows per grid step: target ~512 MXU rows; prefer block_batch | B so no
    # grid step runs entirely on zero-padded batch rows.
    if block_batch is None:
        target_rows = 512
        bt = max(1, min(B, max(1, target_rows // s_pad)))
        for d in range(bt, 0, -1):
            if B % d == 0:
                if 2 * d >= bt:   # accept a divisor unless it is much smaller than target
                    bt = d
                break
    else:
        bt = block_batch
    b_pad = _round_up(B, bt)
    rows = bt * s_pad
    grid = (b_pad // bt, nb)      # (batch steps, attention blocks)

    def pad_to(a, shape, dtype):
        a = a.astype(dtype)
        pads = [(0, t - s) for s, t in zip(a.shape, shape)]
        if any(p for _, p in pads):
            a = jnp.pad(a, pads)
        return a

    # Activations: bf16 I/O, lane dim left un-padded (narrow HBM slab).
    x_io = x.astype(io_dtype)
    if b_pad != B or s_pad != S:
        x_io = jnp.pad(x_io, ((0, b_pad - B), (0, s_pad - S), (0, 0)))
    x_flat = x_io.reshape(b_pad * s_pad, W)

    # Matmul weights in matmul_dtype (bf16); biases/LN params in f32.
    attn_w = pad_to(params["attn_w"], (nb, w_pad, w_pad), matmul_dtype)
    mlp_w1 = pad_to(params["mlp_w1"], (nb, w_pad, w_pad), matmul_dtype)
    mlp_w2 = pad_to(params["mlp_w2"], (nb, w_pad, w_pad), matmul_dtype)
    reshape_w = pad_to(params["reshape_w"], (w_pad, bn_pad), matmul_dtype)

    vec = lambda name: pad_to(params[name], (nb, 1, w_pad), jnp.float32)
    attn_b = vec("attn_b")
    ln1_g, ln1_b = vec("ln1_g"), vec("ln1_b")
    ln2_g, ln2_b = vec("ln2_g"), vec("ln2_b")
    mlp_b1, mlp_b2 = vec("mlp_b1"), vec("mlp_b2")
    reshape_b = pad_to(params["reshape_b"], (1, bn_pad), jnp.float32)

    def per_block(shape):   # streamed per attention block along grid axis 1
        return pl.BlockSpec((None,) + shape,
                            lambda b, k, n=len(shape): (k,) + (0,) * n)

    def resident(shape):    # constant block index -> DMA'd once, VMEM-resident
        return pl.BlockSpec(shape, lambda b, k, n=len(shape): (0,) * n)

    in_specs = [
        pl.BlockSpec((rows, W), lambda b, k: (b, 0)),            # x rows (fetched once per b)
        per_block((w_pad, w_pad)), per_block((1, w_pad)),         # attn_w, attn_b
        per_block((1, w_pad)), per_block((1, w_pad)),             # ln1 gamma, beta
        per_block((1, w_pad)), per_block((1, w_pad)),             # ln2 gamma, beta
        per_block((w_pad, w_pad)), per_block((1, w_pad)),         # mlp_w1, mlp_b1
        per_block((w_pad, w_pad)), per_block((1, w_pad)),         # mlp_w2, mlp_b2
        resident((w_pad, bn_pad)), resident((1, bn_pad)),         # recall W, b (tiny)
    ]
    out_specs = pl.BlockSpec((rows, bn_pad), lambda b, k: (b, 0))  # resident across k

    # Explicit VMEM budget: streamed per-block weights (double-buffered), recall
    # residents, bf16 I/O tiles, f32 carry scratch and f32 elementwise temps.
    itemw = jnp.dtype(matmul_dtype).itemsize
    itemio = jnp.dtype(io_dtype).itemsize
    streamed_w = 2 * (3 * w_pad * w_pad * itemw + 7 * w_pad * 4)
    resident_w = 2 * (w_pad * bn_pad * itemw + bn_pad * 4)
    io_bytes = 2 * rows * (W + bn_pad) * itemio
    carry_bytes = rows * w_pad * 4
    temp_bytes = 8 * rows * w_pad * 4          # x, logits, e, attn, h, mlp_out, ...
    est = streamed_w + resident_w + io_bytes + carry_bytes + temp_bytes + (16 << 20)

    try:
        vmem_cap = pltpu.get_tpu_info().vmem_capacity_bytes
    except Exception:
        vmem_cap = 64 << 20
    ceiling = int(vmem_cap) * 7 // 8            # headroom for compiler-internal scratch
    vmem_limit = int(min(max(est, 32 << 20), ceiling))

    kernel = functools.partial(_attention_block_kernel, nb, W, S, s_pad)
    out = pl.pallas_call(
        kernel,
        out_shape=jax.ShapeDtypeStruct((b_pad * s_pad, bn_pad), io_dtype),
        grid=grid,
        in_specs=in_specs,
        out_specs=out_specs,
        scratch_shapes=[pltpu.VMEM((rows, w_pad), jnp.float32)],   # x carried across blocks
        compiler_params=pltpu.CompilerParams(
            dimension_semantics=("parallel", "arbitrary"),
            vmem_limit_bytes=vmem_limit,
        ),
    )(x_flat, attn_w, attn_b, ln1_g, ln1_b, ln2_g, ln2_b,
      mlp_w1, mlp_b1, mlp_w2, mlp_b2, reshape_w, reshape_b)

    out = out.reshape(b_pad, s_pad, bn_pad)[:B, :S, :bottleneck]
    return out.astype(x.dtype)


def init_params(key, num_blocks, width, bottleneck):
    """Deterministic synthetic parameters (PyTorch-Linear-style uniform init)."""
    ks = jax.random.split(key, 8)
    bound_w = 1.0 / math.sqrt(width)

    def u(k, shape, bound):
        return jax.random.uniform(k, shape, jnp.float32, -bound, bound)

    nb = num_blocks
    return {
        # Linear weights stored as (in, out) = PyTorch weight.T
        "attn_w":  u(ks[0], (nb, width, width), bound_w),
        "attn_b":  u(ks[1], (nb, 1, width), bound_w),
        "ln1_g":   jnp.ones((nb, 1, width), jnp.float32),
        "ln1_b":   jnp.zeros((nb, 1, width), jnp.float32),
        "ln2_g":   jnp.ones((nb, 1, width), jnp.float32),
        "ln2_b":   jnp.zeros((nb, 1, width), jnp.float32),
        "mlp_w1":  u(ks[2], (nb, width, width), bound_w),
        "mlp_b1":  u(ks[3], (nb, 1, width), bound_w),
        "mlp_w2":  u(ks[4], (nb, width, width), bound_w),
        "mlp_b2":  u(ks[5], (nb, 1, width), bound_w),
        "reshape_w": u(ks[6], (width, bottleneck), bound_w),
        "reshape_b": u(ks[7], (1, bottleneck), bound_w),
    }


def reference_forward(x, params, num_blocks, matmul_dtype=jnp.float32):
    """Pure-JAX reference replicating the PyTorch forward (eval mode).

    matmul_dtype=jnp.bfloat16 mirrors the kernel's mixed-precision matmuls
    (bf16 operands, f32 accumulation) for an apples-to-apples comparison.
    """
    def mm(a, w):
        return jnp.dot(a.astype(matmul_dtype), w.astype(matmul_dtype),
                       preferred_element_type=jnp.float32)

    def ln(v, g, b):
        mu = v.mean(-1, keepdims=True)
        var = ((v - mu) ** 2).mean(-1, keepdims=True)
        return (v - mu) * jax.lax.rsqrt(var + LN_EPS) * g + b

    x = x.astype(jnp.float32)
    for blk in range(num_blocks):
        x = ln(x, params["ln1_g"][blk], params["ln1_b"][blk])
        logits = mm(x, params["attn_w"][blk]) + params["attn_b"][blk]
        attn = jax.nn.softmax(logits, axis=1)            # dim=1 == seq axis of (B,S,W)
        x = x + x * attn
        x = ln(x, params["ln2_g"][blk], params["ln2_b"][blk])
        h = _new_gelu(mm(x, params["mlp_w1"][blk]) + params["mlp_b1"][blk])
        x = x + (mm(h, params["mlp_w2"][blk]) + params["mlp_b2"][blk])
        x = _new_gelu(x)
    return _new_gelu(mm(x, params["reshape_w"]) + params["reshape_b"])


if __name__ == "__main__":
    B, S, W = 64, 8, 32
    BOTTLENECK = 16
    NUM_BLOCKS = 2
    DROP_RATE = 0.0  # dropout is identity here (eval semantics)

    key = jax.random.PRNGKey(0)
    kx, kp = jax.random.split(key)
    x = jax.random.normal(kx, (B, S, W), jnp.float32)
    params = init_params(kp, NUM_BLOCKS, W, BOTTLENECK)

    out = recurrent_module_forward(x, params, num_blocks=NUM_BLOCKS)
    out = jax.block_until_ready(out)

    # Compare against a mixed-precision reference: bf16-rounded input (matching
    # the kernel's bf16 activation I/O) and bf16-operand matmuls.
    x_mixed = x.astype(jnp.bfloat16).astype(jnp.float32)
    ref = reference_forward(x_mixed, params, NUM_BLOCKS, matmul_dtype=jnp.bfloat16)
    assert out.shape == (B, S, BOTTLENECK)
    assert jnp.allclose(out, ref, atol=3e-2, rtol=3e-2), \
        float(jnp.max(jnp.abs(out - ref)))

    print("KERNEL_OK")
</pallas_src>

<mosaic_0001>
module attributes {stable_mosaic.version = 11 : i64} {
  func.func @_attention_block_kernel(%arg0: i32, %arg1: i32, %arg2: memref<512x32xbf16, #tpu.memory_space<vmem>>, %arg3: memref<1x128x128xbf16, #tpu.memory_space<vmem>>, %arg4: memref<1x1x128xf32, #tpu.memory_space<vmem>>, %arg5: memref<1x1x128xf32, #tpu.memory_space<vmem>>, %arg6: memref<1x1x128xf32, #tpu.memory_space<vmem>>, %arg7: memref<1x1x128xf32, #tpu.memory_space<vmem>>, %arg8: memref<1x1x128xf32, #tpu.memory_space<vmem>>, %arg9: memref<1x128x128xbf16, #tpu.memory_space<vmem>>, %arg10: memref<1x1x128xf32, #tpu.memory_space<vmem>>, %arg11: memref<1x128x128xbf16, #tpu.memory_space<vmem>>, %arg12: memref<1x1x128xf32, #tpu.memory_space<vmem>>, %arg13: memref<128x128xbf16, #tpu.memory_space<vmem>>, %arg14: memref<1x128xf32, #tpu.memory_space<vmem>>, %arg15: memref<512x128xbf16, #tpu.memory_space<vmem>>, %arg16: memref<512x128xf32, #tpu.memory_space<vmem>>) attributes {dimension_semantics = [#tpu.dimension_semantics<parallel>, #tpu.dimension_semantics<arbitrary>], iteration_bounds = array<i64: 1, 2>, scalar_prefetch = 0 : i64, scratch_operands = 1 : i64, tpu.core_type = #tpu.core_type<tc>, window_params = [{transform_indices = @transform_0, window_bounds = array<i64: 512, 32>}, {transform_indices = @transform_1, window_bounds = array<i64: 1, 128, 128>}, {transform_indices = @transform_2, window_bounds = array<i64: 1, 1, 128>}, {transform_indices = @transform_3, window_bounds = array<i64: 1, 1, 128>}, {transform_indices = @transform_4, window_bounds = array<i64: 1, 1, 128>}, {transform_indices = @transform_5, window_bounds = array<i64: 1, 1, 128>}, {transform_indices = @transform_6, window_bounds = array<i64: 1, 1, 128>}, {transform_indices = @transform_7, window_bounds = array<i64: 1, 128, 128>}, {transform_indices = @transform_8, window_bounds = array<i64: 1, 1, 128>}, {transform_indices = @transform_9, window_bounds = array<i64: 1, 128, 128>}, {transform_indices = @transform_10, window_bounds = array<i64: 1, 1, 128>}, {pipeline_mode = #tpu.pipeline_mode<synchronous>, transform_indices = @transform_11, window_bounds = array<i64: 128, 128>}, {pipeline_mode = #tpu.pipeline_mode<synchronous>, transform_indices = @transform_12, window_bounds = array<i64: 1, 128>}, {transform_indices = @transform_13, window_bounds = array<i64: 512, 128>}]} {
    %c0_i32 = arith.constant 0 : i32
    %0 = arith.cmpi eq, %arg1, %c0_i32 : i32
    %1 = arith.extui %0 : i1 to i32
    %c0_i32_0 = arith.constant 0 : i32
    %2 = arith.cmpi ne, %1, %c0_i32_0 : i32
    scf.if %2 {
      %cst_59 = arith.constant 0.000000e+00 : f32
      %132 = vector.broadcast %cst_59 : f32 to vector<512x128xf32>
      %c0_60 = arith.constant 0 : index
      %c0_61 = arith.constant 0 : index
      %133 = vector.load %arg16[%c0_60, %c0_61] : memref<512x128xf32, #tpu.memory_space<vmem>>, vector<512x128xf32>
      tpu.vector_store %arg16[%c0_60, %c0_61], %132 {strides = array<i32>} : memref<512x128xf32, #tpu.memory_space<vmem>>, vector<512x128xf32>,
      %c0_62 = arith.constant 0 : index
      %c0_63 = arith.constant 0 : index
      %134 = vector.load %arg2[%c0_62, %c0_63] : memref<512x32xbf16, #tpu.memory_space<vmem>>, vector<512x32xbf16>
      %135 = arith.extf %134 : vector<512x32xbf16> to vector<512x32xf32>
      %c0_64 = arith.constant 0 : index
      %c0_65 = arith.constant 0 : index
      %136 = vector.load %arg16[%c0_64, %c0_65] : memref<512x128xf32, #tpu.memory_space<vmem>>, vector<512x32xf32>
      tpu.vector_store %arg16[%c0_64, %c0_65], %135 {strides = array<i32>} : memref<512x128xf32, #tpu.memory_space<vmem>>, vector<512x32xf32>,
    } else {
    }
    %c0 = arith.constant 0 : index
    %c0_1 = arith.constant 0 : index
    %3 = vector.load %arg16[%c0, %c0_1] : memref<512x128xf32, #tpu.memory_space<vmem>>, vector<512x128xf32>
    %4 = tpu.iota {dimensions = array<i32: 1>} : vector<1x128xi32>
    %c32_i32 = arith.constant 32 : i32
    %5 = vector.broadcast %c32_i32 : i32 to vector<1x128xi32>
    %6 = arith.cmpi slt, %4, %5 : vector<1x128xi32>
    %c0_2 = arith.constant 0 : index
    %c0_3 = arith.constant 0 : index
    %c0_4 = arith.constant 0 : index
    %7 = vector.load %arg5[%c0_2, %c0_3, %c0_4] : memref<1x1x128xf32, #tpu.memory_space<vmem>>, vector<1x1x128xf32>
    %8 = vector.shape_cast %7 : vector<1x1x128xf32> to vector<1x128xf32>
    %c0_5 = arith.constant 0 : index
    %c0_6 = arith.constant 0 : index
    %c0_7 = arith.constant 0 : index
    %9 = vector.load %arg6[%c0_5, %c0_6, %c0_7] : memref<1x1x128xf32, #tpu.memory_space<vmem>>, vector<1x1x128xf32>
    %10 = vector.shape_cast %9 : vector<1x1x128xf32> to vector<1x128xf32>
    %cst = arith.constant dense<0.000000e+00> : vector<512xf32>
    %11 = vector.multi_reduction <add>, %3, %cst [1] : vector<512x128xf32> to vector<512xf32>
    %12 = vector.shape_cast %11 : vector<512xf32> to vector<512x1xf32>
    %cst_8 = arith.constant 3.125000e-02 : f32
    %13 = vector.broadcast %cst_8 : f32 to vector<512x1xf32>
    %14 = arith.mulf %12, %13 : vector<512x1xf32>
    %15 = vector.broadcast %14 : vector<512x1xf32> to vector<512x128xf32>
    %16 = arith.subf %3, %15 : vector<512x128xf32>
    %cst_9 = arith.constant 0.000000e+00 : f32
    %17 = vector.shape_cast %6 : vector<1x128xi1> to vector<1x128xi1>
    %18 = vector.broadcast %17 : vector<1x128xi1> to vector<512x128xi1>
    %19 = vector.broadcast %cst_9 : f32 to vector<512x128xf32>
    %20 = arith.select %18, %16, %19 : vector<512x128xi1>, vector<512x128xf32>
    %21 = arith.mulf %20, %20 : vector<512x128xf32>
    %cst_10 = arith.constant dense<0.000000e+00> : vector<512xf32>
    %22 = vector.multi_reduction <add>, %21, %cst_10 [1] : vector<512x128xf32> to vector<512xf32>
    %23 = vector.shape_cast %22 : vector<512xf32> to vector<512x1xf32>
    %cst_11 = arith.constant 3.125000e-02 : f32
    %24 = vector.broadcast %cst_11 : f32 to vector<512x1xf32>
    %25 = arith.mulf %23, %24 : vector<512x1xf32>
    %cst_12 = arith.constant 9.99999974E-6 : f32
    %26 = vector.broadcast %cst_12 : f32 to vector<512x1xf32>
    %27 = arith.addf %25, %26 : vector<512x1xf32>
    %28 = math.rsqrt %27 : vector<512x1xf32>
    %29 = vector.broadcast %28 : vector<512x1xf32> to vector<512x128xf32>
    %30 = arith.mulf %20, %29 : vector<512x128xf32>
    %31 = vector.broadcast %8 : vector<1x128xf32> to vector<512x128xf32>
    %32 = arith.mulf %30, %31 : vector<512x128xf32>
    %33 = vector.broadcast %10 : vector<1x128xf32> to vector<512x128xf32>
    %34 = arith.addf %32, %33 : vector<512x128xf32>
    %c0_13 = arith.constant 0 : index
    %c0_14 = arith.constant 0 : index
    %c0_15 = arith.constant 0 : index
    %35 = vector.load %arg3[%c0_13, %c0_14, %c0_15] : memref<1x128x128xbf16, #tpu.memory_space<vmem>>, vector<1x128x128xbf16>
    %36 = vector.shape_cast %35 : vector<1x128x128xbf16> to vector<128x128xbf16>
    %37 = arith.truncf %34 : vector<512x128xf32> to vector<512x128xbf16>
    %cst_16 = arith.constant dense<0.000000e+00> : vector<512x128xf32>
    %38 = tpu.matmul %37, %36, %cst_16 {dimension_numbers = #tpu.dot_dimension_numbers<[1], [0], [0], [1], [0, 0, 1, 1], [], []>} : vector<512x128xbf16>, vector<128x128xbf16>, vector<512x128xf32> -> vector<512x128xf32>
    %c0_17 = arith.constant 0 : index
    %c0_18 = arith.constant 0 : index
    %c0_19 = arith.constant 0 : index
    %39 = vector.load %arg4[%c0_17, %c0_18, %c0_19] : memref<1x1x128xf32, #tpu.memory_space<vmem>>, vector<1x1x128xf32>
    %40 = vector.shape_cast %39 : vector<1x1x128xf32> to vector<1x128xf32>
    %41 = vector.broadcast %40 : vector<1x128xf32> to vector<512x128xf32>
    %42 = arith.addf %38, %41 : vector<512x128xf32>
    %43 = vector.shape_cast %42 : vector<512x128xf32> to vector<64x8x128xf32>
    %cst_20 = arith.constant dense<0xFF800000> : vector<64x128xf32>
    %44 = vector.multi_reduction <maximumf>, %43, %cst_20 [1] : vector<64x8x128xf32> to vector<64x128xf32>
    %45 = vector.shape_cast %44 : vector<64x128xf32> to vector<64x1x128xf32>
    %46 = vector.broadcast %45 : vector<64x1x128xf32> to vector<64x8x128xf32>
    %47 = arith.subf %43, %46 : vector<64x8x128xf32>
    %48 = math.exp %47 : vector<64x8x128xf32>
    %cst_21 = arith.constant dense<0.000000e+00> : vector<64x128xf32>
    %49 = vector.multi_reduction <add>, %48, %cst_21 [1] : vector<64x8x128xf32> to vector<64x128xf32>
    %50 = vector.shape_cast %49 : vector<64x128xf32> to vector<64x1x128xf32>
    %51 = tpu.reciprocal %50 {approx = true} : vector<64x1x128xf32> -> vector<64x1x128xf32>
    %52 = vector.broadcast %51 : vector<64x1x128xf32> to vector<64x8x128xf32>
    %53 = arith.mulf %48, %52 : vector<64x8x128xf32>
    %54 = vector.shape_cast %53 : vector<64x8x128xf32> to vector<512x128xf32>
    %55 = arith.mulf %34, %54 : vector<512x128xf32>
    %56 = arith.addf %34, %55 : vector<512x128xf32>
    %c0_22 = arith.constant 0 : index
    %c0_23 = arith.constant 0 : index
    %c0_24 = arith.constant 0 : index
    %57 = vector.load %arg7[%c0_22, %c0_23, %c0_24] : memref<1x1x128xf32, #tpu.memory_space<vmem>>, vector<1x1x128xf32>
    %58 = vector.shape_cast %57 : vector<1x1x128xf32> to vector<1x128xf32>
    %c0_25 = arith.constant 0 : index
    %c0_26 = arith.constant 0 : index
    %c0_27 = arith.constant 0 : index
    %59 = vector.load %arg8[%c0_25, %c0_26, %c0_27] : memref<1x1x128xf32, #tpu.memory_space<vmem>>, vector<1x1x128xf32>
    %60 = vector.shape_cast %59 : vector<1x1x128xf32> to vector<1x128xf32>
    %cst_28 = arith.constant dense<0.000000e+00> : vector<512xf32>
    %61 = vector.multi_reduction <add>, %56, %cst_28 [1] : vector<512x128xf32> to vector<512xf32>
    %62 = vector.shape_cast %61 : vector<512xf32> to vector<512x1xf32>
    %cst_29 = arith.constant 3.125000e-02 : f32
    %63 = vector.broadcast %cst_29 : f32 to vector<512x1xf32>
    %64 = arith.mulf %62, %63 : vector<512x1xf32>
    %65 = vector.broadcast %64 : vector<512x1xf32> to vector<512x128xf32>
    %66 = arith.subf %56, %65 : vector<512x128xf32>
    %cst_30 = arith.constant 0.000000e+00 : f32
    %67 = vector.shape_cast %6 : vector<1x128xi1> to vector<1x128xi1>
    %68 = vector.broadcast %67 : vector<1x128xi1> to vector<512x128xi1>
    %69 = vector.broadcast %cst_30 : f32 to vector<512x128xf32>
    %70 = arith.select %68, %66, %69 : vector<512x128xi1>, vector<512x128xf32>
    %71 = arith.mulf %70, %70 : vector<512x128xf32>
    %cst_31 = arith.constant dense<0.000000e+00> : vector<512xf32>
    %72 = vector.multi_reduction <add>, %71, %cst_31 [1] : vector<512x128xf32> to vector<512xf32>
    %73 = vector.shape_cast %72 : vector<512xf32> to vector<512x1xf32>
    %cst_32 = arith.constant 3.125000e-02 : f32
    %74 = vector.broadcast %cst_32 : f32 to vector<512x1xf32>
    %75 = arith.mulf %73, %74 : vector<512x1xf32>
    %cst_33 = arith.constant 9.99999974E-6 : f32
    %76 = vector.broadcast %cst_33 : f32 to vector<512x1xf32>
    %77 = arith.addf %75, %76 : vector<512x1xf32>
    %78 = math.rsqrt %77 : vector<512x1xf32>
    %79 = vector.broadcast %78 : vector<512x1xf32> to vector<512x128xf32>
    %80 = arith.mulf %70, %79 : vector<512x128xf32>
    %81 = vector.broadcast %58 : vector<1x128xf32> to vector<512x128xf32>
    %82 = arith.mulf %80, %81 : vector<512x128xf32>
    %83 = vector.broadcast %60 : vector<1x128xf32> to vector<512x128xf32>
    %84 = arith.addf %82, %83 : vector<512x128xf32>
    %c0_34 = arith.constant 0 : index
    %c0_35 = arith.constant 0 : index
    %c0_36 = arith.constant 0 : index
    %85 = vector.load %arg9[%c0_34, %c0_35, %c0_36] : memref<1x128x128xbf16, #tpu.memory_space<vmem>>, vector<1x128x128xbf16>
    %86 = vector.shape_cast %85 : vector<1x128x128xbf16> to vector<128x128xbf16>
    %87 = arith.truncf %84 : vector<512x128xf32> to vector<512x128xbf16>
    %cst_37 = arith.constant dense<0.000000e+00> : vector<512x128xf32>
    %88 = tpu.matmul %87, %86, %cst_37 {dimension_numbers = #tpu.dot_dimension_numbers<[1], [0], [0], [1], [0, 0, 1, 1], [], []>} : vector<512x128xbf16>, vector<128x128xbf16>, vector<512x128xf32> -> vector<512x128xf32>
    %c0_38 = arith.constant 0 : index
    %c0_39 = arith.constant 0 : index
    %c0_40 = arith.constant 0 : index
    %89 = vector.load %arg10[%c0_38, %c0_39, %c0_40] : memref<1x1x128xf32, #tpu.memory_space<vmem>>, vector<1x1x128xf32>
    %90 = vector.shape_cast %89 : vector<1x1x128xf32> to vector<1x128xf32>
    %91 = vector.broadcast %90 : vector<1x128xf32> to vector<512x128xf32>
    %92 = arith.addf %88, %91 : vector<512x128xf32>
    %93 = arith.truncf %92 : vector<512x128xf32> to vector<512x128xbf16>
    %cst_41 = arith.constant 5.000000e-01 : bf16
    %94 = vector.broadcast %cst_41 : bf16 to vector<512x128xbf16>
    %95 = arith.mulf %94, %93 : vector<512x128xbf16>
    %cst_42 = arith.constant 4.467770e-02 : bf16
    %96 = vector.broadcast %cst_42 : bf16 to vector<512x128xbf16>
    %97 = arith.mulf %96, %93 : vector<512x128xbf16>
    %98 = arith.mulf %97, %93 : vector<512x128xbf16>
    %99 = arith.mulf %98, %93 : vector<512x128xbf16>
    %100 = arith.addf %93, %99 : vector<512x128xbf16>
    %cst_43 = arith.constant 7.968750e-01 : bf16
    %101 = vector.broadcast %cst_43 : bf16 to vector<512x128xbf16>
    %102 = arith.mulf %101, %100 : vector<512x128xbf16>
    %103 = math.tanh %102 : vector<512x128xbf16>
    %cst_44 = arith.constant 1.000000e+00 : bf16
    %104 = vector.broadcast %cst_44 : bf16 to vector<512x128xbf16>
    %105 = arith.addf %104, %103 : vector<512x128xbf16>
    %106 = arith.mulf %95, %105 : vector<512x128xbf16>
    %c0_45 = arith.constant 0 : index
    %c0_46 = arith.constant 0 : index
    %c0_47 = arith.constant 0 : index
    %107 = vector.load %arg11[%c0_45, %c0_46, %c0_47] : memref<1x128x128xbf16, #tpu.memory_space<vmem>>, vector<1x128x128xbf16>
    %108 = vector.shape_cast %107 : vector<1x128x128xbf16> to vector<128x128xbf16>
    %cst_48 = arith.constant dense<0.000000e+00> : vector<512x128xf32>
    %109 = tpu.matmul %106, %108, %cst_48 {dimension_numbers = #tpu.dot_dimension_numbers<[1], [0], [0], [1], [0, 0, 1, 1], [], []>} : vector<512x128xbf16>, vector<128x128xbf16>, vector<512x128xf32> -> vector<512x128xf32>
    %c0_49 = arith.constant 0 : index
    %c0_50 = arith.constant 0 : index
    %c0_51 = arith.constant 0 : index
    %110 = vector.load %arg12[%c0_49, %c0_50, %c0_51] : memref<1x1x128xf32, #tpu.memory_space<vmem>>, vector<1x1x128xf32>
    %111 = vector.shape_cast %110 : vector<1x1x128xf32> to vector<1x128xf32>
    %112 = vector.broadcast %111 : vector<1x128xf32> to vector<512x128xf32>
    %113 = arith.addf %109, %112 : vector<512x128xf32>
    %114 = arith.addf %84, %113 : vector<512x128xf32>
    %cst_52 = arith.constant 5.000000e-01 : f32
    %115 = vector.broadcast %cst_52 : f32 to vector<512x128xf32>
    %116 = arith.mulf %115, %114 : vector<512x128xf32>
    %cst_53 = arith.constant 4.471500e-02 : f32
    %117 = vector.broadcast %cst_53 : f32 to vector<512x128xf32>
    %118 = arith.mulf %117, %114 : vector<512x128xf32>
    %119 = arith.mulf %118, %114 : vector<512x128xf32>
    %120 = arith.mulf %119, %114 : vector<512x128xf32>
    %121 = arith.addf %114, %120 : vector<512x128xf32>
    %cst_54 = arith.constant 0.797884583 : f32
    %122 = vector.broadcast %cst_54 : f32 to vector<512x128xf32>
    %123 = arith.mulf %122, %121 : vector<512x128xf32>
    %124 = math.tanh %123 : vector<512x128xf32>
    %cst_55 = arith.constant 1.000000e+00 : f32
    %125 = vector.broadcast %cst_55 : f32 to vector<512x128xf32>
    %126 = arith.addf %125, %124 : vector<512x128xf32>
    %127 = arith.mulf %116, %126 : vector<512x128xf32>
    %c0_56 = arith.constant 0 : index
    %c0_57 = arith.constant 0 : index
    %128 = vector.load %arg16[%c0_56, %c0_57] : memref<512x128xf32, #tpu.memory_space<vmem>>, vector<512x128xf32>
    tpu.vector_store %arg16[%c0_56, %c0_57], %127 {strides = array<i32>} : memref<512x128xf32, #tpu.memory_space<vmem>>, vector<512x128xf32>,
    %c1_i32 = arith.constant 1 : i32
    %129 = arith.cmpi eq, %arg1, %c1_i32 : i32
    %130 = arith.extui %129 : i1 to i32
    %c0_i32_58 = arith.constant 0 : i32
    %131 = arith.cmpi ne, %130, %c0_i32_58 : i32
    scf.if %131 {
      %c0_59 = arith.constant 0 : index
      %c0_60 = arith.constant 0 : index
      %132 = vector.load %arg13[%c0_59, %c0_60] : memref<128x128xbf16, #tpu.memory_space<vmem>>, vector<128x128xbf16>
      %133 = arith.truncf %127 : vector<512x128xf32> to vector<512x128xbf16>
      %cst_61 = arith.constant dense<0.000000e+00> : vector<512x128xf32>
      %134 = tpu.matmul %133, %132, %cst_61 {dimension_numbers = #tpu.dot_dimension_numbers<[1], [0], [0], [1], [0, 0, 1, 1], [], []>} : vector<512x128xbf16>, vector<128x128xbf16>, vector<512x128xf32> -> vector<512x128xf32>
      %c0_62 = arith.constant 0 : index
      %c0_63 = arith.constant 0 : index
      %135 = vector.load %arg14[%c0_62, %c0_63] : memref<1x128xf32, #tpu.memory_space<vmem>>, vector<1x128xf32>
      %136 = vector.broadcast %135 : vector<1x128xf32> to vector<512x128xf32>
      %137 = arith.addf %134, %136 : vector<512x128xf32>
      %138 = arith.truncf %137 : vector<512x128xf32> to vector<512x128xbf16>
      %cst_64 = arith.constant 5.000000e-01 : bf16
      %139 = vector.broadcast %cst_64 : bf16 to vector<512x128xbf16>
      %140 = arith.mulf %139, %138 : vector<512x128xbf16>
      %cst_65 = arith.constant 4.467770e-02 : bf16
      %141 = vector.broadcast %cst_65 : bf16 to vector<512x128xbf16>
      %142 = arith.mulf %141, %138 : vector<512x128xbf16>
      %143 = arith.mulf %142, %138 : vector<512x128xbf16>
      %144 = arith.mulf %143, %138 : vector<512x128xbf16>
      %145 = arith.addf %138, %144 : vector<512x128xbf16>
      %cst_66 = arith.constant 7.968750e-01 : bf16
      %146 = vector.broadcast %cst_66 : bf16 to vector<512x128xbf16>
      %147 = arith.mulf %146, %145 : vector<512x128xbf16>
      %148 = math.tanh %147 : vector<512x128xbf16>
      %cst_67 = arith.constant 1.000000e+00 : bf16
      %149 = vector.broadcast %cst_67 : bf16 to vector<512x128xbf16>
      %150 = arith.addf %149, %148 : vector<512x128xbf16>
      %151 = arith.mulf %140, %150 : vector<512x128xbf16>
      %c0_68 = arith.constant 0 : index
      %c0_69 = arith.constant 0 : index
      %152 = vector.load %arg15[%c0_68, %c0_69] : memref<512x128xbf16, #tpu.memory_space<vmem>>, vector<512x128xbf16>
      tpu.vector_store %arg15[%c0_68, %c0_69], %151 {strides = array<i32>} : memref<512x128xbf16, #tpu.memory_space<vmem>>, vector<512x128xbf16>,
    } else {
    }
    return
  }
  func.func @transform_0(%arg0: i32, %arg1: i32) -> (i32, i32) {
    %c0_i32 = arith.constant 0 : i32
    %c0_i32_0 = arith.constant 0 : i32
    return %arg0, %c0_i32 : i32, i32
  }
  func.func @transform_1(%arg0: i32, %arg1: i32) -> (i32, i32, i32) {
    %c0_i32 = arith.constant 0 : i32
    %c0_i32_0 = arith.constant 0 : i32
    %c0_i32_1 = arith.constant 0 : i32
    return %arg1, %c0_i32, %c0_i32_0 : i32, i32, i32
  }
  func.func @transform_2(%arg0: i32, %arg1: i32) -> (i32, i32, i32) {
    %c0_i32 = arith.constant 0 : i32
    %c0_i32_0 = arith.constant 0 : i32
    %c0_i32_1 = arith.constant 0 : i32
    return %arg1, %c0_i32, %c0_i32_0 : i32, i32, i32
  }
  func.func @transform_3(%arg0: i32, %arg1: i32) -> (i32, i32, i32) {
    %c0_i32 = arith.constant 0 : i32
    %c0_i32_0 = arith.constant 0 : i32
    %c0_i32_1 = arith.constant 0 : i32
    return %arg1, %c0_i32, %c0_i32_0 : i32, i32, i32
  }
  func.func @transform_4(%arg0: i32, %arg1: i32) -> (i32, i32, i32) {
    %c0_i32 = arith.constant 0 : i32
    %c0_i32_0 = arith.constant 0 : i32
    %c0_i32_1 = arith.constant 0 : i32
    return %arg1, %c0_i32, %c0_i32_0 : i32, i32, i32
  }
  func.func @transform_5(%arg0: i32, %arg1: i32) -> (i32, i32, i32) {
    %c0_i32 = arith.constant 0 : i32
    %c0_i32_0 = arith.constant 0 : i32
    %c0_i32_1 = arith.constant 0 : i32
    return %arg1, %c0_i32, %c0_i32_0 : i32, i32, i32
  }
  func.func @transform_6(%arg0: i32, %arg1: i32) -> (i32, i32, i32) {
    %c0_i32 = arith.constant 0 : i32
    %c0_i32_0 = arith.constant 0 : i32
    %c0_i32_1 = arith.constant 0 : i32
    return %arg1, %c0_i32, %c0_i32_0 : i32, i32, i32
  }
  func.func @transform_7(%arg0: i32, %arg1: i32) -> (i32, i32, i32) {
    %c0_i32 = arith.constant 0 : i32
    %c0_i32_0 = arith.constant 0 : i32
    %c0_i32_1 = arith.constant 0 : i32
    return %arg1, %c0_i32, %c0_i32_0 : i32, i32, i32
  }
  func.func @transform_8(%arg0: i32, %arg1: i32) -> (i32, i32, i32) {
    %c0_i32 = arith.constant 0 : i32
    %c0_i32_0 = arith.constant 0 : i32
    %c0_i32_1 = arith.constant 0 : i32
    return %arg1, %c0_i32, %c0_i32_0 : i32, i32, i32
  }
  func.func @transform_9(%arg0: i32, %arg1: i32) -> (i32, i32, i32) {
    %c0_i32 = arith.constant 0 : i32
    %c0_i32_0 = arith.constant 0 : i32
    %c0_i32_1 = arith.constant 0 : i32
    return %arg1, %c0_i32, %c0_i32_0 : i32, i32, i32
  }
  func.func @transform_10(%arg0: i32, %arg1: i32) -> (i32, i32, i32) {
    %c0_i32 = arith.constant 0 : i32
    %c0_i32_0 = arith.constant 0 : i32
    %c0_i32_1 = arith.constant 0 : i32
    return %arg1, %c0_i32, %c0_i32_0 : i32, i32, i32
  }
  func.func @transform_11(%arg0: i32, %arg1: i32) -> (i32, i32) {
    %c0_i32 = arith.constant 0 : i32
    %c0_i32_0 = arith.constant 0 : i32
    %c0_i32_1 = arith.constant 0 : i32
    return %c0_i32, %c0_i32_0 : i32, i32
  }
  func.func @transform_12(%arg0: i32, %arg1: i32) -> (i32, i32) {
    %c0_i32 = arith.constant 0 : i32
    %c0_i32_0 = arith.constant 0 : i32
    %c0_i32_1 = arith.constant 0 : i32
    return %c0_i32, %c0_i32_0 : i32, i32
  }
  func.func @transform_13(%arg0: i32, %arg1: i32) -> (i32, i32) {
    %c0_i32 = arith.constant 0 : i32
    %c0_i32_0 = arith.constant 0 : i32
    return %arg0, %c0_i32 : i32, i32
  }
}

</mosaic_0001>

<llo_original>
// kernel: tpu_custom_call.1
$region0: #{tpu_custom_call.1}
  #allocation0 [shape = 'u32[]', space=smem, size = 0x4, offset = 0x4, fixed_abs, tag = 'smem constant byte address 0x4 - core index']
  #allocation1 [shape = 'u32[144,128]{1,0:T(1,128)}', space=vmem, size = 0x12000, scoped, tag = 'internal scratch']
  #allocation2 [shape = 'f32[512,128]{1,0:T(8,128)}', space=vmem, size = 0x40000, scoped, tag = 'scratch operand']
  %s0 = inlined_call_operand.vmem [shape: bf16[512,32], index: 0, kind: input, shape index: {}]
  %s1 = inlined_call_operand.vmem [shape: bf16[2,128,128], index: 1, kind: input, shape index: {}]
  %s2 = inlined_call_operand.vmem [shape: f32[2,1,128], index: 2, kind: input, shape index: {}]
  %s3 = inlined_call_operand.hbm [shape: f32[2,1,128], index: 3, kind: input, shape index: {}]
  %s4 = inlined_call_operand.vmem [shape: f32[2,1,128], index: 4, kind: input, shape index: {}]
  %s5 = inlined_call_operand.vmem [shape: f32[2,1,128], index: 5, kind: input, shape index: {}]
  %s6 = inlined_call_operand.vmem [shape: f32[2,1,128], index: 6, kind: input, shape index: {}]
  %s7 = inlined_call_operand.vmem [shape: bf16[2,128,128], index: 7, kind: input, shape index: {}]
  %s8 = inlined_call_operand.vmem [shape: f32[2,1,128], index: 8, kind: input, shape index: {}]
  %s9 = inlined_call_operand.hbm [shape: bf16[2,128,128], index: 9, kind: input, shape index: {}]
  %s10 = inlined_call_operand.vmem [shape: f32[2,1,128], index: 10, kind: input, shape index: {}]
  %s11 = inlined_call_operand.vmem [shape: bf16[128,128], index: 11, kind: input, shape index: {}]
  %s12 = inlined_call_operand.vmem [shape: f32[1,128], index: 12, kind: input, shape index: {}]
  %s13 = inlined_call_operand.hbm [shape: bf16[512,128], index: 13, kind: output, shape index: {}]
  %s14 = sld [smem:[#allocation0]]
  $region101: #{tpu_custom_call.1} parent=0
    _
  %s16 = ssub.s32 1, %s14
  %s17 = scalar_select 0, %s16, %s14
  $region1: #{tpu_custom_call.1} parent=0
    #allocation3 [shape = 'u8[1024]{0}', space=vmem, size = 0x400, scoped, tag = 'input window, operand 3']
    #allocation4 [shape = 's32[2]{0}', space=sflag, size = 0x8, scoped, tag = 'scoped memory for tpu_custom_call.1']
    #allocation5 [shape = 's32[2]{0}', space=sflag, size = 0x8, scoped, tag = 'scoped memory for tpu_custom_call.1']
    #allocation6 [shape = 'u8[65536]{0}', space=vmem, size = 0x10000, scoped, tag = 'input window, operand 9']
    #allocation7 [shape = 's32[2]{0}', space=sflag, size = 0x8, scoped, tag = 'scoped memory for tpu_custom_call.1']
    #allocation8 [shape = 'u8[131072]{0}', space=vmem, size = 0x20000, scoped, tag = 'output window, operand 0, single buffered']
    %18 = vsyncpa [#allocation4], 0
    %s19 = scalar_lea.sflag [#allocation4], 1
    %20 = vsyncpa %s19, 0
    %21 = vsyncpa [#allocation7], 0
    %s22 = scalar_lea.sflag [#allocation7], 1
    %23 = vsyncpa %s22, 0
    %24 = vsyncpa [#allocation5], 0
    loop: start=0, step=1, limit=4
    $region2: #{tpu_custom_call.1} parent=1 // loop_pre_header
      _
    $region3: #{tpu_custom_call.1} parent=1 // loop_header
      %s26 = sphi 0, %s30
      %p27 = scmp.ge.s32.totalorder %s26, 4
      %s33 = sphi 0, %s45
      %s34 = sphi 0, %s41
      %s35 = sphi 0, %s33
      %s36 = sphi 0, %s34
      %s37 = sphi 0, %s35
      %s38 = sphi 0, %s36
      %s48 = sphi 0, %s50
      %s51 = sphi 0, %s48
      %s52 = sphi 0, %s51
      %s68 = sphi 0, %s52
      %s74 = sphi 0, %s76
      %s77 = sphi 0, %s74
      %s78 = sphi 0, %s77
      %s94 = sphi 0, %s78
      %s100 = sphi 0, %s102
      %s103 = sphi 0, %s100
      %s104 = sphi 0, %s103
      %s120 = sphi 0, %s104
      %s126 = sphi 0, %s128
      %s129 = sphi 0, %s126
      %s130 = sphi 0, %s129
      %s146 = sphi 0, %s130
      %s152 = sphi 0, %s154
      %s155 = sphi 0, %s152
      %s156 = sphi 0, %s155
      %s172 = sphi 0, %s156
      %s178 = sphi 0, %s180
      %s181 = sphi 0, %s178
      %s182 = sphi 0, %s181
      %s198 = sphi 0, %s182
      %s204 = sphi 0, %s206
      %s207 = sphi 0, %s204
      %s208 = sphi 0, %s207
      %s224 = sphi 0, %s208
      %s230 = sphi 0, %s232
      %s233 = sphi 0, %s230
      %s234 = sphi 0, %s233
      %s250 = sphi 0, %s234
      %s256 = sphi 0, %s258
      %s259 = sphi 0, %s256
      %s260 = sphi 0, %s259
      %s276 = sphi 0, %s260
      %s282 = sphi 0, %s284
      %s285 = sphi 0, %s282
      %s286 = sphi 0, %s285
      %s302 = sphi 0, %s286
      %s308 = sphi 0, %s310
      %s311 = sphi 0, %s308
      %s312 = sphi 0, %s311
      %s328 = sphi 0, %s312
      %s332 = sphi 0, %s332
      %s334 = sphi 0, %s332
      %s335 = sphi 0, %s334
      %s349 = sphi 0, %s335
      %s353 = sphi 0, %s353
      %s355 = sphi 0, %s353
      %s356 = sphi 0, %s355
      %s370 = sphi 0, %s356
      %s376 = sphi 0, %s378
      %s379 = sphi 0, %s376
      %s380 = sphi 0, %s379
      %s396 = sphi 0, %s380
    $region4: #{tpu_custom_call.1} parent=1 // loop_header_branch
      %29 = sbr.rel (%p27) target = $region8
    $region5: #{tpu_custom_call.1} parent=1 // loop_body
      %s31 = ssub.s32 %s26, 1
      %s32 = ssub.s32 %s26, 2
      %s39 = sadd.s32 1, %s34
      %p40 = scmp.ge.s32.totalorder %s39, 2
      %s41 = scalar_select %p40, 0, %s39
      %s42 = sadd.s32 1, %s33
      %s43 = scalar_select %p40, %s42, %s33
      %p44 = scmp.ge.s32.totalorder %s43, 1
      %s45 = scalar_select %p44, 0, %s43
      %s46 = ssub.s32 %s33, %s45
      %p47 = scmp.eq.s32.totalorder %s46, 0
      %s49 = sadd.s32 %s48, 1
      %s50 = scalar_select %p47, %s48, %s49
      %p53 = pneg %p47
      %p54 = scmp.eq.s32.totalorder %s26, 1
      %p55 = por %p53, %p54
      %p56 = scmp.ne.s32.totalorder %s48, %s51
      %p57 = scmp.eq.s32.totalorder %s26, 0
      %p58 = por %p56, %p57
      %p59 = scmp.ne.s32.totalorder %s48, %s51
      %p60 = scmp.eq.s32.totalorder %s31, 1
      %p61 = por %p59, %p60
      %p62 = scmp.ne.s32.totalorder %s51, %s52
      %p63 = scmp.eq.s32.totalorder %s31, 0
      %p64 = por %p62, %p63
      %p65 = scmp.ne.s32.totalorder %s51, %s52
      %p66 = scmp.eq.s32.totalorder %s32, 1
      %p67 = por %p65, %p66
      %p69 = scmp.ne.s32.totalorder %s52, %s68
      %p70 = scmp.eq.s32.totalorder %s32, 0
      %p71 = por %p69, %p70
      %s72 = ssub.s32 %s34, %s41
      %p73 = scmp.eq.s32.totalorder %s72, 0
      %s75 = sadd.s32 %s74, 1
      %s76 = scalar_select %p73, %s74, %s75
      %p79 = pneg %p73
      %p80 = scmp.eq.s32.totalorder %s26, 1
      %p81 = por %p79, %p80
      %p82 = scmp.ne.s32.totalorder %s74, %s77
      %p83 = scmp.eq.s32.totalorder %s26, 0
      %p84 = por %p82, %p83
      %p85 = scmp.ne.s32.totalorder %s74, %s77
      %p86 = scmp.eq.s32.totalorder %s31, 1
      %p87 = por %p85, %p86
      %p88 = scmp.ne.s32.totalorder %s77, %s78
      %p89 = scmp.eq.s32.totalorder %s31, 0
      %p90 = por %p88, %p89
      %p91 = scmp.ne.s32.totalorder %s77, %s78
      %p92 = scmp.eq.s32.totalorder %s32, 1
      %p93 = por %p91, %p92
      %p95 = scmp.ne.s32.totalorder %s78, %s94
      %p96 = scmp.eq.s32.totalorder %s32, 0
      %p97 = por %p95, %p96
      %s98 = ssub.s32 %s34, %s41
      %p99 = scmp.eq.s32.totalorder %s98, 0
      %s101 = sadd.s32 %s100, 1
      %s102 = scalar_select %p99, %s100, %s101
      %p105 = pneg %p99
      %p106 = scmp.eq.s32.totalorder %s26, 1
      %p107 = por %p105, %p106
      %p108 = scmp.ne.s32.totalorder %s100, %s103
      %p109 = scmp.eq.s32.totalorder %s26, 0
      %p110 = por %p108, %p109
      %p111 = scmp.ne.s32.totalorder %s100, %s103
      %p112 = scmp.eq.s32.totalorder %s31, 1
      %p113 = por %p111, %p112
      %p114 = scmp.ne.s32.totalorder %s103, %s104
      %p115 = scmp.eq.s32.totalorder %s31, 0
      %p116 = por %p114, %p115
      %p117 = scmp.ne.s32.totalorder %s103, %s104
      %p118 = scmp.eq.s32.totalorder %s32, 1
      %p119 = por %p117, %p118
      %p121 = scmp.ne.s32.totalorder %s104, %s120
      %p122 = scmp.eq.s32.totalorder %s32, 0
      %p123 = por %p121, %p122
      %s124 = ssub.s32 %s34, %s41
      %p125 = scmp.eq.s32.totalorder %s124, 0
      %s127 = sadd.s32 %s126, 1
      %s128 = scalar_select %p125, %s126, %s127
      %p131 = pneg %p125
      %p132 = scmp.eq.s32.totalorder %s26, 1
      %p133 = por %p131, %p132
      %p134 = scmp.ne.s32.totalorder %s126, %s129
      %p135 = scmp.eq.s32.totalorder %s26, 0
      %p136 = por %p134, %p135
      %p137 = scmp.ne.s32.totalorder %s126, %s129
      %p138 = scmp.eq.s32.totalorder %s31, 1
      %p139 = por %p137, %p138
      %p140 = scmp.ne.s32.totalorder %s129, %s130
      %p141 = scmp.eq.s32.totalorder %s31, 0
      %p142 = por %p140, %p141
      %p143 = scmp.ne.s32.totalorder %s129, %s130
      %p144 = scmp.eq.s32.totalorder %s32, 1
      %p145 = por %p143, %p144
      %p147 = scmp.ne.s32.totalorder %s130, %s146
      %p148 = scmp.eq.s32.totalorder %s32, 0
      %p149 = por %p147, %p148
      %s150 = ssub.s32 %s34, %s41
      %p151 = scmp.eq.s32.totalorder %s150, 0
      %s153 = sadd.s32 %s152, 1
      %s154 = scalar_select %p151, %s152, %s153
      %p157 = pneg %p151
      %p158 = scmp.eq.s32.totalorder %s26, 1
      %p159 = por %p157, %p158
      %p160 = scmp.ne.s32.totalorder %s152, %s155
      %p161 = scmp.eq.s32.totalorder %s26, 0
      %p162 = por %p160, %p161
      %p163 = scmp.ne.s32.totalorder %s152, %s155
      %p164 = scmp.eq.s32.totalorder %s31, 1
      %p165 = por %p163, %p164
      %p166 = scmp.ne.s32.totalorder %s155, %s156
      %p167 = scmp.eq.s32.totalorder %s31, 0
      %p168 = por %p166, %p167
      %p169 = scmp.ne.s32.totalorder %s155, %s156
      %p170 = scmp.eq.s32.totalorder %s32, 1
      %p171 = por %p169, %p170
      %p173 = scmp.ne.s32.totalorder %s156, %s172
      %p174 = scmp.eq.s32.totalorder %s32, 0
      %p175 = por %p173, %p174
      %s176 = ssub.s32 %s34, %s41
      %p177 = scmp.eq.s32.totalorder %s176, 0
      %s179 = sadd.s32 %s178, 1
      %s180 = scalar_select %p177, %s178, %s179
      %p183 = pneg %p177
      %p184 = scmp.eq.s32.totalorder %s26, 1
      %p185 = por %p183, %p184
      %p186 = scmp.ne.s32.totalorder %s178, %s181
      %p187 = scmp.eq.s32.totalorder %s26, 0
      %p188 = por %p186, %p187
      %p189 = scmp.ne.s32.totalorder %s178, %s181
      %p190 = scmp.eq.s32.totalorder %s31, 1
      %p191 = por %p189, %p190
      %p192 = scmp.ne.s32.totalorder %s181, %s182
      %p193 = scmp.eq.s32.totalorder %s31, 0
      %p194 = por %p192, %p193
      %p195 = scmp.ne.s32.totalorder %s181, %s182
      %p196 = scmp.eq.s32.totalorder %s32, 1
      %p197 = por %p195, %p196
      %p199 = scmp.ne.s32.totalorder %s182, %s198
      %p200 = scmp.eq.s32.totalorder %s32, 0
      %p201 = por %p199, %p200
      %s202 = ssub.s32 %s34, %s41
      %p203 = scmp.eq.s32.totalorder %s202, 0
      %s205 = sadd.s32 %s204, 1
      %s206 = scalar_select %p203, %s204, %s205
      %p209 = pneg %p203
      %p210 = scmp.eq.s32.totalorder %s26, 1
      %p211 = por %p209, %p210
      %p212 = scmp.ne.s32.totalorder %s204, %s207
      %p213 = scmp.eq.s32.totalorder %s26, 0
      %p214 = por %p212, %p213
      %p215 = scmp.ne.s32.totalorder %s204, %s207
      %p216 = scmp.eq.s32.totalorder %s31, 1
      %p217 = por %p215, %p216
      %p218 = scmp.ne.s32.totalorder %s207, %s208
      %p219 = scmp.eq.s32.totalorder %s31, 0
      %p220 = por %p218, %p219
      %p221 = scmp.ne.s32.totalorder %s207, %s208
      %p222 = scmp.eq.s32.totalorder %s32, 1
      %p223 = por %p221, %p222
      %p225 = scmp.ne.s32.totalorder %s208, %s224
      %p226 = scmp.eq.s32.totalorder %s32, 0
      %p227 = por %p225, %p226
      %s228 = ssub.s32 %s34, %s41
      %p229 = scmp.eq.s32.totalorder %s228, 0
      %s231 = sadd.s32 %s230, 1
      %s232 = scalar_select %p229, %s230, %s231
      %p235 = pneg %p229
      %p236 = scmp.eq.s32.totalorder %s26, 1
      %p237 = por %p235, %p236
      %p238 = scmp.ne.s32.totalorder %s230, %s233
      %p239 = scmp.eq.s32.totalorder %s26, 0
      %p240 = por %p238, %p239
      %p241 = scmp.ne.s32.totalorder %s230, %s233
      %p242 = scmp.eq.s32.totalorder %s31, 1
      %p243 = por %p241, %p242
      %p244 = scmp.ne.s32.totalorder %s233, %s234
      %p245 = scmp.eq.s32.totalorder %s31, 0
      %p246 = por %p244, %p245
      %p247 = scmp.ne.s32.totalorder %s233, %s234
      %p248 = scmp.eq.s32.totalorder %s32, 1
      %p249 = por %p247, %p248
      %p251 = scmp.ne.s32.totalorder %s234, %s250
      %p252 = scmp.eq.s32.totalorder %s32, 0
      %p253 = por %p251, %p252
      %s254 = ssub.s32 %s34, %s41
      %p255 = scmp.eq.s32.totalorder %s254, 0
      %s257 = sadd.s32 %s256, 1
      %s258 = scalar_select %p255, %s256, %s257
      %p261 = pneg %p255
      %p262 = scmp.eq.s32.totalorder %s26, 1
      %p263 = por %p261, %p262
      %p264 = scmp.ne.s32.totalorder %s256, %s259
      %p265 = scmp.eq.s32.totalorder %s26, 0
      %p266 = por %p264, %p265
      %p267 = scmp.ne.s32.totalorder %s256, %s259
      %p268 = scmp.eq.s32.totalorder %s31, 1
      %p269 = por %p267, %p268
      %p270 = scmp.ne.s32.totalorder %s259, %s260
      %p271 = scmp.eq.s32.totalorder %s31, 0
      %p272 = por %p270, %p271
      %p273 = scmp.ne.s32.totalorder %s259, %s260
      %p274 = scmp.eq.s32.totalorder %s32, 1
      %p275 = por %p273, %p274
      %p277 = scmp.ne.s32.totalorder %s260, %s276
      %p278 = scmp.eq.s32.totalorder %s32, 0
      %p279 = por %p277, %p278
      %s280 = ssub.s32 %s34, %s41
      %p281 = scmp.eq.s32.totalorder %s280, 0
      %s283 = sadd.s32 %s282, 1
      %s284 = scalar_select %p281, %s282, %s283
      %p287 = pneg %p281
      %p288 = scmp.eq.s32.totalorder %s26, 1
      %p289 = por %p287, %p288
      %p290 = scmp.ne.s32.totalorder %s282, %s285
      %p291 = scmp.eq.s32.totalorder %s26, 0
      %p292 = por %p290, %p291
      %p293 = scmp.ne.s32.totalorder %s282, %s285
      %p294 = scmp.eq.s32.totalorder %s31, 1
      %p295 = por %p293, %p294
      %p296 = scmp.ne.s32.totalorder %s285, %s286
      %p297 = scmp.eq.s32.totalorder %s31, 0
      %p298 = por %p296, %p297
      %p299 = scmp.ne.s32.totalorder %s285, %s286
      %p300 = scmp.eq.s32.totalorder %s32, 1
      %p301 = por %p299, %p300
      %p303 = scmp.ne.s32.totalorder %s286, %s302
      %p304 = scmp.eq.s32.totalorder %s32, 0
      %p305 = por %p303, %p304
      %s306 = ssub.s32 %s34, %s41
      %p307 = scmp.eq.s32.totalorder %s306, 0
      %s309 = sadd.s32 %s308, 1
      %s310 = scalar_select %p307, %s308, %s309
      %p313 = pneg %p307
      %p314 = scmp.eq.s32.totalorder %s26, 1
      %p315 = por %p313, %p314
      %p316 = scmp.ne.s32.totalorder %s308, %s311
      %p317 = scmp.eq.s32.totalorder %s26, 0
      %p318 = por %p316, %p317
      %p319 = scmp.ne.s32.totalorder %s308, %s311
      %p320 = scmp.eq.s32.totalorder %s31, 1
      %p321 = por %p319, %p320
      %p322 = scmp.ne.s32.totalorder %s311, %s312
      %p323 = scmp.eq.s32.totalorder %s31, 0
      %p324 = por %p322, %p323
      %p325 = scmp.ne.s32.totalorder %s311, %s312
      %p326 = scmp.eq.s32.totalorder %s32, 1
      %p327 = por %p325, %p326
      %p329 = scmp.ne.s32.totalorder %s312, %s328
      %p330 = scmp.eq.s32.totalorder %s32, 0
      %p331 = por %p329, %p330
      %s333 = sadd.s32 %s332, 1
      %p336 = scmp.eq.s32.totalorder %s26, 1
      %p337 = scmp.ne.s32.totalorder %s332, %s334
      %p338 = scmp.eq.s32.totalorder %s26, 0
      %p339 = por %p337, %p338
      %p340 = scmp.ne.s32.totalorder %s332, %s334
      %p341 = scmp.eq.s32.totalorder %s31, 1
      %p342 = por %p340, %p341
      %p343 = scmp.ne.s32.totalorder %s334, %s335
      %p344 = scmp.eq.s32.totalorder %s31, 0
      %p345 = por %p343, %p344
      %p346 = scmp.ne.s32.totalorder %s334, %s335
      %p347 = scmp.eq.s32.totalorder %s32, 1
      %p348 = por %p346, %p347
      %p350 = scmp.ne.s32.totalorder %s335, %s349
      %p351 = scmp.eq.s32.totalorder %s32, 0
      %p352 = por %p350, %p351
      %s354 = sadd.s32 %s353, 1
      %p357 = scmp.eq.s32.totalorder %s26, 1
      %p358 = scmp.ne.s32.totalorder %s353, %s355
      %p359 = scmp.eq.s32.totalorder %s26, 0
      %p360 = por %p358, %p359
      %p361 = scmp.ne.s32.totalorder %s353, %s355
      %p362 = scmp.eq.s32.totalorder %s31, 1
      %p363 = por %p361, %p362
      %p364 = scmp.ne.s32.totalorder %s355, %s356
      %p365 = scmp.eq.s32.totalorder %s31, 0
      %p366 = por %p364, %p365
      %p367 = scmp.ne.s32.totalorder %s355, %s356
      %p368 = scmp.eq.s32.totalorder %s32, 1
      %p369 = por %p367, %p368
      %p371 = scmp.ne.s32.totalorder %s356, %s370
      %p372 = scmp.eq.s32.totalorder %s32, 0
      %p373 = por %p371, %p372
      %s374 = ssub.s32 %s33, %s45
      %p375 = scmp.eq.s32.totalorder %s374, 0
      %s377 = sadd.s32 %s376, 1
      %s378 = scalar_select %p375, %s376, %s377
      %p381 = pneg %p375
      %p382 = scmp.eq.s32.totalorder %s26, 1
      %p383 = por %p381, %p382
      %p384 = scmp.ne.s32.totalorder %s376, %s379
      %p385 = scmp.eq.s32.totalorder %s26, 0
      %p386 = por %p384, %p385
      %p387 = scmp.ne.s32.totalorder %s376, %s379
      %p388 = scmp.eq.s32.totalorder %s31, 1
      %p389 = por %p387, %p388
      %p390 = scmp.ne.s32.totalorder %s379, %s380
      %p391 = scmp.eq.s32.totalorder %s31, 0
      %p392 = por %p390, %p391
      %p393 = scmp.ne.s32.totalorder %s379, %s380
      %p394 = scmp.eq.s32.totalorder %s32, 1
      %p395 = por %p393, %p394
      %p397 = scmp.ne.s32.totalorder %s380, %s396
      %p398 = scmp.eq.s32.totalorder %s32, 0
      %p399 = por %p397, %p398
      %p400 = scmp.le.s32.totalorder 1, %s26
      %p401 = scmp.lt.s32.totalorder %s26, 3
      %p402 = pnand %p400, %p401
      %p403 = pneg %p402
      // Predicated region
      $region9: #{tpu_custom_call.1} parent=5 // pred_check
        _
      $region10: #{tpu_custom_call.1} parent=5 // pred_check_branch
        %405 = sbr.rel (%p402) target = $region12
      $region11: #{tpu_custom_call.1} parent=5 // pred_region
        %s406 = ssub.s32 %s26, 1
        // Predicated region
        $region13: #{tpu_custom_call.1} parent=11 // pred_check
          %p407 = pneg %p64
        $region14: #{tpu_custom_call.1} parent=11 // pred_check_branch
          %409 = sbr.rel (%p407) target = $region16
        $region15: #{tpu_custom_call.1} parent=11 // pred_region
          %s410 = smul.u32 64, %s35
          %p411 = scmp.lt.s32.totalorder %s410, 63
          %s412 = scalar_select %p411, %s410, 63
          %s413 = smul.addr %s412, 4
          %s414 = scalar_lea.vmem %s0, %s413
          %s415 = smul.u32 64, %s35
        $region16: #{tpu_custom_call.1} parent=11 // pred_fallthru
          _
        // Predicated region
        $region17: #{tpu_custom_call.1} parent=11 // pred_check
          %p416 = pneg %p345
        $region18: #{tpu_custom_call.1} parent=11 // pred_check_branch
          %418 = sbr.rel (%p416) target = $region20
        $region19: #{tpu_custom_call.1} parent=11 // pred_region
          _
        $region20: #{tpu_custom_call.1} parent=11 // pred_fallthru
          _
        // Predicated region
        $region21: #{tpu_custom_call.1} parent=11 // pred_check
          %p419 = pneg %p366
        $region22: #{tpu_custom_call.1} parent=11 // pred_check_branch
          %421 = sbr.rel (%p419) target = $region24
        $region23: #{tpu_custom_call.1} parent=11 // pred_region
          _
        $region24: #{tpu_custom_call.1} parent=11 // pred_fallthru
          _
      $region12: #{tpu_custom_call.1} parent=5 // pred_fallthru
        _
      %p422 = scmp.lt.s32.totalorder %s26, 2
      // Predicated region
      $region25: #{tpu_custom_call.1} parent=5 // pred_check
        %p423 = pneg %p422
      $region26: #{tpu_custom_call.1} parent=5 // pred_check_branch
        %425 = sbr.rel (%p423) target = $region28
      $region27: #{tpu_custom_call.1} parent=5 // pred_region
        // Predicated region
        $region29: #{tpu_custom_call.1} parent=27 // pred_check
          %p426 = pneg %p84
        $region30: #{tpu_custom_call.1} parent=27 // pred_check_branch
          %428 = sbr.rel (%p426) target = $region32
        $region31: #{tpu_custom_call.1} parent=27 // pred_region
          %p429 = scmp.lt.s32.totalorder %s34, 1
          %s430 = scalar_select %p429, %s34, 1
          %s431 = smul.addr %s430, 16
          %s432 = smul.addr %s431, 4
          %s433 = scalar_lea.vmem %s1, %s432
        $region32: #{tpu_custom_call.1} parent=27 // pred_fallthru
          _
        // Predicated region
        $region33: #{tpu_custom_call.1} parent=27 // pred_check
          %p434 = pneg %p110
        $region34: #{tpu_custom_call.1} parent=27 // pred_check_branch
          %436 = sbr.rel (%p434) target = $region36
        $region35: #{tpu_custom_call.1} parent=27 // pred_region
          %p437 = scmp.lt.s32.totalorder %s34, 1
          %s438 = scalar_select %p437, %s34, 1
          %s439 = scalar_lea.vmem %s2, %s438
        $region36: #{tpu_custom_call.1} parent=27 // pred_fallthru
          _
        // Predicated region
        $region37: #{tpu_custom_call.1} parent=27 // pred_check
          %p440 = pneg %p136
        $region38: #{tpu_custom_call.1} parent=27 // pred_check_branch
          %442 = sbr.rel (%p440) target = $region40
        $region39: #{tpu_custom_call.1} parent=27 // pred_region
          %s443 = sand.u32 %s126, 1
          %s444 = scalar_lea.sflag [#allocation4], %s443
          %s445 = sand.u32 %s126, 1
          %s446 = scalar_lea.vmem [#allocation3], %s445
          %s448 = ssub.s32 16, 16
          %449 = vsyncadd %s444, %s448
          %s450 = smul.addr %s34, 16
          %s451 = scalar_lea.hbm %s3, %s450
          %s453 = sshll.u32 %s446, 4
          %s454 = int_to_ptr.vmem [resolvable:$true] %s453
          %456 = dma.hbm_to_vmem [thread:$0]  %s451, 16, %s454, %s444
        $region40: #{tpu_custom_call.1} parent=27 // pred_fallthru
          _
        // Predicated region
        $region41: #{tpu_custom_call.1} parent=27 // pred_check
          %p457 = pneg %p162
        $region42: #{tpu_custom_call.1} parent=27 // pred_check_branch
          %459 = sbr.rel (%p457) target = $region44
        $region43: #{tpu_custom_call.1} parent=27 // pred_region
          %p460 = scmp.lt.s32.totalorder %s34, 1
          %s461 = scalar_select %p460, %s34, 1
          %s462 = scalar_lea.vmem %s4, %s461
        $region44: #{tpu_custom_call.1} parent=27 // pred_fallthru
          _
        // Predicated region
        $region45: #{tpu_custom_call.1} parent=27 // pred_check
          %p463 = pneg %p188
        $region46: #{tpu_custom_call.1} parent=27 // pred_check_branch
          %465 = sbr.rel (%p463) target = $region48
        $region47: #{tpu_custom_call.1} parent=27 // pred_region
          %p466 = scmp.lt.s32.totalorder %s34, 1
          %s467 = scalar_select %p466, %s34, 1
          %s468 = scalar_lea.vmem %s5, %s467
        $region48: #{tpu_custom_call.1} parent=27 // pred_fallthru
          _
        // Predicated region
        $region49: #{tpu_custom_call.1} parent=27 // pred_check
          %p469 = pneg %p214
        $region50: #{tpu_custom_call.1} parent=27 // pred_check_branch
          %471 = sbr.rel (%p469) target = $region52
        $region51: #{tpu_custom_call.1} parent=27 // pred_region
          %p472 = scmp.lt.s32.totalorder %s34, 1
          %s473 = scalar_select %p472, %s34, 1
          %s474 = scalar_lea.vmem %s6, %s473
        $region52: #{tpu_custom_call.1} parent=27 // pred_fallthru
          _
        // Predicated region
        $region53: #{tpu_custom_call.1} parent=27 // pred_check
          %p475 = pneg %p240
        $region54: #{tpu_custom_call.1} parent=27 // pred_check_branch
          %477 = sbr.rel (%p475) target = $region56
        $region55: #{tpu_custom_call.1} parent=27 // pred_region
          %p478 = scmp.lt.s32.totalorder %s34, 1
          %s479 = scalar_select %p478, %s34, 1
          %s480 = smul.addr %s479, 16
          %s481 = smul.addr %s480, 4
          %s482 = scalar_lea.vmem %s7, %s481
        $region56: #{tpu_custom_call.1} parent=27 // pred_fallthru
          _
        // Predicated region
        $region57: #{tpu_custom_call.1} parent=27 // pred_check
          %p483 = pneg %p266
        $region58: #{tpu_custom_call.1} parent=27 // pred_check_branch
          %485 = sbr.rel (%p483) target = $region60
        $region59: #{tpu_custom_call.1} parent=27 // pred_region
          %p486 = scmp.lt.s32.totalorder %s34, 1
          %s487 = scalar_select %p486, %s34, 1
          %s488 = scalar_lea.vmem %s8, %s487
        $region60: #{tpu_custom_call.1} parent=27 // pred_fallthru
          _
        // Predicated region
        $region61: #{tpu_custom_call.1} parent=27 // pred_check
          %p489 = pneg %p292
        $region62: #{tpu_custom_call.1} parent=27 // pred_check_branch
          %491 = sbr.rel (%p489) target = $region64
        $region63: #{tpu_custom_call.1} parent=27 // pred_region
          %s492 = sand.u32 %s282, 1
          %s493 = scalar_lea.sflag [#allocation7], %s492
          %s494 = sand.u32 %s282, 1
          %s495 = smul.addr %s494, 64
          %s496 = scalar_lea.vmem [#allocation6], %s495
          %s498 = ssub.s32 1024, 1024
          %499 = vsyncadd %s493, %s498
          %s500 = smul.addr %s34, 16
          %s501 = smul.addr %s500, 64
          %s502 = scalar_lea.hbm %s9, %s501
          %s503 = sshll.u32 %s496, 4
          %s504 = int_to_ptr.vmem [resolvable:$true] %s503
          %509 = dma.hbm_to_vmem [thread:$0]  %s502, 1024, %s504, %s493, 64, 64, 4
        $region64: #{tpu_custom_call.1} parent=27 // pred_fallthru
          _
        // Predicated region
        $region65: #{tpu_custom_call.1} parent=27 // pred_check
          %p510 = pneg %p318
        $region66: #{tpu_custom_call.1} parent=27 // pred_check_branch
          %512 = sbr.rel (%p510) target = $region68
        $region67: #{tpu_custom_call.1} parent=27 // pred_region
          %p513 = scmp.lt.s32.totalorder %s34, 1
          %s514 = scalar_select %p513, %s34, 1
          %s515 = scalar_lea.vmem %s10, %s514
        $region68: #{tpu_custom_call.1} parent=27 // pred_fallthru
          _
      $region28: #{tpu_custom_call.1} parent=5 // pred_fallthru
        _
      %p516 = scmp.le.s32.totalorder 1, %s26
      %p517 = scmp.lt.s32.totalorder %s26, 3
      %p518 = pnand %p516, %p517
      %p519 = pneg %p518
      // Predicated region
      $region69: #{tpu_custom_call.1} parent=5 // pred_check
        _
      $region70: #{tpu_custom_call.1} parent=5 // pred_check_branch
        %521 = sbr.rel (%p518) target = $region72
      $region71: #{tpu_custom_call.1} parent=5 // pred_region
        %s522 = ssub.s32 %s26, 1
        %s523 = sand.u32 %s129, 1
        %s524 = scalar_lea.sflag [#allocation4], %s523
        %s525 = sand.u32 %s129, 1
        %s526 = scalar_lea.vmem [#allocation3], %s525
        // Predicated region
        $region73: #{tpu_custom_call.1} parent=71 // pred_check
          %p527 = pneg %p142
        $region74: #{tpu_custom_call.1} parent=71 // pred_check_branch
          %529 = sbr.rel (%p527) target = $region76
        $region75: #{tpu_custom_call.1} parent=71 // pred_region
          %530 = dma.done %s524, 16
        $region76: #{tpu_custom_call.1} parent=71 // pred_fallthru
          _
        %s531 = sand.u32 %s285, 1
        %s532 = scalar_lea.sflag [#allocation7], %s531
        %s533 = sand.u32 %s285, 1
        %s534 = smul.addr %s533, 64
        %s535 = scalar_lea.vmem [#allocation6], %s534
        // Predicated region
        $region77: #{tpu_custom_call.1} parent=71 // pred_check
          %p536 = pneg %p298
        $region78: #{tpu_custom_call.1} parent=71 // pred_check_branch
          %538 = sbr.rel (%p536) target = $region80
        $region79: #{tpu_custom_call.1} parent=71 // pred_region
          %539 = dma.done %s532, 1024
        $region80: #{tpu_custom_call.1} parent=71 // pred_fallthru
          _
        %s540 = smul.u32 64, %s35
        %p541 = scmp.lt.s32.totalorder %s540, 63
        %s542 = scalar_select %p541, %s540, 63
        %s543 = smul.addr %s542, 4
        %s544 = scalar_lea.vmem %s0, %s543
        %p545 = pneg %p64
        %p546 = pneg %p61
        %p547 = scmp.lt.s32.totalorder %s36, 1
        %s548 = scalar_select %p547, %s36, 1
        %s549 = smul.addr %s548, 16
        %s550 = smul.addr %s549, 4
        %s551 = scalar_lea.vmem %s1, %s550
        %p552 = pneg %p90
        %p553 = pneg %p87
        %p554 = scmp.lt.s32.totalorder %s36, 1
        %s555 = scalar_select %p554, %s36, 1
        %s556 = scalar_lea.vmem %s2, %s555
        %p557 = pneg %p116
        %p558 = pneg %p113
        %s559 = sand.u32 %s129, 1
        %s560 = scalar_lea.sflag [#allocation4], %s559
        %s561 = sand.u32 %s129, 1
        %s562 = scalar_lea.vmem [#allocation3], %s561
        %p563 = pneg %p142
        %p564 = pneg %p139
        %p565 = scmp.lt.s32.totalorder %s36, 1
        %s566 = scalar_select %p565, %s36, 1
        %s567 = scalar_lea.vmem %s4, %s566
        %p568 = pneg %p168
        %p569 = pneg %p165
        %p570 = scmp.lt.s32.totalorder %s36, 1
        %s571 = scalar_select %p570, %s36, 1
        %s572 = scalar_lea.vmem %s5, %s571
        %p573 = pneg %p194
        %p574 = pneg %p191
        %p575 = scmp.lt.s32.totalorder %s36, 1
        %s576 = scalar_select %p575, %s36, 1
        %s577 = scalar_lea.vmem %s6, %s576
        %p578 = pneg %p220
        %p579 = pneg %p217
        %p580 = scmp.lt.s32.totalorder %s36, 1
        %s581 = scalar_select %p580, %s36, 1
        %s582 = smul.addr %s581, 16
        %s583 = smul.addr %s582, 4
        %s584 = scalar_lea.vmem %s7, %s583
        %p585 = pneg %p246
        %p586 = pneg %p243
        %p587 = scmp.lt.s32.totalorder %s36, 1
        %s588 = scalar_select %p587, %s36, 1
        %s589 = scalar_lea.vmem %s8, %s588
        %p590 = pneg %p272
        %p591 = pneg %p269
        %s592 = sand.u32 %s285, 1
        %s593 = scalar_lea.sflag [#allocation7], %s592
        %s594 = sand.u32 %s285, 1
        %s595 = smul.addr %s594, 64
        %s596 = scalar_lea.vmem [#allocation6], %s595
        %p597 = pneg %p298
        %p598 = pneg %p295
        %p599 = scmp.lt.s32.totalorder %s36, 1
        %s600 = scalar_select %p599, %s36, 1
        %s601 = scalar_lea.vmem %s10, %s600
        %p602 = pneg %p324
        %p603 = pneg %p321
        %p604 = pneg %p345
        %p605 = pneg %p342
        %p606 = pneg %p366
        %p607 = pneg %p363
        %p608 = pneg %p392
        %p609 = pneg %p389
        %s610 = smul.u32 64, %s35
        %p611 = scmp.lt.s32.totalorder %s610, 63
        %s612 = scalar_select %p611, %s610, 63
        %s613 = smul.addr %s612, 4
        %s614 = scalar_lea.vmem %s0, %s613
        %s615 = smul.u32 64, %s35
        %p616 = scmp.lt.s32.totalorder %s36, 1
        %s617 = scalar_select %p616, %s36, 1
        %s618 = smul.addr %s617, 16
        %s619 = smul.addr %s618, 4
        %s620 = scalar_lea.vmem %s1, %s619
        %p621 = scmp.lt.s32.totalorder %s36, 1
        %s622 = scalar_select %p621, %s36, 1
        %s623 = scalar_lea.vmem %s2, %s622
        %p624 = scmp.lt.s32.totalorder %s36, 1
        %s625 = scalar_select %p624, %s36, 1
        %s626 = scalar_lea.vmem %s4, %s625
        %p627 = scmp.lt.s32.totalorder %s36, 1
        %s628 = scalar_select %p627, %s36, 1
        %s629 = scalar_lea.vmem %s5, %s628
        %p630 = scmp.lt.s32.totalorder %s36, 1
        %s631 = scalar_select %p630, %s36, 1
        %s632 = scalar_lea.vmem %s6, %s631
        %p633 = scmp.lt.s32.totalorder %s36, 1
        %s634 = scalar_select %p633, %s36, 1
        %s635 = smul.addr %s634, 16
        %s636 = smul.addr %s635, 4
        %s637 = scalar_lea.vmem %s7, %s636
        %p638 = scmp.lt.s32.totalorder %s36, 1
        %s639 = scalar_select %p638, %s36, 1
        %s640 = scalar_lea.vmem %s8, %s639
        %p641 = scmp.lt.s32.totalorder %s36, 1
        %s642 = scalar_select %p641, %s36, 1
        %s643 = scalar_lea.vmem %s10, %s642
        %s644 = smul.u32 64, %s35
        %p650 = scmp.eq.s32.totalorder %s36, 0
        // Predicated region
        $region81: #{tpu_custom_call.1} parent=71 // pred_check
          %p651 = pneg %p650
        $region82: #{tpu_custom_call.1} parent=71 // pred_check_branch
          %653 = sbr.rel (%p651) target = $region84
        $region83: #{tpu_custom_call.1} parent=71 // pred_region
          %654 = vst [vmem:[#allocation2] sm:$0xff] 0.0
          %655 = vst [vmem:[#allocation2 + $0x8] sm:$0xff] 0.0
          %656 = vst [vmem:[#allocation2 + $0x10] sm:$0xff] 0.0
          %657 = vst [vmem:[#allocation2 + $0x18] sm:$0xff] 0.0
          %658 = vst [vmem:[#allocation2 + $0x20] sm:$0xff] 0.0
          %659 = vst [vmem:[#allocation2 + $0x28] sm:$0xff] 0.0
          %660 = vst [vmem:[#allocation2 + $0x30] sm:$0xff] 0.0
          %661 = vst [vmem:[#allocation2 + $0x38] sm:$0xff] 0.0
          %662 = vst [vmem:[#allocation2 + $0x40] sm:$0xff] 0.0
          %663 = vst [vmem:[#allocation2 + $0x48] sm:$0xff] 0.0
          %664 = vst [vmem:[#allocation2 + $0x50] sm:$0xff] 0.0
          %665 = vst [vmem:[#allocation2 + $0x58] sm:$0xff] 0.0
          %666 = vst [vmem:[#allocation2 + $0x60] sm:$0xff] 0.0
          %667 = vst [vmem:[#allocation2 + $0x68] sm:$0xff] 0.0
          %668 = vst [vmem:[#allocation2 + $0x70] sm:$0xff] 0.0
          %669 = vst [vmem:[#allocation2 + $0x78] sm:$0xff] 0.0
          %670 = vst [vmem:[#allocation2 + $0x80] sm:$0xff] 0.0
          %671 = vst [vmem:[#allocation2 + $0x88] sm:$0xff] 0.0
          %672 = vst [vmem:[#allocation2 + $0x90] sm:$0xff] 0.0
          %673 = vst [vmem:[#allocation2 + $0x98] sm:$0xff] 0.0
          %674 = vst [vmem:[#allocation2 + $0xa0] sm:$0xff] 0.0
          %675 = vst [vmem:[#allocation2 + $0xa8] sm:$0xff] 0.0
          %676 = vst [vmem:[#allocation2 + $0xb0] sm:$0xff] 0.0
          %677 = vst [vmem:[#allocation2 + $0xb8] sm:$0xff] 0.0
          %678 = vst [vmem:[#allocation2 + $0xc0] sm:$0xff] 0.0
          %679 = vst [vmem:[#allocation2 + $0xc8] sm:$0xff] 0.0
          %680 = vst [vmem:[#allocation2 + $0xd0] sm:$0xff] 0.0
          %681 = vst [vmem:[#allocation2 + $0xd8] sm:$0xff] 0.0
          %682 = vst [vmem:[#allocation2 + $0xe0] sm:$0xff] 0.0
          %683 = vst [vmem:[#allocation2 + $0xe8] sm:$0xff] 0.0
          %684 = vst [vmem:[#allocation2 + $0xf0] sm:$0xff] 0.0
          %685 = vst [vmem:[#allocation2 + $0xf8] sm:$0xff] 0.0
          %686 = vst [vmem:[#allocation2 + $0x100] sm:$0xff] 0.0
          %687 = vst [vmem:[#allocation2 + $0x108] sm:$0xff] 0.0
          %688 = vst [vmem:[#allocation2 + $0x110] sm:$0xff] 0.0
          %689 = vst [vmem:[#allocation2 + $0x118] sm:$0xff] 0.0
          %690 = vst [vmem:[#allocation2 + $0x120] sm:$0xff] 0.0
          %691 = vst [vmem:[#allocation2 + $0x128] sm:$0xff] 0.0
          %692 = vst [vmem:[#allocation2 + $0x130] sm:$0xff] 0.0
          %693 = vst [vmem:[#allocation2 + $0x138] sm:$0xff] 0.0
          %694 = vst [vmem:[#allocation2 + $0x140] sm:$0xff] 0.0
          %695 = vst [vmem:[#allocation2 + $0x148] sm:$0xff] 0.0
          %696 = vst [vmem:[#allocation2 + $0x150] sm:$0xff] 0.0
          %697 = vst [vmem:[#allocation2 + $0x158] sm:$0xff] 0.0
          %698 = vst [vmem:[#allocation2 + $0x160] sm:$0xff] 0.0
          %699 = vst [vmem:[#allocation2 + $0x168] sm:$0xff] 0.0
          %700 = vst [vmem:[#allocation2 + $0x170] sm:$0xff] 0.0
          %701 = vst [vmem:[#allocation2 + $0x178] sm:$0xff] 0.0
          %702 = vst [vmem:[#allocation2 + $0x180] sm:$0xff] 0.0
          %703 = vst [vmem:[#allocation2 + $0x188] sm:$0xff] 0.0
          %704 = vst [vmem:[#allocation2 + $0x190] sm:$0xff] 0.0
          %705 = vst [vmem:[#allocation2 + $0x198] sm:$0xff] 0.0
          %706 = vst [vmem:[#allocation2 + $0x1a0] sm:$0xff] 0.0
          %707 = vst [vmem:[#allocation2 + $0x1a8] sm:$0xff] 0.0
          %708 = vst [vmem:[#allocation2 + $0x1b0] sm:$0xff] 0.0
          %709 = vst [vmem:[#allocation2 + $0x1b8] sm:$0xff] 0.0
          %710 = vst [vmem:[#allocation2 + $0x1c0] sm:$0xff] 0.0
          %711 = vst [vmem:[#allocation2 + $0x1c8] sm:$0xff] 0.0
          %712 = vst [vmem:[#allocation2 + $0x1d0] sm:$0xff] 0.0
          %713 = vst [vmem:[#allocation2 + $0x1d8] sm:$0xff] 0.0
          %714 = vst [vmem:[#allocation2 + $0x1e0] sm:$0xff] 0.0
          %715 = vst [vmem:[#allocation2 + $0x1e8] sm:$0xff] 0.0
          %716 = vst [vmem:[#allocation2 + $0x1f0] sm:$0xff] 0.0
          %717 = vst [vmem:[#allocation2 + $0x1f8] sm:$0xff] 0.0
          %v718 = vld [vmem:[%s614] sm:$0xf]
          %v719 = vld [vmem:[%s614 + $0x4] sm:$0xf]
          %v720 = vld [vmem:[%s614 + $0x8] sm:$0xf]
          %v721 = vld [vmem:[%s614 + $0xc] sm:$0xf]
          %v722 = vld [vmem:[%s614 + $0x10] sm:$0xf]
          %v723 = vld [vmem:[%s614 + $0x14] sm:$0xf]
          %v724 = vld [vmem:[%s614 + $0x18] sm:$0xf]
          %v725 = vld [vmem:[%s614 + $0x1c] sm:$0xf]
          %v726 = vld [vmem:[%s614 + $0x20] sm:$0xf]
          %v727 = vld [vmem:[%s614 + $0x24] sm:$0xf]
          %v728 = vld [vmem:[%s614 + $0x28] sm:$0xf]
          %v729 = vld [vmem:[%s614 + $0x2c] sm:$0xf]
          %v730 = vld [vmem:[%s614 + $0x30] sm:$0xf]
          %v731 = vld [vmem:[%s614 + $0x34] sm:$0xf]
          %v732 = vld [vmem:[%s614 + $0x38] sm:$0xf]
          %v733 = vld [vmem:[%s614 + $0x3c] sm:$0xf]
          %v734 = vld [vmem:[%s614 + $0x40] sm:$0xf]
          %v735 = vld [vmem:[%s614 + $0x44] sm:$0xf]
          %v736 = vld [vmem:[%s614 + $0x48] sm:$0xf]
          %v737 = vld [vmem:[%s614 + $0x4c] sm:$0xf]
          %v738 = vld [vmem:[%s614 + $0x50] sm:$0xf]
          %v739 = vld [vmem:[%s614 + $0x54] sm:$0xf]
          %v740 = vld [vmem:[%s614 + $0x58] sm:$0xf]
          %v741 = vld [vmem:[%s614 + $0x5c] sm:$0xf]
          %v742 = vld [vmem:[%s614 + $0x60] sm:$0xf]
          %v743 = vld [vmem:[%s614 + $0x64] sm:$0xf]
          %v744 = vld [vmem:[%s614 + $0x68] sm:$0xf]
          %v745 = vld [vmem:[%s614 + $0x6c] sm:$0xf]
          %v746 = vld [vmem:[%s614 + $0x70] sm:$0xf]
          %v747 = vld [vmem:[%s614 + $0x74] sm:$0xf]
          %v748 = vld [vmem:[%s614 + $0x78] sm:$0xf]
          %v749 = vld [vmem:[%s614 + $0x7c] sm:$0xf]
          %v750 = vld [vmem:[%s614 + $0x80] sm:$0xf]
          %v751 = vld [vmem:[%s614 + $0x84] sm:$0xf]
          %v752 = vld [vmem:[%s614 + $0x88] sm:$0xf]
          %v753 = vld [vmem:[%s614 + $0x8c] sm:$0xf]
          %v754 = vld [vmem:[%s614 + $0x90] sm:$0xf]
          %v755 = vld [vmem:[%s614 + $0x94] sm:$0xf]
          %v756 = vld [vmem:[%s614 + $0x98] sm:$0xf]
          %v757 = vld [vmem:[%s614 + $0x9c] sm:$0xf]
          %v758 = vld [vmem:[%s614 + $0xa0] sm:$0xf]
          %v759 = vld [vmem:[%s614 + $0xa4] sm:$0xf]
          %v760 = vld [vmem:[%s614 + $0xa8] sm:$0xf]
          %v761 = vld [vmem:[%s614 + $0xac] sm:$0xf]
          %v762 = vld [vmem:[%s614 + $0xb0] sm:$0xf]
          %v763 = vld [vmem:[%s614 + $0xb4] sm:$0xf]
          %v764 = vld [vmem:[%s614 + $0xb8] sm:$0xf]
          %v765 = vld [vmem:[%s614 + $0xbc] sm:$0xf]
          %v766 = vld [vmem:[%s614 + $0xc0] sm:$0xf]
          %v767 = vld [vmem:[%s614 + $0xc4] sm:$0xf]
          %v768 = vld [vmem:[%s614 + $0xc8] sm:$0xf]
          %v769 = vld [vmem:[%s614 + $0xcc] sm:$0xf]
          %v770 = vld [vmem:[%s614 + $0xd0] sm:$0xf]
          %v771 = vld [vmem:[%s614 + $0xd4] sm:$0xf]
          %v772 = vld [vmem:[%s614 + $0xd8] sm:$0xf]
          %v773 = vld [vmem:[%s614 + $0xdc] sm:$0xf]
          %v774 = vld [vmem:[%s614 + $0xe0] sm:$0xf]
          %v775 = vld [vmem:[%s614 + $0xe4] sm:$0xf]
          %v776 = vld [vmem:[%s614 + $0xe8] sm:$0xf]
          %v777 = vld [vmem:[%s614 + $0xec] sm:$0xf]
          %v778 = vld [vmem:[%s614 + $0xf0] sm:$0xf]
          %v779 = vld [vmem:[%s614 + $0xf4] sm:$0xf]
          %v780 = vld [vmem:[%s614 + $0xf8] sm:$0xf]
          %v781 = vld [vmem:[%s614 + $0xfc] sm:$0xf]
          %v782 = vunpack.c.l.bf16 %v718
          %v783 = vunpack.c.l.bf16 %v719
          %v784 = vunpack.c.l.bf16 %v720
          %v785 = vunpack.c.l.bf16 %v721
          %v786 = vunpack.c.l.bf16 %v722
          %v787 = vunpack.c.l.bf16 %v723
          %v788 = vunpack.c.l.bf16 %v724
          %v789 = vunpack.c.l.bf16 %v725
          %v790 = vunpack.c.l.bf16 %v726
          %v791 = vunpack.c.l.bf16 %v727
          %v792 = vunpack.c.l.bf16 %v728
          %v793 = vunpack.c.l.bf16 %v729
          %v794 = vunpack.c.l.bf16 %v730
          %v795 = vunpack.c.l.bf16 %v731
          %v796 = vunpack.c.l.bf16 %v732
          %v797 = vunpack.c.l.bf16 %v733
          %v798 = vunpack.c.l.bf16 %v734
          %v799 = vunpack.c.l.bf16 %v735
          %v800 = vunpack.c.l.bf16 %v736
          %v801 = vunpack.c.l.bf16 %v737
          %v802 = vunpack.c.l.bf16 %v738
          %v803 = vunpack.c.l.bf16 %v739
          %v804 = vunpack.c.l.bf16 %v740
          %v805 = vunpack.c.l.bf16 %v741
          %v806 = vunpack.c.l.bf16 %v742
          %v807 = vunpack.c.l.bf16 %v743
          %v808 = vunpack.c.l.bf16 %v744
          %v809 = vunpack.c.l.bf16 %v745
          %v810 = vunpack.c.l.bf16 %v746
          %v811 = vunpack.c.l.bf16 %v747
          %v812 = vunpack.c.l.bf16 %v748
          %v813 = vunpack.c.l.bf16 %v749
          %v814 = vunpack.c.l.bf16 %v750
          %v815 = vunpack.c.l.bf16 %v751
          %v816 = vunpack.c.l.bf16 %v752
          %v817 = vunpack.c.l.bf16 %v753
          %v818 = vunpack.c.l.bf16 %v754
          %v819 = vunpack.c.l.bf16 %v755
          %v820 = vunpack.c.l.bf16 %v756
          %v821 = vunpack.c.l.bf16 %v757
          %v822 = vunpack.c.l.bf16 %v758
          %v823 = vunpack.c.l.bf16 %v759
          %v824 = vunpack.c.l.bf16 %v760
          %v825 = vunpack.c.l.bf16 %v761
          %v826 = vunpack.c.l.bf16 %v762
          %v827 = vunpack.c.l.bf16 %v763
          %v828 = vunpack.c.l.bf16 %v764
          %v829 = vunpack.c.l.bf16 %v765
          %v830 = vunpack.c.l.bf16 %v766
          %v831 = vunpack.c.l.bf16 %v767
          %v832 = vunpack.c.l.bf16 %v768
          %v833 = vunpack.c.l.bf16 %v769
          %v834 = vunpack.c.l.bf16 %v770
          %v835 = vunpack.c.l.bf16 %v771
          %v836 = vunpack.c.l.bf16 %v772
          %v837 = vunpack.c.l.bf16 %v773
          %v838 = vunpack.c.l.bf16 %v774
          %v839 = vunpack.c.l.bf16 %v775
          %v840 = vunpack.c.l.bf16 %v776
          %v841 = vunpack.c.l.bf16 %v777
          %v842 = vunpack.c.l.bf16 %v778
          %v843 = vunpack.c.l.bf16 %v779
          %v844 = vunpack.c.l.bf16 %v780
          %v845 = vunpack.c.l.bf16 %v781
          %vm846 = vcmask 261120
          %847 = vst.msk [vmem:[#allocation2] sm:$0xff] %vm846, %v782
          %848 = vst.msk [vmem:[#allocation2 + $0x8] sm:$0xff] %vm846, %v783
          %849 = vst.msk [vmem:[#allocation2 + $0x10] sm:$0xff] %vm846, %v784
          %850 = vst.msk [vmem:[#allocation2 + $0x18] sm:$0xff] %vm846, %v785
          %851 = vst.msk [vmem:[#allocation2 + $0x20] sm:$0xff] %vm846, %v786
          %852 = vst.msk [vmem:[#allocation2 + $0x28] sm:$0xff] %vm846, %v787
          %853 = vst.msk [vmem:[#allocation2 + $0x30] sm:$0xff] %vm846, %v788
          %854 = vst.msk [vmem:[#allocation2 + $0x38] sm:$0xff] %vm846, %v789
          %855 = vst.msk [vmem:[#allocation2 + $0x40] sm:$0xff] %vm846, %v790
          %856 = vst.msk [vmem:[#allocation2 + $0x48] sm:$0xff] %vm846, %v791
          %857 = vst.msk [vmem:[#allocation2 + $0x50] sm:$0xff] %vm846, %v792
          %858 = vst.msk [vmem:[#allocation2 + $0x58] sm:$0xff] %vm846, %v793
          %859 = vst.msk [vmem:[#allocation2 + $0x60] sm:$0xff] %vm846, %v794
          %860 = vst.msk [vmem:[#allocation2 + $0x68] sm:$0xff] %vm846, %v795
          %861 = vst.msk [vmem:[#allocation2 + $0x70] sm:$0xff] %vm846, %v796
          %862 = vst.msk [vmem:[#allocation2 + $0x78] sm:$0xff] %vm846, %v797
          %863 = vst.msk [vmem:[#allocation2 + $0x80] sm:$0xff] %vm846, %v798
          %864 = vst.msk [vmem:[#allocation2 + $0x88] sm:$0xff] %vm846, %v799
          %865 = vst.msk [vmem:[#allocation2 + $0x90] sm:$0xff] %vm846, %v800
          %866 = vst.msk [vmem:[#allocation2 + $0x98] sm:$0xff] %vm846, %v801
          %867 = vst.msk [vmem:[#allocation2 + $0xa0] sm:$0xff] %vm846, %v802
          %868 = vst.msk [vmem:[#allocation2 + $0xa8] sm:$0xff] %vm846, %v803
          %869 = vst.msk [vmem:[#allocation2 + $0xb0] sm:$0xff] %vm846, %v804
          %870 = vst.msk [vmem:[#allocation2 + $0xb8] sm:$0xff] %vm846, %v805
          %871 = vst.msk [vmem:[#allocation2 + $0xc0] sm:$0xff] %vm846, %v806
          %872 = vst.msk [vmem:[#allocation2 + $0xc8] sm:$0xff] %vm846, %v807
          %873 = vst.msk [vmem:[#allocation2 + $0xd0] sm:$0xff] %vm846, %v808
          %874 = vst.msk [vmem:[#allocation2 + $0xd8] sm:$0xff] %vm846, %v809
          %875 = vst.msk [vmem:[#allocation2 + $0xe0] sm:$0xff] %vm846, %v810
          %876 = vst.msk [vmem:[#allocation2 + $0xe8] sm:$0xff] %vm846, %v811
          %877 = vst.msk [vmem:[#allocation2 + $0xf0] sm:$0xff] %vm846, %v812
          %878 = vst.msk [vmem:[#allocation2 + $0xf8] sm:$0xff] %vm846, %v813
          %879 = vst.msk [vmem:[#allocation2 + $0x100] sm:$0xff] %vm846, %v814
          %880 = vst.msk [vmem:[#allocation2 + $0x108] sm:$0xff] %vm846, %v815
          %881 = vst.msk [vmem:[#allocation2 + $0x110] sm:$0xff] %vm846, %v816
          %882 = vst.msk [vmem:[#allocation2 + $0x118] sm:$0xff] %vm846, %v817
          %883 = vst.msk [vmem:[#allocation2 + $0x120] sm:$0xff] %vm846, %v818
          %884 = vst.msk [vmem:[#allocation2 + $0x128] sm:$0xff] %vm846, %v819
          %885 = vst.msk [vmem:[#allocation2 + $0x130] sm:$0xff] %vm846, %v820
          %886 = vst.msk [vmem:[#allocation2 + $0x138] sm:$0xff] %vm846, %v821
          %887 = vst.msk [vmem:[#allocation2 + $0x140] sm:$0xff] %vm846, %v822
          %888 = vst.msk [vmem:[#allocation2 + $0x148] sm:$0xff] %vm846, %v823
          %889 = vst.msk [vmem:[#allocation2 + $0x150] sm:$0xff] %vm846, %v824
          %890 = vst.msk [vmem:[#allocation2 + $0x158] sm:$0xff] %vm846, %v825
          %891 = vst.msk [vmem:[#allocation2 + $0x160] sm:$0xff] %vm846, %v826
          %892 = vst.msk [vmem:[#allocation2 + $0x168] sm:$0xff] %vm846, %v827
          %893 = vst.msk [vmem:[#allocation2 + $0x170] sm:$0xff] %vm846, %v828
          %894 = vst.msk [vmem:[#allocation2 + $0x178] sm:$0xff] %vm846, %v829
          %895 = vst.msk [vmem:[#allocation2 + $0x180] sm:$0xff] %vm846, %v830
          %896 = vst.msk [vmem:[#allocation2 + $0x188] sm:$0xff] %vm846, %v831
          %897 = vst.msk [vmem:[#allocation2 + $0x190] sm:$0xff] %vm846, %v832
          %898 = vst.msk [vmem:[#allocation2 + $0x198] sm:$0xff] %vm846, %v833
          %899 = vst.msk [vmem:[#allocation2 + $0x1a0] sm:$0xff] %vm846, %v834
          %900 = vst.msk [vmem:[#allocation2 + $0x1a8] sm:$0xff] %vm846, %v835
          %901 = vst.msk [vmem:[#allocation2 + $0x1b0] sm:$0xff] %vm846, %v836
          %902 = vst.msk [vmem:[#allocation2 + $0x1b8] sm:$0xff] %vm846, %v837
          %903 = vst.msk [vmem:[#allocation2 + $0x1c0] sm:$0xff] %vm846, %v838
          %904 = vst.msk [vmem:[#allocation2 + $0x1c8] sm:$0xff] %vm846, %v839
          %905 = vst.msk [vmem:[#allocation2 + $0x1d0] sm:$0xff] %vm846, %v840
          %906 = vst.msk [vmem:[#allocation2 + $0x1d8] sm:$0xff] %vm846, %v841
          %907 = vst.msk [vmem:[#allocation2 + $0x1e0] sm:$0xff] %vm846, %v842
          %908 = vst.msk [vmem:[#allocation2 + $0x1e8] sm:$0xff] %vm846, %v843
          %909 = vst.msk [vmem:[#allocation2 + $0x1f0] sm:$0xff] %vm846, %v844
          %910 = vst.msk [vmem:[#allocation2 + $0x1f8] sm:$0xff] %vm846, %v845
        $region84: #{tpu_custom_call.1} parent=71 // pred_fallthru
          _
        %v911 = vld [vmem:[#allocation2] sm:$0xff]
        %v912 = vld [vmem:[#allocation2 + $0x8] sm:$0xff]
        %v913 = vld [vmem:[#allocation2 + $0x10] sm:$0xff]
        %v914 = vld [vmem:[#allocation2 + $0x18] sm:$0xff]
        %v915 = vld [vmem:[#allocation2 + $0x20] sm:$0xff]
        %v916 = vld [vmem:[#allocation2 + $0x28] sm:$0xff]
        %v917 = vld [vmem:[#allocation2 + $0x30] sm:$0xff]
        %v918 = vld [vmem:[#allocation2 + $0x38] sm:$0xff]
        %v919 = vld [vmem:[#allocation2 + $0x40] sm:$0xff]
        %v920 = vld [vmem:[#allocation2 + $0x48] sm:$0xff]
        %v921 = vld [vmem:[#allocation2 + $0x50] sm:$0xff]
        %v922 = vld [vmem:[#allocation2 + $0x58] sm:$0xff]
        %v923 = vld [vmem:[#allocation2 + $0x60] sm:$0xff]
        %v924 = vld [vmem:[#allocation2 + $0x68] sm:$0xff]
        %v925 = vld [vmem:[#allocation2 + $0x70] sm:$0xff]
        %v926 = vld [vmem:[#allocation2 + $0x78] sm:$0xff]
        %v927 = vld [vmem:[#allocation2 + $0x80] sm:$0xff]
        %v928 = vld [vmem:[#allocation2 + $0x88] sm:$0xff]
        %v929 = vld [vmem:[#allocation2 + $0x90] sm:$0xff]
        %v930 = vld [vmem:[#allocation2 + $0x98] sm:$0xff]
        %v931 = vld [vmem:[#allocation2 + $0xa0] sm:$0xff]
        %v932 = vld [vmem:[#allocation2 + $0xa8] sm:$0xff]
        %v933 = vld [vmem:[#allocation2 + $0xb0] sm:$0xff]
        %v934 = vld [vmem:[#allocation2 + $0xb8] sm:$0xff]
        %v935 = vld [vmem:[#allocation2 + $0xc0] sm:$0xff]
        %v936 = vld [vmem:[#allocation2 + $0xc8] sm:$0xff]
        %v937 = vld [vmem:[#allocation2 + $0xd0] sm:$0xff]
        %v938 = vld [vmem:[#allocation2 + $0xd8] sm:$0xff]
        %v939 = vld [vmem:[#allocation2 + $0xe0] sm:$0xff]
        %v940 = vld [vmem:[#allocation2 + $0xe8] sm:$0xff]
        %v941 = vld [vmem:[#allocation2 + $0xf0] sm:$0xff]
        %v942 = vld [vmem:[#allocation2 + $0xf8] sm:$0xff]
        %v943 = vld [vmem:[#allocation2 + $0x100] sm:$0xff]
        %v944 = vld [vmem:[#allocation2 + $0x108] sm:$0xff]
        %v945 = vld [vmem:[#allocation2 + $0x110] sm:$0xff]
        %v946 = vld [vmem:[#allocation2 + $0x118] sm:$0xff]
        %v947 = vld [vmem:[#allocation2 + $0x120] sm:$0xff]
        %v948 = vld [vmem:[#allocation2 + $0x128] sm:$0xff]
        %v949 = vld [vmem:[#allocation2 + $0x130] sm:$0xff]
        %v950 = vld [vmem:[#allocation2 + $0x138] sm:$0xff]
        %v951 = vld [vmem:[#allocation2 + $0x140] sm:$0xff]
        %v952 = vld [vmem:[#allocation2 + $0x148] sm:$0xff]
        %v953 = vld [vmem:[#allocation2 + $0x150] sm:$0xff]
        %v954 = vld [vmem:[#allocation2 + $0x158] sm:$0xff]
        %v955 = vld [vmem:[#allocation2 + $0x160] sm:$0xff]
        %v956 = vld [vmem:[#allocation2 + $0x168] sm:$0xff]
        %v957 = vld [vmem:[#allocation2 + $0x170] sm:$0xff]
        %v958 = vld [vmem:[#allocation2 + $0x178] sm:$0xff]
        %v959 = vld [vmem:[#allocation2 + $0x180] sm:$0xff]
        %v960 = vld [vmem:[#allocation2 + $0x188] sm:$0xff]
        %v961 = vld [vmem:[#allocation2 + $0x190] sm:$0xff]
        %v962 = vld [vmem:[#allocation2 + $0x198] sm:$0xff]
        %v963 = vld [vmem:[#allocation2 + $0x1a0] sm:$0xff]
        %v964 = vld [vmem:[#allocation2 + $0x1a8] sm:$0xff]
        %v965 = vld [vmem:[#allocation2 + $0x1b0] sm:$0xff]
        %v966 = vld [vmem:[#allocation2 + $0x1b8] sm:$0xff]
        %v967 = vld [vmem:[#allocation2 + $0x1c0] sm:$0xff]
        %v968 = vld [vmem:[#allocation2 + $0x1c8] sm:$0xff]
        %v969 = vld [vmem:[#allocation2 + $0x1d0] sm:$0xff]
        %v970 = vld [vmem:[#allocation2 + $0x1d8] sm:$0xff]
        %v971 = vld [vmem:[#allocation2 + $0x1e0] sm:$0xff]
        %v972 = vld [vmem:[#allocation2 + $0x1e8] sm:$0xff]
        %v973 = vld [vmem:[#allocation2 + $0x1f0] sm:$0xff]
        %v974 = vld [vmem:[#allocation2 + $0x1f8] sm:$0xff]
        %v975 = vlaneseq
        %v976 = vand.u32 %v975, 127
        %vm977 = vcmp.lt.s32.totalorder %v976, 32
        %v978 = vld [vmem:[%s526] sm:$0x1]
        %v979 = vld [vmem:[%s626] sm:$0x1]
        %980 = vadd.xlane.f32.xlu0 %v911
        %v981 = vpop.xlane.xlu0 %980
        %982 = vadd.xlane.f32.xlu0 %v912
        %v983 = vpop.xlane.xlu0 %982
        %984 = vadd.xlane.f32.xlu0 %v913
        %v985 = vpop.xlane.xlu0 %984
        %986 = vadd.xlane.f32.xlu0 %v914
        %v987 = vpop.xlane.xlu0 %986
        %988 = vadd.xlane.f32.xlu0 %v915
        %v989 = vpop.xlane.xlu0 %988
        %990 = vadd.xlane.f32.xlu0 %v916
        %v991 = vpop.xlane.xlu0 %990
        %992 = vadd.xlane.f32.xlu0 %v917
        %v993 = vpop.xlane.xlu0 %992
        %994 = vadd.xlane.f32.xlu0 %v918
        %v995 = vpop.xlane.xlu0 %994
        %996 = vadd.xlane.f32.xlu0 %v919
        %v997 = vpop.xlane.xlu0 %996
        %998 = vadd.xlane.f32.xlu0 %v920
        %v999 = vpop.xlane.xlu0 %998
        %1000 = vadd.xlane.f32.xlu0 %v921
        %v1001 = vpop.xlane.xlu0 %1000
        %1002 = vadd.xlane.f32.xlu0 %v922
        %v1003 = vpop.xlane.xlu0 %1002
        %1004 = vadd.xlane.f32.xlu0 %v923
        %v1005 = vpop.xlane.xlu0 %1004
        %1006 = vadd.xlane.f32.xlu0 %v924
        %v1007 = vpop.xlane.xlu0 %1006
        %1008 = vadd.xlane.f32.xlu0 %v925
        %v1009 = vpop.xlane.xlu0 %1008
        %1010 = vadd.xlane.f32.xlu0 %v926
        %v1011 = vpop.xlane.xlu0 %1010
        %1012 = vadd.xlane.f32.xlu0 %v927
        %v1013 = vpop.xlane.xlu0 %1012
        %1014 = vadd.xlane.f32.xlu0 %v928
        %v1015 = vpop.xlane.xlu0 %1014
        %1016 = vadd.xlane.f32.xlu0 %v929
        %v1017 = vpop.xlane.xlu0 %1016
        %1018 = vadd.xlane.f32.xlu0 %v930
        %v1019 = vpop.xlane.xlu0 %1018
        %1020 = vadd.xlane.f32.xlu0 %v931
        %v1021 = vpop.xlane.xlu0 %1020
        %1022 = vadd.xlane.f32.xlu0 %v932
        %v1023 = vpop.xlane.xlu0 %1022
        %1024 = vadd.xlane.f32.xlu0 %v933
        %v1025 = vpop.xlane.xlu0 %1024
        %1026 = vadd.xlane.f32.xlu0 %v934
        %v1027 = vpop.xlane.xlu0 %1026
        %1028 = vadd.xlane.f32.xlu0 %v935
        %v1029 = vpop.xlane.xlu0 %1028
        %1030 = vadd.xlane.f32.xlu0 %v936
        %v1031 = vpop.xlane.xlu0 %1030
        %1032 = vadd.xlane.f32.xlu0 %v937
        %v1033 = vpop.xlane.xlu0 %1032
        %1034 = vadd.xlane.f32.xlu0 %v938
        %v1035 = vpop.xlane.xlu0 %1034
        %1036 = vadd.xlane.f32.xlu0 %v939
        %v1037 = vpop.xlane.xlu0 %1036
        %1038 = vadd.xlane.f32.xlu0 %v940
        %v1039 = vpop.xlane.xlu0 %1038
        %1040 = vadd.xlane.f32.xlu0 %v941
        %v1041 = vpop.xlane.xlu0 %1040
        %1042 = vadd.xlane.f32.xlu0 %v942
        %v1043 = vpop.xlane.xlu0 %1042
        %1044 = vadd.xlane.f32.xlu0 %v943
        %v1045 = vpop.xlane.xlu0 %1044
        %1046 = vadd.xlane.f32.xlu0 %v944
        %v1047 = vpop.xlane.xlu0 %1046
        %1048 = vadd.xlane.f32.xlu0 %v945
        %v1049 = vpop.xlane.xlu0 %1048
        %1050 = vadd.xlane.f32.xlu0 %v946
        %v1051 = vpop.xlane.xlu0 %1050
        %1052 = vadd.xlane.f32.xlu0 %v947
        %v1053 = vpop.xlane.xlu0 %1052
        %1054 = vadd.xlane.f32.xlu0 %v948
        %v1055 = vpop.xlane.xlu0 %1054
        %1056 = vadd.xlane.f32.xlu0 %v949
        %v1057 = vpop.xlane.xlu0 %1056
        %1058 = vadd.xlane.f32.xlu0 %v950
        %v1059 = vpop.xlane.xlu0 %1058
        %1060 = vadd.xlane.f32.xlu0 %v951
        %v1061 = vpop.xlane.xlu0 %1060
        %1062 = vadd.xlane.f32.xlu0 %v952
        %v1063 = vpop.xlane.xlu0 %1062
        %1064 = vadd.xlane.f32.xlu0 %v953
        %v1065 = vpop.xlane.xlu0 %1064
        %1066 = vadd.xlane.f32.xlu0 %v954
        %v1067 = vpop.xlane.xlu0 %1066
        %1068 = vadd.xlane.f32.xlu0 %v955
        %v1069 = vpop.xlane.xlu0 %1068
        %1070 = vadd.xlane.f32.xlu0 %v956
        %v1071 = vpop.xlane.xlu0 %1070
        %1072 = vadd.xlane.f32.xlu0 %v957
        %v1073 = vpop.xlane.xlu0 %1072
        %1074 = vadd.xlane.f32.xlu0 %v958
        %v1075 = vpop.xlane.xlu0 %1074
        %1076 = vadd.xlane.f32.xlu0 %v959
        %v1077 = vpop.xlane.xlu0 %1076
        %1078 = vadd.xlane.f32.xlu0 %v960
        %v1079 = vpop.xlane.xlu0 %1078
        %1080 = vadd.xlane.f32.xlu0 %v961
        %v1081 = vpop.xlane.xlu0 %1080
        %1082 = vadd.xlane.f32.xlu0 %v962
        %v1083 = vpop.xlane.xlu0 %1082
        %1084 = vadd.xlane.f32.xlu0 %v963
        %v1085 = vpop.xlane.xlu0 %1084
        %1086 = vadd.xlane.f32.xlu0 %v964
        %v1087 = vpop.xlane.xlu0 %1086
        %1088 = vadd.xlane.f32.xlu0 %v965
        %v1089 = vpop.xlane.xlu0 %1088
        %1090 = vadd.xlane.f32.xlu0 %v966
        %v1091 = vpop.xlane.xlu0 %1090
        %1092 = vadd.xlane.f32.xlu0 %v967
        %v1093 = vpop.xlane.xlu0 %1092
        %1094 = vadd.xlane.f32.xlu0 %v968
        %v1095 = vpop.xlane.xlu0 %1094
        %1096 = vadd.xlane.f32.xlu0 %v969
        %v1097 = vpop.xlane.xlu0 %1096
        %1098 = vadd.xlane.f32.xlu0 %v970
        %v1099 = vpop.xlane.xlu0 %1098
        %1100 = vadd.xlane.f32.xlu0 %v971
        %v1101 = vpop.xlane.xlu0 %1100
        %1102 = vadd.xlane.f32.xlu0 %v972
        %v1103 = vpop.xlane.xlu0 %1102
        %1104 = vadd.xlane.f32.xlu0 %v973
        %v1105 = vpop.xlane.xlu0 %1104
        %1106 = vadd.xlane.f32.xlu0 %v974
        %v1107 = vpop.xlane.xlu0 %1106
        %v1108 = vmul.f32 %v981, 0.03125
        %v1109 = vmul.f32 %v983, 0.03125
        %v1110 = vmul.f32 %v985, 0.03125
        %v1111 = vmul.f32 %v987, 0.03125
        %v1112 = vmul.f32 %v989, 0.03125
        %v1113 = vmul.f32 %v991, 0.03125
        %v1114 = vmul.f32 %v993, 0.03125
        %v1115 = vmul.f32 %v995, 0.03125
        %v1116 = vmul.f32 %v997, 0.03125
        %v1117 = vmul.f32 %v999, 0.03125
        %v1118 = vmul.f32 %v1001, 0.03125
        %v1119 = vmul.f32 %v1003, 0.03125
        %v1120 = vmul.f32 %v1005, 0.03125
        %v1121 = vmul.f32 %v1007, 0.03125
        %v1122 = vmul.f32 %v1009, 0.03125
        %v1123 = vmul.f32 %v1011, 0.03125
        %v1124 = vmul.f32 %v1013, 0.03125
        %v1125 = vmul.f32 %v1015, 0.03125
        %v1126 = vmul.f32 %v1017, 0.03125
        %v1127 = vmul.f32 %v1019, 0.03125
        %v1128 = vmul.f32 %v1021, 0.03125
        %v1129 = vmul.f32 %v1023, 0.03125
        %v1130 = vmul.f32 %v1025, 0.03125
        %v1131 = vmul.f32 %v1027, 0.03125
        %v1132 = vmul.f32 %v1029, 0.03125
        %v1133 = vmul.f32 %v1031, 0.03125
        %v1134 = vmul.f32 %v1033, 0.03125
        %v1135 = vmul.f32 %v1035, 0.03125
        %v1136 = vmul.f32 %v1037, 0.03125
        %v1137 = vmul.f32 %v1039, 0.03125
        %v1138 = vmul.f32 %v1041, 0.03125
        %v1139 = vmul.f32 %v1043, 0.03125
        %v1140 = vmul.f32 %v1045, 0.03125
        %v1141 = vmul.f32 %v1047, 0.03125
        %v1142 = vmul.f32 %v1049, 0.03125
        %v1143 = vmul.f32 %v1051, 0.03125
        %v1144 = vmul.f32 %v1053, 0.03125
        %v1145 = vmul.f32 %v1055, 0.03125
        %v1146 = vmul.f32 %v1057, 0.03125
        %v1147 = vmul.f32 %v1059, 0.03125
        %v1148 = vmul.f32 %v1061, 0.03125
        %v1149 = vmul.f32 %v1063, 0.03125
        %v1150 = vmul.f32 %v1065, 0.03125
        %v1151 = vmul.f32 %v1067, 0.03125
        %v1152 = vmul.f32 %v1069, 0.03125
        %v1153 = vmul.f32 %v1071, 0.03125
        %v1154 = vmul.f32 %v1073, 0.03125
        %v1155 = vmul.f32 %v1075, 0.03125
        %v1156 = vmul.f32 %v1077, 0.03125
        %v1157 = vmul.f32 %v1079, 0.03125
        %v1158 = vmul.f32 %v1081, 0.03125
        %v1159 = vmul.f32 %v1083, 0.03125
        %v1160 = vmul.f32 %v1085, 0.03125
        %v1161 = vmul.f32 %v1087, 0.03125
        %v1162 = vmul.f32 %v1089, 0.03125
        %v1163 = vmul.f32 %v1091, 0.03125
        %v1164 = vmul.f32 %v1093, 0.03125
        %v1165 = vmul.f32 %v1095, 0.03125
        %v1166 = vmul.f32 %v1097, 0.03125
        %v1167 = vmul.f32 %v1099, 0.03125
        %v1168 = vmul.f32 %v1101, 0.03125
        %v1169 = vmul.f32 %v1103, 0.03125
        %v1170 = vmul.f32 %v1105, 0.03125
        %v1171 = vmul.f32 %v1107, 0.03125
        %v1172 = vsub.f32 %v911, %v1108
        %v1173 = vsub.f32 %v912, %v1109
        %v1174 = vsub.f32 %v913, %v1110
        %v1175 = vsub.f32 %v914, %v1111
        %v1176 = vsub.f32 %v915, %v1112
        %v1177 = vsub.f32 %v916, %v1113
        %v1178 = vsub.f32 %v917, %v1114
        %v1179 = vsub.f32 %v918, %v1115
        %v1180 = vsub.f32 %v919, %v1116
        %v1181 = vsub.f32 %v920, %v1117
        %v1182 = vsub.f32 %v921, %v1118
        %v1183 = vsub.f32 %v922, %v1119
        %v1184 = vsub.f32 %v923, %v1120
        %v1185 = vsub.f32 %v924, %v1121
        %v1186 = vsub.f32 %v925, %v1122
        %v1187 = vsub.f32 %v926, %v1123
        %v1188 = vsub.f32 %v927, %v1124
        %v1189 = vsub.f32 %v928, %v1125
        %v1190 = vsub.f32 %v929, %v1126
        %v1191 = vsub.f32 %v930, %v1127
        %v1192 = vsub.f32 %v931, %v1128
        %v1193 = vsub.f32 %v932, %v1129
        %v1194 = vsub.f32 %v933, %v1130
        %v1195 = vsub.f32 %v934, %v1131
        %v1196 = vsub.f32 %v935, %v1132
        %v1197 = vsub.f32 %v936, %v1133
        %v1198 = vsub.f32 %v937, %v1134
        %v1199 = vsub.f32 %v938, %v1135
        %v1200 = vsub.f32 %v939, %v1136
        %v1201 = vsub.f32 %v940, %v1137
        %v1202 = vsub.f32 %v941, %v1138
        %v1203 = vsub.f32 %v942, %v1139
        %v1204 = vsub.f32 %v943, %v1140
        %v1205 = vsub.f32 %v944, %v1141
        %v1206 = vsub.f32 %v945, %v1142
        %v1207 = vsub.f32 %v946, %v1143
        %v1208 = vsub.f32 %v947, %v1144
        %v1209 = vsub.f32 %v948, %v1145
        %v1210 = vsub.f32 %v949, %v1146
        %v1211 = vsub.f32 %v950, %v1147
        %v1212 = vsub.f32 %v951, %v1148
        %v1213 = vsub.f32 %v952, %v1149
        %v1214 = vsub.f32 %v953, %v1150
        %v1215 = vsub.f32 %v954, %v1151
        %v1216 = vsub.f32 %v955, %v1152
        %v1217 = vsub.f32 %v956, %v1153
        %v1218 = vsub.f32 %v957, %v1154
        %v1219 = vsub.f32 %v958, %v1155
        %v1220 = vsub.f32 %v959, %v1156
        %v1221 = vsub.f32 %v960, %v1157
        %v1222 = vsub.f32 %v961, %v1158
        %v1223 = vsub.f32 %v962, %v1159
        %v1224 = vsub.f32 %v963, %v1160
        %v1225 = vsub.f32 %v964, %v1161
        %v1226 = vsub.f32 %v965, %v1162
        %v1227 = vsub.f32 %v966, %v1163
        %v1228 = vsub.f32 %v967, %v1164
        %v1229 = vsub.f32 %v968, %v1165
        %v1230 = vsub.f32 %v969, %v1166
        %v1231 = vsub.f32 %v970, %v1167
        %v1232 = vsub.f32 %v971, %v1168
        %v1233 = vsub.f32 %v972, %v1169
        %v1234 = vsub.f32 %v973, %v1170
        %v1235 = vsub.f32 %v974, %v1171
        %v1236 = vsel %vm977, 1, 0
        %vm1237 = vcmp.eq.s32.totalorder %v1236, 1
        %v1238 = vsel %vm1237, %v1172, 0.0
        %v1239 = vsel %vm1237, %v1173, 0.0
        %v1240 = vsel %vm1237, %v1174, 0.0
        %v1241 = vsel %vm1237, %v1175, 0.0
        %v1242 = vsel %vm1237, %v1176, 0.0
        %v1243 = vsel %vm1237, %v1177, 0.0
        %v1244 = vsel %vm1237, %v1178, 0.0
        %v1245 = vsel %vm1237, %v1179, 0.0
        %v1246 = vsel %vm1237, %v1180, 0.0
        %v1247 = vsel %vm1237, %v1181, 0.0
        %v1248 = vsel %vm1237, %v1182, 0.0
        %v1249 = vsel %vm1237, %v1183, 0.0
        %v1250 = vsel %vm1237, %v1184, 0.0
        %v1251 = vsel %vm1237, %v1185, 0.0
        %v1252 = vsel %vm1237, %v1186, 0.0
        %v1253 = vsel %vm1237, %v1187, 0.0
        %v1254 = vsel %vm1237, %v1188, 0.0
        %v1255 = vsel %vm1237, %v1189, 0.0
        %v1256 = vsel %vm1237, %v1190, 0.0
        %v1257 = vsel %vm1237, %v1191, 0.0
        %v1258 = vsel %vm1237, %v1192, 0.0
        %v1259 = vsel %vm1237, %v1193, 0.0
        %v1260 = vsel %vm1237, %v1194, 0.0
        %v1261 = vsel %vm1237, %v1195, 0.0
        %v1262 = vsel %vm1237, %v1196, 0.0
        %v1263 = vsel %vm1237, %v1197, 0.0
        %v1264 = vsel %vm1237, %v1198, 0.0
        %v1265 = vsel %vm1237, %v1199, 0.0
        %v1266 = vsel %vm1237, %v1200, 0.0
        %v1267 = vsel %vm1237, %v1201, 0.0
        %v1268 = vsel %vm1237, %v1202, 0.0
        %v1269 = vsel %vm1237, %v1203, 0.0
        %v1270 = vsel %vm1237, %v1204, 0.0
        %v1271 = vsel %vm1237, %v1205, 0.0
        %v1272 = vsel %vm1237, %v1206, 0.0
        %v1273 = vsel %vm1237, %v1207, 0.0
        %v1274 = vsel %vm1237, %v1208, 0.0
        %v1275 = vsel %vm1237, %v1209, 0.0
        %v1276 = vsel %vm1237, %v1210, 0.0
        %v1277 = vsel %vm1237, %v1211, 0.0
        %v1278 = vsel %vm1237, %v1212, 0.0
        %v1279 = vsel %vm1237, %v1213, 0.0
        %v1280 = vsel %vm1237, %v1214, 0.0
        %v1281 = vsel %vm1237, %v1215, 0.0
        %v1282 = vsel %vm1237, %v1216, 0.0
        %v1283 = vsel %vm1237, %v1217, 0.0
        %v1284 = vsel %vm1237, %v1218, 0.0
        %v1285 = vsel %vm1237, %v1219, 0.0
        %v1286 = vsel %vm1237, %v1220, 0.0
        %v1287 = vsel %vm1237, %v1221, 0.0
        %v1288 = vsel %vm1237, %v1222, 0.0
        %v1289 = vsel %vm1237, %v1223, 0.0
        %v1290 = vsel %vm1237, %v1224, 0.0
        %v1291 = vsel %vm1237, %v1225, 0.0
        %v1292 = vsel %vm1237, %v1226, 0.0
        %v1293 = vsel %vm1237, %v1227, 0.0
        %v1294 = vsel %vm1237, %v1228, 0.0
        %v1295 = vsel %vm1237, %v1229, 0.0
        %v1296 = vsel %vm1237, %v1230, 0.0
        %v1297 = vsel %vm1237, %v1231, 0.0
        %v1298 = vsel %vm1237, %v1232, 0.0
        %v1299 = vsel %vm1237, %v1233, 0.0
        %v1300 = vsel %vm1237, %v1234, 0.0
        %v1301 = vsel %vm1237, %v1235, 0.0
        %v1302 = vmul.f32 %v1238, %v1238
        %v1303 = vmul.f32 %v1239, %v1239
        %v1304 = vmul.f32 %v1240, %v1240
        %v1305 = vmul.f32 %v1241, %v1241
        %v1306 = vmul.f32 %v1242, %v1242
        %v1307 = vmul.f32 %v1243, %v1243
        %v1308 = vmul.f32 %v1244, %v1244
        %v1309 = vmul.f32 %v1245, %v1245
        %v1310 = vmul.f32 %v1246, %v1246
        %v1311 = vmul.f32 %v1247, %v1247
        %v1312 = vmul.f32 %v1248, %v1248
        %v1313 = vmul.f32 %v1249, %v1249
        %v1314 = vmul.f32 %v1250, %v1250
        %v1315 = vmul.f32 %v1251, %v1251
        %v1316 = vmul.f32 %v1252, %v1252
        %v1317 = vmul.f32 %v1253, %v1253
        %v1318 = vmul.f32 %v1254, %v1254
        %v1319 = vmul.f32 %v1255, %v1255
        %v1320 = vmul.f32 %v1256, %v1256
        %v1321 = vmul.f32 %v1257, %v1257
        %v1322 = vmul.f32 %v1258, %v1258
        %v1323 = vmul.f32 %v1259, %v1259
        %v1324 = vmul.f32 %v1260, %v1260
        %v1325 = vmul.f32 %v1261, %v1261
        %v1326 = vmul.f32 %v1262, %v1262
        %v1327 = vmul.f32 %v1263, %v1263
        %v1328 = vmul.f32 %v1264, %v1264
        %v1329 = vmul.f32 %v1265, %v1265
        %v1330 = vmul.f32 %v1266, %v1266
        %v1331 = vmul.f32 %v1267, %v1267
        %v1332 = vmul.f32 %v1268, %v1268
        %v1333 = vmul.f32 %v1269, %v1269
        %v1334 = vmul.f32 %v1270, %v1270
        %v1335 = vmul.f32 %v1271, %v1271
        %v1336 = vmul.f32 %v1272, %v1272
        %v1337 = vmul.f32 %v1273, %v1273
        %v1338 = vmul.f32 %v1274, %v1274
        %v1339 = vmul.f32 %v1275, %v1275
        %v1340 = vmul.f32 %v1276, %v1276
        %v1341 = vmul.f32 %v1277, %v1277
        %v1342 = vmul.f32 %v1278, %v1278
        %v1343 = vmul.f32 %v1279, %v1279
        %v1344 = vmul.f32 %v1280, %v1280
        %v1345 = vmul.f32 %v1281, %v1281
        %v1346 = vmul.f32 %v1282, %v1282
        %v1347 = vmul.f32 %v1283, %v1283
        %v1348 = vmul.f32 %v1284, %v1284
        %v1349 = vmul.f32 %v1285, %v1285
        %v1350 = vmul.f32 %v1286, %v1286
        %v1351 = vmul.f32 %v1287, %v1287
        %v1352 = vmul.f32 %v1288, %v1288
        %v1353 = vmul.f32 %v1289, %v1289
        %v1354 = vmul.f32 %v1290, %v1290
        %v1355 = vmul.f32 %v1291, %v1291
        %v1356 = vmul.f32 %v1292, %v1292
        %v1357 = vmul.f32 %v1293, %v1293
        %v1358 = vmul.f32 %v1294, %v1294
        %v1359 = vmul.f32 %v1295, %v1295
        %v1360 = vmul.f32 %v1296, %v1296
        %v1361 = vmul.f32 %v1297, %v1297
        %v1362 = vmul.f32 %v1298, %v1298
        %v1363 = vmul.f32 %v1299, %v1299
        %v1364 = vmul.f32 %v1300, %v1300
        %v1365 = vmul.f32 %v1301, %v1301
        %1366 = vadd.xlane.f32.xlu0 %v1302
        %v1367 = vpop.xlane.xlu0 %1366
        %1368 = vadd.xlane.f32.xlu0 %v1303
        %v1369 = vpop.xlane.xlu0 %1368
        %1370 = vadd.xlane.f32.xlu0 %v1304
        %v1371 = vpop.xlane.xlu0 %1370
        %1372 = vadd.xlane.f32.xlu0 %v1305
        %v1373 = vpop.xlane.xlu0 %1372
        %1374 = vadd.xlane.f32.xlu0 %v1306
        %v1375 = vpop.xlane.xlu0 %1374
        %1376 = vadd.xlane.f32.xlu0 %v1307
        %v1377 = vpop.xlane.xlu0 %1376
        %1378 = vadd.xlane.f32.xlu0 %v1308
        %v1379 = vpop.xlane.xlu0 %1378
        %1380 = vadd.xlane.f32.xlu0 %v1309
        %v1381 = vpop.xlane.xlu0 %1380
        %1382 = vadd.xlane.f32.xlu0 %v1310
        %v1383 = vpop.xlane.xlu0 %1382
        %1384 = vadd.xlane.f32.xlu0 %v1311
        %v1385 = vpop.xlane.xlu0 %1384
        %1386 = vadd.xlane.f32.xlu0 %v1312
        %v1387 = vpop.xlane.xlu0 %1386
        %1388 = vadd.xlane.f32.xlu0 %v1313
        %v1389 = vpop.xlane.xlu0 %1388
        %1390 = vadd.xlane.f32.xlu0 %v1314
        %v1391 = vpop.xlane.xlu0 %1390
        %1392 = vadd.xlane.f32.xlu0 %v1315
        %v1393 = vpop.xlane.xlu0 %1392
        %1394 = vadd.xlane.f32.xlu0 %v1316
        %v1395 = vpop.xlane.xlu0 %1394
        %1396 = vadd.xlane.f32.xlu0 %v1317
        %v1397 = vpop.xlane.xlu0 %1396
        %1398 = vadd.xlane.f32.xlu0 %v1318
        %v1399 = vpop.xlane.xlu0 %1398
        %1400 = vadd.xlane.f32.xlu0 %v1319
        %v1401 = vpop.xlane.xlu0 %1400
        %1402 = vadd.xlane.f32.xlu0 %v1320
        %v1403 = vpop.xlane.xlu0 %1402
        %1404 = vadd.xlane.f32.xlu0 %v1321
        %v1405 = vpop.xlane.xlu0 %1404
        %1406 = vadd.xlane.f32.xlu0 %v1322
        %v1407 = vpop.xlane.xlu0 %1406
        %1408 = vadd.xlane.f32.xlu0 %v1323
        %v1409 = vpop.xlane.xlu0 %1408
        %1410 = vadd.xlane.f32.xlu0 %v1324
        %v1411 = vpop.xlane.xlu0 %1410
        %1412 = vadd.xlane.f32.xlu0 %v1325
        %v1413 = vpop.xlane.xlu0 %1412
        %1414 = vadd.xlane.f32.xlu0 %v1326
        %v1415 = vpop.xlane.xlu0 %1414
        %1416 = vadd.xlane.f32.xlu0 %v1327
        %v1417 = vpop.xlane.xlu0 %1416
        %1418 = vadd.xlane.f32.xlu0 %v1328
        %v1419 = vpop.xlane.xlu0 %1418
        %1420 = vadd.xlane.f32.xlu0 %v1329
        %v1421 = vpop.xlane.xlu0 %1420
        %1422 = vadd.xlane.f32.xlu0 %v1330
        %v1423 = vpop.xlane.xlu0 %1422
        %1424 = vadd.xlane.f32.xlu0 %v1331
        %v1425 = vpop.xlane.xlu0 %1424
        %1426 = vadd.xlane.f32.xlu0 %v1332
        %v1427 = vpop.xlane.xlu0 %1426
        %1428 = vadd.xlane.f32.xlu0 %v1333
        %v1429 = vpop.xlane.xlu0 %1428
        %1430 = vadd.xlane.f32.xlu0 %v1334
        %v1431 = vpop.xlane.xlu0 %1430
        %1432 = vadd.xlane.f32.xlu0 %v1335
        %v1433 = vpop.xlane.xlu0 %1432
        %1434 = vadd.xlane.f32.xlu0 %v1336
        %v1435 = vpop.xlane.xlu0 %1434
        %1436 = vadd.xlane.f32.xlu0 %v1337
        %v1437 = vpop.xlane.xlu0 %1436
        %1438 = vadd.xlane.f32.xlu0 %v1338
        %v1439 = vpop.xlane.xlu0 %1438
        %1440 = vadd.xlane.f32.xlu0 %v1339
        %v1441 = vpop.xlane.xlu0 %1440
        %1442 = vadd.xlane.f32.xlu0 %v1340
        %v1443 = vpop.xlane.xlu0 %1442
        %1444 = vadd.xlane.f32.xlu0 %v1341
        %v1445 = vpop.xlane.xlu0 %1444
        %1446 = vadd.xlane.f32.xlu0 %v1342
        %v1447 = vpop.xlane.xlu0 %1446
        %1448 = vadd.xlane.f32.xlu0 %v1343
        %v1449 = vpop.xlane.xlu0 %1448
        %1450 = vadd.xlane.f32.xlu0 %v1344
        %v1451 = vpop.xlane.xlu0 %1450
        %1452 = vadd.xlane.f32.xlu0 %v1345
        %v1453 = vpop.xlane.xlu0 %1452
        %1454 = vadd.xlane.f32.xlu0 %v1346
        %v1455 = vpop.xlane.xlu0 %1454
        %1456 = vadd.xlane.f32.xlu0 %v1347
        %v1457 = vpop.xlane.xlu0 %1456
        %1458 = vadd.xlane.f32.xlu0 %v1348
        %v1459 = vpop.xlane.xlu0 %1458
        %1460 = vadd.xlane.f32.xlu0 %v1349
        %v1461 = vpop.xlane.xlu0 %1460
        %1462 = vadd.xlane.f32.xlu0 %v1350
        %v1463 = vpop.xlane.xlu0 %1462
        %1464 = vadd.xlane.f32.xlu0 %v1351
        %v1465 = vpop.xlane.xlu0 %1464
        %1466 = vadd.xlane.f32.xlu0 %v1352
        %v1467 = vpop.xlane.xlu0 %1466
        %1468 = vadd.xlane.f32.xlu0 %v1353
        %v1469 = vpop.xlane.xlu0 %1468
        %1470 = vadd.xlane.f32.xlu0 %v1354
        %v1471 = vpop.xlane.xlu0 %1470
        %1472 = vadd.xlane.f32.xlu0 %v1355
        %v1473 = vpop.xlane.xlu0 %1472
        %1474 = vadd.xlane.f32.xlu0 %v1356
        %v1475 = vpop.xlane.xlu0 %1474
        %1476 = vadd.xlane.f32.xlu0 %v1357
        %v1477 = vpop.xlane.xlu0 %1476
        %1478 = vadd.xlane.f32.xlu0 %v1358
        %v1479 = vpop.xlane.xlu0 %1478
        %1480 = vadd.xlane.f32.xlu0 %v1359
        %v1481 = vpop.xlane.xlu0 %1480
        %1482 = vadd.xlane.f32.xlu0 %v1360
        %v1483 = vpop.xlane.xlu0 %1482
        %1484 = vadd.xlane.f32.xlu0 %v1361
        %v1485 = vpop.xlane.xlu0 %1484
        %1486 = vadd.xlane.f32.xlu0 %v1362
        %v1487 = vpop.xlane.xlu0 %1486
        %1488 = vadd.xlane.f32.xlu0 %v1363
        %v1489 = vpop.xlane.xlu0 %1488
        %1490 = vadd.xlane.f32.xlu0 %v1364
        %v1491 = vpop.xlane.xlu0 %1490
        %1492 = vadd.xlane.f32.xlu0 %v1365
        %v1493 = vpop.xlane.xlu0 %1492
        %v1494 = vmul.f32 %v1367, 0.03125
        %v1495 = vmul.f32 %v1369, 0.03125
        %v1496 = vmul.f32 %v1371, 0.03125
        %v1497 = vmul.f32 %v1373, 0.03125
        %v1498 = vmul.f32 %v1375, 0.03125
        %v1499 = vmul.f32 %v1377, 0.03125
        %v1500 = vmul.f32 %v1379, 0.03125
        %v1501 = vmul.f32 %v1381, 0.03125
        %v1502 = vmul.f32 %v1383, 0.03125
        %v1503 = vmul.f32 %v1385, 0.03125
        %v1504 = vmul.f32 %v1387, 0.03125
        %v1505 = vmul.f32 %v1389, 0.03125
        %v1506 = vmul.f32 %v1391, 0.03125
        %v1507 = vmul.f32 %v1393, 0.03125
        %v1508 = vmul.f32 %v1395, 0.03125
        %v1509 = vmul.f32 %v1397, 0.03125
        %v1510 = vmul.f32 %v1399, 0.03125
        %v1511 = vmul.f32 %v1401, 0.03125
        %v1512 = vmul.f32 %v1403, 0.03125
        %v1513 = vmul.f32 %v1405, 0.03125
        %v1514 = vmul.f32 %v1407, 0.03125
        %v1515 = vmul.f32 %v1409, 0.03125
        %v1516 = vmul.f32 %v1411, 0.03125
        %v1517 = vmul.f32 %v1413, 0.03125
        %v1518 = vmul.f32 %v1415, 0.03125
        %v1519 = vmul.f32 %v1417, 0.03125
        %v1520 = vmul.f32 %v1419, 0.03125
        %v1521 = vmul.f32 %v1421, 0.03125
        %v1522 = vmul.f32 %v1423, 0.03125
        %v1523 = vmul.f32 %v1425, 0.03125
        %v1524 = vmul.f32 %v1427, 0.03125
        %v1525 = vmul.f32 %v1429, 0.03125
        %v1526 = vmul.f32 %v1431, 0.03125
        %v1527 = vmul.f32 %v1433, 0.03125
        %v1528 = vmul.f32 %v1435, 0.03125
        %v1529 = vmul.f32 %v1437, 0.03125
        %v1530 = vmul.f32 %v1439, 0.03125
        %v1531 = vmul.f32 %v1441, 0.03125
        %v1532 = vmul.f32 %v1443, 0.03125
        %v1533 = vmul.f32 %v1445, 0.03125
        %v1534 = vmul.f32 %v1447, 0.03125
        %v1535 = vmul.f32 %v1449, 0.03125
        %v1536 = vmul.f32 %v1451, 0.03125
        %v1537 = vmul.f32 %v1453, 0.03125
        %v1538 = vmul.f32 %v1455, 0.03125
        %v1539 = vmul.f32 %v1457, 0.03125
        %v1540 = vmul.f32 %v1459, 0.03125
        %v1541 = vmul.f32 %v1461, 0.03125
        %v1542 = vmul.f32 %v1463, 0.03125
        %v1543 = vmul.f32 %v1465, 0.03125
        %v1544 = vmul.f32 %v1467, 0.03125
        %v1545 = vmul.f32 %v1469, 0.03125
        %v1546 = vmul.f32 %v1471, 0.03125
        %v1547 = vmul.f32 %v1473, 0.03125
        %v1548 = vmul.f32 %v1475, 0.03125
        %v1549 = vmul.f32 %v1477, 0.03125
        %v1550 = vmul.f32 %v1479, 0.03125
        %v1551 = vmul.f32 %v1481, 0.03125
        %v1552 = vmul.f32 %v1483, 0.03125
        %v1553 = vmul.f32 %v1485, 0.03125
        %v1554 = vmul.f32 %v1487, 0.03125
        %v1555 = vmul.f32 %v1489, 0.03125
        %v1556 = vmul.f32 %v1491, 0.03125
        %v1557 = vmul.f32 %v1493, 0.03125
        %v1558 = vadd.f32 %v1494, 1e-05
        %v1559 = vadd.f32 %v1495, 1e-05
        %v1560 = vadd.f32 %v1496, 1e-05
        %v1561 = vadd.f32 %v1497, 1e-05
        %v1562 = vadd.f32 %v1498, 1e-05
        %v1563 = vadd.f32 %v1499, 1e-05
        %v1564 = vadd.f32 %v1500, 1e-05
        %v1565 = vadd.f32 %v1501, 1e-05
        %v1566 = vadd.f32 %v1502, 1e-05
        %v1567 = vadd.f32 %v1503, 1e-05
        %v1568 = vadd.f32 %v1504, 1e-05
        %v1569 = vadd.f32 %v1505, 1e-05
        %v1570 = vadd.f32 %v1506, 1e-05
        %v1571 = vadd.f32 %v1507, 1e-05
        %v1572 = vadd.f32 %v1508, 1e-05
        %v1573 = vadd.f32 %v1509, 1e-05
        %v1574 = vadd.f32 %v1510, 1e-05
        %v1575 = vadd.f32 %v1511, 1e-05
        %v1576 = vadd.f32 %v1512, 1e-05
        %v1577 = vadd.f32 %v1513, 1e-05
        %v1578 = vadd.f32 %v1514, 1e-05
        %v1579 = vadd.f32 %v1515, 1e-05
        %v1580 = vadd.f32 %v1516, 1e-05
        %v1581 = vadd.f32 %v1517, 1e-05
        %v1582 = vadd.f32 %v1518, 1e-05
        %v1583 = vadd.f32 %v1519, 1e-05
        %v1584 = vadd.f32 %v1520, 1e-05
        %v1585 = vadd.f32 %v1521, 1e-05
        %v1586 = vadd.f32 %v1522, 1e-05
        %v1587 = vadd.f32 %v1523, 1e-05
        %v1588 = vadd.f32 %v1524, 1e-05
        %v1589 = vadd.f32 %v1525, 1e-05
        %v1590 = vadd.f32 %v1526, 1e-05
        %v1591 = vadd.f32 %v1527, 1e-05
        %v1592 = vadd.f32 %v1528, 1e-05
        %v1593 = vadd.f32 %v1529, 1e-05
        %v1594 = vadd.f32 %v1530, 1e-05
        %v1595 = vadd.f32 %v1531, 1e-05
        %v1596 = vadd.f32 %v1532, 1e-05
        %v1597 = vadd.f32 %v1533, 1e-05
        %v1598 = vadd.f32 %v1534, 1e-05
        %v1599 = vadd.f32 %v1535, 1e-05
        %v1600 = vadd.f32 %v1536, 1e-05
        %v1601 = vadd.f32 %v1537, 1e-05
        %v1602 = vadd.f32 %v1538, 1e-05
        %v1603 = vadd.f32 %v1539, 1e-05
        %v1604 = vadd.f32 %v1540, 1e-05
        %v1605 = vadd.f32 %v1541, 1e-05
        %v1606 = vadd.f32 %v1542, 1e-05
        %v1607 = vadd.f32 %v1543, 1e-05
        %v1608 = vadd.f32 %v1544, 1e-05
        %v1609 = vadd.f32 %v1545, 1e-05
        %v1610 = vadd.f32 %v1546, 1e-05
        %v1611 = vadd.f32 %v1547, 1e-05
        %v1612 = vadd.f32 %v1548, 1e-05
        %v1613 = vadd.f32 %v1549, 1e-05
        %v1614 = vadd.f32 %v1550, 1e-05
        %v1615 = vadd.f32 %v1551, 1e-05
        %v1616 = vadd.f32 %v1552, 1e-05
        %v1617 = vadd.f32 %v1553, 1e-05
        %v1618 = vadd.f32 %v1554, 1e-05
        %v1619 = vadd.f32 %v1555, 1e-05
        %v1620 = vadd.f32 %v1556, 1e-05
        %v1621 = vadd.f32 %v1557, 1e-05
        %v1622 = vrsqrt.pop %v1558
        %v1623 = vrsqrt.pop %v1559
        %v1624 = vrsqrt.pop %v1560
        %v1625 = vrsqrt.pop %v1561
        %v1626 = vrsqrt.pop %v1562
        %v1627 = vrsqrt.pop %v1563
        %v1628 = vrsqrt.pop %v1564
        %v1629 = vrsqrt.pop %v1565
        %v1630 = vrsqrt.pop %v1566
        %v1631 = vrsqrt.pop %v1567
        %v1632 = vrsqrt.pop %v1568
        %v1633 = vrsqrt.pop %v1569
        %v1634 = vrsqrt.pop %v1570
        %v1635 = vrsqrt.pop %v1571
        %v1636 = vrsqrt.pop %v1572
        %v1637 = vrsqrt.pop %v1573
        %v1638 = vrsqrt.pop %v1574
        %v1639 = vrsqrt.pop %v1575
        %v1640 = vrsqrt.pop %v1576
        %v1641 = vrsqrt.pop %v1577
        %v1642 = vrsqrt.pop %v1578
        %v1643 = vrsqrt.pop %v1579
        %v1644 = vrsqrt.pop %v1580
        %v1645 = vrsqrt.pop %v1581
        %v1646 = vrsqrt.pop %v1582
        %v1647 = vrsqrt.pop %v1583
        %v1648 = vrsqrt.pop %v1584
        %v1649 = vrsqrt.pop %v1585
        %v1650 = vrsqrt.pop %v1586
        %v1651 = vrsqrt.pop %v1587
        %v1652 = vrsqrt.pop %v1588
        %v1653 = vrsqrt.pop %v1589
        %v1654 = vrsqrt.pop %v1590
        %v1655 = vrsqrt.pop %v1591
        %v1656 = vrsqrt.pop %v1592
        %v1657 = vrsqrt.pop %v1593
        %v1658 = vrsqrt.pop %v1594
        %v1659 = vrsqrt.pop %v1595
        %v1660 = vrsqrt.pop %v1596
        %v1661 = vrsqrt.pop %v1597
        %v1662 = vrsqrt.pop %v1598
        %v1663 = vrsqrt.pop %v1599
        %v1664 = vrsqrt.pop %v1600
        %v1665 = vrsqrt.pop %v1601
        %v1666 = vrsqrt.pop %v1602
        %v1667 = vrsqrt.pop %v1603
        %v1668 = vrsqrt.pop %v1604
        %v1669 = vrsqrt.pop %v1605
        %v1670 = vrsqrt.pop %v1606
        %v1671 = vrsqrt.pop %v1607
        %v1672 = vrsqrt.pop %v1608
        %v1673 = vrsqrt.pop %v1609
        %v1674 = vrsqrt.pop %v1610
        %v1675 = vrsqrt.pop %v1611
        %v1676 = vrsqrt.pop %v1612
        %v1677 = vrsqrt.pop %v1613
        %v1678 = vrsqrt.pop %v1614
        %v1679 = vrsqrt.pop %v1615
        %v1680 = vrsqrt.pop %v1616
        %v1681 = vrsqrt.pop %v1617
        %v1682 = vrsqrt.pop %v1618
        %v1683 = vrsqrt.pop %v1619
        %v1684 = vrsqrt.pop %v1620
        %v1685 = vrsqrt.pop %v1621
        %v1686 = vmul.f32 %v1238, %v1622
        %v1687 = vmul.f32 %v1239, %v1623
        %v1688 = vmul.f32 %v1240, %v1624
        %v1689 = vmul.f32 %v1241, %v1625
        %v1690 = vmul.f32 %v1242, %v1626
        %v1691 = vmul.f32 %v1243, %v1627
        %v1692 = vmul.f32 %v1244, %v1628
        %v1693 = vmul.f32 %v1245, %v1629
        %v1694 = vmul.f32 %v1246, %v1630
        %v1695 = vmul.f32 %v1247, %v1631
        %v1696 = vmul.f32 %v1248, %v1632
        %v1697 = vmul.f32 %v1249, %v1633
        %v1698 = vmul.f32 %v1250, %v1634
        %v1699 = vmul.f32 %v1251, %v1635
        %v1700 = vmul.f32 %v1252, %v1636
        %v1701 = vmul.f32 %v1253, %v1637
        %v1702 = vmul.f32 %v1254, %v1638
        %v1703 = vmul.f32 %v1255, %v1639
        %v1704 = vmul.f32 %v1256, %v1640
        %v1705 = vmul.f32 %v1257, %v1641
        %v1706 = vmul.f32 %v1258, %v1642
        %v1707 = vmul.f32 %v1259, %v1643
        %v1708 = vmul.f32 %v1260, %v1644
        %v1709 = vmul.f32 %v1261, %v1645
        %v1710 = vmul.f32 %v1262, %v1646
        %v1711 = vmul.f32 %v1263, %v1647
        %v1712 = vmul.f32 %v1264, %v1648
        %v1713 = vmul.f32 %v1265, %v1649
        %v1714 = vmul.f32 %v1266, %v1650
        %v1715 = vmul.f32 %v1267, %v1651
        %v1716 = vmul.f32 %v1268, %v1652
        %v1717 = vmul.f32 %v1269, %v1653
        %v1718 = vmul.f32 %v1270, %v1654
        %v1719 = vmul.f32 %v1271, %v1655
        %v1720 = vmul.f32 %v1272, %v1656
        %v1721 = vmul.f32 %v1273, %v1657
        %v1722 = vmul.f32 %v1274, %v1658
        %v1723 = vmul.f32 %v1275, %v1659
        %v1724 = vmul.f32 %v1276, %v1660
        %v1725 = vmul.f32 %v1277, %v1661
        %v1726 = vmul.f32 %v1278, %v1662
        %v1727 = vmul.f32 %v1279, %v1663
        %v1728 = vmul.f32 %v1280, %v1664
        %v1729 = vmul.f32 %v1281, %v1665
        %v1730 = vmul.f32 %v1282, %v1666
        %v1731 = vmul.f32 %v1283, %v1667
        %v1732 = vmul.f32 %v1284, %v1668
        %v1733 = vmul.f32 %v1285, %v1669
        %v1734 = vmul.f32 %v1286, %v1670
        %v1735 = vmul.f32 %v1287, %v1671
        %v1736 = vmul.f32 %v1288, %v1672
        %v1737 = vmul.f32 %v1289, %v1673
        %v1738 = vmul.f32 %v1290, %v1674
        %v1739 = vmul.f32 %v1291, %v1675
        %v1740 = vmul.f32 %v1292, %v1676
        %v1741 = vmul.f32 %v1293, %v1677
        %v1742 = vmul.f32 %v1294, %v1678
        %v1743 = vmul.f32 %v1295, %v1679
        %v1744 = vmul.f32 %v1296, %v1680
        %v1745 = vmul.f32 %v1297, %v1681
        %v1746 = vmul.f32 %v1298, %v1682
        %v1747 = vmul.f32 %v1299, %v1683
        %v1748 = vmul.f32 %v1300, %v1684
        %v1749 = vmul.f32 %v1301, %v1685
        %v1751 = vlaneseq
        %v1752 = vshrl.u32 %v1751, 7
        %v1753 = vsub.s32 0, %v1752
        %v1754 = vrot.slane %v978, %v1753
        %v1756 = vmul.f32 %v1686, %v1754
        %v1757 = vmul.f32 %v1687, %v1754
        %v1758 = vmul.f32 %v1688, %v1754
        %v1759 = vmul.f32 %v1689, %v1754
        %v1760 = vmul.f32 %v1690, %v1754
        %v1761 = vmul.f32 %v1691, %v1754
        %v1762 = vmul.f32 %v1692, %v1754
        %v1763 = vmul.f32 %v1693, %v1754
        %v1764 = vmul.f32 %v1694, %v1754
        %v1765 = vmul.f32 %v1695, %v1754
        %v1766 = vmul.f32 %v1696, %v1754
        %v1767 = vmul.f32 %v1697, %v1754
        %v1768 = vmul.f32 %v1698, %v1754
        %v1769 = vmul.f32 %v1699, %v1754
        %v1770 = vmul.f32 %v1700, %v1754
        %v1771 = vmul.f32 %v1701, %v1754
        %v1772 = vmul.f32 %v1702, %v1754
        %v1773 = vmul.f32 %v1703, %v1754
        %v1774 = vmul.f32 %v1704, %v1754
        %v1775 = vmul.f32 %v1705, %v1754
        %v1776 = vmul.f32 %v1706, %v1754
        %v1777 = vmul.f32 %v1707, %v1754
        %v1778 = vmul.f32 %v1708, %v1754
        %v1779 = vmul.f32 %v1709, %v1754
        %v1780 = vmul.f32 %v1710, %v1754
        %v1781 = vmul.f32 %v1711, %v1754
        %v1782 = vmul.f32 %v1712, %v1754
        %v1783 = vmul.f32 %v1713, %v1754
        %v1784 = vmul.f32 %v1714, %v1754
        %v1785 = vmul.f32 %v1715, %v1754
        %v1786 = vmul.f32 %v1716, %v1754
        %v1787 = vmul.f32 %v1717, %v1754
        %v1788 = vmul.f32 %v1718, %v1754
        %v1789 = vmul.f32 %v1719, %v1754
        %v1790 = vmul.f32 %v1720, %v1754
        %v1791 = vmul.f32 %v1721, %v1754
        %v1792 = vmul.f32 %v1722, %v1754
        %v1793 = vmul.f32 %v1723, %v1754
        %v1794 = vmul.f32 %v1724, %v1754
        %v1795 = vmul.f32 %v1725, %v1754
        %v1796 = vmul.f32 %v1726, %v1754
        %v1797 = vmul.f32 %v1727, %v1754
        %v1798 = vmul.f32 %v1728, %v1754
        %v1799 = vmul.f32 %v1729, %v1754
        %v1800 = vmul.f32 %v1730, %v1754
        %v1801 = vmul.f32 %v1731, %v1754
        %v1802 = vmul.f32 %v1732, %v1754
        %v1803 = vmul.f32 %v1733, %v1754
        %v1804 = vmul.f32 %v1734, %v1754
        %v1805 = vmul.f32 %v1735, %v1754
        %v1806 = vmul.f32 %v1736, %v1754
        %v1807 = vmul.f32 %v1737, %v1754
        %v1808 = vmul.f32 %v1738, %v1754
        %v1809 = vmul.f32 %v1739, %v1754
        %v1810 = vmul.f32 %v1740, %v1754
        %v1811 = vmul.f32 %v1741, %v1754
        %v1812 = vmul.f32 %v1742, %v1754
        %v1813 = vmul.f32 %v1743, %v1754
        %v1814 = vmul.f32 %v1744, %v1754
        %v1815 = vmul.f32 %v1745, %v1754
        %v1816 = vmul.f32 %v1746, %v1754
        %v1817 = vmul.f32 %v1747, %v1754
        %v1818 = vmul.f32 %v1748, %v1754
        %v1819 = vmul.f32 %v1749, %v1754
        %v1821 = vlaneseq
        %v1822 = vshrl.u32 %v1821, 7
        %v1823 = vsub.s32 0, %v1822
        %v1824 = vrot.slane %v979, %v1823
        %v1826 = vadd.f32 %v1756, %v1824
        %v1827 = vadd.f32 %v1757, %v1824
        %v1828 = vadd.f32 %v1758, %v1824
        %v1829 = vadd.f32 %v1759, %v1824
        %v1830 = vadd.f32 %v1760, %v1824
        %v1831 = vadd.f32 %v1761, %v1824
        %v1832 = vadd.f32 %v1762, %v1824
        %v1833 = vadd.f32 %v1763, %v1824
        %v1834 = vadd.f32 %v1764, %v1824
        %v1835 = vadd.f32 %v1765, %v1824
        %v1836 = vadd.f32 %v1766, %v1824
        %v1837 = vadd.f32 %v1767, %v1824
        %v1838 = vadd.f32 %v1768, %v1824
        %v1839 = vadd.f32 %v1769, %v1824
        %v1840 = vadd.f32 %v1770, %v1824
        %v1841 = vadd.f32 %v1771, %v1824
        %v1842 = vadd.f32 %v1772, %v1824
        %v1843 = vadd.f32 %v1773, %v1824
        %v1844 = vadd.f32 %v1774, %v1824
        %v1845 = vadd.f32 %v1775, %v1824
        %v1846 = vadd.f32 %v1776, %v1824
        %v1847 = vadd.f32 %v1777, %v1824
        %v1848 = vadd.f32 %v1778, %v1824
        %v1849 = vadd.f32 %v1779, %v1824
        %v1850 = vadd.f32 %v1780, %v1824
        %v1851 = vadd.f32 %v1781, %v1824
        %v1852 = vadd.f32 %v1782, %v1824
        %v1853 = vadd.f32 %v1783, %v1824
        %v1854 = vadd.f32 %v1784, %v1824
        %v1855 = vadd.f32 %v1785, %v1824
        %v1856 = vadd.f32 %v1786, %v1824
        %v1857 = vadd.f32 %v1787, %v1824
        %v1858 = vadd.f32 %v1788, %v1824
        %v1859 = vadd.f32 %v1789, %v1824
        %v1860 = vadd.f32 %v1790, %v1824
        %v1861 = vadd.f32 %v1791, %v1824
        %v1862 = vadd.f32 %v1792, %v1824
        %v1863 = vadd.f32 %v1793, %v1824
        %v1864 = vadd.f32 %v1794, %v1824
        %v1865 = vadd.f32 %v1795, %v1824
        %v1866 = vadd.f32 %v1796, %v1824
        %v1867 = vadd.f32 %v1797, %v1824
        %v1868 = vadd.f32 %v1798, %v1824
        %v1869 = vadd.f32 %v1799, %v1824
        %v1870 = vadd.f32 %v1800, %v1824
        %v1871 = vadd.f32 %v1801, %v1824
        %v1872 = vadd.f32 %v1802, %v1824
        %v1873 = vadd.f32 %v1803, %v1824
        %v1874 = vadd.f32 %v1804, %v1824
        %v1875 = vadd.f32 %v1805, %v1824
        %v1876 = vadd.f32 %v1806, %v1824
        %v1877 = vadd.f32 %v1807, %v1824
        %v1878 = vadd.f32 %v1808, %v1824
        %v1879 = vadd.f32 %v1809, %v1824
        %v1880 = vadd.f32 %v1810, %v1824
        %v1881 = vadd.f32 %v1811, %v1824
        %v1882 = vadd.f32 %v1812, %v1824
        %v1883 = vadd.f32 %v1813, %v1824
        %v1884 = vadd.f32 %v1814, %v1824
        %v1885 = vadd.f32 %v1815, %v1824
        %v1886 = vadd.f32 %v1816, %v1824
        %v1887 = vadd.f32 %v1817, %v1824
        %v1888 = vadd.f32 %v1818, %v1824
        %v1889 = vadd.f32 %v1819, %v1824
        %v1890 = vld [vmem:[%s620] sm:$0xf]
        %v1891 = vld [vmem:[%s620 + $0x4] sm:$0xf]
        %v1892 = vld [vmem:[%s620 + $0x8] sm:$0xf]
        %v1893 = vld [vmem:[%s620 + $0xc] sm:$0xf]
        %v1894 = vld [vmem:[%s620 + $0x10] sm:$0xf]
        %v1895 = vld [vmem:[%s620 + $0x14] sm:$0xf]
        %v1896 = vld [vmem:[%s620 + $0x18] sm:$0xf]
        %v1897 = vld [vmem:[%s620 + $0x1c] sm:$0xf]
        %v1898 = vld [vmem:[%s620 + $0x20] sm:$0xf]
        %v1899 = vld [vmem:[%s620 + $0x24] sm:$0xf]
        %v1900 = vld [vmem:[%s620 + $0x28] sm:$0xf]
        %v1901 = vld [vmem:[%s620 + $0x2c] sm:$0xf]
        %v1902 = vld [vmem:[%s620 + $0x30] sm:$0xf]
        %v1903 = vld [vmem:[%s620 + $0x34] sm:$0xf]
        %v1904 = vld [vmem:[%s620 + $0x38] sm:$0xf]
        %v1905 = vld [vmem:[%s620 + $0x3c] sm:$0xf]
        %v1906 = vpack.c.bf16 %v1827, %v1826
        %v1907 = vpack.c.bf16 %v1829, %v1828
        %v1908 = vpack.c.bf16 %v1831, %v1830
        %v1909 = vpack.c.bf16 %v1833, %v1832
        %v1910 = vpack.c.bf16 %v1835, %v1834
        %v1911 = vpack.c.bf16 %v1837, %v1836
        %v1912 = vpack.c.bf16 %v1839, %v1838
        %v1913 = vpack.c.bf16 %v1841, %v1840
        %v1914 = vpack.c.bf16 %v1843, %v1842
        %v1915 = vpack.c.bf16 %v1845, %v1844
        %v1916 = vpack.c.bf16 %v1847, %v1846
        %v1917 = vpack.c.bf16 %v1849, %v1848
        %v1918 = vpack.c.bf16 %v1851, %v1850
        %v1919 = vpack.c.bf16 %v1853, %v1852
        %v1920 = vpack.c.bf16 %v1855, %v1854
        %v1921 = vpack.c.bf16 %v1857, %v1856
        %v1922 = vpack.c.bf16 %v1859, %v1858
        %v1923 = vpack.c.bf16 %v1861, %v1860
        %v1924 = vpack.c.bf16 %v1863, %v1862
        %v1925 = vpack.c.bf16 %v1865, %v1864
        %v1926 = vpack.c.bf16 %v1867, %v1866
        %v1927 = vpack.c.bf16 %v1869, %v1868
        %v1928 = vpack.c.bf16 %v1871, %v1870
        %v1929 = vpack.c.bf16 %v1873, %v1872
        %v1930 = vpack.c.bf16 %v1875, %v1874
        %v1931 = vpack.c.bf16 %v1877, %v1876
        %v1932 = vpack.c.bf16 %v1879, %v1878
        %v1933 = vpack.c.bf16 %v1881, %v1880
        %v1934 = vpack.c.bf16 %v1883, %v1882
        %v1935 = vpack.c.bf16 %v1885, %v1884
        %v1936 = vpack.c.bf16 %v1887, %v1886
        %v1937 = vpack.c.bf16 %v1889, %v1888
        %v1938 = vld [vmem:[%s623] sm:$0x1]
        %v1940 = vlaneseq
        %v1941 = vshrl.u32 %v1940, 7
        %v1942 = vsub.s32 0, %v1941
        %v1943 = vrot.slane %v1938, %v1942
        %v1961 = vunpack.c.l.b16 %v1890
        %v1962 = vunpack.c.l.b16 %v1891
        %v1963 = vunpack.c.l.b16 %v1892
        %v1964 = vunpack.c.l.b16 %v1893
        %v1965 = vunpack.c.l.b16 %v1894
        %v1966 = vunpack.c.l.b16 %v1895
        %v1967 = vunpack.c.l.b16 %v1896
        %v1968 = vunpack.c.l.b16 %v1897
        %v1969 = vunpack.c.l.b16 %v1898
        %v1970 = vunpack.c.l.b16 %v1899
        %v1971 = vunpack.c.l.b16 %v1900
        %v1972 = vunpack.c.l.b16 %v1901
        %v1973 = vunpack.c.l.b16 %v1902
        %v1974 = vunpack.c.l.b16 %v1903
        %v1975 = vunpack.c.l.b16 %v1904
        %v1976 = vunpack.c.l.b16 %v1905
        %v1977 = vpack.c.b16 %v1962, %v1961
        %v1978 = vpack.c.b16 %v1964, %v1963
        %v1979 = vpack.c.b16 %v1966, %v1965
        %v1980 = vpack.c.b16 %v1968, %v1967
        %v1981 = vpack.c.b16 %v1970, %v1969
        %v1982 = vpack.c.b16 %v1972, %v1971
        %v1983 = vpack.c.b16 %v1974, %v1973
        %v1984 = vpack.c.b16 %v1976, %v1975
        %1993 = vmatprep.subr.bf16.mxu0 0
        %1994 = vmatpush1.bf16.msra.mxu0 %v1984
        %1995 = vmatprep.subr.bf16.mxu0 0
        %1996 = vmatpush1.bf16.msra.mxu0 %v1983
        %1997 = vmatprep.subr.bf16.mxu0 0
        %1998 = vmatpush1.bf16.msra.mxu0 %v1982
        %1999 = vmatprep.subr.bf16.mxu0 0
        %2000 = vmatpush1.bf16.msra.mxu0 %v1981
        %2001 = vmatprep.subr.bf16.mxu0 0
        %2002 = vmatpush1.bf16.msra.mxu0 %v1980
        %2003 = vmatprep.subr.bf16.mxu0 0
        %2004 = vmatpush1.bf16.msra.mxu0 %v1979
        %2005 = vmatprep.subr.bf16.mxu0 0
        %2006 = vmatpush1.bf16.msra.mxu0 %v1978
        %2007 = vmatprep.subr.bf16.mxu0 0
        %2008 = vmatpush1.bf16.msra.mxu0 %v1977
        %2009 = vmatprep.subr.bf16.mxu0 0
        %2010 = vmatpush2.bf16.msra.mxu0 0
        %2011 = vmatprep.subr.bf16.mxu0 0
        %2012 = vmatpush2.bf16.msra.mxu0 0
        %2013 = vmatprep.subr.bf16.mxu0 0
        %2014 = vmatpush2.bf16.msra.mxu0 0
        %2015 = vmatprep.subr.bf16.mxu0 0
        %2016 = vmatpush2.bf16.msra.mxu0 0
        %2017 = vmatprep.subr.bf16.mxu0 0
        %2018 = vmatpush2.bf16.msra.mxu0 0
        %2019 = vmatprep.subr.bf16.mxu0 0
        %2020 = vmatpush2.bf16.msra.mxu0 0
        %2021 = vmatprep.subr.bf16.mxu0 0
        %2022 = vmatpush2.bf16.msra.mxu0 0
        %2023 = vmatprep.subr.bf16.mxu0 0
        %2024 = vmatpush2.bf16.msra.mxu0 0
        %2025 = vmatprep.mubr.bf16.mxu0 0
        %2026 = vmatmul.mubr.bf16.gmra.mxu0 %v1906
        %v2027 = vpop.f32.mrf.mxu0
        %v2028 = vadd.f32 %v1943, %v2027
        %v2029 = vpop.f32.mrf.mxu0
        %v2030 = vpop.f32.mrf.mxu0
        %v2031 = vadd.f32 %v1943, %v2030
        %v2032 = vpop.f32.mrf.mxu0
        %2033 = vmatprep.mubr.bf16.mxu0 0
        %2034 = vmatmul.mubr.bf16.gmra.mxu0 %v1907
        %v2035 = vpop.f32.mrf.mxu0
        %v2036 = vadd.f32 %v1943, %v2035
        %v2037 = vpop.f32.mrf.mxu0
        %v2038 = vpop.f32.mrf.mxu0
        %v2039 = vadd.f32 %v1943, %v2038
        %v2040 = vpop.f32.mrf.mxu0
        %2041 = vmatprep.mubr.bf16.mxu0 0
        %2042 = vmatmul.mubr.bf16.gmra.mxu0 %v1908
        %v2043 = vpop.f32.mrf.mxu0
        %v2044 = vadd.f32 %v1943, %v2043
        %v2045 = vpop.f32.mrf.mxu0
        %v2046 = vpop.f32.mrf.mxu0
        %v2047 = vadd.f32 %v1943, %v2046
        %v2048 = vpop.f32.mrf.mxu0
        %2049 = vmatprep.mubr.bf16.mxu0 0
        %2050 = vmatmul.mubr.bf16.gmra.mxu0 %v1909
        %v2051 = vpop.f32.mrf.mxu0
        %v2052 = vadd.f32 %v1943, %v2051
        %v2053 = vpop.f32.mrf.mxu0
        %v2054 = vpop.f32.mrf.mxu0
        %v2055 = vadd.f32 %v1943, %v2054
        %v2056 = vpop.f32.mrf.mxu0
        %2057 = vmatprep.mubr.bf16.mxu0 0
        %2058 = vmatmul.mubr.bf16.gmra.mxu0 %v1910
        %v2059 = vpop.f32.mrf.mxu0
        %v2060 = vadd.f32 %v1943, %v2059
        %v2061 = vpop.f32.mrf.mxu0
        %v2062 = vpop.f32.mrf.mxu0
        %v2063 = vadd.f32 %v1943, %v2062
        %v2064 = vpop.f32.mrf.mxu0
        %2065 = vmatprep.mubr.bf16.mxu0 0
        %2066 = vmatmul.mubr.bf16.gmra.mxu0 %v1911
        %v2067 = vpop.f32.mrf.mxu0
        %v2068 = vadd.f32 %v1943, %v2067
        %v2069 = vpop.f32.mrf.mxu0
        %v2070 = vpop.f32.mrf.mxu0
        %v2071 = vadd.f32 %v1943, %v2070
        %v2072 = vpop.f32.mrf.mxu0
        %2073 = vmatprep.mubr.bf16.mxu0 0
        %2074 = vmatmul.mubr.bf16.gmra.mxu0 %v1912
        %v2075 = vpop.f32.mrf.mxu0
        %v2076 = vadd.f32 %v1943, %v2075
        %v2077 = vpop.f32.mrf.mxu0
        %v2078 = vpop.f32.mrf.mxu0
        %v2079 = vadd.f32 %v1943, %v2078
        %v2080 = vpop.f32.mrf.mxu0
        %2081 = vmatprep.mubr.bf16.mxu0 0
        %2082 = vmatmul.mubr.bf16.gmra.mxu0 %v1913
        %v2083 = vpop.f32.mrf.mxu0
        %v2084 = vadd.f32 %v1943, %v2083
        %v2085 = vpop.f32.mrf.mxu0
        %v2086 = vpop.f32.mrf.mxu0
        %v2087 = vadd.f32 %v1943, %v2086
        %v2088 = vpop.f32.mrf.mxu0
        %2089 = vmatprep.mubr.bf16.mxu0 0
        %2090 = vmatmul.mubr.bf16.gmra.mxu0 %v1914
        %v2091 = vpop.f32.mrf.mxu0
        %v2092 = vadd.f32 %v1943, %v2091
        %v2093 = vpop.f32.mrf.mxu0
        %v2094 = vpop.f32.mrf.mxu0
        %v2095 = vadd.f32 %v1943, %v2094
        %v2096 = vpop.f32.mrf.mxu0
        %2097 = vmatprep.mubr.bf16.mxu0 0
        %2098 = vmatmul.mubr.bf16.gmra.mxu0 %v1915
        %v2099 = vpop.f32.mrf.mxu0
        %v2100 = vadd.f32 %v1943, %v2099
        %v2101 = vpop.f32.mrf.mxu0
        %v2102 = vpop.f32.mrf.mxu0
        %v2103 = vadd.f32 %v1943, %v2102
        %v2104 = vpop.f32.mrf.mxu0
        %2105 = vmatprep.mubr.bf16.mxu0 0
        %2106 = vmatmul.mubr.bf16.gmra.mxu0 %v1916
        %v2107 = vpop.f32.mrf.mxu0
        %v2108 = vadd.f32 %v1943, %v2107
        %v2109 = vpop.f32.mrf.mxu0
        %v2110 = vpop.f32.mrf.mxu0
        %v2111 = vadd.f32 %v1943, %v2110
        %v2112 = vpop.f32.mrf.mxu0
        %2113 = vmatprep.mubr.bf16.mxu0 0
        %2114 = vmatmul.mubr.bf16.gmra.mxu0 %v1917
        %v2115 = vpop.f32.mrf.mxu0
        %v2116 = vadd.f32 %v1943, %v2115
        %v2117 = vpop.f32.mrf.mxu0
        %v2118 = vpop.f32.mrf.mxu0
        %v2119 = vadd.f32 %v1943, %v2118
        %v2120 = vpop.f32.mrf.mxu0
        %2121 = vmatprep.mubr.bf16.mxu0 0
        %2122 = vmatmul.mubr.bf16.gmra.mxu0 %v1918
        %v2123 = vpop.f32.mrf.mxu0
        %v2124 = vadd.f32 %v1943, %v2123
        %v2125 = vpop.f32.mrf.mxu0
        %v2126 = vpop.f32.mrf.mxu0
        %v2127 = vadd.f32 %v1943, %v2126
        %v2128 = vpop.f32.mrf.mxu0
        %2129 = vmatprep.mubr.bf16.mxu0 0
        %2130 = vmatmul.mubr.bf16.gmra.mxu0 %v1919
        %v2131 = vpop.f32.mrf.mxu0
        %v2132 = vadd.f32 %v1943, %v2131
        %v2133 = vpop.f32.mrf.mxu0
        %v2134 = vpop.f32.mrf.mxu0
        %v2135 = vadd.f32 %v1943, %v2134
        %v2136 = vpop.f32.mrf.mxu0
        %2137 = vmatprep.mubr.bf16.mxu0 0
        %2138 = vmatmul.mubr.bf16.gmra.mxu0 %v1920
        %v2139 = vpop.f32.mrf.mxu0
        %v2140 = vadd.f32 %v1943, %v2139
        %v2141 = vpop.f32.mrf.mxu0
        %v2142 = vpop.f32.mrf.mxu0
        %v2143 = vadd.f32 %v1943, %v2142
        %v2144 = vpop.f32.mrf.mxu0
        %2145 = vmatprep.mubr.bf16.mxu0 0
        %2146 = vmatmul.mubr.bf16.gmra.mxu0 %v1921
        %v2147 = vpop.f32.mrf.mxu0
        %v2148 = vadd.f32 %v1943, %v2147
        %v2149 = vpop.f32.mrf.mxu0
        %v2150 = vpop.f32.mrf.mxu0
        %v2151 = vadd.f32 %v1943, %v2150
        %v2152 = vpop.f32.mrf.mxu0
        %2153 = vmatprep.mubr.bf16.mxu0 0
        %2154 = vmatmul.mubr.bf16.gmra.mxu0 %v1922
        %v2155 = vpop.f32.mrf.mxu0
        %v2156 = vadd.f32 %v1943, %v2155
        %v2157 = vpop.f32.mrf.mxu0
        %v2158 = vpop.f32.mrf.mxu0
        %v2159 = vadd.f32 %v1943, %v2158
        %v2160 = vpop.f32.mrf.mxu0
        %2161 = vmatprep.mubr.bf16.mxu0 0
        %2162 = vmatmul.mubr.bf16.gmra.mxu0 %v1923
        %v2163 = vpop.f32.mrf.mxu0
        %v2164 = vadd.f32 %v1943, %v2163
        %v2165 = vpop.f32.mrf.mxu0
        %v2166 = vpop.f32.mrf.mxu0
        %v2167 = vadd.f32 %v1943, %v2166
        %v2168 = vpop.f32.mrf.mxu0
        %2169 = vmatprep.mubr.bf16.mxu0 0
        %2170 = vmatmul.mubr.bf16.gmra.mxu0 %v1924
        %v2171 = vpop.f32.mrf.mxu0
        %v2172 = vadd.f32 %v1943, %v2171
        %v2173 = vpop.f32.mrf.mxu0
        %v2174 = vpop.f32.mrf.mxu0
        %v2175 = vadd.f32 %v1943, %v2174
        %v2176 = vpop.f32.mrf.mxu0
        %2177 = vmatprep.mubr.bf16.mxu0 0
        %2178 = vmatmul.mubr.bf16.gmra.mxu0 %v1925
        %v2179 = vpop.f32.mrf.mxu0
        %v2180 = vadd.f32 %v1943, %v2179
        %v2181 = vpop.f32.mrf.mxu0
        %v2182 = vpop.f32.mrf.mxu0
        %v2183 = vadd.f32 %v1943, %v2182
        %v2184 = vpop.f32.mrf.mxu0
        %2185 = vmatprep.mubr.bf16.mxu0 0
        %2186 = vmatmul.mubr.bf16.gmra.mxu0 %v1926
        %v2187 = vpop.f32.mrf.mxu0
        %v2188 = vadd.f32 %v1943, %v2187
        %v2189 = vpop.f32.mrf.mxu0
        %v2190 = vpop.f32.mrf.mxu0
        %v2191 = vadd.f32 %v1943, %v2190
        %v2192 = vpop.f32.mrf.mxu0
        %2193 = vmatprep.mubr.bf16.mxu0 0
        %2194 = vmatmul.mubr.bf16.gmra.mxu0 %v1927
        %v2195 = vpop.f32.mrf.mxu0
        %v2196 = vadd.f32 %v1943, %v2195
        %v2197 = vpop.f32.mrf.mxu0
        %v2198 = vpop.f32.mrf.mxu0
        %v2199 = vadd.f32 %v1943, %v2198
        %v2200 = vpop.f32.mrf.mxu0
        %2201 = vmatprep.mubr.bf16.mxu0 0
        %2202 = vmatmul.mubr.bf16.gmra.mxu0 %v1928
        %v2203 = vpop.f32.mrf.mxu0
        %v2204 = vadd.f32 %v1943, %v2203
        %v2205 = vpop.f32.mrf.mxu0
        %v2206 = vpop.f32.mrf.mxu0
        %v2207 = vadd.f32 %v1943, %v2206
        %v2208 = vpop.f32.mrf.mxu0
        %2209 = vmatprep.mubr.bf16.mxu0 0
        %2210 = vmatmul.mubr.bf16.gmra.mxu0 %v1929
        %v2211 = vpop.f32.mrf.mxu0
        %v2212 = vadd.f32 %v1943, %v2211
        %v2213 = vpop.f32.mrf.mxu0
        %v2214 = vpop.f32.mrf.mxu0
        %v2215 = vadd.f32 %v1943, %v2214
        %v2216 = vpop.f32.mrf.mxu0
        %2217 = vmatprep.mubr.bf16.mxu0 0
        %2218 = vmatmul.mubr.bf16.gmra.mxu0 %v1930
        %v2219 = vpop.f32.mrf.mxu0
        %v2220 = vadd.f32 %v1943, %v2219
        %v2221 = vpop.f32.mrf.mxu0
        %v2222 = vpop.f32.mrf.mxu0
        %v2223 = vadd.f32 %v1943, %v2222
        %v2224 = vpop.f32.mrf.mxu0
        %2225 = vmatprep.mubr.bf16.mxu0 0
        %2226 = vmatmul.mubr.bf16.gmra.mxu0 %v1931
        %v2227 = vpop.f32.mrf.mxu0
        %v2228 = vadd.f32 %v1943, %v2227
        %v2229 = vpop.f32.mrf.mxu0
        %v2230 = vpop.f32.mrf.mxu0
        %v2231 = vadd.f32 %v1943, %v2230
        %v2232 = vpop.f32.mrf.mxu0
        %2233 = vmatprep.mubr.bf16.mxu0 0
        %2234 = vmatmul.mubr.bf16.gmra.mxu0 %v1932
        %v2235 = vpop.f32.mrf.mxu0
        %v2236 = vadd.f32 %v1943, %v2235
        %v2237 = vpop.f32.mrf.mxu0
        %v2238 = vpop.f32.mrf.mxu0
        %v2239 = vadd.f32 %v1943, %v2238
        %v2240 = vpop.f32.mrf.mxu0
        %2241 = vmatprep.mubr.bf16.mxu0 0
        %2242 = vmatmul.mubr.bf16.gmra.mxu0 %v1933
        %v2243 = vpop.f32.mrf.mxu0
        %v2244 = vadd.f32 %v1943, %v2243
        %v2245 = vpop.f32.mrf.mxu0
        %v2246 = vpop.f32.mrf.mxu0
        %v2247 = vadd.f32 %v1943, %v2246
        %v2248 = vpop.f32.mrf.mxu0
        %2249 = vmatprep.mubr.bf16.mxu0 0
        %2250 = vmatmul.mubr.bf16.gmra.mxu0 %v1934
        %v2251 = vpop.f32.mrf.mxu0
        %v2252 = vadd.f32 %v1943, %v2251
        %v2253 = vpop.f32.mrf.mxu0
        %v2254 = vpop.f32.mrf.mxu0
        %v2255 = vadd.f32 %v1943, %v2254
        %v2256 = vpop.f32.mrf.mxu0
        %2257 = vmatprep.mubr.bf16.mxu0 0
        %2258 = vmatmul.mubr.bf16.gmra.mxu0 %v1935
        %v2259 = vpop.f32.mrf.mxu0
        %v2260 = vadd.f32 %v1943, %v2259
        %v2261 = vpop.f32.mrf.mxu0
        %v2262 = vpop.f32.mrf.mxu0
        %v2263 = vadd.f32 %v1943, %v2262
        %v2264 = vpop.f32.mrf.mxu0
        %2265 = vmatprep.mubr.bf16.mxu0 0
        %2266 = vmatmul.mubr.bf16.gmra.mxu0 %v1936
        %v2267 = vpop.f32.mrf.mxu0
        %v2268 = vadd.f32 %v1943, %v2267
        %v2269 = vpop.f32.mrf.mxu0
        %v2270 = vpop.f32.mrf.mxu0
        %v2271 = vadd.f32 %v1943, %v2270
        %v2272 = vpop.f32.mrf.mxu0
        %2273 = vmatprep.mubr.bf16.mxu0 0
        %2274 = vmatmul.mubr.bf16.gmra.mxu0 %v1937
        %v2275 = vpop.f32.mrf.mxu0
        %v2276 = vadd.f32 %v1943, %v2275
        %v2277 = vpop.f32.mrf.mxu0
        %v2278 = vpop.f32.mrf.mxu0
        %v2279 = vadd.f32 %v1943, %v2278
        %v2280 = vpop.f32.mrf.mxu0
        %2281 = vdwg.mxu0
        %v2282 = vrot.slane %v2028, 4
        %v2283 = vmax.f32 %v2028, %v2282
        %v2284 = vrot.slane %v2283, 2
        %v2285 = vmax.f32 %v2283, %v2284
        %v2286 = vrot.slane %v2285, 1
        %v2287 = vmax.f32 %v2285, %v2286
        %v2288 = vrot.slane %v2031, 4
        %v2289 = vmax.f32 %v2031, %v2288
        %v2290 = vrot.slane %v2289, 2
        %v2291 = vmax.f32 %v2289, %v2290
        %v2292 = vrot.slane %v2291, 1
        %v2293 = vmax.f32 %v2291, %v2292
        %v2294 = vrot.slane %v2036, 4
        %v2295 = vmax.f32 %v2036, %v2294
        %v2296 = vrot.slane %v2295, 2
        %v2297 = vmax.f32 %v2295, %v2296
        %v2298 = vrot.slane %v2297, 1
        %v2299 = vmax.f32 %v2297, %v2298
        %v2300 = vrot.slane %v2039, 4
        %v2301 = vmax.f32 %v2039, %v2300
        %v2302 = vrot.slane %v2301, 2
        %v2303 = vmax.f32 %v2301, %v2302
        %v2304 = vrot.slane %v2303, 1
        %v2305 = vmax.f32 %v2303, %v2304
        %v2306 = vrot.slane %v2044, 4
        %v2307 = vmax.f32 %v2044, %v2306
        %v2308 = vrot.slane %v2307, 2
        %v2309 = vmax.f32 %v2307, %v2308
        %v2310 = vrot.slane %v2309, 1
        %v2311 = vmax.f32 %v2309, %v2310
        %v2312 = vrot.slane %v2047, 4
        %v2313 = vmax.f32 %v2047, %v2312
        %v2314 = vrot.slane %v2313, 2
        %v2315 = vmax.f32 %v2313, %v2314
        %v2316 = vrot.slane %v2315, 1
        %v2317 = vmax.f32 %v2315, %v2316
        %v2318 = vrot.slane %v2052, 4
        %v2319 = vmax.f32 %v2052, %v2318
        %v2320 = vrot.slane %v2319, 2
        %v2321 = vmax.f32 %v2319, %v2320
        %v2322 = vrot.slane %v2321, 1
        %v2323 = vmax.f32 %v2321, %v2322
        %v2324 = vrot.slane %v2055, 4
        %v2325 = vmax.f32 %v2055, %v2324
        %v2326 = vrot.slane %v2325, 2
        %v2327 = vmax.f32 %v2325, %v2326
        %v2328 = vrot.slane %v2327, 1
        %v2329 = vmax.f32 %v2327, %v2328
        %v2330 = vrot.slane %v2060, 4
        %v2331 = vmax.f32 %v2060, %v2330
        %v2332 = vrot.slane %v2331, 2
        %v2333 = vmax.f32 %v2331, %v2332
        %v2334 = vrot.slane %v2333, 1
        %v2335 = vmax.f32 %v2333, %v2334
        %v2336 = vrot.slane %v2063, 4
        %v2337 = vmax.f32 %v2063, %v2336
        %v2338 = vrot.slane %v2337, 2
        %v2339 = vmax.f32 %v2337, %v2338
        %v2340 = vrot.slane %v2339, 1
        %v2341 = vmax.f32 %v2339, %v2340
        %v2342 = vrot.slane %v2068, 4
        %v2343 = vmax.f32 %v2068, %v2342
        %v2344 = vrot.slane %v2343, 2
        %v2345 = vmax.f32 %v2343, %v2344
        %v2346 = vrot.slane %v2345, 1
        %v2347 = vmax.f32 %v2345, %v2346
        %v2348 = vrot.slane %v2071, 4
        %v2349 = vmax.f32 %v2071, %v2348
        %v2350 = vrot.slane %v2349, 2
        %v2351 = vmax.f32 %v2349, %v2350
        %v2352 = vrot.slane %v2351, 1
        %v2353 = vmax.f32 %v2351, %v2352
        %v2354 = vrot.slane %v2076, 4
        %v2355 = vmax.f32 %v2076, %v2354
        %v2356 = vrot.slane %v2355, 2
        %v2357 = vmax.f32 %v2355, %v2356
        %v2358 = vrot.slane %v2357, 1
        %v2359 = vmax.f32 %v2357, %v2358
        %v2360 = vrot.slane %v2079, 4
        %v2361 = vmax.f32 %v2079, %v2360
        %v2362 = vrot.slane %v2361, 2
        %v2363 = vmax.f32 %v2361, %v2362
        %v2364 = vrot.slane %v2363, 1
        %v2365 = vmax.f32 %v2363, %v2364
        %v2366 = vrot.slane %v2084, 4
        %v2367 = vmax.f32 %v2084, %v2366
        %v2368 = vrot.slane %v2367, 2
        %v2369 = vmax.f32 %v2367, %v2368
        %v2370 = vrot.slane %v2369, 1
        %v2371 = vmax.f32 %v2369, %v2370
        %v2372 = vrot.slane %v2087, 4
        %v2373 = vmax.f32 %v2087, %v2372
        %v2374 = vrot.slane %v2373, 2
        %v2375 = vmax.f32 %v2373, %v2374
        %v2376 = vrot.slane %v2375, 1
        %v2377 = vmax.f32 %v2375, %v2376
        %v2378 = vrot.slane %v2092, 4
        %v2379 = vmax.f32 %v2092, %v2378
        %v2380 = vrot.slane %v2379, 2
        %v2381 = vmax.f32 %v2379, %v2380
        %v2382 = vrot.slane %v2381, 1
        %v2383 = vmax.f32 %v2381, %v2382
        %v2384 = vrot.slane %v2095, 4
        %v2385 = vmax.f32 %v2095, %v2384
        %v2386 = vrot.slane %v2385, 2
        %v2387 = vmax.f32 %v2385, %v2386
        %v2388 = vrot.slane %v2387, 1
        %v2389 = vmax.f32 %v2387, %v2388
        %v2390 = vrot.slane %v2100, 4
        %v2391 = vmax.f32 %v2100, %v2390
        %v2392 = vrot.slane %v2391, 2
        %v2393 = vmax.f32 %v2391, %v2392
        %v2394 = vrot.slane %v2393, 1
        %v2395 = vmax.f32 %v2393, %v2394
        %v2396 = vrot.slane %v2103, 4
        %v2397 = vmax.f32 %v2103, %v2396
        %v2398 = vrot.slane %v2397, 2
        %v2399 = vmax.f32 %v2397, %v2398
        %v2400 = vrot.slane %v2399, 1
        %v2401 = vmax.f32 %v2399, %v2400
        %v2402 = vrot.slane %v2108, 4
        %v2403 = vmax.f32 %v2108, %v2402
        %v2404 = vrot.slane %v2403, 2
        %v2405 = vmax.f32 %v2403, %v2404
        %v2406 = vrot.slane %v2405, 1
        %v2407 = vmax.f32 %v2405, %v2406
        %v2408 = vrot.slane %v2111, 4
        %v2409 = vmax.f32 %v2111, %v2408
        %v2410 = vrot.slane %v2409, 2
        %v2411 = vmax.f32 %v2409, %v2410
        %v2412 = vrot.slane %v2411, 1
        %v2413 = vmax.f32 %v2411, %v2412
        %v2414 = vrot.slane %v2116, 4
        %v2415 = vmax.f32 %v2116, %v2414
        %v2416 = vrot.slane %v2415, 2
        %v2417 = vmax.f32 %v2415, %v2416
        %v2418 = vrot.slane %v2417, 1
        %v2419 = vmax.f32 %v2417, %v2418
        %v2420 = vrot.slane %v2119, 4
        %v2421 = vmax.f32 %v2119, %v2420
        %v2422 = vrot.slane %v2421, 2
        %v2423 = vmax.f32 %v2421, %v2422
        %v2424 = vrot.slane %v2423, 1
        %v2425 = vmax.f32 %v2423, %v2424
        %v2426 = vrot.slane %v2124, 4
        %v2427 = vmax.f32 %v2124, %v2426
        %v2428 = vrot.slane %v2427, 2
        %v2429 = vmax.f32 %v2427, %v2428
        %v2430 = vrot.slane %v2429, 1
        %v2431 = vmax.f32 %v2429, %v2430
        %v2432 = vrot.slane %v2127, 4
        %v2433 = vmax.f32 %v2127, %v2432
        %v2434 = vrot.slane %v2433, 2
        %v2435 = vmax.f32 %v2433, %v2434
        %v2436 = vrot.slane %v2435, 1
        %v2437 = vmax.f32 %v2435, %v2436
        %v2438 = vrot.slane %v2132, 4
        %v2439 = vmax.f32 %v2132, %v2438
        %v2440 = vrot.slane %v2439, 2
        %v2441 = vmax.f32 %v2439, %v2440
        %v2442 = vrot.slane %v2441, 1
        %v2443 = vmax.f32 %v2441, %v2442
        %v2444 = vrot.slane %v2135, 4
        %v2445 = vmax.f32 %v2135, %v2444
        %v2446 = vrot.slane %v2445, 2
        %v2447 = vmax.f32 %v2445, %v2446
        %v2448 = vrot.slane %v2447, 1
        %v2449 = vmax.f32 %v2447, %v2448
        %v2450 = vrot.slane %v2140, 4
        %v2451 = vmax.f32 %v2140, %v2450
        %v2452 = vrot.slane %v2451, 2
        %v2453 = vmax.f32 %v2451, %v2452
        %v2454 = vrot.slane %v2453, 1
        %v2455 = vmax.f32 %v2453, %v2454
        %v2456 = vrot.slane %v2143, 4
        %v2457 = vmax.f32 %v2143, %v2456
        %v2458 = vrot.slane %v2457, 2
        %v2459 = vmax.f32 %v2457, %v2458
        %v2460 = vrot.slane %v2459, 1
        %v2461 = vmax.f32 %v2459, %v2460
        %v2462 = vrot.slane %v2148, 4
        %v2463 = vmax.f32 %v2148, %v2462
        %v2464 = vrot.slane %v2463, 2
        %v2465 = vmax.f32 %v2463, %v2464
        %v2466 = vrot.slane %v2465, 1
        %v2467 = vmax.f32 %v2465, %v2466
        %v2468 = vrot.slane %v2151, 4
        %v2469 = vmax.f32 %v2151, %v2468
        %v2470 = vrot.slane %v2469, 2
        %v2471 = vmax.f32 %v2469, %v2470
        %v2472 = vrot.slane %v2471, 1
        %v2473 = vmax.f32 %v2471, %v2472
        %v2474 = vrot.slane %v2156, 4
        %v2475 = vmax.f32 %v2156, %v2474
        %v2476 = vrot.slane %v2475, 2
        %v2477 = vmax.f32 %v2475, %v2476
        %v2478 = vrot.slane %v2477, 1
        %v2479 = vmax.f32 %v2477, %v2478
        %v2480 = vrot.slane %v2159, 4
        %v2481 = vmax.f32 %v2159, %v2480
        %v2482 = vrot.slane %v2481, 2
        %v2483 = vmax.f32 %v2481, %v2482
        %v2484 = vrot.slane %v2483, 1
        %v2485 = vmax.f32 %v2483, %v2484
        %v2486 = vrot.slane %v2164, 4
        %v2487 = vmax.f32 %v2164, %v2486
        %v2488 = vrot.slane %v2487, 2
        %v2489 = vmax.f32 %v2487, %v2488
        %v2490 = vrot.slane %v2489, 1
        %v2491 = vmax.f32 %v2489, %v2490
        %v2492 = vrot.slane %v2167, 4
        %v2493 = vmax.f32 %v2167, %v2492
        %v2494 = vrot.slane %v2493, 2
        %v2495 = vmax.f32 %v2493, %v2494
        %v2496 = vrot.slane %v2495, 1
        %v2497 = vmax.f32 %v2495, %v2496
        %v2498 = vrot.slane %v2172, 4
        %v2499 = vmax.f32 %v2172, %v2498
        %v2500 = vrot.slane %v2499, 2
        %v2501 = vmax.f32 %v2499, %v2500
        %v2502 = vrot.slane %v2501, 1
        %v2503 = vmax.f32 %v2501, %v2502
        %v2504 = vrot.slane %v2175, 4
        %v2505 = vmax.f32 %v2175, %v2504
        %v2506 = vrot.slane %v2505, 2
        %v2507 = vmax.f32 %v2505, %v2506
        %v2508 = vrot.slane %v2507, 1
        %v2509 = vmax.f32 %v2507, %v2508
        %v2510 = vrot.slane %v2180, 4
        %v2511 = vmax.f32 %v2180, %v2510
        %v2512 = vrot.slane %v2511, 2
        %v2513 = vmax.f32 %v2511, %v2512
        %v2514 = vrot.slane %v2513, 1
        %v2515 = vmax.f32 %v2513, %v2514
        %v2516 = vrot.slane %v2183, 4
        %v2517 = vmax.f32 %v2183, %v2516
        %v2518 = vrot.slane %v2517, 2
        %v2519 = vmax.f32 %v2517, %v2518
        %v2520 = vrot.slane %v2519, 1
        %v2521 = vmax.f32 %v2519, %v2520
        %v2522 = vrot.slane %v2188, 4
        %v2523 = vmax.f32 %v2188, %v2522
        %v2524 = vrot.slane %v2523, 2
        %v2525 = vmax.f32 %v2523, %v2524
        %v2526 = vrot.slane %v2525, 1
        %v2527 = vmax.f32 %v2525, %v2526
        %v2528 = vrot.slane %v2191, 4
        %v2529 = vmax.f32 %v2191, %v2528
        %v2530 = vrot.slane %v2529, 2
        %v2531 = vmax.f32 %v2529, %v2530
        %v2532 = vrot.slane %v2531, 1
        %v2533 = vmax.f32 %v2531, %v2532
        %v2534 = vrot.slane %v2196, 4
        %v2535 = vmax.f32 %v2196, %v2534
        %v2536 = vrot.slane %v2535, 2
        %v2537 = vmax.f32 %v2535, %v2536
        %v2538 = vrot.slane %v2537, 1
        %v2539 = vmax.f32 %v2537, %v2538
        %v2540 = vrot.slane %v2199, 4
        %v2541 = vmax.f32 %v2199, %v2540
        %v2542 = vrot.slane %v2541, 2
        %v2543 = vmax.f32 %v2541, %v2542
        %v2544 = vrot.slane %v2543, 1
        %v2545 = vmax.f32 %v2543, %v2544
        %v2546 = vrot.slane %v2204, 4
        %v2547 = vmax.f32 %v2204, %v2546
        %v2548 = vrot.slane %v2547, 2
        %v2549 = vmax.f32 %v2547, %v2548
        %v2550 = vrot.slane %v2549, 1
        %v2551 = vmax.f32 %v2549, %v2550
        %v2552 = vrot.slane %v2207, 4
        %v2553 = vmax.f32 %v2207, %v2552
        %v2554 = vrot.slane %v2553, 2
        %v2555 = vmax.f32 %v2553, %v2554
        %v2556 = vrot.slane %v2555, 1
        %v2557 = vmax.f32 %v2555, %v2556
        %v2558 = vrot.slane %v2212, 4
        %v2559 = vmax.f32 %v2212, %v2558
        %v2560 = vrot.slane %v2559, 2
        %v2561 = vmax.f32 %v2559, %v2560
        %v2562 = vrot.slane %v2561, 1
        %v2563 = vmax.f32 %v2561, %v2562
        %v2564 = vrot.slane %v2215, 4
        %v2565 = vmax.f32 %v2215, %v2564
        %v2566 = vrot.slane %v2565, 2
        %v2567 = vmax.f32 %v2565, %v2566
        %v2568 = vrot.slane %v2567, 1
        %v2569 = vmax.f32 %v2567, %v2568
        %v2570 = vrot.slane %v2220, 4
        %v2571 = vmax.f32 %v2220, %v2570
        %v2572 = vrot.slane %v2571, 2
        %v2573 = vmax.f32 %v2571, %v2572
        %v2574 = vrot.slane %v2573, 1
        %v2575 = vmax.f32 %v2573, %v2574
        %v2576 = vrot.slane %v2223, 4
        %v2577 = vmax.f32 %v2223, %v2576
        %v2578 = vrot.slane %v2577, 2
        %v2579 = vmax.f32 %v2577, %v2578
        %v2580 = vrot.slane %v2579, 1
        %v2581 = vmax.f32 %v2579, %v2580
        %v2582 = vrot.slane %v2228, 4
        %v2583 = vmax.f32 %v2228, %v2582
        %v2584 = vrot.slane %v2583, 2
        %v2585 = vmax.f32 %v2583, %v2584
        %v2586 = vrot.slane %v2585, 1
        %v2587 = vmax.f32 %v2585, %v2586
        %v2588 = vrot.slane %v2231, 4
        %v2589 = vmax.f32 %v2231, %v2588
        %v2590 = vrot.slane %v2589, 2
        %v2591 = vmax.f32 %v2589, %v2590
        %v2592 = vrot.slane %v2591, 1
        %v2593 = vmax.f32 %v2591, %v2592
        %v2594 = vrot.slane %v2236, 4
        %v2595 = vmax.f32 %v2236, %v2594
        %v2596 = vrot.slane %v2595, 2
        %v2597 = vmax.f32 %v2595, %v2596
        %v2598 = vrot.slane %v2597, 1
        %v2599 = vmax.f32 %v2597, %v2598
        %v2600 = vrot.slane %v2239, 4
        %v2601 = vmax.f32 %v2239, %v2600
        %v2602 = vrot.slane %v2601, 2
        %v2603 = vmax.f32 %v2601, %v2602
        %v2604 = vrot.slane %v2603, 1
        %v2605 = vmax.f32 %v2603, %v2604
        %v2606 = vrot.slane %v2244, 4
        %v2607 = vmax.f32 %v2244, %v2606
        %v2608 = vrot.slane %v2607, 2
        %v2609 = vmax.f32 %v2607, %v2608
        %v2610 = vrot.slane %v2609, 1
        %v2611 = vmax.f32 %v2609, %v2610
        %v2612 = vrot.slane %v2247, 4
        %v2613 = vmax.f32 %v2247, %v2612
        %v2614 = vrot.slane %v2613, 2
        %v2615 = vmax.f32 %v2613, %v2614
        %v2616 = vrot.slane %v2615, 1
        %v2617 = vmax.f32 %v2615, %v2616
        %v2618 = vrot.slane %v2252, 4
        %v2619 = vmax.f32 %v2252, %v2618
        %v2620 = vrot.slane %v2619, 2
        %v2621 = vmax.f32 %v2619, %v2620
        %v2622 = vrot.slane %v2621, 1
        %v2623 = vmax.f32 %v2621, %v2622
        %v2624 = vrot.slane %v2255, 4
        %v2625 = vmax.f32 %v2255, %v2624
        %v2626 = vrot.slane %v2625, 2
        %v2627 = vmax.f32 %v2625, %v2626
        %v2628 = vrot.slane %v2627, 1
        %v2629 = vmax.f32 %v2627, %v2628
        %v2630 = vrot.slane %v2260, 4
        %v2631 = vmax.f32 %v2260, %v2630
        %v2632 = vrot.slane %v2631, 2
        %v2633 = vmax.f32 %v2631, %v2632
        %v2634 = vrot.slane %v2633, 1
        %v2635 = vmax.f32 %v2633, %v2634
        %v2636 = vrot.slane %v2263, 4
        %v2637 = vmax.f32 %v2263, %v2636
        %v2638 = vrot.slane %v2637, 2
        %v2639 = vmax.f32 %v2637, %v2638
        %v2640 = vrot.slane %v2639, 1
        %v2641 = vmax.f32 %v2639, %v2640
        %v2642 = vrot.slane %v2268, 4
        %v2643 = vmax.f32 %v2268, %v2642
        %v2644 = vrot.slane %v2643, 2
        %v2645 = vmax.f32 %v2643, %v2644
        %v2646 = vrot.slane %v2645, 1
        %v2647 = vmax.f32 %v2645, %v2646
        %v2648 = vrot.slane %v2271, 4
        %v2649 = vmax.f32 %v2271, %v2648
        %v2650 = vrot.slane %v2649, 2
        %v2651 = vmax.f32 %v2649, %v2650
        %v2652 = vrot.slane %v2651, 1
        %v2653 = vmax.f32 %v2651, %v2652
        %v2654 = vrot.slane %v2276, 4
        %v2655 = vmax.f32 %v2276, %v2654
        %v2656 = vrot.slane %v2655, 2
        %v2657 = vmax.f32 %v2655, %v2656
        %v2658 = vrot.slane %v2657, 1
        %v2659 = vmax.f32 %v2657, %v2658
        %v2660 = vrot.slane %v2279, 4
        %v2661 = vmax.f32 %v2279, %v2660
        %v2662 = vrot.slane %v2661, 2
        %v2663 = vmax.f32 %v2661, %v2662
        %v2664 = vrot.slane %v2663, 1
        %v2665 = vmax.f32 %v2663, %v2664
        %v2666 = vsub.f32 %v2028, %v2287
        %v2667 = vsub.f32 %v2031, %v2293
        %v2668 = vsub.f32 %v2036, %v2299
        %v2669 = vsub.f32 %v2039, %v2305
        %v2670 = vsub.f32 %v2044, %v2311
        %v2671 = vsub.f32 %v2047, %v2317
        %v2672 = vsub.f32 %v2052, %v2323
        %v2673 = vsub.f32 %v2055, %v2329
        %v2674 = vsub.f32 %v2060, %v2335
        %v2675 = vsub.f32 %v2063, %v2341
        %v2676 = vsub.f32 %v2068, %v2347
        %v2677 = vsub.f32 %v2071, %v2353
        %v2678 = vsub.f32 %v2076, %v2359
        %v2679 = vsub.f32 %v2079, %v2365
        %v2680 = vsub.f32 %v2084, %v2371
        %v2681 = vsub.f32 %v2087, %v2377
        %v2682 = vsub.f32 %v2092, %v2383
        %v2683 = vsub.f32 %v2095, %v2389
        %v2684 = vsub.f32 %v2100, %v2395
        %v2685 = vsub.f32 %v2103, %v2401
        %v2686 = vsub.f32 %v2108, %v2407
        %v2687 = vsub.f32 %v2111, %v2413
        %v2688 = vsub.f32 %v2116, %v2419
        %v2689 = vsub.f32 %v2119, %v2425
        %v2690 = vsub.f32 %v2124, %v2431
        %v2691 = vsub.f32 %v2127, %v2437
        %v2692 = vsub.f32 %v2132, %v2443
        %v2693 = vsub.f32 %v2135, %v2449
        %v2694 = vsub.f32 %v2140, %v2455
        %v2695 = vsub.f32 %v2143, %v2461
        %v2696 = vsub.f32 %v2148, %v2467
        %v2697 = vsub.f32 %v2151, %v2473
        %v2698 = vsub.f32 %v2156, %v2479
        %v2699 = vsub.f32 %v2159, %v2485
        %v2700 = vsub.f32 %v2164, %v2491
        %v2701 = vsub.f32 %v2167, %v2497
        %v2702 = vsub.f32 %v2172, %v2503
        %v2703 = vsub.f32 %v2175, %v2509
        %v2704 = vsub.f32 %v2180, %v2515
        %v2705 = vsub.f32 %v2183, %v2521
        %v2706 = vsub.f32 %v2188, %v2527
        %v2707 = vsub.f32 %v2191, %v2533
        %v2708 = vsub.f32 %v2196, %v2539
        %v2709 = vsub.f32 %v2199, %v2545
        %v2710 = vsub.f32 %v2204, %v2551
        %v2711 = vsub.f32 %v2207, %v2557
        %v2712 = vsub.f32 %v2212, %v2563
        %v2713 = vsub.f32 %v2215, %v2569
        %v2714 = vsub.f32 %v2220, %v2575
        %v2715 = vsub.f32 %v2223, %v2581
        %v2716 = vsub.f32 %v2228, %v2587
        %v2717 = vsub.f32 %v2231, %v2593
        %v2718 = vsub.f32 %v2236, %v2599
        %v2719 = vsub.f32 %v2239, %v2605
        %v2720 = vsub.f32 %v2244, %v2611
        %v2721 = vsub.f32 %v2247, %v2617
        %v2722 = vsub.f32 %v2252, %v2623
        %v2723 = vsub.f32 %v2255, %v2629
        %v2724 = vsub.f32 %v2260, %v2635
        %v2725 = vsub.f32 %v2263, %v2641
        %v2726 = vsub.f32 %v2268, %v2647
        %v2727 = vsub.f32 %v2271, %v2653
        %v2728 = vsub.f32 %v2276, %v2659
        %v2729 = vsub.f32 %v2279, %v2665
        %v2730 = vmul.f32 %v2666, 1.442695
        %v2731 = vpow.pop %v2730
        %v2732 = vmul.f32 %v2667, 1.442695
        %v2733 = vpow.pop %v2732
        %v2734 = vmul.f32 %v2668, 1.442695
        %v2735 = vpow.pop %v2734
        %v2736 = vmul.f32 %v2669, 1.442695
        %v2737 = vpow.pop %v2736
        %v2738 = vmul.f32 %v2670, 1.442695
        %v2739 = vpow.pop %v2738
        %v2740 = vmul.f32 %v2671, 1.442695
        %v2741 = vpow.pop %v2740
        %v2742 = vmul.f32 %v2672, 1.442695
        %v2743 = vpow.pop %v2742
        %v2744 = vmul.f32 %v2673, 1.442695
        %v2745 = vpow.pop %v2744
        %v2746 = vmul.f32 %v2674, 1.442695
        %v2747 = vpow.pop %v2746
        %v2748 = vmul.f32 %v2675, 1.442695
        %v2749 = vpow.pop %v2748
        %v2750 = vmul.f32 %v2676, 1.442695
        %v2751 = vpow.pop %v2750
        %v2752 = vmul.f32 %v2677, 1.442695
        %v2753 = vpow.pop %v2752
        %v2754 = vmul.f32 %v2678, 1.442695
        %v2755 = vpow.pop %v2754
        %v2756 = vmul.f32 %v2679, 1.442695
        %v2757 = vpow.pop %v2756
        %v2758 = vmul.f32 %v2680, 1.442695
        %v2759 = vpow.pop %v2758
        %v2760 = vmul.f32 %v2681, 1.442695
        %v2761 = vpow.pop %v2760
        %v2762 = vmul.f32 %v2682, 1.442695
        %v2763 = vpow.pop %v2762
        %v2764 = vmul.f32 %v2683, 1.442695
        %v2765 = vpow.pop %v2764
        %v2766 = vmul.f32 %v2684, 1.442695
        %v2767 = vpow.pop %v2766
        %v2768 = vmul.f32 %v2685, 1.442695
        %v2769 = vpow.pop %v2768
        %v2770 = vmul.f32 %v2686, 1.442695
        %v2771 = vpow.pop %v2770
        %v2772 = vmul.f32 %v2687, 1.442695
        %v2773 = vpow.pop %v2772
        %v2774 = vmul.f32 %v2688, 1.442695
        %v2775 = vpow.pop %v2774
        %v2776 = vmul.f32 %v2689, 1.442695
        %v2777 = vpow.pop %v2776
        %v2778 = vmul.f32 %v2690, 1.442695
        %v2779 = vpow.pop %v2778
        %v2780 = vmul.f32 %v2691, 1.442695
        %v2781 = vpow.pop %v2780
        %v2782 = vmul.f32 %v2692, 1.442695
        %v2783 = vpow.pop %v2782
        %v2784 = vmul.f32 %v2693, 1.442695
        %v2785 = vpow.pop %v2784
        %v2786 = vmul.f32 %v2694, 1.442695
        %v2787 = vpow.pop %v2786
        %v2788 = vmul.f32 %v2695, 1.442695
        %v2789 = vpow.pop %v2788
        %v2790 = vmul.f32 %v2696, 1.442695
        %v2791 = vpow.pop %v2790
        %v2792 = vmul.f32 %v2697, 1.442695
        %v2793 = vpow.pop %v2792
        %v2794 = vmul.f32 %v2698, 1.442695
        %v2795 = vpow.pop %v2794
        %v2796 = vmul.f32 %v2699, 1.442695
        %v2797 = vpow.pop %v2796
        %v2798 = vmul.f32 %v2700, 1.442695
        %v2799 = vpow.pop %v2798
        %v2800 = vmul.f32 %v2701, 1.442695
        %v2801 = vpow.pop %v2800
        %v2802 = vmul.f32 %v2702, 1.442695
        %v2803 = vpow.pop %v2802
        %v2804 = vmul.f32 %v2703, 1.442695
        %v2805 = vpow.pop %v2804
        %v2806 = vmul.f32 %v2704, 1.442695
        %v2807 = vpow.pop %v2806
        %v2808 = vmul.f32 %v2705, 1.442695
        %v2809 = vpow.pop %v2808
        %v2810 = vmul.f32 %v2706, 1.442695
        %v2811 = vpow.pop %v2810
        %v2812 = vmul.f32 %v2707, 1.442695
        %v2813 = vpow.pop %v2812
        %v2814 = vmul.f32 %v2708, 1.442695
        %v2815 = vpow.pop %v2814
        %v2816 = vmul.f32 %v2709, 1.442695
        %v2817 = vpow.pop %v2816
        %v2818 = vmul.f32 %v2710, 1.442695
        %v2819 = vpow.pop %v2818
        %v2820 = vmul.f32 %v2711, 1.442695
        %v2821 = vpow.pop %v2820
        %v2822 = vmul.f32 %v2712, 1.442695
        %v2823 = vpow.pop %v2822
        %v2824 = vmul.f32 %v2713, 1.442695
        %v2825 = vpow.pop %v2824
        %v2826 = vmul.f32 %v2714, 1.442695
        %v2827 = vpow.pop %v2826
        %v2828 = vmul.f32 %v2715, 1.442695
        %v2829 = vpow.pop %v2828
        %v2830 = vmul.f32 %v2716, 1.442695
        %v2831 = vpow.pop %v2830
        %v2832 = vmul.f32 %v2717, 1.442695
        %v2833 = vpow.pop %v2832
        %v2834 = vmul.f32 %v2718, 1.442695
        %v2835 = vpow.pop %v2834
        %v2836 = vmul.f32 %v2719, 1.442695
        %v2837 = vpow.pop %v2836
        %v2838 = vmul.f32 %v2720, 1.442695
        %v2839 = vpow.pop %v2838
        %v2840 = vmul.f32 %v2721, 1.442695
        %v2841 = vpow.pop %v2840
        %v2842 = vmul.f32 %v2722, 1.442695
        %v2843 = vpow.pop %v2842
        %v2844 = vmul.f32 %v2723, 1.442695
        %v2845 = vpow.pop %v2844
        %v2846 = vmul.f32 %v2724, 1.442695
        %v2847 = vpow.pop %v2846
        %v2848 = vmul.f32 %v2725, 1.442695
        %v2849 = vpow.pop %v2848
        %v2850 = vmul.f32 %v2726, 1.442695
        %v2851 = vpow.pop %v2850
        %v2852 = vmul.f32 %v2727, 1.442695
        %v2853 = vpow.pop %v2852
        %v2854 = vmul.f32 %v2728, 1.442695
        %v2855 = vpow.pop %v2854
        %v2856 = vmul.f32 %v2729, 1.442695
        %v2857 = vpow.pop %v2856
        %v2858 = vrot.slane %v2731, 4
        %v2859 = vadd.f32 %v2731, %v2858
        %v2860 = vrot.slane %v2859, 2
        %v2861 = vadd.f32 %v2859, %v2860
        %v2862 = vrot.slane %v2861, 1
        %v2863 = vadd.f32 %v2861, %v2862
        %v2864 = vrot.slane %v2733, 4
        %v2865 = vadd.f32 %v2733, %v2864
        %v2866 = vrot.slane %v2865, 2
        %v2867 = vadd.f32 %v2865, %v2866
        %v2868 = vrot.slane %v2867, 1
        %v2869 = vadd.f32 %v2867, %v2868
        %v2870 = vrot.slane %v2735, 4
        %v2871 = vadd.f32 %v2735, %v2870
        %v2872 = vrot.slane %v2871, 2
        %v2873 = vadd.f32 %v2871, %v2872
        %v2874 = vrot.slane %v2873, 1
        %v2875 = vadd.f32 %v2873, %v2874
        %v2876 = vrot.slane %v2737, 4
        %v2877 = vadd.f32 %v2737, %v2876
        %v2878 = vrot.slane %v2877, 2
        %v2879 = vadd.f32 %v2877, %v2878
        %v2880 = vrot.slane %v2879, 1
        %v2881 = vadd.f32 %v2879, %v2880
        %v2882 = vrot.slane %v2739, 4
        %v2883 = vadd.f32 %v2739, %v2882
        %v2884 = vrot.slane %v2883, 2
        %v2885 = vadd.f32 %v2883, %v2884
        %v2886 = vrot.slane %v2885, 1
        %v2887 = vadd.f32 %v2885, %v2886
        %v2888 = vrot.slane %v2741, 4
        %v2889 = vadd.f32 %v2741, %v2888
        %v2890 = vrot.slane %v2889, 2
        %v2891 = vadd.f32 %v2889, %v2890
        %v2892 = vrot.slane %v2891, 1
        %v2893 = vadd.f32 %v2891, %v2892
        %v2894 = vrot.slane %v2743, 4
        %v2895 = vadd.f32 %v2743, %v2894
        %v2896 = vrot.slane %v2895, 2
        %v2897 = vadd.f32 %v2895, %v2896
        %v2898 = vrot.slane %v2897, 1
        %v2899 = vadd.f32 %v2897, %v2898
        %v2900 = vrot.slane %v2745, 4
        %v2901 = vadd.f32 %v2745, %v2900
        %v2902 = vrot.slane %v2901, 2
        %v2903 = vadd.f32 %v2901, %v2902
        %v2904 = vrot.slane %v2903, 1
        %v2905 = vadd.f32 %v2903, %v2904
        %v2906 = vrot.slane %v2747, 4
        %v2907 = vadd.f32 %v2747, %v2906
        %v2908 = vrot.slane %v2907, 2
        %v2909 = vadd.f32 %v2907, %v2908
        %v2910 = vrot.slane %v2909, 1
        %v2911 = vadd.f32 %v2909, %v2910
        %v2912 = vrot.slane %v2749, 4
        %v2913 = vadd.f32 %v2749, %v2912
        %v2914 = vrot.slane %v2913, 2
        %v2915 = vadd.f32 %v2913, %v2914
        %v2916 = vrot.slane %v2915, 1
        %v2917 = vadd.f32 %v2915, %v2916
        %v2918 = vrot.slane %v2751, 4
        %v2919 = vadd.f32 %v2751, %v2918
        %v2920 = vrot.slane %v2919, 2
        %v2921 = vadd.f32 %v2919, %v2920
        %v2922 = vrot.slane %v2921, 1
        %v2923 = vadd.f32 %v2921, %v2922
        %v2924 = vrot.slane %v2753, 4
        %v2925 = vadd.f32 %v2753, %v2924
        %v2926 = vrot.slane %v2925, 2
        %v2927 = vadd.f32 %v2925, %v2926
        %v2928 = vrot.slane %v2927, 1
        %v2929 = vadd.f32 %v2927, %v2928
        %v2930 = vrot.slane %v2755, 4
        %v2931 = vadd.f32 %v2755, %v2930
        %v2932 = vrot.slane %v2931, 2
        %v2933 = vadd.f32 %v2931, %v2932
        %v2934 = vrot.slane %v2933, 1
        %v2935 = vadd.f32 %v2933, %v2934
        %v2936 = vrot.slane %v2757, 4
        %v2937 = vadd.f32 %v2757, %v2936
        %v2938 = vrot.slane %v2937, 2
        %v2939 = vadd.f32 %v2937, %v2938
        %v2940 = vrot.slane %v2939, 1
        %v2941 = vadd.f32 %v2939, %v2940
        %v2942 = vrot.slane %v2759, 4
        %v2943 = vadd.f32 %v2759, %v2942
        %v2944 = vrot.slane %v2943, 2
        %v2945 = vadd.f32 %v2943, %v2944
        %v2946 = vrot.slane %v2945, 1
        %v2947 = vadd.f32 %v2945, %v2946
        %v2948 = vrot.slane %v2761, 4
        %v2949 = vadd.f32 %v2761, %v2948
        %v2950 = vrot.slane %v2949, 2
        %v2951 = vadd.f32 %v2949, %v2950
        %v2952 = vrot.slane %v2951, 1
        %v2953 = vadd.f32 %v2951, %v2952
        %v2954 = vrot.slane %v2763, 4
        %v2955 = vadd.f32 %v2763, %v2954
        %v2956 = vrot.slane %v2955, 2
        %v2957 = vadd.f32 %v2955, %v2956
        %v2958 = vrot.slane %v2957, 1
        %v2959 = vadd.f32 %v2957, %v2958
        %v2960 = vrot.slane %v2765, 4
        %v2961 = vadd.f32 %v2765, %v2960
        %v2962 = vrot.slane %v2961, 2
        %v2963 = vadd.f32 %v2961, %v2962
        %v2964 = vrot.slane %v2963, 1
        %v2965 = vadd.f32 %v2963, %v2964
        %v2966 = vrot.slane %v2767, 4
        %v2967 = vadd.f32 %v2767, %v2966
        %v2968 = vrot.slane %v2967, 2
        %v2969 = vadd.f32 %v2967, %v2968
        %v2970 = vrot.slane %v2969, 1
        %v2971 = vadd.f32 %v2969, %v2970
        %v2972 = vrot.slane %v2769, 4
        %v2973 = vadd.f32 %v2769, %v2972
        %v2974 = vrot.slane %v2973, 2
        %v2975 = vadd.f32 %v2973, %v2974
        %v2976 = vrot.slane %v2975, 1
        %v2977 = vadd.f32 %v2975, %v2976
        %v2978 = vrot.slane %v2771, 4
        %v2979 = vadd.f32 %v2771, %v2978
        %v2980 = vrot.slane %v2979, 2
        %v2981 = vadd.f32 %v2979, %v2980
        %v2982 = vrot.slane %v2981, 1
        %v2983 = vadd.f32 %v2981, %v2982
        %v2984 = vrot.slane %v2773, 4
        %v2985 = vadd.f32 %v2773, %v2984
        %v2986 = vrot.slane %v2985, 2
        %v2987 = vadd.f32 %v2985, %v2986
        %v2988 = vrot.slane %v2987, 1
        %v2989 = vadd.f32 %v2987, %v2988
        %v2990 = vrot.slane %v2775, 4
        %v2991 = vadd.f32 %v2775, %v2990
        %v2992 = vrot.slane %v2991, 2
        %v2993 = vadd.f32 %v2991, %v2992
        %v2994 = vrot.slane %v2993, 1
        %v2995 = vadd.f32 %v2993, %v2994
        %v2996 = vrot.slane %v2777, 4
        %v2997 = vadd.f32 %v2777, %v2996
        %v2998 = vrot.slane %v2997, 2
        %v2999 = vadd.f32 %v2997, %v2998
        %v3000 = vrot.slane %v2999, 1
        %v3001 = vadd.f32 %v2999, %v3000
        %v3002 = vrot.slane %v2779, 4
        %v3003 = vadd.f32 %v2779, %v3002
        %v3004 = vrot.slane %v3003, 2
        %v3005 = vadd.f32 %v3003, %v3004
        %v3006 = vrot.slane %v3005, 1
        %v3007 = vadd.f32 %v3005, %v3006
        %v3008 = vrot.slane %v2781, 4
        %v3009 = vadd.f32 %v2781, %v3008
        %v3010 = vrot.slane %v3009, 2
        %v3011 = vadd.f32 %v3009, %v3010
        %v3012 = vrot.slane %v3011, 1
        %v3013 = vadd.f32 %v3011, %v3012
        %v3014 = vrot.slane %v2783, 4
        %v3015 = vadd.f32 %v2783, %v3014
        %v3016 = vrot.slane %v3015, 2
        %v3017 = vadd.f32 %v3015, %v3016
        %v3018 = vrot.slane %v3017, 1
        %v3019 = vadd.f32 %v3017, %v3018
        %v3020 = vrot.slane %v2785, 4
        %v3021 = vadd.f32 %v2785, %v3020
        %v3022 = vrot.slane %v3021, 2
        %v3023 = vadd.f32 %v3021, %v3022
        %v3024 = vrot.slane %v3023, 1
        %v3025 = vadd.f32 %v3023, %v3024
        %v3026 = vrot.slane %v2787, 4
        %v3027 = vadd.f32 %v2787, %v3026
        %v3028 = vrot.slane %v3027, 2
        %v3029 = vadd.f32 %v3027, %v3028
        %v3030 = vrot.slane %v3029, 1
        %v3031 = vadd.f32 %v3029, %v3030
        %v3032 = vrot.slane %v2789, 4
        %v3033 = vadd.f32 %v2789, %v3032
        %v3034 = vrot.slane %v3033, 2
        %v3035 = vadd.f32 %v3033, %v3034
        %v3036 = vrot.slane %v3035, 1
        %v3037 = vadd.f32 %v3035, %v3036
        %v3038 = vrot.slane %v2791, 4
        %v3039 = vadd.f32 %v2791, %v3038
        %v3040 = vrot.slane %v3039, 2
        %v3041 = vadd.f32 %v3039, %v3040
        %v3042 = vrot.slane %v3041, 1
        %v3043 = vadd.f32 %v3041, %v3042
        %v3044 = vrot.slane %v2793, 4
        %v3045 = vadd.f32 %v2793, %v3044
        %v3046 = vrot.slane %v3045, 2
        %v3047 = vadd.f32 %v3045, %v3046
        %v3048 = vrot.slane %v3047, 1
        %v3049 = vadd.f32 %v3047, %v3048
        %v3050 = vrot.slane %v2795, 4
        %v3051 = vadd.f32 %v2795, %v3050
        %v3052 = vrot.slane %v3051, 2
        %v3053 = vadd.f32 %v3051, %v3052
        %v3054 = vrot.slane %v3053, 1
        %v3055 = vadd.f32 %v3053, %v3054
        %v3056 = vrot.slane %v2797, 4
        %v3057 = vadd.f32 %v2797, %v3056
        %v3058 = vrot.slane %v3057, 2
        %v3059 = vadd.f32 %v3057, %v3058
        %v3060 = vrot.slane %v3059, 1
        %v3061 = vadd.f32 %v3059, %v3060
        %v3062 = vrot.slane %v2799, 4
        %v3063 = vadd.f32 %v2799, %v3062
        %v3064 = vrot.slane %v3063, 2
        %v3065 = vadd.f32 %v3063, %v3064
        %v3066 = vrot.slane %v3065, 1
        %v3067 = vadd.f32 %v3065, %v3066
        %v3068 = vrot.slane %v2801, 4
        %v3069 = vadd.f32 %v2801, %v3068
        %v3070 = vrot.slane %v3069, 2
        %v3071 = vadd.f32 %v3069, %v3070
        %v3072 = vrot.slane %v3071, 1
        %v3073 = vadd.f32 %v3071, %v3072
        %v3074 = vrot.slane %v2803, 4
        %v3075 = vadd.f32 %v2803, %v3074
        %v3076 = vrot.slane %v3075, 2
        %v3077 = vadd.f32 %v3075, %v3076
        %v3078 = vrot.slane %v3077, 1
        %v3079 = vadd.f32 %v3077, %v3078
        %v3080 = vrot.slane %v2805, 4
        %v3081 = vadd.f32 %v2805, %v3080
        %v3082 = vrot.slane %v3081, 2
        %v3083 = vadd.f32 %v3081, %v3082
        %v3084 = vrot.slane %v3083, 1
        %v3085 = vadd.f32 %v3083, %v3084
        %v3086 = vrot.slane %v2807, 4
        %v3087 = vadd.f32 %v2807, %v3086
        %v3088 = vrot.slane %v3087, 2
        %v3089 = vadd.f32 %v3087, %v3088
        %v3090 = vrot.slane %v3089, 1
        %v3091 = vadd.f32 %v3089, %v3090
        %v3092 = vrot.slane %v2809, 4
        %v3093 = vadd.f32 %v2809, %v3092
        %v3094 = vrot.slane %v3093, 2
        %v3095 = vadd.f32 %v3093, %v3094
        %v3096 = vrot.slane %v3095, 1
        %v3097 = vadd.f32 %v3095, %v3096
        %v3098 = vrot.slane %v2811, 4
        %v3099 = vadd.f32 %v2811, %v3098
        %v3100 = vrot.slane %v3099, 2
        %v3101 = vadd.f32 %v3099, %v3100
        %v3102 = vrot.slane %v3101, 1
        %v3103 = vadd.f32 %v3101, %v3102
        %v3104 = vrot.slane %v2813, 4
        %v3105 = vadd.f32 %v2813, %v3104
        %v3106 = vrot.slane %v3105, 2
        %v3107 = vadd.f32 %v3105, %v3106
        %v3108 = vrot.slane %v3107, 1
        %v3109 = vadd.f32 %v3107, %v3108
        %v3110 = vrot.slane %v2815, 4
        %v3111 = vadd.f32 %v2815, %v3110
        %v3112 = vrot.slane %v3111, 2
        %v3113 = vadd.f32 %v3111, %v3112
        %v3114 = vrot.slane %v3113, 1
        %v3115 = vadd.f32 %v3113, %v3114
        %v3116 = vrot.slane %v2817, 4
        %v3117 = vadd.f32 %v2817, %v3116
        %v3118 = vrot.slane %v3117, 2
        %v3119 = vadd.f32 %v3117, %v3118
        %v3120 = vrot.slane %v3119, 1
        %v3121 = vadd.f32 %v3119, %v3120
        %v3122 = vrot.slane %v2819, 4
        %v3123 = vadd.f32 %v2819, %v3122
        %v3124 = vrot.slane %v3123, 2
        %v3125 = vadd.f32 %v3123, %v3124
        %v3126 = vrot.slane %v3125, 1
        %v3127 = vadd.f32 %v3125, %v3126
        %v3128 = vrot.slane %v2821, 4
        %v3129 = vadd.f32 %v2821, %v3128
        %v3130 = vrot.slane %v3129, 2
        %v3131 = vadd.f32 %v3129, %v3130
        %v3132 = vrot.slane %v3131, 1
        %v3133 = vadd.f32 %v3131, %v3132
        %v3134 = vrot.slane %v2823, 4
        %v3135 = vadd.f32 %v2823, %v3134
        %v3136 = vrot.slane %v3135, 2
        %v3137 = vadd.f32 %v3135, %v3136
        %v3138 = vrot.slane %v3137, 1
        %v3139 = vadd.f32 %v3137, %v3138
        %v3140 = vrot.slane %v2825, 4
        %v3141 = vadd.f32 %v2825, %v3140
        %v3142 = vrot.slane %v3141, 2
        %v3143 = vadd.f32 %v3141, %v3142
        %v3144 = vrot.slane %v3143, 1
        %v3145 = vadd.f32 %v3143, %v3144
        %v3146 = vrot.slane %v2827, 4
        %v3147 = vadd.f32 %v2827, %v3146
        %v3148 = vrot.slane %v3147, 2
        %v3149 = vadd.f32 %v3147, %v3148
        %v3150 = vrot.slane %v3149, 1
        %v3151 = vadd.f32 %v3149, %v3150
        %v3152 = vrot.slane %v2829, 4
        %v3153 = vadd.f32 %v2829, %v3152
        %v3154 = vrot.slane %v3153, 2
        %v3155 = vadd.f32 %v3153, %v3154
        %v3156 = vrot.slane %v3155, 1
        %v3157 = vadd.f32 %v3155, %v3156
        %v3158 = vrot.slane %v2831, 4
        %v3159 = vadd.f32 %v2831, %v3158
        %v3160 = vrot.slane %v3159, 2
        %v3161 = vadd.f32 %v3159, %v3160
        %v3162 = vrot.slane %v3161, 1
        %v3163 = vadd.f32 %v3161, %v3162
        %v3164 = vrot.slane %v2833, 4
        %v3165 = vadd.f32 %v2833, %v3164
        %v3166 = vrot.slane %v3165, 2
        %v3167 = vadd.f32 %v3165, %v3166
        %v3168 = vrot.slane %v3167, 1
        %v3169 = vadd.f32 %v3167, %v3168
        %v3170 = vrot.slane %v2835, 4
        %v3171 = vadd.f32 %v2835, %v3170
        %v3172 = vrot.slane %v3171, 2
        %v3173 = vadd.f32 %v3171, %v3172
        %v3174 = vrot.slane %v3173, 1
        %v3175 = vadd.f32 %v3173, %v3174
        %v3176 = vrot.slane %v2837, 4
        %v3177 = vadd.f32 %v2837, %v3176
        %v3178 = vrot.slane %v3177, 2
        %v3179 = vadd.f32 %v3177, %v3178
        %v3180 = vrot.slane %v3179, 1
        %v3181 = vadd.f32 %v3179, %v3180
        %v3182 = vrot.slane %v2839, 4
        %v3183 = vadd.f32 %v2839, %v3182
        %v3184 = vrot.slane %v3183, 2
        %v3185 = vadd.f32 %v3183, %v3184
        %v3186 = vrot.slane %v3185, 1
        %v3187 = vadd.f32 %v3185, %v3186
        %v3188 = vrot.slane %v2841, 4
        %v3189 = vadd.f32 %v2841, %v3188
        %v3190 = vrot.slane %v3189, 2
        %v3191 = vadd.f32 %v3189, %v3190
        %v3192 = vrot.slane %v3191, 1
        %v3193 = vadd.f32 %v3191, %v3192
        %v3194 = vrot.slane %v2843, 4
        %v3195 = vadd.f32 %v2843, %v3194
        %v3196 = vrot.slane %v3195, 2
        %v3197 = vadd.f32 %v3195, %v3196
        %v3198 = vrot.slane %v3197, 1
        %v3199 = vadd.f32 %v3197, %v3198
        %v3200 = vrot.slane %v2845, 4
        %v3201 = vadd.f32 %v2845, %v3200
        %v3202 = vrot.slane %v3201, 2
        %v3203 = vadd.f32 %v3201, %v3202
        %v3204 = vrot.slane %v3203, 1
        %v3205 = vadd.f32 %v3203, %v3204
        %v3206 = vrot.slane %v2847, 4
        %v3207 = vadd.f32 %v2847, %v3206
        %v3208 = vrot.slane %v3207, 2
        %v3209 = vadd.f32 %v3207, %v3208
        %v3210 = vrot.slane %v3209, 1
        %v3211 = vadd.f32 %v3209, %v3210
        %v3212 = vrot.slane %v2849, 4
        %v3213 = vadd.f32 %v2849, %v3212
        %v3214 = vrot.slane %v3213, 2
        %v3215 = vadd.f32 %v3213, %v3214
        %v3216 = vrot.slane %v3215, 1
        %v3217 = vadd.f32 %v3215, %v3216
        %v3218 = vrot.slane %v2851, 4
        %v3219 = vadd.f32 %v2851, %v3218
        %v3220 = vrot.slane %v3219, 2
        %v3221 = vadd.f32 %v3219, %v3220
        %v3222 = vrot.slane %v3221, 1
        %v3223 = vadd.f32 %v3221, %v3222
        %v3224 = vrot.slane %v2853, 4
        %v3225 = vadd.f32 %v2853, %v3224
        %v3226 = vrot.slane %v3225, 2
        %v3227 = vadd.f32 %v3225, %v3226
        %v3228 = vrot.slane %v3227, 1
        %v3229 = vadd.f32 %v3227, %v3228
        %v3230 = vrot.slane %v2855, 4
        %v3231 = vadd.f32 %v2855, %v3230
        %v3232 = vrot.slane %v3231, 2
        %v3233 = vadd.f32 %v3231, %v3232
        %v3234 = vrot.slane %v3233, 1
        %v3235 = vadd.f32 %v3233, %v3234
        %v3236 = vrot.slane %v2857, 4
        %v3237 = vadd.f32 %v2857, %v3236
        %v3238 = vrot.slane %v3237, 2
        %v3239 = vadd.f32 %v3237, %v3238
        %v3240 = vrot.slane %v3239, 1
        %v3241 = vadd.f32 %v3239, %v3240
        %v3242 = vrcp.pop %v2863
        %v3243 = vrcp.pop %v2869
        %v3244 = vrcp.pop %v2875
        %v3245 = vrcp.pop %v2881
        %v3246 = vrcp.pop %v2887
        %v3247 = vrcp.pop %v2893
        %v3248 = vrcp.pop %v2899
        %v3249 = vrcp.pop %v2905
        %v3250 = vrcp.pop %v2911
        %v3251 = vrcp.pop %v2917
        %v3252 = vrcp.pop %v2923
        %v3253 = vrcp.pop %v2929
        %v3254 = vrcp.pop %v2935
        %v3255 = vrcp.pop %v2941
        %v3256 = vrcp.pop %v2947
        %v3257 = vrcp.pop %v2953
        %v3258 = vrcp.pop %v2959
        %v3259 = vrcp.pop %v2965
        %v3260 = vrcp.pop %v2971
        %v3261 = vrcp.pop %v2977
        %v3262 = vrcp.pop %v2983
        %v3263 = vrcp.pop %v2989
        %v3264 = vrcp.pop %v2995
        %v3265 = vrcp.pop %v3001
        %v3266 = vrcp.pop %v3007
        %v3267 = vrcp.pop %v3013
        %v3268 = vrcp.pop %v3019
        %v3269 = vrcp.pop %v3025
        %v3270 = vrcp.pop %v3031
        %v3271 = vrcp.pop %v3037
        %v3272 = vrcp.pop %v3043
        %v3273 = vrcp.pop %v3049
        %v3274 = vrcp.pop %v3055
        %v3275 = vrcp.pop %v3061
        %v3276 = vrcp.pop %v3067
        %v3277 = vrcp.pop %v3073
        %v3278 = vrcp.pop %v3079
        %v3279 = vrcp.pop %v3085
        %v3280 = vrcp.pop %v3091
        %v3281 = vrcp.pop %v3097
        %v3282 = vrcp.pop %v3103
        %v3283 = vrcp.pop %v3109
        %v3284 = vrcp.pop %v3115
        %v3285 = vrcp.pop %v3121
        %v3286 = vrcp.pop %v3127
        %v3287 = vrcp.pop %v3133
        %v3288 = vrcp.pop %v3139
        %v3289 = vrcp.pop %v3145
        %v3290 = vrcp.pop %v3151
        %v3291 = vrcp.pop %v3157
        %v3292 = vrcp.pop %v3163
        %v3293 = vrcp.pop %v3169
        %v3294 = vrcp.pop %v3175
        %v3295 = vrcp.pop %v3181
        %v3296 = vrcp.pop %v3187
        %v3297 = vrcp.pop %v3193
        %v3298 = vrcp.pop %v3199
        %v3299 = vrcp.pop %v3205
        %v3300 = vrcp.pop %v3211
        %v3301 = vrcp.pop %v3217
        %v3302 = vrcp.pop %v3223
        %v3303 = vrcp.pop %v3229
        %v3304 = vrcp.pop %v3235
        %v3305 = vrcp.pop %v3241
        %v3306 = vmul.f32 %v2731, %v3242
        %v3307 = vmul.f32 %v2733, %v3243
        %v3308 = vmul.f32 %v2735, %v3244
        %v3309 = vmul.f32 %v2737, %v3245
        %v3310 = vmul.f32 %v2739, %v3246
        %v3311 = vmul.f32 %v2741, %v3247
        %v3312 = vmul.f32 %v2743, %v3248
        %v3313 = vmul.f32 %v2745, %v3249
        %v3314 = vmul.f32 %v2747, %v3250
        %v3315 = vmul.f32 %v2749, %v3251
        %v3316 = vmul.f32 %v2751, %v3252
        %v3317 = vmul.f32 %v2753, %v3253
        %v3318 = vmul.f32 %v2755, %v3254
        %v3319 = vmul.f32 %v2757, %v3255
        %v3320 = vmul.f32 %v2759, %v3256
        %v3321 = vmul.f32 %v2761, %v3257
        %v3322 = vmul.f32 %v2763, %v3258
        %v3323 = vmul.f32 %v2765, %v3259
        %v3324 = vmul.f32 %v2767, %v3260
        %v3325 = vmul.f32 %v2769, %v3261
        %v3326 = vmul.f32 %v2771, %v3262
        %v3327 = vmul.f32 %v2773, %v3263
        %v3328 = vmul.f32 %v2775, %v3264
        %v3329 = vmul.f32 %v2777, %v3265
        %v3330 = vmul.f32 %v2779, %v3266
        %v3331 = vmul.f32 %v2781, %v3267
        %v3332 = vmul.f32 %v2783, %v3268
        %v3333 = vmul.f32 %v2785, %v3269
        %v3334 = vmul.f32 %v2787, %v3270
        %v3335 = vmul.f32 %v2789, %v3271
        %v3336 = vmul.f32 %v2791, %v3272
        %v3337 = vmul.f32 %v2793, %v3273
        %v3338 = vmul.f32 %v2795, %v3274
        %v3339 = vmul.f32 %v2797, %v3275
        %v3340 = vmul.f32 %v2799, %v3276
        %v3341 = vmul.f32 %v2801, %v3277
        %v3342 = vmul.f32 %v2803, %v3278
        %v3343 = vmul.f32 %v2805, %v3279
        %v3344 = vmul.f32 %v2807, %v3280
        %v3345 = vmul.f32 %v2809, %v3281
        %v3346 = vmul.f32 %v2811, %v3282
        %v3347 = vmul.f32 %v2813, %v3283
        %v3348 = vmul.f32 %v2815, %v3284
        %v3349 = vmul.f32 %v2817, %v3285
        %v3350 = vmul.f32 %v2819, %v3286
        %v3351 = vmul.f32 %v2821, %v3287
        %v3352 = vmul.f32 %v2823, %v3288
        %v3353 = vmul.f32 %v2825, %v3289
        %v3354 = vmul.f32 %v2827, %v3290
        %v3355 = vmul.f32 %v2829, %v3291
        %v3356 = vmul.f32 %v2831, %v3292
        %v3357 = vmul.f32 %v2833, %v3293
        %v3358 = vmul.f32 %v2835, %v3294
        %v3359 = vmul.f32 %v2837, %v3295
        %v3360 = vmul.f32 %v2839, %v3296
        %v3361 = vmul.f32 %v2841, %v3297
        %v3362 = vmul.f32 %v2843, %v3298
        %v3363 = vmul.f32 %v2845, %v3299
        %v3364 = vmul.f32 %v2847, %v3300
        %v3365 = vmul.f32 %v2849, %v3301
        %v3366 = vmul.f32 %v2851, %v3302
        %v3367 = vmul.f32 %v2853, %v3303
        %v3368 = vmul.f32 %v2855, %v3304
        %v3369 = vmul.f32 %v2857, %v3305
        %v3370 = vmul.f32 %v1826, %v3306
        %v3371 = vmul.f32 %v1827, %v3307
        %v3372 = vmul.f32 %v1828, %v3308
        %v3373 = vmul.f32 %v1829, %v3309
        %v3374 = vmul.f32 %v1830, %v3310
        %v3375 = vmul.f32 %v1831, %v3311
        %v3376 = vmul.f32 %v1832, %v3312
        %v3377 = vmul.f32 %v1833, %v3313
        %v3378 = vmul.f32 %v1834, %v3314
        %v3379 = vmul.f32 %v1835, %v3315
        %v3380 = vmul.f32 %v1836, %v3316
        %v3381 = vmul.f32 %v1837, %v3317
        %v3382 = vmul.f32 %v1838, %v3318
        %v3383 = vmul.f32 %v1839, %v3319
        %v3384 = vmul.f32 %v1840, %v3320
        %v3385 = vmul.f32 %v1841, %v3321
        %v3386 = vmul.f32 %v1842, %v3322
        %v3387 = vmul.f32 %v1843, %v3323
        %v3388 = vmul.f32 %v1844, %v3324
        %v3389 = vmul.f32 %v1845, %v3325
        %v3390 = vmul.f32 %v1846, %v3326
        %v3391 = vmul.f32 %v1847, %v3327
        %v3392 = vmul.f32 %v1848, %v3328
        %v3393 = vmul.f32 %v1849, %v3329
        %v3394 = vmul.f32 %v1850, %v3330
        %v3395 = vmul.f32 %v1851, %v3331
        %v3396 = vmul.f32 %v1852, %v3332
        %v3397 = vmul.f32 %v1853, %v3333
        %v3398 = vmul.f32 %v1854, %v3334
        %v3399 = vmul.f32 %v1855, %v3335
        %v3400 = vmul.f32 %v1856, %v3336
        %v3401 = vmul.f32 %v1857, %v3337
        %v3402 = vmul.f32 %v1858, %v3338
        %v3403 = vmul.f32 %v1859, %v3339
        %v3404 = vmul.f32 %v1860, %v3340
        %v3405 = vmul.f32 %v1861, %v3341
        %v3406 = vmul.f32 %v1862, %v3342
        %v3407 = vmul.f32 %v1863, %v3343
        %v3408 = vmul.f32 %v1864, %v3344
        %v3409 = vmul.f32 %v1865, %v3345
        %v3410 = vmul.f32 %v1866, %v3346
        %v3411 = vmul.f32 %v1867, %v3347
        %v3412 = vmul.f32 %v1868, %v3348
        %v3413 = vmul.f32 %v1869, %v3349
        %v3414 = vmul.f32 %v1870, %v3350
        %v3415 = vmul.f32 %v1871, %v3351
        %v3416 = vmul.f32 %v1872, %v3352
        %v3417 = vmul.f32 %v1873, %v3353
        %v3418 = vmul.f32 %v1874, %v3354
        %v3419 = vmul.f32 %v1875, %v3355
        %v3420 = vmul.f32 %v1876, %v3356
        %v3421 = vmul.f32 %v1877, %v3357
        %v3422 = vmul.f32 %v1878, %v3358
        %v3423 = vmul.f32 %v1879, %v3359
        %v3424 = vmul.f32 %v1880, %v3360
        %v3425 = vmul.f32 %v1881, %v3361
        %v3426 = vmul.f32 %v1882, %v3362
        %v3427 = vmul.f32 %v1883, %v3363
        %v3428 = vmul.f32 %v1884, %v3364
        %v3429 = vmul.f32 %v1885, %v3365
        %v3430 = vmul.f32 %v1886, %v3366
        %v3431 = vmul.f32 %v1887, %v3367
        %v3432 = vmul.f32 %v1888, %v3368
        %v3433 = vmul.f32 %v1889, %v3369
        %v3434 = vadd.f32 %v1826, %v3370
        %v3435 = vadd.f32 %v1827, %v3371
        %v3436 = vadd.f32 %v1828, %v3372
        %v3437 = vadd.f32 %v1829, %v3373
        %v3438 = vadd.f32 %v1830, %v3374
        %v3439 = vadd.f32 %v1831, %v3375
        %v3440 = vadd.f32 %v1832, %v3376
        %v3441 = vadd.f32 %v1833, %v3377
        %v3442 = vadd.f32 %v1834, %v3378
        %v3443 = vadd.f32 %v1835, %v3379
        %v3444 = vadd.f32 %v1836, %v3380
        %v3445 = vadd.f32 %v1837, %v3381
        %v3446 = vadd.f32 %v1838, %v3382
        %v3447 = vadd.f32 %v1839, %v3383
        %v3448 = vadd.f32 %v1840, %v3384
        %v3449 = vadd.f32 %v1841, %v3385
        %v3450 = vadd.f32 %v1842, %v3386
        %v3451 = vadd.f32 %v1843, %v3387
        %v3452 = vadd.f32 %v1844, %v3388
        %v3453 = vadd.f32 %v1845, %v3389
        %v3454 = vadd.f32 %v1846, %v3390
        %v3455 = vadd.f32 %v1847, %v3391
        %v3456 = vadd.f32 %v1848, %v3392
        %v3457 = vadd.f32 %v1849, %v3393
        %v3458 = vadd.f32 %v1850, %v3394
        %v3459 = vadd.f32 %v1851, %v3395
        %v3460 = vadd.f32 %v1852, %v3396
        %v3461 = vadd.f32 %v1853, %v3397
        %v3462 = vadd.f32 %v1854, %v3398
        %v3463 = vadd.f32 %v1855, %v3399
        %v3464 = vadd.f32 %v1856, %v3400
        %v3465 = vadd.f32 %v1857, %v3401
        %v3466 = vadd.f32 %v1858, %v3402
        %v3467 = vadd.f32 %v1859, %v3403
        %v3468 = vadd.f32 %v1860, %v3404
        %v3469 = vadd.f32 %v1861, %v3405
        %v3470 = vadd.f32 %v1862, %v3406
        %v3471 = vadd.f32 %v1863, %v3407
        %v3472 = vadd.f32 %v1864, %v3408
        %v3473 = vadd.f32 %v1865, %v3409
        %v3474 = vadd.f32 %v1866, %v3410
        %v3475 = vadd.f32 %v1867, %v3411
        %v3476 = vadd.f32 %v1868, %v3412
        %v3477 = vadd.f32 %v1869, %v3413
        %v3478 = vadd.f32 %v1870, %v3414
        %v3479 = vadd.f32 %v1871, %v3415
        %v3480 = vadd.f32 %v1872, %v3416
        %v3481 = vadd.f32 %v1873, %v3417
        %v3482 = vadd.f32 %v1874, %v3418
        %v3483 = vadd.f32 %v1875, %v3419
        %v3484 = vadd.f32 %v1876, %v3420
        %v3485 = vadd.f32 %v1877, %v3421
        %v3486 = vadd.f32 %v1878, %v3422
        %v3487 = vadd.f32 %v1879, %v3423
        %v3488 = vadd.f32 %v1880, %v3424
        %v3489 = vadd.f32 %v1881, %v3425
        %v3490 = vadd.f32 %v1882, %v3426
        %v3491 = vadd.f32 %v1883, %v3427
        %v3492 = vadd.f32 %v1884, %v3428
        %v3493 = vadd.f32 %v1885, %v3429
        %v3494 = vadd.f32 %v1886, %v3430
        %v3495 = vadd.f32 %v1887, %v3431
        %v3496 = vadd.f32 %v1888, %v3432
        %v3497 = vadd.f32 %v1889, %v3433
        %v3498 = vld [vmem:[%s629] sm:$0x1]
        %v3499 = vld [vmem:[%s632] sm:$0x1]
        %3500 = vadd.xlane.f32.xlu0 %v3434
        %v3501 = vpop.xlane.xlu0 %3500
        %3502 = vadd.xlane.f32.xlu0 %v3435
        %v3503 = vpop.xlane.xlu0 %3502
        %3504 = vadd.xlane.f32.xlu0 %v3436
        %v3505 = vpop.xlane.xlu0 %3504
        %3506 = vadd.xlane.f32.xlu0 %v3437
        %v3507 = vpop.xlane.xlu0 %3506
        %3508 = vadd.xlane.f32.xlu0 %v3438
        %v3509 = vpop.xlane.xlu0 %3508
        %3510 = vadd.xlane.f32.xlu0 %v3439
        %v3511 = vpop.xlane.xlu0 %3510
        %3512 = vadd.xlane.f32.xlu0 %v3440
        %v3513 = vpop.xlane.xlu0 %3512
        %3514 = vadd.xlane.f32.xlu0 %v3441
        %v3515 = vpop.xlane.xlu0 %3514
        %3516 = vadd.xlane.f32.xlu0 %v3442
        %v3517 = vpop.xlane.xlu0 %3516
        %3518 = vadd.xlane.f32.xlu0 %v3443
        %v3519 = vpop.xlane.xlu0 %3518
        %3520 = vadd.xlane.f32.xlu0 %v3444
        %v3521 = vpop.xlane.xlu0 %3520
        %3522 = vadd.xlane.f32.xlu0 %v3445
        %v3523 = vpop.xlane.xlu0 %3522
        %3524 = vadd.xlane.f32.xlu0 %v3446
        %v3525 = vpop.xlane.xlu0 %3524
        %3526 = vadd.xlane.f32.xlu0 %v3447
        %v3527 = vpop.xlane.xlu0 %3526
        %3528 = vadd.xlane.f32.xlu0 %v3448
        %v3529 = vpop.xlane.xlu0 %3528
        %3530 = vadd.xlane.f32.xlu0 %v3449
        %v3531 = vpop.xlane.xlu0 %3530
        %3532 = vadd.xlane.f32.xlu0 %v3450
        %v3533 = vpop.xlane.xlu0 %3532
        %3534 = vadd.xlane.f32.xlu0 %v3451
        %v3535 = vpop.xlane.xlu0 %3534
        %3536 = vadd.xlane.f32.xlu0 %v3452
        %v3537 = vpop.xlane.xlu0 %3536
        %3538 = vadd.xlane.f32.xlu0 %v3453
        %v3539 = vpop.xlane.xlu0 %3538
        %3540 = vadd.xlane.f32.xlu0 %v3454
        %v3541 = vpop.xlane.xlu0 %3540
        %3542 = vadd.xlane.f32.xlu0 %v3455
        %v3543 = vpop.xlane.xlu0 %3542
        %3544 = vadd.xlane.f32.xlu0 %v3456
        %v3545 = vpop.xlane.xlu0 %3544
        %3546 = vadd.xlane.f32.xlu0 %v3457
        %v3547 = vpop.xlane.xlu0 %3546
        %3548 = vadd.xlane.f32.xlu0 %v3458
        %v3549 = vpop.xlane.xlu0 %3548
        %3550 = vadd.xlane.f32.xlu0 %v3459
        %v3551 = vpop.xlane.xlu0 %3550
        %3552 = vadd.xlane.f32.xlu0 %v3460
        %v3553 = vpop.xlane.xlu0 %3552
        %3554 = vadd.xlane.f32.xlu0 %v3461
        %v3555 = vpop.xlane.xlu0 %3554
        %3556 = vadd.xlane.f32.xlu0 %v3462
        %v3557 = vpop.xlane.xlu0 %3556
        %3558 = vadd.xlane.f32.xlu0 %v3463
        %v3559 = vpop.xlane.xlu0 %3558
        %3560 = vadd.xlane.f32.xlu0 %v3464
        %v3561 = vpop.xlane.xlu0 %3560
        %3562 = vadd.xlane.f32.xlu0 %v3465
        %v3563 = vpop.xlane.xlu0 %3562
        %3564 = vadd.xlane.f32.xlu0 %v3466
        %v3565 = vpop.xlane.xlu0 %3564
        %3566 = vadd.xlane.f32.xlu0 %v3467
        %v3567 = vpop.xlane.xlu0 %3566
        %3568 = vadd.xlane.f32.xlu0 %v3468
        %v3569 = vpop.xlane.xlu0 %3568
        %3570 = vadd.xlane.f32.xlu0 %v3469
        %v3571 = vpop.xlane.xlu0 %3570
        %3572 = vadd.xlane.f32.xlu0 %v3470
        %v3573 = vpop.xlane.xlu0 %3572
        %3574 = vadd.xlane.f32.xlu0 %v3471
        %v3575 = vpop.xlane.xlu0 %3574
        %3576 = vadd.xlane.f32.xlu0 %v3472
        %v3577 = vpop.xlane.xlu0 %3576
        %3578 = vadd.xlane.f32.xlu0 %v3473
        %v3579 = vpop.xlane.xlu0 %3578
        %3580 = vadd.xlane.f32.xlu0 %v3474
        %v3581 = vpop.xlane.xlu0 %3580
        %3582 = vadd.xlane.f32.xlu0 %v3475
        %v3583 = vpop.xlane.xlu0 %3582
        %3584 = vadd.xlane.f32.xlu0 %v3476
        %v3585 = vpop.xlane.xlu0 %3584
        %3586 = vadd.xlane.f32.xlu0 %v3477
        %v3587 = vpop.xlane.xlu0 %3586
        %3588 = vadd.xlane.f32.xlu0 %v3478
        %v3589 = vpop.xlane.xlu0 %3588
        %3590 = vadd.xlane.f32.xlu0 %v3479
        %v3591 = vpop.xlane.xlu0 %3590
        %3592 = vadd.xlane.f32.xlu0 %v3480
        %v3593 = vpop.xlane.xlu0 %3592
        %3594 = vadd.xlane.f32.xlu0 %v3481
        %v3595 = vpop.xlane.xlu0 %3594
        %3596 = vadd.xlane.f32.xlu0 %v3482
        %v3597 = vpop.xlane.xlu0 %3596
        %3598 = vadd.xlane.f32.xlu0 %v3483
        %v3599 = vpop.xlane.xlu0 %3598
        %3600 = vadd.xlane.f32.xlu0 %v3484
        %v3601 = vpop.xlane.xlu0 %3600
        %3602 = vadd.xlane.f32.xlu0 %v3485
        %v3603 = vpop.xlane.xlu0 %3602
        %3604 = vadd.xlane.f32.xlu0 %v3486
        %v3605 = vpop.xlane.xlu0 %3604
        %3606 = vadd.xlane.f32.xlu0 %v3487
        %v3607 = vpop.xlane.xlu0 %3606
        %3608 = vadd.xlane.f32.xlu0 %v3488
        %v3609 = vpop.xlane.xlu0 %3608
        %3610 = vadd.xlane.f32.xlu0 %v3489
        %v3611 = vpop.xlane.xlu0 %3610
        %3612 = vadd.xlane.f32.xlu0 %v3490
        %v3613 = vpop.xlane.xlu0 %3612
        %3614 = vadd.xlane.f32.xlu0 %v3491
        %v3615 = vpop.xlane.xlu0 %3614
        %3616 = vadd.xlane.f32.xlu0 %v3492
        %v3617 = vpop.xlane.xlu0 %3616
        %3618 = vadd.xlane.f32.xlu0 %v3493
        %v3619 = vpop.xlane.xlu0 %3618
        %3620 = vadd.xlane.f32.xlu0 %v3494
        %v3621 = vpop.xlane.xlu0 %3620
        %3622 = vadd.xlane.f32.xlu0 %v3495
        %v3623 = vpop.xlane.xlu0 %3622
        %3624 = vadd.xlane.f32.xlu0 %v3496
        %v3625 = vpop.xlane.xlu0 %3624
        %3626 = vadd.xlane.f32.xlu0 %v3497
        %v3627 = vpop.xlane.xlu0 %3626
        %v3628 = vmul.f32 %v3501, 0.03125
        %v3629 = vmul.f32 %v3503, 0.03125
        %v3630 = vmul.f32 %v3505, 0.03125
        %v3631 = vmul.f32 %v3507, 0.03125
        %v3632 = vmul.f32 %v3509, 0.03125
        %v3633 = vmul.f32 %v3511, 0.03125
        %v3634 = vmul.f32 %v3513, 0.03125
        %v3635 = vmul.f32 %v3515, 0.03125
        %v3636 = vmul.f32 %v3517, 0.03125
        %v3637 = vmul.f32 %v3519, 0.03125
        %v3638 = vmul.f32 %v3521, 0.03125
        %v3639 = vmul.f32 %v3523, 0.03125
        %v3640 = vmul.f32 %v3525, 0.03125
        %v3641 = vmul.f32 %v3527, 0.03125
        %v3642 = vmul.f32 %v3529, 0.03125
        %v3643 = vmul.f32 %v3531, 0.03125
        %v3644 = vmul.f32 %v3533, 0.03125
        %v3645 = vmul.f32 %v3535, 0.03125
        %v3646 = vmul.f32 %v3537, 0.03125
        %v3647 = vmul.f32 %v3539, 0.03125
        %v3648 = vmul.f32 %v3541, 0.03125
        %v3649 = vmul.f32 %v3543, 0.03125
        %v3650 = vmul.f32 %v3545, 0.03125
        %v3651 = vmul.f32 %v3547, 0.03125
        %v3652 = vmul.f32 %v3549, 0.03125
        %v3653 = vmul.f32 %v3551, 0.03125
        %v3654 = vmul.f32 %v3553, 0.03125
        %v3655 = vmul.f32 %v3555, 0.03125
        %v3656 = vmul.f32 %v3557, 0.03125
        %v3657 = vmul.f32 %v3559, 0.03125
        %v3658 = vmul.f32 %v3561, 0.03125
        %v3659 = vmul.f32 %v3563, 0.03125
        %v3660 = vmul.f32 %v3565, 0.03125
        %v3661 = vmul.f32 %v3567, 0.03125
        %v3662 = vmul.f32 %v3569, 0.03125
        %v3663 = vmul.f32 %v3571, 0.03125
        %v3664 = vmul.f32 %v3573, 0.03125
        %v3665 = vmul.f32 %v3575, 0.03125
        %v3666 = vmul.f32 %v3577, 0.03125
        %v3667 = vmul.f32 %v3579, 0.03125
        %v3668 = vmul.f32 %v3581, 0.03125
        %v3669 = vmul.f32 %v3583, 0.03125
        %v3670 = vmul.f32 %v3585, 0.03125
        %v3671 = vmul.f32 %v3587, 0.03125
        %v3672 = vmul.f32 %v3589, 0.03125
        %v3673 = vmul.f32 %v3591, 0.03125
        %v3674 = vmul.f32 %v3593, 0.03125
        %v3675 = vmul.f32 %v3595, 0.03125
        %v3676 = vmul.f32 %v3597, 0.03125
        %v3677 = vmul.f32 %v3599, 0.03125
        %v3678 = vmul.f32 %v3601, 0.03125
        %v3679 = vmul.f32 %v3603, 0.03125
        %v3680 = vmul.f32 %v3605, 0.03125
        %v3681 = vmul.f32 %v3607, 0.03125
        %v3682 = vmul.f32 %v3609, 0.03125
        %v3683 = vmul.f32 %v3611, 0.03125
        %v3684 = vmul.f32 %v3613, 0.03125
        %v3685 = vmul.f32 %v3615, 0.03125
        %v3686 = vmul.f32 %v3617, 0.03125
        %v3687 = vmul.f32 %v3619, 0.03125
        %v3688 = vmul.f32 %v3621, 0.03125
        %v3689 = vmul.f32 %v3623, 0.03125
        %v3690 = vmul.f32 %v3625, 0.03125
        %v3691 = vmul.f32 %v3627, 0.03125
        %v3692 = vsub.f32 %v3434, %v3628
        %v3693 = vsub.f32 %v3435, %v3629
        %v3694 = vsub.f32 %v3436, %v3630
        %v3695 = vsub.f32 %v3437, %v3631
        %v3696 = vsub.f32 %v3438, %v3632
        %v3697 = vsub.f32 %v3439, %v3633
        %v3698 = vsub.f32 %v3440, %v3634
        %v3699 = vsub.f32 %v3441, %v3635
        %v3700 = vsub.f32 %v3442, %v3636
        %v3701 = vsub.f32 %v3443, %v3637
        %v3702 = vsub.f32 %v3444, %v3638
        %v3703 = vsub.f32 %v3445, %v3639
        %v3704 = vsub.f32 %v3446, %v3640
        %v3705 = vsub.f32 %v3447, %v3641
        %v3706 = vsub.f32 %v3448, %v3642
        %v3707 = vsub.f32 %v3449, %v3643
        %v3708 = vsub.f32 %v3450, %v3644
        %v3709 = vsub.f32 %v3451, %v3645
        %v3710 = vsub.f32 %v3452, %v3646
        %v3711 = vsub.f32 %v3453, %v3647
        %v3712 = vsub.f32 %v3454, %v3648
        %v3713 = vsub.f32 %v3455, %v3649
        %v3714 = vsub.f32 %v3456, %v3650
        %v3715 = vsub.f32 %v3457, %v3651
        %v3716 = vsub.f32 %v3458, %v3652
        %v3717 = vsub.f32 %v3459, %v3653
        %v3718 = vsub.f32 %v3460, %v3654
        %v3719 = vsub.f32 %v3461, %v3655
        %v3720 = vsub.f32 %v3462, %v3656
        %v3721 = vsub.f32 %v3463, %v3657
        %v3722 = vsub.f32 %v3464, %v3658
        %v3723 = vsub.f32 %v3465, %v3659
        %v3724 = vsub.f32 %v3466, %v3660
        %v3725 = vsub.f32 %v3467, %v3661
        %v3726 = vsub.f32 %v3468, %v3662
        %v3727 = vsub.f32 %v3469, %v3663
        %v3728 = vsub.f32 %v3470, %v3664
        %v3729 = vsub.f32 %v3471, %v3665
        %v3730 = vsub.f32 %v3472, %v3666
        %v3731 = vsub.f32 %v3473, %v3667
        %v3732 = vsub.f32 %v3474, %v3668
        %v3733 = vsub.f32 %v3475, %v3669
        %v3734 = vsub.f32 %v3476, %v3670
        %v3735 = vsub.f32 %v3477, %v3671
        %v3736 = vsub.f32 %v3478, %v3672
        %v3737 = vsub.f32 %v3479, %v3673
        %v3738 = vsub.f32 %v3480, %v3674
        %v3739 = vsub.f32 %v3481, %v3675
        %v3740 = vsub.f32 %v3482, %v3676
        %v3741 = vsub.f32 %v3483, %v3677
        %v3742 = vsub.f32 %v3484, %v3678
        %v3743 = vsub.f32 %v3485, %v3679
        %v3744 = vsub.f32 %v3486, %v3680
        %v3745 = vsub.f32 %v3487, %v3681
        %v3746 = vsub.f32 %v3488, %v3682
        %v3747 = vsub.f32 %v3489, %v3683
        %v3748 = vsub.f32 %v3490, %v3684
        %v3749 = vsub.f32 %v3491, %v3685
        %v3750 = vsub.f32 %v3492, %v3686
        %v3751 = vsub.f32 %v3493, %v3687
        %v3752 = vsub.f32 %v3494, %v3688
        %v3753 = vsub.f32 %v3495, %v3689
        %v3754 = vsub.f32 %v3496, %v3690
        %v3755 = vsub.f32 %v3497, %v3691
        %v3756 = vsel %vm1237, %v3692, 0.0
        %v3757 = vsel %vm1237, %v3693, 0.0
        %v3758 = vsel %vm1237, %v3694, 0.0
        %v3759 = vsel %vm1237, %v3695, 0.0
        %v3760 = vsel %vm1237, %v3696, 0.0
        %v3761 = vsel %vm1237, %v3697, 0.0
        %v3762 = vsel %vm1237, %v3698, 0.0
        %v3763 = vsel %vm1237, %v3699, 0.0
        %v3764 = vsel %vm1237, %v3700, 0.0
        %v3765 = vsel %vm1237, %v3701, 0.0
        %v3766 = vsel %vm1237, %v3702, 0.0
        %v3767 = vsel %vm1237, %v3703, 0.0
        %v3768 = vsel %vm1237, %v3704, 0.0
        %v3769 = vsel %vm1237, %v3705, 0.0
        %v3770 = vsel %vm1237, %v3706, 0.0
        %v3771 = vsel %vm1237, %v3707, 0.0
        %v3772 = vsel %vm1237, %v3708, 0.0
        %v3773 = vsel %vm1237, %v3709, 0.0
        %v3774 = vsel %vm1237, %v3710, 0.0
        %v3775 = vsel %vm1237, %v3711, 0.0
        %v3776 = vsel %vm1237, %v3712, 0.0
        %v3777 = vsel %vm1237, %v3713, 0.0
        %v3778 = vsel %vm1237, %v3714, 0.0
        %v3779 = vsel %vm1237, %v3715, 0.0
        %v3780 = vsel %vm1237, %v3716, 0.0
        %v3781 = vsel %vm1237, %v3717, 0.0
        %v3782 = vsel %vm1237, %v3718, 0.0
        %v3783 = vsel %vm1237, %v3719, 0.0
        %v3784 = vsel %vm1237, %v3720, 0.0
        %v3785 = vsel %vm1237, %v3721, 0.0
        %v3786 = vsel %vm1237, %v3722, 0.0
        %v3787 = vsel %vm1237, %v3723, 0.0
        %v3788 = vsel %vm1237, %v3724, 0.0
        %v3789 = vsel %vm1237, %v3725, 0.0
        %v3790 = vsel %vm1237, %v3726, 0.0
        %v3791 = vsel %vm1237, %v3727, 0.0
        %v3792 = vsel %vm1237, %v3728, 0.0
        %v3793 = vsel %vm1237, %v3729, 0.0
        %v3794 = vsel %vm1237, %v3730, 0.0
        %v3795 = vsel %vm1237, %v3731, 0.0
        %v3796 = vsel %vm1237, %v3732, 0.0
        %v3797 = vsel %vm1237, %v3733, 0.0
        %v3798 = vsel %vm1237, %v3734, 0.0
        %v3799 = vsel %vm1237, %v3735, 0.0
        %v3800 = vsel %vm1237, %v3736, 0.0
        %v3801 = vsel %vm1237, %v3737, 0.0
        %v3802 = vsel %vm1237, %v3738, 0.0
        %v3803 = vsel %vm1237, %v3739, 0.0
        %v3804 = vsel %vm1237, %v3740, 0.0
        %v3805 = vsel %vm1237, %v3741, 0.0
        %v3806 = vsel %vm1237, %v3742, 0.0
        %v3807 = vsel %vm1237, %v3743, 0.0
        %v3808 = vsel %vm1237, %v3744, 0.0
        %v3809 = vsel %vm1237, %v3745, 0.0
        %v3810 = vsel %vm1237, %v3746, 0.0
        %v3811 = vsel %vm1237, %v3747, 0.0
        %v3812 = vsel %vm1237, %v3748, 0.0
        %v3813 = vsel %vm1237, %v3749, 0.0
        %v3814 = vsel %vm1237, %v3750, 0.0
        %v3815 = vsel %vm1237, %v3751, 0.0
        %v3816 = vsel %vm1237, %v3752, 0.0
        %v3817 = vsel %vm1237, %v3753, 0.0
        %v3818 = vsel %vm1237, %v3754, 0.0
        %v3819 = vsel %vm1237, %v3755, 0.0
        %v3820 = vmul.f32 %v3756, %v3756
        %v3821 = vmul.f32 %v3757, %v3757
        %v3822 = vmul.f32 %v3758, %v3758
        %v3823 = vmul.f32 %v3759, %v3759
        %v3824 = vmul.f32 %v3760, %v3760
        %v3825 = vmul.f32 %v3761, %v3761
        %v3826 = vmul.f32 %v3762, %v3762
        %v3827 = vmul.f32 %v3763, %v3763
        %v3828 = vmul.f32 %v3764, %v3764
        %v3829 = vmul.f32 %v3765, %v3765
        %v3830 = vmul.f32 %v3766, %v3766
        %v3831 = vmul.f32 %v3767, %v3767
        %v3832 = vmul.f32 %v3768, %v3768
        %v3833 = vmul.f32 %v3769, %v3769
        %v3834 = vmul.f32 %v3770, %v3770
        %v3835 = vmul.f32 %v3771, %v3771
        %v3836 = vmul.f32 %v3772, %v3772
        %v3837 = vmul.f32 %v3773, %v3773
        %v3838 = vmul.f32 %v3774, %v3774
        %v3839 = vmul.f32 %v3775, %v3775
        %v3840 = vmul.f32 %v3776, %v3776
        %v3841 = vmul.f32 %v3777, %v3777
        %v3842 = vmul.f32 %v3778, %v3778
        %v3843 = vmul.f32 %v3779, %v3779
        %v3844 = vmul.f32 %v3780, %v3780
        %v3845 = vmul.f32 %v3781, %v3781
        %v3846 = vmul.f32 %v3782, %v3782
        %v3847 = vmul.f32 %v3783, %v3783
        %v3848 = vmul.f32 %v3784, %v3784
        %v3849 = vmul.f32 %v3785, %v3785
        %v3850 = vmul.f32 %v3786, %v3786
        %v3851 = vmul.f32 %v3787, %v3787
        %v3852 = vmul.f32 %v3788, %v3788
        %v3853 = vmul.f32 %v3789, %v3789
        %v3854 = vmul.f32 %v3790, %v3790
        %v3855 = vmul.f32 %v3791, %v3791
        %v3856 = vmul.f32 %v3792, %v3792
        %v3857 = vmul.f32 %v3793, %v3793
        %v3858 = vmul.f32 %v3794, %v3794
        %v3859 = vmul.f32 %v3795, %v3795
        %v3860 = vmul.f32 %v3796, %v3796
        %v3861 = vmul.f32 %v3797, %v3797
        %v3862 = vmul.f32 %v3798, %v3798
        %v3863 = vmul.f32 %v3799, %v3799
        %v3864 = vmul.f32 %v3800, %v3800
        %v3865 = vmul.f32 %v3801, %v3801
        %v3866 = vmul.f32 %v3802, %v3802
        %v3867 = vmul.f32 %v3803, %v3803
        %v3868 = vmul.f32 %v3804, %v3804
        %v3869 = vmul.f32 %v3805, %v3805
        %v3870 = vmul.f32 %v3806, %v3806
        %v3871 = vmul.f32 %v3807, %v3807
        %v3872 = vmul.f32 %v3808, %v3808
        %v3873 = vmul.f32 %v3809, %v3809
        %v3874 = vmul.f32 %v3810, %v3810
        %v3875 = vmul.f32 %v3811, %v3811
        %v3876 = vmul.f32 %v3812, %v3812
        %v3877 = vmul.f32 %v3813, %v3813
        %v3878 = vmul.f32 %v3814, %v3814
        %v3879 = vmul.f32 %v3815, %v3815
        %v3880 = vmul.f32 %v3816, %v3816
        %v3881 = vmul.f32 %v3817, %v3817
        %v3882 = vmul.f32 %v3818, %v3818
        %v3883 = vmul.f32 %v3819, %v3819
        %3884 = vadd.xlane.f32.xlu0 %v3820
        %v3885 = vpop.xlane.xlu0 %3884
        %3886 = vadd.xlane.f32.xlu0 %v3821
        %v3887 = vpop.xlane.xlu0 %3886
        %3888 = vadd.xlane.f32.xlu0 %v3822
        %v3889 = vpop.xlane.xlu0 %3888
        %3890 = vadd.xlane.f32.xlu0 %v3823
        %v3891 = vpop.xlane.xlu0 %3890
        %3892 = vadd.xlane.f32.xlu0 %v3824
        %v3893 = vpop.xlane.xlu0 %3892
        %3894 = vadd.xlane.f32.xlu0 %v3825
        %v3895 = vpop.xlane.xlu0 %3894
        %3896 = vadd.xlane.f32.xlu0 %v3826
        %v3897 = vpop.xlane.xlu0 %3896
        %3898 = vadd.xlane.f32.xlu0 %v3827
        %v3899 = vpop.xlane.xlu0 %3898
        %3900 = vadd.xlane.f32.xlu0 %v3828
        %v3901 = vpop.xlane.xlu0 %3900
        %3902 = vadd.xlane.f32.xlu0 %v3829
        %v3903 = vpop.xlane.xlu0 %3902
        %3904 = vadd.xlane.f32.xlu0 %v3830
        %v3905 = vpop.xlane.xlu0 %3904
        %3906 = vadd.xlane.f32.xlu0 %v3831
        %v3907 = vpop.xlane.xlu0 %3906
        %3908 = vadd.xlane.f32.xlu0 %v3832
        %v3909 = vpop.xlane.xlu0 %3908
        %3910 = vadd.xlane.f32.xlu0 %v3833
        %v3911 = vpop.xlane.xlu0 %3910
        %3912 = vadd.xlane.f32.xlu0 %v3834
        %v3913 = vpop.xlane.xlu0 %3912
        %3914 = vadd.xlane.f32.xlu0 %v3835
        %v3915 = vpop.xlane.xlu0 %3914
        %3916 = vadd.xlane.f32.xlu0 %v3836
        %v3917 = vpop.xlane.xlu0 %3916
        %3918 = vadd.xlane.f32.xlu0 %v3837
        %v3919 = vpop.xlane.xlu0 %3918
        %3920 = vadd.xlane.f32.xlu0 %v3838
        %v3921 = vpop.xlane.xlu0 %3920
        %3922 = vadd.xlane.f32.xlu0 %v3839
        %v3923 = vpop.xlane.xlu0 %3922
        %3924 = vadd.xlane.f32.xlu0 %v3840
        %v3925 = vpop.xlane.xlu0 %3924
        %3926 = vadd.xlane.f32.xlu0 %v3841
        %v3927 = vpop.xlane.xlu0 %3926
        %3928 = vadd.xlane.f32.xlu0 %v3842
        %v3929 = vpop.xlane.xlu0 %3928
        %3930 = vadd.xlane.f32.xlu0 %v3843
        %v3931 = vpop.xlane.xlu0 %3930
        %3932 = vadd.xlane.f32.xlu0 %v3844
        %v3933 = vpop.xlane.xlu0 %3932
        %3934 = vadd.xlane.f32.xlu0 %v3845
        %v3935 = vpop.xlane.xlu0 %3934
        %3936 = vadd.xlane.f32.xlu0 %v3846
        %v3937 = vpop.xlane.xlu0 %3936
        %3938 = vadd.xlane.f32.xlu0 %v3847
        %v3939 = vpop.xlane.xlu0 %3938
        %3940 = vadd.xlane.f32.xlu0 %v3848
        %v3941 = vpop.xlane.xlu0 %3940
        %3942 = vadd.xlane.f32.xlu0 %v3849
        %v3943 = vpop.xlane.xlu0 %3942
        %3944 = vadd.xlane.f32.xlu0 %v3850
        %v3945 = vpop.xlane.xlu0 %3944
        %3946 = vadd.xlane.f32.xlu0 %v3851
        %v3947 = vpop.xlane.xlu0 %3946
        %3948 = vadd.xlane.f32.xlu0 %v3852
        %v3949 = vpop.xlane.xlu0 %3948
        %3950 = vadd.xlane.f32.xlu0 %v3853
        %v3951 = vpop.xlane.xlu0 %3950
        %3952 = vadd.xlane.f32.xlu0 %v3854
        %v3953 = vpop.xlane.xlu0 %3952
        %3954 = vadd.xlane.f32.xlu0 %v3855
        %v3955 = vpop.xlane.xlu0 %3954
        %3956 = vadd.xlane.f32.xlu0 %v3856
        %v3957 = vpop.xlane.xlu0 %3956
        %3958 = vadd.xlane.f32.xlu0 %v3857
        %v3959 = vpop.xlane.xlu0 %3958
        %3960 = vadd.xlane.f32.xlu0 %v3858
        %v3961 = vpop.xlane.xlu0 %3960
        %3962 = vadd.xlane.f32.xlu0 %v3859
        %v3963 = vpop.xlane.xlu0 %3962
        %3964 = vadd.xlane.f32.xlu0 %v3860
        %v3965 = vpop.xlane.xlu0 %3964
        %3966 = vadd.xlane.f32.xlu0 %v3861
        %v3967 = vpop.xlane.xlu0 %3966
        %3968 = vadd.xlane.f32.xlu0 %v3862
        %v3969 = vpop.xlane.xlu0 %3968
        %3970 = vadd.xlane.f32.xlu0 %v3863
        %v3971 = vpop.xlane.xlu0 %3970
        %3972 = vadd.xlane.f32.xlu0 %v3864
        %v3973 = vpop.xlane.xlu0 %3972
        %3974 = vadd.xlane.f32.xlu0 %v3865
        %v3975 = vpop.xlane.xlu0 %3974
        %3976 = vadd.xlane.f32.xlu0 %v3866
        %v3977 = vpop.xlane.xlu0 %3976
        %3978 = vadd.xlane.f32.xlu0 %v3867
        %v3979 = vpop.xlane.xlu0 %3978
        %3980 = vadd.xlane.f32.xlu0 %v3868
        %v3981 = vpop.xlane.xlu0 %3980
        %3982 = vadd.xlane.f32.xlu0 %v3869
        %v3983 = vpop.xlane.xlu0 %3982
        %3984 = vadd.xlane.f32.xlu0 %v3870
        %v3985 = vpop.xlane.xlu0 %3984
        %3986 = vadd.xlane.f32.xlu0 %v3871
        %v3987 = vpop.xlane.xlu0 %3986
        %3988 = vadd.xlane.f32.xlu0 %v3872
        %v3989 = vpop.xlane.xlu0 %3988
        %3990 = vadd.xlane.f32.xlu0 %v3873
        %v3991 = vpop.xlane.xlu0 %3990
        %3992 = vadd.xlane.f32.xlu0 %v3874
        %v3993 = vpop.xlane.xlu0 %3992
        %3994 = vadd.xlane.f32.xlu0 %v3875
        %v3995 = vpop.xlane.xlu0 %3994
        %3996 = vadd.xlane.f32.xlu0 %v3876
        %v3997 = vpop.xlane.xlu0 %3996
        %3998 = vadd.xlane.f32.xlu0 %v3877
        %v3999 = vpop.xlane.xlu0 %3998
        %4000 = vadd.xlane.f32.xlu0 %v3878
        %v4001 = vpop.xlane.xlu0 %4000
        %4002 = vadd.xlane.f32.xlu0 %v3879
        %v4003 = vpop.xlane.xlu0 %4002
        %4004 = vadd.xlane.f32.xlu0 %v3880
        %v4005 = vpop.xlane.xlu0 %4004
        %4006 = vadd.xlane.f32.xlu0 %v3881
        %v4007 = vpop.xlane.xlu0 %4006
        %4008 = vadd.xlane.f32.xlu0 %v3882
        %v4009 = vpop.xlane.xlu0 %4008
        %4010 = vadd.xlane.f32.xlu0 %v3883
        %v4011 = vpop.xlane.xlu0 %4010
        %v4012 = vmul.f32 %v3885, 0.03125
        %v4013 = vmul.f32 %v3887, 0.03125
        %v4014 = vmul.f32 %v3889, 0.03125
        %v4015 = vmul.f32 %v3891, 0.03125
        %v4016 = vmul.f32 %v3893, 0.03125
        %v4017 = vmul.f32 %v3895, 0.03125
        %v4018 = vmul.f32 %v3897, 0.03125
        %v4019 = vmul.f32 %v3899, 0.03125
        %v4020 = vmul.f32 %v3901, 0.03125
        %v4021 = vmul.f32 %v3903, 0.03125
        %v4022 = vmul.f32 %v3905, 0.03125
        %v4023 = vmul.f32 %v3907, 0.03125
        %v4024 = vmul.f32 %v3909, 0.03125
        %v4025 = vmul.f32 %v3911, 0.03125
        %v4026 = vmul.f32 %v3913, 0.03125
        %v4027 = vmul.f32 %v3915, 0.03125
        %v4028 = vmul.f32 %v3917, 0.03125
        %v4029 = vmul.f32 %v3919, 0.03125
        %v4030 = vmul.f32 %v3921, 0.03125
        %v4031 = vmul.f32 %v3923, 0.03125
        %v4032 = vmul.f32 %v3925, 0.03125
        %v4033 = vmul.f32 %v3927, 0.03125
        %v4034 = vmul.f32 %v3929, 0.03125
        %v4035 = vmul.f32 %v3931, 0.03125
        %v4036 = vmul.f32 %v3933, 0.03125
        %v4037 = vmul.f32 %v3935, 0.03125
        %v4038 = vmul.f32 %v3937, 0.03125
        %v4039 = vmul.f32 %v3939, 0.03125
        %v4040 = vmul.f32 %v3941, 0.03125
        %v4041 = vmul.f32 %v3943, 0.03125
        %v4042 = vmul.f32 %v3945, 0.03125
        %v4043 = vmul.f32 %v3947, 0.03125
        %v4044 = vmul.f32 %v3949, 0.03125
        %v4045 = vmul.f32 %v3951, 0.03125
        %v4046 = vmul.f32 %v3953, 0.03125
        %v4047 = vmul.f32 %v3955, 0.03125
        %v4048 = vmul.f32 %v3957, 0.03125
        %v4049 = vmul.f32 %v3959, 0.03125
        %v4050 = vmul.f32 %v3961, 0.03125
        %v4051 = vmul.f32 %v3963, 0.03125
        %v4052 = vmul.f32 %v3965, 0.03125
        %v4053 = vmul.f32 %v3967, 0.03125
        %v4054 = vmul.f32 %v3969, 0.03125
        %v4055 = vmul.f32 %v3971, 0.03125
        %v4056 = vmul.f32 %v3973, 0.03125
        %v4057 = vmul.f32 %v3975, 0.03125
        %v4058 = vmul.f32 %v3977, 0.03125
        %v4059 = vmul.f32 %v3979, 0.03125
        %v4060 = vmul.f32 %v3981, 0.03125
        %v4061 = vmul.f32 %v3983, 0.03125
        %v4062 = vmul.f32 %v3985, 0.03125
        %v4063 = vmul.f32 %v3987, 0.03125
        %v4064 = vmul.f32 %v3989, 0.03125
        %v4065 = vmul.f32 %v3991, 0.03125
        %v4066 = vmul.f32 %v3993, 0.03125
        %v4067 = vmul.f32 %v3995, 0.03125
        %v4068 = vmul.f32 %v3997, 0.03125
        %v4069 = vmul.f32 %v3999, 0.03125
        %v4070 = vmul.f32 %v4001, 0.03125
        %v4071 = vmul.f32 %v4003, 0.03125
        %v4072 = vmul.f32 %v4005, 0.03125
        %v4073 = vmul.f32 %v4007, 0.03125
        %v4074 = vmul.f32 %v4009, 0.03125
        %v4075 = vmul.f32 %v4011, 0.03125
        %v4076 = vadd.f32 %v4012, 1e-05
        %v4077 = vadd.f32 %v4013, 1e-05
        %v4078 = vadd.f32 %v4014, 1e-05
        %v4079 = vadd.f32 %v4015, 1e-05
        %v4080 = vadd.f32 %v4016, 1e-05
        %v4081 = vadd.f32 %v4017, 1e-05
        %v4082 = vadd.f32 %v4018, 1e-05
        %v4083 = vadd.f32 %v4019, 1e-05
        %v4084 = vadd.f32 %v4020, 1e-05
        %v4085 = vadd.f32 %v4021, 1e-05
        %v4086 = vadd.f32 %v4022, 1e-05
        %v4087 = vadd.f32 %v4023, 1e-05
        %v4088 = vadd.f32 %v4024, 1e-05
        %v4089 = vadd.f32 %v4025, 1e-05
        %v4090 = vadd.f32 %v4026, 1e-05
        %v4091 = vadd.f32 %v4027, 1e-05
        %v4092 = vadd.f32 %v4028, 1e-05
        %v4093 = vadd.f32 %v4029, 1e-05
        %v4094 = vadd.f32 %v4030, 1e-05
        %v4095 = vadd.f32 %v4031, 1e-05
        %v4096 = vadd.f32 %v4032, 1e-05
        %v4097 = vadd.f32 %v4033, 1e-05
        %v4098 = vadd.f32 %v4034, 1e-05
        %v4099 = vadd.f32 %v4035, 1e-05
        %v4100 = vadd.f32 %v4036, 1e-05
        %v4101 = vadd.f32 %v4037, 1e-05
        %v4102 = vadd.f32 %v4038, 1e-05
        %v4103 = vadd.f32 %v4039, 1e-05
        %v4104 = vadd.f32 %v4040, 1e-05
        %v4105 = vadd.f32 %v4041, 1e-05
        %v4106 = vadd.f32 %v4042, 1e-05
        %v4107 = vadd.f32 %v4043, 1e-05
        %v4108 = vadd.f32 %v4044, 1e-05
        %v4109 = vadd.f32 %v4045, 1e-05
        %v4110 = vadd.f32 %v4046, 1e-05
        %v4111 = vadd.f32 %v4047, 1e-05
        %v4112 = vadd.f32 %v4048, 1e-05
        %v4113 = vadd.f32 %v4049, 1e-05
        %v4114 = vadd.f32 %v4050, 1e-05
        %v4115 = vadd.f32 %v4051, 1e-05
        %v4116 = vadd.f32 %v4052, 1e-05
        %v4117 = vadd.f32 %v4053, 1e-05
        %v4118 = vadd.f32 %v4054, 1e-05
        %v4119 = vadd.f32 %v4055, 1e-05
        %v4120 = vadd.f32 %v4056, 1e-05
        %v4121 = vadd.f32 %v4057, 1e-05
        %v4122 = vadd.f32 %v4058, 1e-05
        %v4123 = vadd.f32 %v4059, 1e-05
        %v4124 = vadd.f32 %v4060, 1e-05
        %v4125 = vadd.f32 %v4061, 1e-05
        %v4126 = vadd.f32 %v4062, 1e-05
        %v4127 = vadd.f32 %v4063, 1e-05
        %v4128 = vadd.f32 %v4064, 1e-05
        %v4129 = vadd.f32 %v4065, 1e-05
        %v4130 = vadd.f32 %v4066, 1e-05
        %v4131 = vadd.f32 %v4067, 1e-05
        %v4132 = vadd.f32 %v4068, 1e-05
        %v4133 = vadd.f32 %v4069, 1e-05
        %v4134 = vadd.f32 %v4070, 1e-05
        %v4135 = vadd.f32 %v4071, 1e-05
        %v4136 = vadd.f32 %v4072, 1e-05
        %v4137 = vadd.f32 %v4073, 1e-05
        %v4138 = vadd.f32 %v4074, 1e-05
        %v4139 = vadd.f32 %v4075, 1e-05
        %v4140 = vrsqrt.pop %v4076
        %v4141 = vrsqrt.pop %v4077
        %v4142 = vrsqrt.pop %v4078
        %v4143 = vrsqrt.pop %v4079
        %v4144 = vrsqrt.pop %v4080
        %v4145 = vrsqrt.pop %v4081
        %v4146 = vrsqrt.pop %v4082
        %v4147 = vrsqrt.pop %v4083
        %v4148 = vrsqrt.pop %v4084
        %v4149 = vrsqrt.pop %v4085
        %v4150 = vrsqrt.pop %v4086
        %v4151 = vrsqrt.pop %v4087
        %v4152 = vrsqrt.pop %v4088
        %v4153 = vrsqrt.pop %v4089
        %v4154 = vrsqrt.pop %v4090
        %v4155 = vrsqrt.pop %v4091
        %v4156 = vrsqrt.pop %v4092
        %v4157 = vrsqrt.pop %v4093
        %v4158 = vrsqrt.pop %v4094
        %v4159 = vrsqrt.pop %v4095
        %v4160 = vrsqrt.pop %v4096
        %v4161 = vrsqrt.pop %v4097
        %v4162 = vrsqrt.pop %v4098
        %v4163 = vrsqrt.pop %v4099
        %v4164 = vrsqrt.pop %v4100
        %v4165 = vrsqrt.pop %v4101
        %v4166 = vrsqrt.pop %v4102
        %v4167 = vrsqrt.pop %v4103
        %v4168 = vrsqrt.pop %v4104
        %v4169 = vrsqrt.pop %v4105
        %v4170 = vrsqrt.pop %v4106
        %v4171 = vrsqrt.pop %v4107
        %v4172 = vrsqrt.pop %v4108
        %v4173 = vrsqrt.pop %v4109
        %v4174 = vrsqrt.pop %v4110
        %v4175 = vrsqrt.pop %v4111
        %v4176 = vrsqrt.pop %v4112
        %v4177 = vrsqrt.pop %v4113
        %v4178 = vrsqrt.pop %v4114
        %v4179 = vrsqrt.pop %v4115
        %v4180 = vrsqrt.pop %v4116
        %v4181 = vrsqrt.pop %v4117
        %v4182 = vrsqrt.pop %v4118
        %v4183 = vrsqrt.pop %v4119
        %v4184 = vrsqrt.pop %v4120
        %v4185 = vrsqrt.pop %v4121
        %v4186 = vrsqrt.pop %v4122
        %v4187 = vrsqrt.pop %v4123
        %v4188 = vrsqrt.pop %v4124
        %v4189 = vrsqrt.pop %v4125
        %v4190 = vrsqrt.pop %v4126
        %v4191 = vrsqrt.pop %v4127
        %v4192 = vrsqrt.pop %v4128
        %v4193 = vrsqrt.pop %v4129
        %v4194 = vrsqrt.pop %v4130
        %v4195 = vrsqrt.pop %v4131
        %v4196 = vrsqrt.pop %v4132
        %v4197 = vrsqrt.pop %v4133
        %v4198 = vrsqrt.pop %v4134
        %v4199 = vrsqrt.pop %v4135
        %v4200 = vrsqrt.pop %v4136
        %v4201 = vrsqrt.pop %v4137
        %v4202 = vrsqrt.pop %v4138
        %v4203 = vrsqrt.pop %v4139
        %v4204 = vmul.f32 %v3756, %v4140
        %v4205 = vmul.f32 %v3757, %v4141
        %v4206 = vmul.f32 %v3758, %v4142
        %v4207 = vmul.f32 %v3759, %v4143
        %v4208 = vmul.f32 %v3760, %v4144
        %v4209 = vmul.f32 %v3761, %v4145
        %v4210 = vmul.f32 %v3762, %v4146
        %v4211 = vmul.f32 %v3763, %v4147
        %v4212 = vmul.f32 %v3764, %v4148
        %v4213 = vmul.f32 %v3765, %v4149
        %v4214 = vmul.f32 %v3766, %v4150
        %v4215 = vmul.f32 %v3767, %v4151
        %v4216 = vmul.f32 %v3768, %v4152
        %v4217 = vmul.f32 %v3769, %v4153
        %v4218 = vmul.f32 %v3770, %v4154
        %v4219 = vmul.f32 %v3771, %v4155
        %v4220 = vmul.f32 %v3772, %v4156
        %v4221 = vmul.f32 %v3773, %v4157
        %v4222 = vmul.f32 %v3774, %v4158
        %v4223 = vmul.f32 %v3775, %v4159
        %v4224 = vmul.f32 %v3776, %v4160
        %v4225 = vmul.f32 %v3777, %v4161
        %v4226 = vmul.f32 %v3778, %v4162
        %v4227 = vmul.f32 %v3779, %v4163
        %v4228 = vmul.f32 %v3780, %v4164
        %v4229 = vmul.f32 %v3781, %v4165
        %v4230 = vmul.f32 %v3782, %v4166
        %v4231 = vmul.f32 %v3783, %v4167
        %v4232 = vmul.f32 %v3784, %v4168
        %v4233 = vmul.f32 %v3785, %v4169
        %v4234 = vmul.f32 %v3786, %v4170
        %v4235 = vmul.f32 %v3787, %v4171
        %v4236 = vmul.f32 %v3788, %v4172
        %v4237 = vmul.f32 %v3789, %v4173
        %v4238 = vmul.f32 %v3790, %v4174
        %v4239 = vmul.f32 %v3791, %v4175
        %v4240 = vmul.f32 %v3792, %v4176
        %v4241 = vmul.f32 %v3793, %v4177
        %v4242 = vmul.f32 %v3794, %v4178
        %v4243 = vmul.f32 %v3795, %v4179
        %v4244 = vmul.f32 %v3796, %v4180
        %v4245 = vmul.f32 %v3797, %v4181
        %v4246 = vmul.f32 %v3798, %v4182
        %v4247 = vmul.f32 %v3799, %v4183
        %v4248 = vmul.f32 %v3800, %v4184
        %v4249 = vmul.f32 %v3801, %v4185
        %v4250 = vmul.f32 %v3802, %v4186
        %v4251 = vmul.f32 %v3803, %v4187
        %v4252 = vmul.f32 %v3804, %v4188
        %v4253 = vmul.f32 %v3805, %v4189
        %v4254 = vmul.f32 %v3806, %v4190
        %v4255 = vmul.f32 %v3807, %v4191
        %v4256 = vmul.f32 %v3808, %v4192
        %v4257 = vmul.f32 %v3809, %v4193
        %v4258 = vmul.f32 %v3810, %v4194
        %v4259 = vmul.f32 %v3811, %v4195
        %v4260 = vmul.f32 %v3812, %v4196
        %v4261 = vmul.f32 %v3813, %v4197
        %v4262 = vmul.f32 %v3814, %v4198
        %v4263 = vmul.f32 %v3815, %v4199
        %v4264 = vmul.f32 %v3816, %v4200
        %v4265 = vmul.f32 %v3817, %v4201
        %v4266 = vmul.f32 %v3818, %v4202
        %v4267 = vmul.f32 %v3819, %v4203
        %v4269 = vlaneseq
        %v4270 = vshrl.u32 %v4269, 7
        %v4271 = vsub.s32 0, %v4270
        %v4272 = vrot.slane %v3498, %v4271
        %v4274 = vmul.f32 %v4204, %v4272
        %v4275 = vmul.f32 %v4205, %v4272
        %v4276 = vmul.f32 %v4206, %v4272
        %v4277 = vmul.f32 %v4207, %v4272
        %v4278 = vmul.f32 %v4208, %v4272
        %v4279 = vmul.f32 %v4209, %v4272
        %v4280 = vmul.f32 %v4210, %v4272
        %v4281 = vmul.f32 %v4211, %v4272
        %v4282 = vmul.f32 %v4212, %v4272
        %v4283 = vmul.f32 %v4213, %v4272
        %v4284 = vmul.f32 %v4214, %v4272
        %v4285 = vmul.f32 %v4215, %v4272
        %v4286 = vmul.f32 %v4216, %v4272
        %v4287 = vmul.f32 %v4217, %v4272
        %v4288 = vmul.f32 %v4218, %v4272
        %v4289 = vmul.f32 %v4219, %v4272
        %v4290 = vmul.f32 %v4220, %v4272
        %v4291 = vmul.f32 %v4221, %v4272
        %v4292 = vmul.f32 %v4222, %v4272
        %v4293 = vmul.f32 %v4223, %v4272
        %v4294 = vmul.f32 %v4224, %v4272
        %v4295 = vmul.f32 %v4225, %v4272
        %v4296 = vmul.f32 %v4226, %v4272
        %v4297 = vmul.f32 %v4227, %v4272
        %v4298 = vmul.f32 %v4228, %v4272
        %v4299 = vmul.f32 %v4229, %v4272
        %v4300 = vmul.f32 %v4230, %v4272
        %v4301 = vmul.f32 %v4231, %v4272
        %v4302 = vmul.f32 %v4232, %v4272
        %v4303 = vmul.f32 %v4233, %v4272
        %v4304 = vmul.f32 %v4234, %v4272
        %v4305 = vmul.f32 %v4235, %v4272
        %v4306 = vmul.f32 %v4236, %v4272
        %v4307 = vmul.f32 %v4237, %v4272
        %v4308 = vmul.f32 %v4238, %v4272
        %v4309 = vmul.f32 %v4239, %v4272
        %v4310 = vmul.f32 %v4240, %v4272
        %v4311 = vmul.f32 %v4241, %v4272
        %v4312 = vmul.f32 %v4242, %v4272
        %v4313 = vmul.f32 %v4243, %v4272
        %v4314 = vmul.f32 %v4244, %v4272
        %v4315 = vmul.f32 %v4245, %v4272
        %v4316 = vmul.f32 %v4246, %v4272
        %v4317 = vmul.f32 %v4247, %v4272
        %v4318 = vmul.f32 %v4248, %v4272
        %v4319 = vmul.f32 %v4249, %v4272
        %v4320 = vmul.f32 %v4250, %v4272
        %v4321 = vmul.f32 %v4251, %v4272
        %v4322 = vmul.f32 %v4252, %v4272
        %v4323 = vmul.f32 %v4253, %v4272
        %v4324 = vmul.f32 %v4254, %v4272
        %v4325 = vmul.f32 %v4255, %v4272
        %v4326 = vmul.f32 %v4256, %v4272
        %v4327 = vmul.f32 %v4257, %v4272
        %v4328 = vmul.f32 %v4258, %v4272
        %v4329 = vmul.f32 %v4259, %v4272
        %v4330 = vmul.f32 %v4260, %v4272
        %v4331 = vmul.f32 %v4261, %v4272
        %v4332 = vmul.f32 %v4262, %v4272
        %v4333 = vmul.f32 %v4263, %v4272
        %v4334 = vmul.f32 %v4264, %v4272
        %v4335 = vmul.f32 %v4265, %v4272
        %v4336 = vmul.f32 %v4266, %v4272
        %v4337 = vmul.f32 %v4267, %v4272
        %v4339 = vlaneseq
        %v4340 = vshrl.u32 %v4339, 7
        %v4341 = vsub.s32 0, %v4340
        %v4342 = vrot.slane %v3499, %v4341
        %v4344 = vadd.f32 %v4274, %v4342
        %v4345 = vadd.f32 %v4275, %v4342
        %v4346 = vadd.f32 %v4276, %v4342
        %v4347 = vadd.f32 %v4277, %v4342
        %v4348 = vadd.f32 %v4278, %v4342
        %v4349 = vadd.f32 %v4279, %v4342
        %v4350 = vadd.f32 %v4280, %v4342
        %v4351 = vadd.f32 %v4281, %v4342
        %v4352 = vadd.f32 %v4282, %v4342
        %v4353 = vadd.f32 %v4283, %v4342
        %v4354 = vadd.f32 %v4284, %v4342
        %v4355 = vadd.f32 %v4285, %v4342
        %v4356 = vadd.f32 %v4286, %v4342
        %v4357 = vadd.f32 %v4287, %v4342
        %v4358 = vadd.f32 %v4288, %v4342
        %v4359 = vadd.f32 %v4289, %v4342
        %v4360 = vadd.f32 %v4290, %v4342
        %v4361 = vadd.f32 %v4291, %v4342
        %v4362 = vadd.f32 %v4292, %v4342
        %v4363 = vadd.f32 %v4293, %v4342
        %v4364 = vadd.f32 %v4294, %v4342
        %v4365 = vadd.f32 %v4295, %v4342
        %v4366 = vadd.f32 %v4296, %v4342
        %v4367 = vadd.f32 %v4297, %v4342
        %v4368 = vadd.f32 %v4298, %v4342
        %v4369 = vadd.f32 %v4299, %v4342
        %v4370 = vadd.f32 %v4300, %v4342
        %v4371 = vadd.f32 %v4301, %v4342
        %v4372 = vadd.f32 %v4302, %v4342
        %v4373 = vadd.f32 %v4303, %v4342
        %v4374 = vadd.f32 %v4304, %v4342
        %v4375 = vadd.f32 %v4305, %v4342
        %v4376 = vadd.f32 %v4306, %v4342
        %v4377 = vadd.f32 %v4307, %v4342
        %v4378 = vadd.f32 %v4308, %v4342
        %v4379 = vadd.f32 %v4309, %v4342
        %v4380 = vadd.f32 %v4310, %v4342
        %v4381 = vadd.f32 %v4311, %v4342
        %v4382 = vadd.f32 %v4312, %v4342
        %v4383 = vadd.f32 %v4313, %v4342
        %v4384 = vadd.f32 %v4314, %v4342
        %v4385 = vadd.f32 %v4315, %v4342
        %v4386 = vadd.f32 %v4316, %v4342
        %v4387 = vadd.f32 %v4317, %v4342
        %v4388 = vadd.f32 %v4318, %v4342
        %v4389 = vadd.f32 %v4319, %v4342
        %v4390 = vadd.f32 %v4320, %v4342
        %v4391 = vadd.f32 %v4321, %v4342
        %v4392 = vadd.f32 %v4322, %v4342
        %v4393 = vadd.f32 %v4323, %v4342
        %v4394 = vadd.f32 %v4324, %v4342
        %v4395 = vadd.f32 %v4325, %v4342
        %v4396 = vadd.f32 %v4326, %v4342
        %v4397 = vadd.f32 %v4327, %v4342
        %v4398 = vadd.f32 %v4328, %v4342
        %v4399 = vadd.f32 %v4329, %v4342
        %v4400 = vadd.f32 %v4330, %v4342
        %v4401 = vadd.f32 %v4331, %v4342
        %v4402 = vadd.f32 %v4332, %v4342
        %v4403 = vadd.f32 %v4333, %v4342
        %v4404 = vadd.f32 %v4334, %v4342
        %v4405 = vadd.f32 %v4335, %v4342
        %v4406 = vadd.f32 %v4336, %v4342
        %v4407 = vadd.f32 %v4337, %v4342
        %v4408 = vld [vmem:[%s637] sm:$0xf]
        %v4409 = vld [vmem:[%s637 + $0x4] sm:$0xf]
        %v4410 = vld [vmem:[%s637 + $0x8] sm:$0xf]
        %v4411 = vld [vmem:[%s637 + $0xc] sm:$0xf]
        %v4412 = vld [vmem:[%s637 + $0x10] sm:$0xf]
        %v4413 = vld [vmem:[%s637 + $0x14] sm:$0xf]
        %v4414 = vld [vmem:[%s637 + $0x18] sm:$0xf]
        %v4415 = vld [vmem:[%s637 + $0x1c] sm:$0xf]
        %v4416 = vld [vmem:[%s637 + $0x20] sm:$0xf]
        %v4417 = vld [vmem:[%s637 + $0x24] sm:$0xf]
        %v4418 = vld [vmem:[%s637 + $0x28] sm:$0xf]
        %v4419 = vld [vmem:[%s637 + $0x2c] sm:$0xf]
        %v4420 = vld [vmem:[%s637 + $0x30] sm:$0xf]
        %v4421 = vld [vmem:[%s637 + $0x34] sm:$0xf]
        %v4422 = vld [vmem:[%s637 + $0x38] sm:$0xf]
        %v4423 = vld [vmem:[%s637 + $0x3c] sm:$0xf]
        %v4424 = vpack.c.bf16 %v4345, %v4344
        %v4425 = vpack.c.bf16 %v4347, %v4346
        %v4426 = vpack.c.bf16 %v4349, %v4348
        %v4427 = vpack.c.bf16 %v4351, %v4350
        %v4428 = vpack.c.bf16 %v4353, %v4352
        %v4429 = vpack.c.bf16 %v4355, %v4354
        %v4430 = vpack.c.bf16 %v4357, %v4356
        %v4431 = vpack.c.bf16 %v4359, %v4358
        %v4432 = vpack.c.bf16 %v4361, %v4360
        %v4433 = vpack.c.bf16 %v4363, %v4362
        %v4434 = vpack.c.bf16 %v4365, %v4364
        %v4435 = vpack.c.bf16 %v4367, %v4366
        %v4436 = vpack.c.bf16 %v4369, %v4368
        %v4437 = vpack.c.bf16 %v4371, %v4370
        %v4438 = vpack.c.bf16 %v4373, %v4372
        %v4439 = vpack.c.bf16 %v4375, %v4374
        %v4440 = vpack.c.bf16 %v4377, %v4376
        %v4441 = vpack.c.bf16 %v4379, %v4378
        %v4442 = vpack.c.bf16 %v4381, %v4380
        %v4443 = vpack.c.bf16 %v4383, %v4382
        %v4444 = vpack.c.bf16 %v4385, %v4384
        %v4445 = vpack.c.bf16 %v4387, %v4386
        %v4446 = vpack.c.bf16 %v4389, %v4388
        %v4447 = vpack.c.bf16 %v4391, %v4390
        %v4448 = vpack.c.bf16 %v4393, %v4392
        %v4449 = vpack.c.bf16 %v4395, %v4394
        %v4450 = vpack.c.bf16 %v4397, %v4396
        %v4451 = vpack.c.bf16 %v4399, %v4398
        %v4452 = vpack.c.bf16 %v4401, %v4400
        %v4453 = vpack.c.bf16 %v4403, %v4402
        %v4454 = vpack.c.bf16 %v4405, %v4404
        %v4455 = vpack.c.bf16 %v4407, %v4406
        %v4456 = vld [vmem:[%s640] sm:$0x1]
        %v4458 = vlaneseq
        %v4459 = vshrl.u32 %v4458, 7
        %v4460 = vsub.s32 0, %v4459
        %v4461 = vrot.slane %v4456, %v4460
        %v4479 = vunpack.c.l.b16 %v4408
        %v4480 = vunpack.c.l.b16 %v4409
        %v4481 = vunpack.c.l.b16 %v4410
        %v4482 = vunpack.c.l.b16 %v4411
        %v4483 = vunpack.c.l.b16 %v4412
        %v4484 = vunpack.c.l.b16 %v4413
        %v4485 = vunpack.c.l.b16 %v4414
        %v4486 = vunpack.c.l.b16 %v4415
        %v4487 = vunpack.c.l.b16 %v4416
        %v4488 = vunpack.c.l.b16 %v4417
        %v4489 = vunpack.c.l.b16 %v4418
        %v4490 = vunpack.c.l.b16 %v4419
        %v4491 = vunpack.c.l.b16 %v4420
        %v4492 = vunpack.c.l.b16 %v4421
        %v4493 = vunpack.c.l.b16 %v4422
        %v4494 = vunpack.c.l.b16 %v4423
        %v4495 = vpack.c.b16 %v4480, %v4479
        %v4496 = vpack.c.b16 %v4482, %v4481
        %v4497 = vpack.c.b16 %v4484, %v4483
        %v4498 = vpack.c.b16 %v4486, %v4485
        %v4499 = vpack.c.b16 %v4488, %v4487
        %v4500 = vpack.c.b16 %v4490, %v4489
        %v4501 = vpack.c.b16 %v4492, %v4491
        %v4502 = vpack.c.b16 %v4494, %v4493
        %4511 = vmatprep.subr.bf16.mxu0 0
        %4512 = vmatpush1.bf16.msra.mxu0 %v4502
        %4513 = vmatprep.subr.bf16.mxu0 0
        %4514 = vmatpush1.bf16.msra.mxu0 %v4501
        %4515 = vmatprep.subr.bf16.mxu0 0
        %4516 = vmatpush1.bf16.msra.mxu0 %v4500
        %4517 = vmatprep.subr.bf16.mxu0 0
        %4518 = vmatpush1.bf16.msra.mxu0 %v4499
        %4519 = vmatprep.subr.bf16.mxu0 0
        %4520 = vmatpush1.bf16.msra.mxu0 %v4498
        %4521 = vmatprep.subr.bf16.mxu0 0
        %4522 = vmatpush1.bf16.msra.mxu0 %v4497
        %4523 = vmatprep.subr.bf16.mxu0 0
        %4524 = vmatpush1.bf16.msra.mxu0 %v4496
        %4525 = vmatprep.subr.bf16.mxu0 0
        %4526 = vmatpush1.bf16.msra.mxu0 %v4495
        %4527 = vmatprep.subr.bf16.mxu0 0
        %4528 = vmatpush2.bf16.msra.mxu0 0
        %4529 = vmatprep.subr.bf16.mxu0 0
        %4530 = vmatpush2.bf16.msra.mxu0 0
        %4531 = vmatprep.subr.bf16.mxu0 0
        %4532 = vmatpush2.bf16.msra.mxu0 0
        %4533 = vmatprep.subr.bf16.mxu0 0
        %4534 = vmatpush2.bf16.msra.mxu0 0
        %4535 = vmatprep.subr.bf16.mxu0 0
        %4536 = vmatpush2.bf16.msra.mxu0 0
        %4537 = vmatprep.subr.bf16.mxu0 0
        %4538 = vmatpush2.bf16.msra.mxu0 0
        %4539 = vmatprep.subr.bf16.mxu0 0
        %4540 = vmatpush2.bf16.msra.mxu0 0
        %4541 = vmatprep.subr.bf16.mxu0 0
        %4542 = vmatpush2.bf16.msra.mxu0 0
        %4543 = vmatprep.mubr.bf16.mxu0 0
        %4544 = vmatmul.mubr.bf16.gmra.mxu0 %v4424
        %v4545 = vpop.f32.mrf.mxu0
        %v4546 = vadd.f32 %v4461, %v4545
        %v4547 = vpop.f32.mrf.mxu0
        %v4548 = vpop.f32.mrf.mxu0
        %v4549 = vadd.f32 %v4461, %v4548
        %v4550 = vpop.f32.mrf.mxu0
        %4551 = vmatprep.mubr.bf16.mxu0 0
        %4552 = vmatmul.mubr.bf16.gmra.mxu0 %v4425
        %v4553 = vpop.f32.mrf.mxu0
        %v4554 = vadd.f32 %v4461, %v4553
        %v4555 = vpop.f32.mrf.mxu0
        %v4556 = vpop.f32.mrf.mxu0
        %v4557 = vadd.f32 %v4461, %v4556
        %v4558 = vpop.f32.mrf.mxu0
        %4559 = vmatprep.mubr.bf16.mxu0 0
        %4560 = vmatmul.mubr.bf16.gmra.mxu0 %v4426
        %v4561 = vpop.f32.mrf.mxu0
        %v4562 = vadd.f32 %v4461, %v4561
        %v4563 = vpop.f32.mrf.mxu0
        %v4564 = vpop.f32.mrf.mxu0
        %v4565 = vadd.f32 %v4461, %v4564
        %v4566 = vpop.f32.mrf.mxu0
        %4567 = vmatprep.mubr.bf16.mxu0 0
        %4568 = vmatmul.mubr.bf16.gmra.mxu0 %v4427
        %v4569 = vpop.f32.mrf.mxu0
        %v4570 = vadd.f32 %v4461, %v4569
        %v4571 = vpop.f32.mrf.mxu0
        %v4572 = vpop.f32.mrf.mxu0
        %v4573 = vadd.f32 %v4461, %v4572
        %v4574 = vpop.f32.mrf.mxu0
        %4575 = vmatprep.mubr.bf16.mxu0 0
        %4576 = vmatmul.mubr.bf16.gmra.mxu0 %v4428
        %v4577 = vpop.f32.mrf.mxu0
        %v4578 = vadd.f32 %v4461, %v4577
        %v4579 = vpop.f32.mrf.mxu0
        %v4580 = vpop.f32.mrf.mxu0
        %v4581 = vadd.f32 %v4461, %v4580
        %v4582 = vpop.f32.mrf.mxu0
        %4583 = vmatprep.mubr.bf16.mxu0 0
        %4584 = vmatmul.mubr.bf16.gmra.mxu0 %v4429
        %v4585 = vpop.f32.mrf.mxu0
        %v4586 = vadd.f32 %v4461, %v4585
        %v4587 = vpop.f32.mrf.mxu0
        %v4588 = vpop.f32.mrf.mxu0
        %v4589 = vadd.f32 %v4461, %v4588
        %v4590 = vpop.f32.mrf.mxu0
        %4591 = vmatprep.mubr.bf16.mxu0 0
        %4592 = vmatmul.mubr.bf16.gmra.mxu0 %v4430
        %v4593 = vpop.f32.mrf.mxu0
        %v4594 = vadd.f32 %v4461, %v4593
        %v4595 = vpop.f32.mrf.mxu0
        %v4596 = vpop.f32.mrf.mxu0
        %v4597 = vadd.f32 %v4461, %v4596
        %v4598 = vpop.f32.mrf.mxu0
        %4599 = vmatprep.mubr.bf16.mxu0 0
        %4600 = vmatmul.mubr.bf16.gmra.mxu0 %v4431
        %v4601 = vpop.f32.mrf.mxu0
        %v4602 = vadd.f32 %v4461, %v4601
        %v4603 = vpop.f32.mrf.mxu0
        %v4604 = vpop.f32.mrf.mxu0
        %v4605 = vadd.f32 %v4461, %v4604
        %v4606 = vpop.f32.mrf.mxu0
        %4607 = vmatprep.mubr.bf16.mxu0 0
        %4608 = vmatmul.mubr.bf16.gmra.mxu0 %v4432
        %v4609 = vpop.f32.mrf.mxu0
        %v4610 = vadd.f32 %v4461, %v4609
        %v4611 = vpop.f32.mrf.mxu0
        %v4612 = vpop.f32.mrf.mxu0
        %v4613 = vadd.f32 %v4461, %v4612
        %v4614 = vpop.f32.mrf.mxu0
        %4615 = vmatprep.mubr.bf16.mxu0 0
        %4616 = vmatmul.mubr.bf16.gmra.mxu0 %v4433
        %v4617 = vpop.f32.mrf.mxu0
        %v4618 = vadd.f32 %v4461, %v4617
        %v4619 = vpop.f32.mrf.mxu0
        %v4620 = vpop.f32.mrf.mxu0
        %v4621 = vadd.f32 %v4461, %v4620
        %v4622 = vpop.f32.mrf.mxu0
        %4623 = vmatprep.mubr.bf16.mxu0 0
        %4624 = vmatmul.mubr.bf16.gmra.mxu0 %v4434
        %v4625 = vpop.f32.mrf.mxu0
        %v4626 = vadd.f32 %v4461, %v4625
        %v4627 = vpop.f32.mrf.mxu0
        %v4628 = vpop.f32.mrf.mxu0
        %v4629 = vadd.f32 %v4461, %v4628
        %v4630 = vpop.f32.mrf.mxu0
        %4631 = vmatprep.mubr.bf16.mxu0 0
        %4632 = vmatmul.mubr.bf16.gmra.mxu0 %v4435
        %v4633 = vpop.f32.mrf.mxu0
        %v4634 = vadd.f32 %v4461, %v4633
        %v4635 = vpop.f32.mrf.mxu0
        %v4636 = vpop.f32.mrf.mxu0
        %v4637 = vadd.f32 %v4461, %v4636
        %v4638 = vpop.f32.mrf.mxu0
        %4639 = vmatprep.mubr.bf16.mxu0 0
        %4640 = vmatmul.mubr.bf16.gmra.mxu0 %v4436
        %v4641 = vpop.f32.mrf.mxu0
        %v4642 = vadd.f32 %v4461, %v4641
        %v4643 = vpop.f32.mrf.mxu0
        %v4644 = vpop.f32.mrf.mxu0
        %v4645 = vadd.f32 %v4461, %v4644
        %v4646 = vpop.f32.mrf.mxu0
        %4647 = vmatprep.mubr.bf16.mxu0 0
        %4648 = vmatmul.mubr.bf16.gmra.mxu0 %v4437
        %v4649 = vpop.f32.mrf.mxu0
        %v4650 = vadd.f32 %v4461, %v4649
        %v4651 = vpop.f32.mrf.mxu0
        %v4652 = vpop.f32.mrf.mxu0
        %v4653 = vadd.f32 %v4461, %v4652
        %v4654 = vpop.f32.mrf.mxu0
        %4655 = vmatprep.mubr.bf16.mxu0 0
        %4656 = vmatmul.mubr.bf16.gmra.mxu0 %v4438
        %v4657 = vpop.f32.mrf.mxu0
        %v4658 = vadd.f32 %v4461, %v4657
        %v4659 = vpop.f32.mrf.mxu0
        %v4660 = vpop.f32.mrf.mxu0
        %v4661 = vadd.f32 %v4461, %v4660
        %v4662 = vpop.f32.mrf.mxu0
        %4663 = vmatprep.mubr.bf16.mxu0 0
        %4664 = vmatmul.mubr.bf16.gmra.mxu0 %v4439
        %v4665 = vpop.f32.mrf.mxu0
        %v4666 = vadd.f32 %v4461, %v4665
        %v4667 = vpop.f32.mrf.mxu0
        %v4668 = vpop.f32.mrf.mxu0
        %v4669 = vadd.f32 %v4461, %v4668
        %v4670 = vpop.f32.mrf.mxu0
        %4671 = vmatprep.mubr.bf16.mxu0 0
        %4672 = vmatmul.mubr.bf16.gmra.mxu0 %v4440
        %v4673 = vpop.f32.mrf.mxu0
        %v4674 = vadd.f32 %v4461, %v4673
        %v4675 = vpop.f32.mrf.mxu0
        %v4676 = vpop.f32.mrf.mxu0
        %v4677 = vadd.f32 %v4461, %v4676
        %v4678 = vpop.f32.mrf.mxu0
        %4679 = vmatprep.mubr.bf16.mxu0 0
        %4680 = vmatmul.mubr.bf16.gmra.mxu0 %v4441
        %v4681 = vpop.f32.mrf.mxu0
        %v4682 = vadd.f32 %v4461, %v4681
        %v4683 = vpop.f32.mrf.mxu0
        %v4684 = vpop.f32.mrf.mxu0
        %v4685 = vadd.f32 %v4461, %v4684
        %v4686 = vpop.f32.mrf.mxu0
        %4687 = vmatprep.mubr.bf16.mxu0 0
        %4688 = vmatmul.mubr.bf16.gmra.mxu0 %v4442
        %v4689 = vpop.f32.mrf.mxu0
        %v4690 = vadd.f32 %v4461, %v4689
        %v4691 = vpop.f32.mrf.mxu0
        %v4692 = vpop.f32.mrf.mxu0
        %v4693 = vadd.f32 %v4461, %v4692
        %v4694 = vpop.f32.mrf.mxu0
        %4695 = vmatprep.mubr.bf16.mxu0 0
        %4696 = vmatmul.mubr.bf16.gmra.mxu0 %v4443
        %v4697 = vpop.f32.mrf.mxu0
        %v4698 = vadd.f32 %v4461, %v4697
        %v4699 = vpop.f32.mrf.mxu0
        %v4700 = vpop.f32.mrf.mxu0
        %v4701 = vadd.f32 %v4461, %v4700
        %v4702 = vpop.f32.mrf.mxu0
        %4703 = vmatprep.mubr.bf16.mxu0 0
        %4704 = vmatmul.mubr.bf16.gmra.mxu0 %v4444
        %v4705 = vpop.f32.mrf.mxu0
        %v4706 = vadd.f32 %v4461, %v4705
        %v4707 = vpop.f32.mrf.mxu0
        %v4708 = vpop.f32.mrf.mxu0
        %v4709 = vadd.f32 %v4461, %v4708
        %v4710 = vpop.f32.mrf.mxu0
        %4711 = vmatprep.mubr.bf16.mxu0 0
        %4712 = vmatmul.mubr.bf16.gmra.mxu0 %v4445
        %v4713 = vpop.f32.mrf.mxu0
        %v4714 = vadd.f32 %v4461, %v4713
        %v4715 = vpop.f32.mrf.mxu0
        %v4716 = vpop.f32.mrf.mxu0
        %v4717 = vadd.f32 %v4461, %v4716
        %v4718 = vpop.f32.mrf.mxu0
        %4719 = vmatprep.mubr.bf16.mxu0 0
        %4720 = vmatmul.mubr.bf16.gmra.mxu0 %v4446
        %v4721 = vpop.f32.mrf.mxu0
        %v4722 = vadd.f32 %v4461, %v4721
        %v4723 = vpop.f32.mrf.mxu0
        %v4724 = vpop.f32.mrf.mxu0
        %v4725 = vadd.f32 %v4461, %v4724
        %v4726 = vpop.f32.mrf.mxu0
        %4727 = vmatprep.mubr.bf16.mxu0 0
        %4728 = vmatmul.mubr.bf16.gmra.mxu0 %v4447
        %v4729 = vpop.f32.mrf.mxu0
        %v4730 = vadd.f32 %v4461, %v4729
        %v4731 = vpop.f32.mrf.mxu0
        %v4732 = vpop.f32.mrf.mxu0
        %v4733 = vadd.f32 %v4461, %v4732
        %v4734 = vpop.f32.mrf.mxu0
        %4735 = vmatprep.mubr.bf16.mxu0 0
        %4736 = vmatmul.mubr.bf16.gmra.mxu0 %v4448
        %v4737 = vpop.f32.mrf.mxu0
        %v4738 = vadd.f32 %v4461, %v4737
        %v4739 = vpop.f32.mrf.mxu0
        %v4740 = vpop.f32.mrf.mxu0
        %v4741 = vadd.f32 %v4461, %v4740
        %v4742 = vpop.f32.mrf.mxu0
        %4743 = vmatprep.mubr.bf16.mxu0 0
        %4744 = vmatmul.mubr.bf16.gmra.mxu0 %v4449
        %v4745 = vpop.f32.mrf.mxu0
        %v4746 = vadd.f32 %v4461, %v4745
        %v4747 = vpop.f32.mrf.mxu0
        %v4748 = vpop.f32.mrf.mxu0
        %v4749 = vadd.f32 %v4461, %v4748
        %v4750 = vpop.f32.mrf.mxu0
        %4751 = vmatprep.mubr.bf16.mxu0 0
        %4752 = vmatmul.mubr.bf16.gmra.mxu0 %v4450
        %v4753 = vpop.f32.mrf.mxu0
        %v4754 = vadd.f32 %v4461, %v4753
        %v4755 = vpop.f32.mrf.mxu0
        %v4756 = vpop.f32.mrf.mxu0
        %v4757 = vadd.f32 %v4461, %v4756
        %v4758 = vpop.f32.mrf.mxu0
        %4759 = vmatprep.mubr.bf16.mxu0 0
        %4760 = vmatmul.mubr.bf16.gmra.mxu0 %v4451
        %v4761 = vpop.f32.mrf.mxu0
        %v4762 = vadd.f32 %v4461, %v4761
        %v4763 = vpop.f32.mrf.mxu0
        %v4764 = vpop.f32.mrf.mxu0
        %v4765 = vadd.f32 %v4461, %v4764
        %v4766 = vpop.f32.mrf.mxu0
        %4767 = vmatprep.mubr.bf16.mxu0 0
        %4768 = vmatmul.mubr.bf16.gmra.mxu0 %v4452
        %v4769 = vpop.f32.mrf.mxu0
        %v4770 = vadd.f32 %v4461, %v4769
        %v4771 = vpop.f32.mrf.mxu0
        %v4772 = vpop.f32.mrf.mxu0
        %v4773 = vadd.f32 %v4461, %v4772
        %v4774 = vpop.f32.mrf.mxu0
        %4775 = vmatprep.mubr.bf16.mxu0 0
        %4776 = vmatmul.mubr.bf16.gmra.mxu0 %v4453
        %v4777 = vpop.f32.mrf.mxu0
        %v4778 = vadd.f32 %v4461, %v4777
        %v4779 = vpop.f32.mrf.mxu0
        %v4780 = vpop.f32.mrf.mxu0
        %v4781 = vadd.f32 %v4461, %v4780
        %v4782 = vpop.f32.mrf.mxu0
        %4783 = vmatprep.mubr.bf16.mxu0 0
        %4784 = vmatmul.mubr.bf16.gmra.mxu0 %v4454
        %v4785 = vpop.f32.mrf.mxu0
        %v4786 = vadd.f32 %v4461, %v4785
        %v4787 = vpop.f32.mrf.mxu0
        %v4788 = vpop.f32.mrf.mxu0
        %v4789 = vadd.f32 %v4461, %v4788
        %v4790 = vpop.f32.mrf.mxu0
        %4791 = vmatprep.mubr.bf16.mxu0 0
        %4792 = vmatmul.mubr.bf16.gmra.mxu0 %v4455
        %v4793 = vpop.f32.mrf.mxu0
        %v4794 = vadd.f32 %v4461, %v4793
        %v4795 = vpop.f32.mrf.mxu0
        %v4796 = vpop.f32.mrf.mxu0
        %v4797 = vadd.f32 %v4461, %v4796
        %v4798 = vpop.f32.mrf.mxu0
        %4799 = vdwg.mxu0
        %v4800 = vpack.c.bf16 %v4549, %v4546
        %v4801 = vpack.c.bf16 %v4557, %v4554
        %v4802 = vpack.c.bf16 %v4565, %v4562
        %v4803 = vpack.c.bf16 %v4573, %v4570
        %v4804 = vpack.c.bf16 %v4581, %v4578
        %v4805 = vpack.c.bf16 %v4589, %v4586
        %v4806 = vpack.c.bf16 %v4597, %v4594
        %v4807 = vpack.c.bf16 %v4605, %v4602
        %v4808 = vpack.c.bf16 %v4613, %v4610
        %v4809 = vpack.c.bf16 %v4621, %v4618
        %v4810 = vpack.c.bf16 %v4629, %v4626
        %v4811 = vpack.c.bf16 %v4637, %v4634
        %v4812 = vpack.c.bf16 %v4645, %v4642
        %v4813 = vpack.c.bf16 %v4653, %v4650
        %v4814 = vpack.c.bf16 %v4661, %v4658
        %v4815 = vpack.c.bf16 %v4669, %v4666
        %v4816 = vpack.c.bf16 %v4677, %v4674
        %v4817 = vpack.c.bf16 %v4685, %v4682
        %v4818 = vpack.c.bf16 %v4693, %v4690
        %v4819 = vpack.c.bf16 %v4701, %v4698
        %v4820 = vpack.c.bf16 %v4709, %v4706
        %v4821 = vpack.c.bf16 %v4717, %v4714
        %v4822 = vpack.c.bf16 %v4725, %v4722
        %v4823 = vpack.c.bf16 %v4733, %v4730
        %v4824 = vpack.c.bf16 %v4741, %v4738
        %v4825 = vpack.c.bf16 %v4749, %v4746
        %v4826 = vpack.c.bf16 %v4757, %v4754
        %v4827 = vpack.c.bf16 %v4765, %v4762
        %v4828 = vpack.c.bf16 %v4773, %v4770
        %v4829 = vpack.c.bf16 %v4781, %v4778
        %v4830 = vpack.c.bf16 %v4789, %v4786
        %v4831 = vpack.c.bf16 %v4797, %v4794
        %v4832 = vmul.bf16 %v4800, 1056980736
        %v4833 = vmul.bf16 %v4801, 1056980736
        %v4834 = vmul.bf16 %v4802, 1056980736
        %v4835 = vmul.bf16 %v4803, 1056980736
        %v4836 = vmul.bf16 %v4804, 1056980736
        %v4837 = vmul.bf16 %v4805, 1056980736
        %v4838 = vmul.bf16 %v4806, 1056980736
        %v4839 = vmul.bf16 %v4807, 1056980736
        %v4840 = vmul.bf16 %v4808, 1056980736
        %v4841 = vmul.bf16 %v4809, 1056980736
        %v4842 = vmul.bf16 %v4810, 1056980736
        %v4843 = vmul.bf16 %v4811, 1056980736
        %v4844 = vmul.bf16 %v4812, 1056980736
        %v4845 = vmul.bf16 %v4813, 1056980736
        %v4846 = vmul.bf16 %v4814, 1056980736
        %v4847 = vmul.bf16 %v4815, 1056980736
        %v4848 = vmul.bf16 %v4816, 1056980736
        %v4849 = vmul.bf16 %v4817, 1056980736
        %v4850 = vmul.bf16 %v4818, 1056980736
        %v4851 = vmul.bf16 %v4819, 1056980736
        %v4852 = vmul.bf16 %v4820, 1056980736
        %v4853 = vmul.bf16 %v4821, 1056980736
        %v4854 = vmul.bf16 %v4822, 1056980736
        %v4855 = vmul.bf16 %v4823, 1056980736
        %v4856 = vmul.bf16 %v4824, 1056980736
        %v4857 = vmul.bf16 %v4825, 1056980736
        %v4858 = vmul.bf16 %v4826, 1056980736
        %v4859 = vmul.bf16 %v4827, 1056980736
        %v4860 = vmul.bf16 %v4828, 1056980736
        %v4861 = vmul.bf16 %v4829, 1056980736
        %v4862 = vmul.bf16 %v4830, 1056980736
        %v4863 = vmul.bf16 %v4831, 1056980736
        %v4864 = vmul.bf16 %v4800, 1027030327
        %v4865 = vmul.bf16 %v4801, 1027030327
        %v4866 = vmul.bf16 %v4802, 1027030327
        %v4867 = vmul.bf16 %v4803, 1027030327
        %v4868 = vmul.bf16 %v4804, 1027030327
        %v4869 = vmul.bf16 %v4805, 1027030327
        %v4870 = vmul.bf16 %v4806, 1027030327
        %v4871 = vmul.bf16 %v4807, 1027030327
        %v4872 = vmul.bf16 %v4808, 1027030327
        %v4873 = vmul.bf16 %v4809, 1027030327
        %v4874 = vmul.bf16 %v4810, 1027030327
        %v4875 = vmul.bf16 %v4811, 1027030327
        %v4876 = vmul.bf16 %v4812, 1027030327
        %v4877 = vmul.bf16 %v4813, 1027030327
        %v4878 = vmul.bf16 %v4814, 1027030327
        %v4879 = vmul.bf16 %v4815, 1027030327
        %v4880 = vmul.bf16 %v4816, 1027030327
        %v4881 = vmul.bf16 %v4817, 1027030327
        %v4882 = vmul.bf16 %v4818, 1027030327
        %v4883 = vmul.bf16 %v4819, 1027030327
        %v4884 = vmul.bf16 %v4820, 1027030327
        %v4885 = vmul.bf16 %v4821, 1027030327
        %v4886 = vmul.bf16 %v4822, 1027030327
        %v4887 = vmul.bf16 %v4823, 1027030327
        %v4888 = vmul.bf16 %v4824, 1027030327
        %v4889 = vmul.bf16 %v4825, 1027030327
        %v4890 = vmul.bf16 %v4826, 1027030327
        %v4891 = vmul.bf16 %v4827, 1027030327
        %v4892 = vmul.bf16 %v4828, 1027030327
        %v4893 = vmul.bf16 %v4829, 1027030327
        %v4894 = vmul.bf16 %v4830, 1027030327
        %v4895 = vmul.bf16 %v4831, 1027030327
        %v4896 = vmul.bf16 %v4864, %v4800
        %v4897 = vmul.bf16 %v4865, %v4801
        %v4898 = vmul.bf16 %v4866, %v4802
        %v4899 = vmul.bf16 %v4867, %v4803
        %v4900 = vmul.bf16 %v4868, %v4804
        %v4901 = vmul.bf16 %v4869, %v4805
        %v4902 = vmul.bf16 %v4870, %v4806
        %v4903 = vmul.bf16 %v4871, %v4807
        %v4904 = vmul.bf16 %v4872, %v4808
        %v4905 = vmul.bf16 %v4873, %v4809
        %v4906 = vmul.bf16 %v4874, %v4810
        %v4907 = vmul.bf16 %v4875, %v4811
        %v4908 = vmul.bf16 %v4876, %v4812
        %v4909 = vmul.bf16 %v4877, %v4813
        %v4910 = vmul.bf16 %v4878, %v4814
        %v4911 = vmul.bf16 %v4879, %v4815
        %v4912 = vmul.bf16 %v4880, %v4816
        %v4913 = vmul.bf16 %v4881, %v4817
        %v4914 = vmul.bf16 %v4882, %v4818
        %v4915 = vmul.bf16 %v4883, %v4819
        %v4916 = vmul.bf16 %v4884, %v4820
        %v4917 = vmul.bf16 %v4885, %v4821
        %v4918 = vmul.bf16 %v4886, %v4822
        %v4919 = vmul.bf16 %v4887, %v4823
        %v4920 = vmul.bf16 %v4888, %v4824
        %v4921 = vmul.bf16 %v4889, %v4825
        %v4922 = vmul.bf16 %v4890, %v4826
        %v4923 = vmul.bf16 %v4891, %v4827
        %v4924 = vmul.bf16 %v4892, %v4828
        %v4925 = vmul.bf16 %v4893, %v4829
        %v4926 = vmul.bf16 %v4894, %v4830
        %v4927 = vmul.bf16 %v4895, %v4831
        %v4928 = vmul.bf16 %v4896, %v4800
        %v4929 = vmul.bf16 %v4897, %v4801
        %v4930 = vmul.bf16 %v4898, %v4802
        %v4931 = vmul.bf16 %v4899, %v4803
        %v4932 = vmul.bf16 %v4900, %v4804
        %v4933 = vmul.bf16 %v4901, %v4805
        %v4934 = vmul.bf16 %v4902, %v4806
        %v4935 = vmul.bf16 %v4903, %v4807
        %v4936 = vmul.bf16 %v4904, %v4808
        %v4937 = vmul.bf16 %v4905, %v4809
        %v4938 = vmul.bf16 %v4906, %v4810
        %v4939 = vmul.bf16 %v4907, %v4811
        %v4940 = vmul.bf16 %v4908, %v4812
        %v4941 = vmul.bf16 %v4909, %v4813
        %v4942 = vmul.bf16 %v4910, %v4814
        %v4943 = vmul.bf16 %v4911, %v4815
        %v4944 = vmul.bf16 %v4912, %v4816
        %v4945 = vmul.bf16 %v4913, %v4817
        %v4946 = vmul.bf16 %v4914, %v4818
        %v4947 = vmul.bf16 %v4915, %v4819
        %v4948 = vmul.bf16 %v4916, %v4820
        %v4949 = vmul.bf16 %v4917, %v4821
        %v4950 = vmul.bf16 %v4918, %v4822
        %v4951 = vmul.bf16 %v4919, %v4823
        %v4952 = vmul.bf16 %v4920, %v4824
        %v4953 = vmul.bf16 %v4921, %v4825
        %v4954 = vmul.bf16 %v4922, %v4826
        %v4955 = vmul.bf16 %v4923, %v4827
        %v4956 = vmul.bf16 %v4924, %v4828
        %v4957 = vmul.bf16 %v4925, %v4829
        %v4958 = vmul.bf16 %v4926, %v4830
        %v4959 = vmul.bf16 %v4927, %v4831
        %v4960 = vadd.bf16 %v4800, %v4928
        %v4961 = vadd.bf16 %v4801, %v4929
        %v4962 = vadd.bf16 %v4802, %v4930
        %v4963 = vadd.bf16 %v4803, %v4931
        %v4964 = vadd.bf16 %v4804, %v4932
        %v4965 = vadd.bf16 %v4805, %v4933
        %v4966 = vadd.bf16 %v4806, %v4934
        %v4967 = vadd.bf16 %v4807, %v4935
        %v4968 = vadd.bf16 %v4808, %v4936
        %v4969 = vadd.bf16 %v4809, %v4937
        %v4970 = vadd.bf16 %v4810, %v4938
        %v4971 = vadd.bf16 %v4811, %v4939
        %v4972 = vadd.bf16 %v4812, %v4940
        %v4973 = vadd.bf16 %v4813, %v4941
        %v4974 = vadd.bf16 %v4814, %v4942
        %v4975 = vadd.bf16 %v4815, %v4943
        %v4976 = vadd.bf16 %v4816, %v4944
        %v4977 = vadd.bf16 %v4817, %v4945
        %v4978 = vadd.bf16 %v4818, %v4946
        %v4979 = vadd.bf16 %v4819, %v4947
        %v4980 = vadd.bf16 %v4820, %v4948
        %v4981 = vadd.bf16 %v4821, %v4949
        %v4982 = vadd.bf16 %v4822, %v4950
        %v4983 = vadd.bf16 %v4823, %v4951
        %v4984 = vadd.bf16 %v4824, %v4952
        %v4985 = vadd.bf16 %v4825, %v4953
        %v4986 = vadd.bf16 %v4826, %v4954
        %v4987 = vadd.bf16 %v4827, %v4955
        %v4988 = vadd.bf16 %v4828, %v4956
        %v4989 = vadd.bf16 %v4829, %v4957
        %v4990 = vadd.bf16 %v4830, %v4958
        %v4991 = vadd.bf16 %v4831, %v4959
        %v4992 = vmul.bf16 %v4960, 1061961548
        %v4993 = vmul.bf16 %v4961, 1061961548
        %v4994 = vmul.bf16 %v4962, 1061961548
        %v4995 = vmul.bf16 %v4963, 1061961548
        %v4996 = vmul.bf16 %v4964, 1061961548
        %v4997 = vmul.bf16 %v4965, 1061961548
        %v4998 = vmul.bf16 %v4966, 1061961548
        %v4999 = vmul.bf16 %v4967, 1061961548
        %v5000 = vmul.bf16 %v4968, 1061961548
        %v5001 = vmul.bf16 %v4969, 1061961548
        %v5002 = vmul.bf16 %v4970, 1061961548
        %v5003 = vmul.bf16 %v4971, 1061961548
        %v5004 = vmul.bf16 %v4972, 1061961548
        %v5005 = vmul.bf16 %v4973, 1061961548
        %v5006 = vmul.bf16 %v4974, 1061961548
        %v5007 = vmul.bf16 %v4975, 1061961548
        %v5008 = vmul.bf16 %v4976, 1061961548
        %v5009 = vmul.bf16 %v4977, 1061961548
        %v5010 = vmul.bf16 %v4978, 1061961548
        %v5011 = vmul.bf16 %v4979, 1061961548
        %v5012 = vmul.bf16 %v4980, 1061961548
        %v5013 = vmul.bf16 %v4981, 1061961548
        %v5014 = vmul.bf16 %v4982, 1061961548
        %v5015 = vmul.bf16 %v4983, 1061961548
        %v5016 = vmul.bf16 %v4984, 1061961548
        %v5017 = vmul.bf16 %v4985, 1061961548
        %v5018 = vmul.bf16 %v4986, 1061961548
        %v5019 = vmul.bf16 %v4987, 1061961548
        %v5020 = vmul.bf16 %v4988, 1061961548
        %v5021 = vmul.bf16 %v4989, 1061961548
        %v5022 = vmul.bf16 %v4990, 1061961548
        %v5023 = vmul.bf16 %v4991, 1061961548
        %v5024 = vtanh.bf16.pop %v4992
        %v5025 = vtanh.bf16.pop %v4993
        %v5026 = vtanh.bf16.pop %v4994
        %v5027 = vtanh.bf16.pop %v4995
        %v5028 = vtanh.bf16.pop %v4996
        %v5029 = vtanh.bf16.pop %v4997
        %v5030 = vtanh.bf16.pop %v4998
        %v5031 = vtanh.bf16.pop %v4999
        %v5032 = vtanh.bf16.pop %v5000
        %v5033 = vtanh.bf16.pop %v5001
        %v5034 = vtanh.bf16.pop %v5002
        %v5035 = vtanh.bf16.pop %v5003
        %v5036 = vtanh.bf16.pop %v5004
        %v5037 = vtanh.bf16.pop %v5005
        %v5038 = vtanh.bf16.pop %v5006
        %v5039 = vtanh.bf16.pop %v5007
        %v5040 = vtanh.bf16.pop %v5008
        %v5041 = vtanh.bf16.pop %v5009
        %v5042 = vtanh.bf16.pop %v5010
        %v5043 = vtanh.bf16.pop %v5011
        %v5044 = vtanh.bf16.pop %v5012
        %v5045 = vtanh.bf16.pop %v5013
        %v5046 = vtanh.bf16.pop %v5014
        %v5047 = vtanh.bf16.pop %v5015
        %v5048 = vtanh.bf16.pop %v5016
        %v5049 = vtanh.bf16.pop %v5017
        %v5050 = vtanh.bf16.pop %v5018
        %v5051 = vtanh.bf16.pop %v5019
        %v5052 = vtanh.bf16.pop %v5020
        %v5053 = vtanh.bf16.pop %v5021
        %v5054 = vtanh.bf16.pop %v5022
        %v5055 = vtanh.bf16.pop %v5023
        %v5056 = vadd.bf16 %v5024, 1065369472
        %v5057 = vadd.bf16 %v5025, 1065369472
        %v5058 = vadd.bf16 %v5026, 1065369472
        %v5059 = vadd.bf16 %v5027, 1065369472
        %v5060 = vadd.bf16 %v5028, 1065369472
        %v5061 = vadd.bf16 %v5029, 1065369472
        %v5062 = vadd.bf16 %v5030, 1065369472
        %v5063 = vadd.bf16 %v5031, 1065369472
        %v5064 = vadd.bf16 %v5032, 1065369472
        %v5065 = vadd.bf16 %v5033, 1065369472
        %v5066 = vadd.bf16 %v5034, 1065369472
        %v5067 = vadd.bf16 %v5035, 1065369472
        %v5068 = vadd.bf16 %v5036, 1065369472
        %v5069 = vadd.bf16 %v5037, 1065369472
        %v5070 = vadd.bf16 %v5038, 1065369472
        %v5071 = vadd.bf16 %v5039, 1065369472
        %v5072 = vadd.bf16 %v5040, 1065369472
        %v5073 = vadd.bf16 %v5041, 1065369472
        %v5074 = vadd.bf16 %v5042, 1065369472
        %v5075 = vadd.bf16 %v5043, 1065369472
        %v5076 = vadd.bf16 %v5044, 1065369472
        %v5077 = vadd.bf16 %v5045, 1065369472
        %v5078 = vadd.bf16 %v5046, 1065369472
        %v5079 = vadd.bf16 %v5047, 1065369472
        %v5080 = vadd.bf16 %v5048, 1065369472
        %v5081 = vadd.bf16 %v5049, 1065369472
        %v5082 = vadd.bf16 %v5050, 1065369472
        %v5083 = vadd.bf16 %v5051, 1065369472
        %v5084 = vadd.bf16 %v5052, 1065369472
        %v5085 = vadd.bf16 %v5053, 1065369472
        %v5086 = vadd.bf16 %v5054, 1065369472
        %v5087 = vadd.bf16 %v5055, 1065369472
        %v5088 = vmul.bf16 %v4832, %v5056
        %v5089 = vmul.bf16 %v4833, %v5057
        %v5090 = vmul.bf16 %v4834, %v5058
        %v5091 = vmul.bf16 %v4835, %v5059
        %v5092 = vmul.bf16 %v4836, %v5060
        %v5093 = vmul.bf16 %v4837, %v5061
        %v5094 = vmul.bf16 %v4838, %v5062
        %v5095 = vmul.bf16 %v4839, %v5063
        %v5096 = vmul.bf16 %v4840, %v5064
        %v5097 = vmul.bf16 %v4841, %v5065
        %v5098 = vmul.bf16 %v4842, %v5066
        %v5099 = vmul.bf16 %v4843, %v5067
        %v5100 = vmul.bf16 %v4844, %v5068
        %v5101 = vmul.bf16 %v4845, %v5069
        %v5102 = vmul.bf16 %v4846, %v5070
        %v5103 = vmul.bf16 %v4847, %v5071
        %v5104 = vmul.bf16 %v4848, %v5072
        %v5105 = vmul.bf16 %v4849, %v5073
        %v5106 = vmul.bf16 %v4850, %v5074
        %v5107 = vmul.bf16 %v4851, %v5075
        %v5108 = vmul.bf16 %v4852, %v5076
        %v5109 = vmul.bf16 %v4853, %v5077
        %v5110 = vmul.bf16 %v4854, %v5078
        %v5111 = vmul.bf16 %v4855, %v5079
        %v5112 = vmul.bf16 %v4856, %v5080
        %v5113 = vmul.bf16 %v4857, %v5081
        %v5114 = vmul.bf16 %v4858, %v5082
        %v5115 = vmul.bf16 %v4859, %v5083
        %v5116 = vmul.bf16 %v4860, %v5084
        %v5117 = vmul.bf16 %v4861, %v5085
        %v5118 = vmul.bf16 %v4862, %v5086
        %v5119 = vmul.bf16 %v4863, %v5087
        %v5120 = vld [vmem:[%s535] sm:$0xf]
        %v5121 = vld [vmem:[%s535 + $0x4] sm:$0xf]
        %v5122 = vld [vmem:[%s535 + $0x8] sm:$0xf]
        %v5123 = vld [vmem:[%s535 + $0xc] sm:$0xf]
        %v5124 = vld [vmem:[%s535 + $0x10] sm:$0xf]
        %v5125 = vld [vmem:[%s535 + $0x14] sm:$0xf]
        %v5126 = vld [vmem:[%s535 + $0x18] sm:$0xf]
        %v5127 = vld [vmem:[%s535 + $0x1c] sm:$0xf]
        %v5128 = vld [vmem:[%s535 + $0x20] sm:$0xf]
        %v5129 = vld [vmem:[%s535 + $0x24] sm:$0xf]
        %v5130 = vld [vmem:[%s535 + $0x28] sm:$0xf]
        %v5131 = vld [vmem:[%s535 + $0x2c] sm:$0xf]
        %v5132 = vld [vmem:[%s535 + $0x30] sm:$0xf]
        %v5133 = vld [vmem:[%s535 + $0x34] sm:$0xf]
        %v5134 = vld [vmem:[%s535 + $0x38] sm:$0xf]
        %v5135 = vld [vmem:[%s535 + $0x3c] sm:$0xf]
        %v5136 = vld [vmem:[%s643] sm:$0x1]
        %v5138 = vlaneseq
        %v5139 = vshrl.u32 %v5138, 7
        %v5140 = vsub.s32 0, %v5139
        %v5141 = vrot.slane %v5136, %v5140
        %v5159 = vunpack.c.l.b16 %v5120
        %v5160 = vunpack.c.l.b16 %v5121
        %v5161 = vunpack.c.l.b16 %v5122
        %v5162 = vunpack.c.l.b16 %v5123
        %v5163 = vunpack.c.l.b16 %v5124
        %v5164 = vunpack.c.l.b16 %v5125
        %v5165 = vunpack.c.l.b16 %v5126
        %v5166 = vunpack.c.l.b16 %v5127
        %v5167 = vunpack.c.l.b16 %v5128
        %v5168 = vunpack.c.l.b16 %v5129
        %v5169 = vunpack.c.l.b16 %v5130
        %v5170 = vunpack.c.l.b16 %v5131
        %v5171 = vunpack.c.l.b16 %v5132
        %v5172 = vunpack.c.l.b16 %v5133
        %v5173 = vunpack.c.l.b16 %v5134
        %v5174 = vunpack.c.l.b16 %v5135
        %v5175 = vpack.c.b16 %v5160, %v5159
        %v5176 = vpack.c.b16 %v5162, %v5161
        %v5177 = vpack.c.b16 %v5164, %v5163
        %v5178 = vpack.c.b16 %v5166, %v5165
        %v5179 = vpack.c.b16 %v5168, %v5167
        %v5180 = vpack.c.b16 %v5170, %v5169
        %v5181 = vpack.c.b16 %v5172, %v5171
        %v5182 = vpack.c.b16 %v5174, %v5173
        %5191 = vmatprep.subr.bf16.mxu0 0
        %5192 = vmatpush1.bf16.msra.mxu0 %v5182
        %5193 = vmatprep.subr.bf16.mxu0 0
        %5194 = vmatpush1.bf16.msra.mxu0 %v5181
        %5195 = vmatprep.subr.bf16.mxu0 0
        %5196 = vmatpush1.bf16.msra.mxu0 %v5180
        %5197 = vmatprep.subr.bf16.mxu0 0
        %5198 = vmatpush1.bf16.msra.mxu0 %v5179
        %5199 = vmatprep.subr.bf16.mxu0 0
        %5200 = vmatpush1.bf16.msra.mxu0 %v5178
        %5201 = vmatprep.subr.bf16.mxu0 0
        %5202 = vmatpush1.bf16.msra.mxu0 %v5177
        %5203 = vmatprep.subr.bf16.mxu0 0
        %5204 = vmatpush1.bf16.msra.mxu0 %v5176
        %5205 = vmatprep.subr.bf16.mxu0 0
        %5206 = vmatpush1.bf16.msra.mxu0 %v5175
        %5207 = vmatprep.subr.bf16.mxu0 0
        %5208 = vmatpush2.bf16.msra.mxu0 0
        %5209 = vmatprep.subr.bf16.mxu0 0
        %5210 = vmatpush2.bf16.msra.mxu0 0
        %5211 = vmatprep.subr.bf16.mxu0 0
        %5212 = vmatpush2.bf16.msra.mxu0 0
        %5213 = vmatprep.subr.bf16.mxu0 0
        %5214 = vmatpush2.bf16.msra.mxu0 0
        %5215 = vmatprep.subr.bf16.mxu0 0
        %5216 = vmatpush2.bf16.msra.mxu0 0
        %5217 = vmatprep.subr.bf16.mxu0 0
        %5218 = vmatpush2.bf16.msra.mxu0 0
        %5219 = vmatprep.subr.bf16.mxu0 0
        %5220 = vmatpush2.bf16.msra.mxu0 0
        %5221 = vmatprep.subr.bf16.mxu0 0
        %5222 = vmatpush2.bf16.msra.mxu0 0
        %5223 = vmatprep.mubr.bf16.mxu0 0
        %5224 = vmatmul.mubr.bf16.gmra.mxu0 %v5088
        %v5225 = vpop.f32.mrf.mxu0
        %v5226 = vadd.f32 %v5141, %v5225
        %v5227 = vpop.f32.mrf.mxu0
        %v5228 = vpop.f32.mrf.mxu0
        %v5229 = vadd.f32 %v5141, %v5228
        %v5230 = vpop.f32.mrf.mxu0
        %5231 = vmatprep.mubr.bf16.mxu0 0
        %5232 = vmatmul.mubr.bf16.gmra.mxu0 %v5089
        %v5233 = vpop.f32.mrf.mxu0
        %v5234 = vadd.f32 %v5141, %v5233
        %v5235 = vpop.f32.mrf.mxu0
        %v5236 = vpop.f32.mrf.mxu0
        %v5237 = vadd.f32 %v5141, %v5236
        %v5238 = vpop.f32.mrf.mxu0
        %5239 = vmatprep.mubr.bf16.mxu0 0
        %5240 = vmatmul.mubr.bf16.gmra.mxu0 %v5090
        %v5241 = vpop.f32.mrf.mxu0
        %v5242 = vadd.f32 %v5141, %v5241
        %v5243 = vpop.f32.mrf.mxu0
        %v5244 = vpop.f32.mrf.mxu0
        %v5245 = vadd.f32 %v5141, %v5244
        %v5246 = vpop.f32.mrf.mxu0
        %5247 = vmatprep.mubr.bf16.mxu0 0
        %5248 = vmatmul.mubr.bf16.gmra.mxu0 %v5091
        %v5249 = vpop.f32.mrf.mxu0
        %v5250 = vadd.f32 %v5141, %v5249
        %v5251 = vpop.f32.mrf.mxu0
        %v5252 = vpop.f32.mrf.mxu0
        %v5253 = vadd.f32 %v5141, %v5252
        %v5254 = vpop.f32.mrf.mxu0
        %5255 = vmatprep.mubr.bf16.mxu0 0
        %5256 = vmatmul.mubr.bf16.gmra.mxu0 %v5092
        %v5257 = vpop.f32.mrf.mxu0
        %v5258 = vadd.f32 %v5141, %v5257
        %v5259 = vpop.f32.mrf.mxu0
        %v5260 = vpop.f32.mrf.mxu0
        %v5261 = vadd.f32 %v5141, %v5260
        %v5262 = vpop.f32.mrf.mxu0
        %5263 = vmatprep.mubr.bf16.mxu0 0
        %5264 = vmatmul.mubr.bf16.gmra.mxu0 %v5093
        %v5265 = vpop.f32.mrf.mxu0
        %v5266 = vadd.f32 %v5141, %v5265
        %v5267 = vpop.f32.mrf.mxu0
        %v5268 = vpop.f32.mrf.mxu0
        %v5269 = vadd.f32 %v5141, %v5268
        %v5270 = vpop.f32.mrf.mxu0
        %5271 = vmatprep.mubr.bf16.mxu0 0
        %5272 = vmatmul.mubr.bf16.gmra.mxu0 %v5094
        %v5273 = vpop.f32.mrf.mxu0
        %v5274 = vadd.f32 %v5141, %v5273
        %v5275 = vpop.f32.mrf.mxu0
        %v5276 = vpop.f32.mrf.mxu0
        %v5277 = vadd.f32 %v5141, %v5276
        %v5278 = vpop.f32.mrf.mxu0
        %5279 = vmatprep.mubr.bf16.mxu0 0
        %5280 = vmatmul.mubr.bf16.gmra.mxu0 %v5095
        %v5281 = vpop.f32.mrf.mxu0
        %v5282 = vadd.f32 %v5141, %v5281
        %v5283 = vpop.f32.mrf.mxu0
        %v5284 = vpop.f32.mrf.mxu0
        %v5285 = vadd.f32 %v5141, %v5284
        %v5286 = vpop.f32.mrf.mxu0
        %5287 = vmatprep.mubr.bf16.mxu0 0
        %5288 = vmatmul.mubr.bf16.gmra.mxu0 %v5096
        %v5289 = vpop.f32.mrf.mxu0
        %v5290 = vadd.f32 %v5141, %v5289
        %v5291 = vpop.f32.mrf.mxu0
        %v5292 = vpop.f32.mrf.mxu0
        %v5293 = vadd.f32 %v5141, %v5292
        %v5294 = vpop.f32.mrf.mxu0
        %5295 = vmatprep.mubr.bf16.mxu0 0
        %5296 = vmatmul.mubr.bf16.gmra.mxu0 %v5097
        %v5297 = vpop.f32.mrf.mxu0
        %v5298 = vadd.f32 %v5141, %v5297
        %v5299 = vpop.f32.mrf.mxu0
        %v5300 = vpop.f32.mrf.mxu0
        %v5301 = vadd.f32 %v5141, %v5300
        %v5302 = vpop.f32.mrf.mxu0
        %5303 = vmatprep.mubr.bf16.mxu0 0
        %5304 = vmatmul.mubr.bf16.gmra.mxu0 %v5098
        %v5305 = vpop.f32.mrf.mxu0
        %v5306 = vadd.f32 %v5141, %v5305
        %v5307 = vpop.f32.mrf.mxu0
        %v5308 = vpop.f32.mrf.mxu0
        %v5309 = vadd.f32 %v5141, %v5308
        %v5310 = vpop.f32.mrf.mxu0
        %5311 = vmatprep.mubr.bf16.mxu0 0
        %5312 = vmatmul.mubr.bf16.gmra.mxu0 %v5099
        %v5313 = vpop.f32.mrf.mxu0
        %v5314 = vadd.f32 %v5141, %v5313
        %v5315 = vpop.f32.mrf.mxu0
        %v5316 = vpop.f32.mrf.mxu0
        %v5317 = vadd.f32 %v5141, %v5316
        %v5318 = vpop.f32.mrf.mxu0
        %5319 = vmatprep.mubr.bf16.mxu0 0
        %5320 = vmatmul.mubr.bf16.gmra.mxu0 %v5100
        %v5321 = vpop.f32.mrf.mxu0
        %v5322 = vadd.f32 %v5141, %v5321
        %v5323 = vpop.f32.mrf.mxu0
        %v5324 = vpop.f32.mrf.mxu0
        %v5325 = vadd.f32 %v5141, %v5324
        %v5326 = vpop.f32.mrf.mxu0
        %5327 = vmatprep.mubr.bf16.mxu0 0
        %5328 = vmatmul.mubr.bf16.gmra.mxu0 %v5101
        %v5329 = vpop.f32.mrf.mxu0
        %v5330 = vadd.f32 %v5141, %v5329
        %v5331 = vpop.f32.mrf.mxu0
        %v5332 = vpop.f32.mrf.mxu0
        %v5333 = vadd.f32 %v5141, %v5332
        %v5334 = vpop.f32.mrf.mxu0
        %5335 = vmatprep.mubr.bf16.mxu0 0
        %5336 = vmatmul.mubr.bf16.gmra.mxu0 %v5102
        %v5337 = vpop.f32.mrf.mxu0
        %v5338 = vadd.f32 %v5141, %v5337
        %v5339 = vpop.f32.mrf.mxu0
        %v5340 = vpop.f32.mrf.mxu0
        %v5341 = vadd.f32 %v5141, %v5340
        %v5342 = vpop.f32.mrf.mxu0
        %5343 = vmatprep.mubr.bf16.mxu0 0
        %5344 = vmatmul.mubr.bf16.gmra.mxu0 %v5103
        %v5345 = vpop.f32.mrf.mxu0
        %v5346 = vadd.f32 %v5141, %v5345
        %v5347 = vpop.f32.mrf.mxu0
        %v5348 = vpop.f32.mrf.mxu0
        %v5349 = vadd.f32 %v5141, %v5348
        %v5350 = vpop.f32.mrf.mxu0
        %5351 = vmatprep.mubr.bf16.mxu0 0
        %5352 = vmatmul.mubr.bf16.gmra.mxu0 %v5104
        %v5353 = vpop.f32.mrf.mxu0
        %v5354 = vadd.f32 %v5141, %v5353
        %v5355 = vpop.f32.mrf.mxu0
        %v5356 = vpop.f32.mrf.mxu0
        %v5357 = vadd.f32 %v5141, %v5356
        %v5358 = vpop.f32.mrf.mxu0
        %5359 = vmatprep.mubr.bf16.mxu0 0
        %5360 = vmatmul.mubr.bf16.gmra.mxu0 %v5105
        %v5361 = vpop.f32.mrf.mxu0
        %v5362 = vadd.f32 %v5141, %v5361
        %v5363 = vpop.f32.mrf.mxu0
        %v5364 = vpop.f32.mrf.mxu0
        %v5365 = vadd.f32 %v5141, %v5364
        %v5366 = vpop.f32.mrf.mxu0
        %5367 = vmatprep.mubr.bf16.mxu0 0
        %5368 = vmatmul.mubr.bf16.gmra.mxu0 %v5106
        %v5369 = vpop.f32.mrf.mxu0
        %v5370 = vadd.f32 %v5141, %v5369
        %v5371 = vpop.f32.mrf.mxu0
        %v5372 = vpop.f32.mrf.mxu0
        %v5373 = vadd.f32 %v5141, %v5372
        %v5374 = vpop.f32.mrf.mxu0
        %5375 = vmatprep.mubr.bf16.mxu0 0
        %5376 = vmatmul.mubr.bf16.gmra.mxu0 %v5107
        %v5377 = vpop.f32.mrf.mxu0
        %v5378 = vadd.f32 %v5141, %v5377
        %v5379 = vpop.f32.mrf.mxu0
        %v5380 = vpop.f32.mrf.mxu0
        %v5381 = vadd.f32 %v5141, %v5380
        %v5382 = vpop.f32.mrf.mxu0
        %5383 = vmatprep.mubr.bf16.mxu0 0
        %5384 = vmatmul.mubr.bf16.gmra.mxu0 %v5108
        %v5385 = vpop.f32.mrf.mxu0
        %v5386 = vadd.f32 %v5141, %v5385
        %v5387 = vpop.f32.mrf.mxu0
        %v5388 = vpop.f32.mrf.mxu0
        %v5389 = vadd.f32 %v5141, %v5388
        %v5390 = vpop.f32.mrf.mxu0
        %5391 = vmatprep.mubr.bf16.mxu0 0
        %5392 = vmatmul.mubr.bf16.gmra.mxu0 %v5109
        %v5393 = vpop.f32.mrf.mxu0
        %v5394 = vadd.f32 %v5141, %v5393
        %v5395 = vpop.f32.mrf.mxu0
        %v5396 = vpop.f32.mrf.mxu0
        %v5397 = vadd.f32 %v5141, %v5396
        %v5398 = vpop.f32.mrf.mxu0
        %5399 = vmatprep.mubr.bf16.mxu0 0
        %5400 = vmatmul.mubr.bf16.gmra.mxu0 %v5110
        %v5401 = vpop.f32.mrf.mxu0
        %v5402 = vadd.f32 %v5141, %v5401
        %v5403 = vpop.f32.mrf.mxu0
        %v5404 = vpop.f32.mrf.mxu0
        %v5405 = vadd.f32 %v5141, %v5404
        %v5406 = vpop.f32.mrf.mxu0
        %5407 = vmatprep.mubr.bf16.mxu0 0
        %5408 = vmatmul.mubr.bf16.gmra.mxu0 %v5111
        %v5409 = vpop.f32.mrf.mxu0
        %v5410 = vadd.f32 %v5141, %v5409
        %v5411 = vpop.f32.mrf.mxu0
        %v5412 = vpop.f32.mrf.mxu0
        %v5413 = vadd.f32 %v5141, %v5412
        %v5414 = vpop.f32.mrf.mxu0
        %5415 = vmatprep.mubr.bf16.mxu0 0
        %5416 = vmatmul.mubr.bf16.gmra.mxu0 %v5112
        %v5417 = vpop.f32.mrf.mxu0
        %v5418 = vadd.f32 %v5141, %v5417
        %v5419 = vpop.f32.mrf.mxu0
        %v5420 = vpop.f32.mrf.mxu0
        %v5421 = vadd.f32 %v5141, %v5420
        %v5422 = vpop.f32.mrf.mxu0
        %5423 = vmatprep.mubr.bf16.mxu0 0
        %5424 = vmatmul.mubr.bf16.gmra.mxu0 %v5113
        %v5425 = vpop.f32.mrf.mxu0
        %v5426 = vadd.f32 %v5141, %v5425
        %v5427 = vpop.f32.mrf.mxu0
        %v5428 = vpop.f32.mrf.mxu0
        %v5429 = vadd.f32 %v5141, %v5428
        %v5430 = vpop.f32.mrf.mxu0
        %5431 = vmatprep.mubr.bf16.mxu0 0
        %5432 = vmatmul.mubr.bf16.gmra.mxu0 %v5114
        %v5433 = vpop.f32.mrf.mxu0
        %v5434 = vadd.f32 %v5141, %v5433
        %v5435 = vpop.f32.mrf.mxu0
        %v5436 = vpop.f32.mrf.mxu0
        %v5437 = vadd.f32 %v5141, %v5436
        %v5438 = vpop.f32.mrf.mxu0
        %5439 = vmatprep.mubr.bf16.mxu0 0
        %5440 = vmatmul.mubr.bf16.gmra.mxu0 %v5115
        %v5441 = vpop.f32.mrf.mxu0
        %v5442 = vadd.f32 %v5141, %v5441
        %v5443 = vpop.f32.mrf.mxu0
        %v5444 = vpop.f32.mrf.mxu0
        %v5445 = vadd.f32 %v5141, %v5444
        %v5446 = vpop.f32.mrf.mxu0
        %5447 = vmatprep.mubr.bf16.mxu0 0
        %5448 = vmatmul.mubr.bf16.gmra.mxu0 %v5116
        %v5449 = vpop.f32.mrf.mxu0
        %v5450 = vadd.f32 %v5141, %v5449
        %v5451 = vpop.f32.mrf.mxu0
        %v5452 = vpop.f32.mrf.mxu0
        %v5453 = vadd.f32 %v5141, %v5452
        %v5454 = vpop.f32.mrf.mxu0
        %5455 = vmatprep.mubr.bf16.mxu0 0
        %5456 = vmatmul.mubr.bf16.gmra.mxu0 %v5117
        %v5457 = vpop.f32.mrf.mxu0
        %v5458 = vadd.f32 %v5141, %v5457
        %v5459 = vpop.f32.mrf.mxu0
        %v5460 = vpop.f32.mrf.mxu0
        %v5461 = vadd.f32 %v5141, %v5460
        %v5462 = vpop.f32.mrf.mxu0
        %5463 = vmatprep.mubr.bf16.mxu0 0
        %5464 = vmatmul.mubr.bf16.gmra.mxu0 %v5118
        %v5465 = vpop.f32.mrf.mxu0
        %v5466 = vadd.f32 %v5141, %v5465
        %v5467 = vpop.f32.mrf.mxu0
        %v5468 = vpop.f32.mrf.mxu0
        %v5469 = vadd.f32 %v5141, %v5468
        %v5470 = vpop.f32.mrf.mxu0
        %5471 = vmatprep.mubr.bf16.mxu0 0
        %5472 = vmatmul.mubr.bf16.gmra.mxu0 %v5119
        %v5473 = vpop.f32.mrf.mxu0
        %v5474 = vadd.f32 %v5141, %v5473
        %v5475 = vpop.f32.mrf.mxu0
        %v5476 = vpop.f32.mrf.mxu0
        %v5477 = vadd.f32 %v5141, %v5476
        %v5478 = vpop.f32.mrf.mxu0
        %5479 = vdwg.mxu0
        %v5480 = vadd.f32 %v4344, %v5226
        %v5481 = vadd.f32 %v4345, %v5229
        %v5482 = vadd.f32 %v4346, %v5234
        %v5483 = vadd.f32 %v4347, %v5237
        %v5484 = vadd.f32 %v4348, %v5242
        %v5485 = vadd.f32 %v4349, %v5245
        %v5486 = vadd.f32 %v4350, %v5250
        %v5487 = vadd.f32 %v4351, %v5253
        %v5488 = vadd.f32 %v4352, %v5258
        %v5489 = vadd.f32 %v4353, %v5261
        %v5490 = vadd.f32 %v4354, %v5266
        %v5491 = vadd.f32 %v4355, %v5269
        %v5492 = vadd.f32 %v4356, %v5274
        %v5493 = vadd.f32 %v4357, %v5277
        %v5494 = vadd.f32 %v4358, %v5282
        %v5495 = vadd.f32 %v4359, %v5285
        %v5496 = vadd.f32 %v4360, %v5290
        %v5497 = vadd.f32 %v4361, %v5293
        %v5498 = vadd.f32 %v4362, %v5298
        %v5499 = vadd.f32 %v4363, %v5301
        %v5500 = vadd.f32 %v4364, %v5306
        %v5501 = vadd.f32 %v4365, %v5309
        %v5502 = vadd.f32 %v4366, %v5314
        %v5503 = vadd.f32 %v4367, %v5317
        %v5504 = vadd.f32 %v4368, %v5322
        %v5505 = vadd.f32 %v4369, %v5325
        %v5506 = vadd.f32 %v4370, %v5330
        %v5507 = vadd.f32 %v4371, %v5333
        %v5508 = vadd.f32 %v4372, %v5338
        %v5509 = vadd.f32 %v4373, %v5341
        %v5510 = vadd.f32 %v4374, %v5346
        %v5511 = vadd.f32 %v4375, %v5349
        %v5512 = vadd.f32 %v4376, %v5354
        %v5513 = vadd.f32 %v4377, %v5357
        %v5514 = vadd.f32 %v4378, %v5362
        %v5515 = vadd.f32 %v4379, %v5365
        %v5516 = vadd.f32 %v4380, %v5370
        %v5517 = vadd.f32 %v4381, %v5373
        %v5518 = vadd.f32 %v4382, %v5378
        %v5519 = vadd.f32 %v4383, %v5381
        %v5520 = vadd.f32 %v4384, %v5386
        %v5521 = vadd.f32 %v4385, %v5389
        %v5522 = vadd.f32 %v4386, %v5394
        %v5523 = vadd.f32 %v4387, %v5397
        %v5524 = vadd.f32 %v4388, %v5402
        %v5525 = vadd.f32 %v4389, %v5405
        %v5526 = vadd.f32 %v4390, %v5410
        %v5527 = vadd.f32 %v4391, %v5413
        %v5528 = vadd.f32 %v4392, %v5418
        %v5529 = vadd.f32 %v4393, %v5421
        %v5530 = vadd.f32 %v4394, %v5426
        %v5531 = vadd.f32 %v4395, %v5429
        %v5532 = vadd.f32 %v4396, %v5434
        %v5533 = vadd.f32 %v4397, %v5437
        %v5534 = vadd.f32 %v4398, %v5442
        %v5535 = vadd.f32 %v4399, %v5445
        %v5536 = vadd.f32 %v4400, %v5450
        %v5537 = vadd.f32 %v4401, %v5453
        %v5538 = vadd.f32 %v4402, %v5458
        %v5539 = vadd.f32 %v4403, %v5461
        %v5540 = vadd.f32 %v4404, %v5466
        %v5541 = vadd.f32 %v4405, %v5469
        %v5542 = vadd.f32 %v4406, %v5474
        %v5543 = vadd.f32 %v4407, %v5477
        %v5544 = vmul.f32 %v5480, 0.5
        %v5545 = vmul.f32 %v5481, 0.5
        %v5546 = vmul.f32 %v5482, 0.5
        %v5547 = vmul.f32 %v5483, 0.5
        %v5548 = vmul.f32 %v5484, 0.5
        %v5549 = vmul.f32 %v5485, 0.5
        %v5550 = vmul.f32 %v5486, 0.5
        %v5551 = vmul.f32 %v5487, 0.5
        %v5552 = vmul.f32 %v5488, 0.5
        %v5553 = vmul.f32 %v5489, 0.5
        %v5554 = vmul.f32 %v5490, 0.5
        %v5555 = vmul.f32 %v5491, 0.5
        %v5556 = vmul.f32 %v5492, 0.5
        %v5557 = vmul.f32 %v5493, 0.5
        %v5558 = vmul.f32 %v5494, 0.5
        %v5559 = vmul.f32 %v5495, 0.5
        %v5560 = vmul.f32 %v5496, 0.5
        %v5561 = vmul.f32 %v5497, 0.5
        %v5562 = vmul.f32 %v5498, 0.5
        %v5563 = vmul.f32 %v5499, 0.5
        %v5564 = vmul.f32 %v5500, 0.5
        %v5565 = vmul.f32 %v5501, 0.5
        %v5566 = vmul.f32 %v5502, 0.5
        %v5567 = vmul.f32 %v5503, 0.5
        %v5568 = vmul.f32 %v5504, 0.5
        %v5569 = vmul.f32 %v5505, 0.5
        %v5570 = vmul.f32 %v5506, 0.5
        %v5571 = vmul.f32 %v5507, 0.5
        %v5572 = vmul.f32 %v5508, 0.5
        %v5573 = vmul.f32 %v5509, 0.5
        %v5574 = vmul.f32 %v5510, 0.5
        %v5575 = vmul.f32 %v5511, 0.5
        %v5576 = vmul.f32 %v5512, 0.5
        %v5577 = vmul.f32 %v5513, 0.5
        %v5578 = vmul.f32 %v5514, 0.5
        %v5579 = vmul.f32 %v5515, 0.5
        %v5580 = vmul.f32 %v5516, 0.5
        %v5581 = vmul.f32 %v5517, 0.5
        %v5582 = vmul.f32 %v5518, 0.5
        %v5583 = vmul.f32 %v5519, 0.5
        %v5584 = vmul.f32 %v5520, 0.5
        %v5585 = vmul.f32 %v5521, 0.5
        %v5586 = vmul.f32 %v5522, 0.5
        %v5587 = vmul.f32 %v5523, 0.5
        %v5588 = vmul.f32 %v5524, 0.5
        %v5589 = vmul.f32 %v5525, 0.5
        %v5590 = vmul.f32 %v5526, 0.5
        %v5591 = vmul.f32 %v5527, 0.5
        %v5592 = vmul.f32 %v5528, 0.5
        %v5593 = vmul.f32 %v5529, 0.5
        %v5594 = vmul.f32 %v5530, 0.5
        %v5595 = vmul.f32 %v5531, 0.5
        %v5596 = vmul.f32 %v5532, 0.5
        %v5597 = vmul.f32 %v5533, 0.5
        %v5598 = vmul.f32 %v5534, 0.5
        %v5599 = vmul.f32 %v5535, 0.5
        %v5600 = vmul.f32 %v5536, 0.5
        %v5601 = vmul.f32 %v5537, 0.5
        %v5602 = vmul.f32 %v5538, 0.5
        %v5603 = vmul.f32 %v5539, 0.5
        %v5604 = vmul.f32 %v5540, 0.5
        %v5605 = vmul.f32 %v5541, 0.5
        %v5606 = vmul.f32 %v5542, 0.5
        %v5607 = vmul.f32 %v5543, 0.5
        %v5608 = vmul.f32 %v5480, 0.044715
        %v5609 = vmul.f32 %v5481, 0.044715
        %v5610 = vmul.f32 %v5482, 0.044715
        %v5611 = vmul.f32 %v5483, 0.044715
        %v5612 = vmul.f32 %v5484, 0.044715
        %v5613 = vmul.f32 %v5485, 0.044715
        %v5614 = vmul.f32 %v5486, 0.044715
        %v5615 = vmul.f32 %v5487, 0.044715
        %v5616 = vmul.f32 %v5488, 0.044715
        %v5617 = vmul.f32 %v5489, 0.044715
        %v5618 = vmul.f32 %v5490, 0.044715
        %v5619 = vmul.f32 %v5491, 0.044715
        %v5620 = vmul.f32 %v5492, 0.044715
        %v5621 = vmul.f32 %v5493, 0.044715
        %v5622 = vmul.f32 %v5494, 0.044715
        %v5623 = vmul.f32 %v5495, 0.044715
        %v5624 = vmul.f32 %v5496, 0.044715
        %v5625 = vmul.f32 %v5497, 0.044715
        %v5626 = vmul.f32 %v5498, 0.044715
        %v5627 = vmul.f32 %v5499, 0.044715
        %v5628 = vmul.f32 %v5500, 0.044715
        %v5629 = vmul.f32 %v5501, 0.044715
        %v5630 = vmul.f32 %v5502, 0.044715
        %v5631 = vmul.f32 %v5503, 0.044715
        %v5632 = vmul.f32 %v5504, 0.044715
        %v5633 = vmul.f32 %v5505, 0.044715
        %v5634 = vmul.f32 %v5506, 0.044715
        %v5635 = vmul.f32 %v5507, 0.044715
        %v5636 = vmul.f32 %v5508, 0.044715
        %v5637 = vmul.f32 %v5509, 0.044715
        %v5638 = vmul.f32 %v5510, 0.044715
        %v5639 = vmul.f32 %v5511, 0.044715
        %v5640 = vmul.f32 %v5512, 0.044715
        %v5641 = vmul.f32 %v5513, 0.044715
        %v5642 = vmul.f32 %v5514, 0.044715
        %v5643 = vmul.f32 %v5515, 0.044715
        %v5644 = vmul.f32 %v5516, 0.044715
        %v5645 = vmul.f32 %v5517, 0.044715
        %v5646 = vmul.f32 %v5518, 0.044715
        %v5647 = vmul.f32 %v5519, 0.044715
        %v5648 = vmul.f32 %v5520, 0.044715
        %v5649 = vmul.f32 %v5521, 0.044715
        %v5650 = vmul.f32 %v5522, 0.044715
        %v5651 = vmul.f32 %v5523, 0.044715
        %v5652 = vmul.f32 %v5524, 0.044715
        %v5653 = vmul.f32 %v5525, 0.044715
        %v5654 = vmul.f32 %v5526, 0.044715
        %v5655 = vmul.f32 %v5527, 0.044715
        %v5656 = vmul.f32 %v5528, 0.044715
        %v5657 = vmul.f32 %v5529, 0.044715
        %v5658 = vmul.f32 %v5530, 0.044715
        %v5659 = vmul.f32 %v5531, 0.044715
        %v5660 = vmul.f32 %v5532, 0.044715
        %v5661 = vmul.f32 %v5533, 0.044715
        %v5662 = vmul.f32 %v5534, 0.044715
        %v5663 = vmul.f32 %v5535, 0.044715
        %v5664 = vmul.f32 %v5536, 0.044715
        %v5665 = vmul.f32 %v5537, 0.044715
        %v5666 = vmul.f32 %v5538, 0.044715
        %v5667 = vmul.f32 %v5539, 0.044715
        %v5668 = vmul.f32 %v5540, 0.044715
        %v5669 = vmul.f32 %v5541, 0.044715
        %v5670 = vmul.f32 %v5542, 0.044715
        %v5671 = vmul.f32 %v5543, 0.044715
        %v5672 = vmul.f32 %v5608, %v5480
        %v5673 = vmul.f32 %v5609, %v5481
        %v5674 = vmul.f32 %v5610, %v5482
        %v5675 = vmul.f32 %v5611, %v5483
        %v5676 = vmul.f32 %v5612, %v5484
        %v5677 = vmul.f32 %v5613, %v5485
        %v5678 = vmul.f32 %v5614, %v5486
        %v5679 = vmul.f32 %v5615, %v5487
        %v5680 = vmul.f32 %v5616, %v5488
        %v5681 = vmul.f32 %v5617, %v5489
        %v5682 = vmul.f32 %v5618, %v5490
        %v5683 = vmul.f32 %v5619, %v5491
        %v5684 = vmul.f32 %v5620, %v5492
        %v5685 = vmul.f32 %v5621, %v5493
        %v5686 = vmul.f32 %v5622, %v5494
        %v5687 = vmul.f32 %v5623, %v5495
        %v5688 = vmul.f32 %v5624, %v5496
        %v5689 = vmul.f32 %v5625, %v5497
        %v5690 = vmul.f32 %v5626, %v5498
        %v5691 = vmul.f32 %v5627, %v5499
        %v5692 = vmul.f32 %v5628, %v5500
        %v5693 = vmul.f32 %v5629, %v5501
        %v5694 = vmul.f32 %v5630, %v5502
        %v5695 = vmul.f32 %v5631, %v5503
        %v5696 = vmul.f32 %v5632, %v5504
        %v5697 = vmul.f32 %v5633, %v5505
        %v5698 = vmul.f32 %v5634, %v5506
        %v5699 = vmul.f32 %v5635, %v5507
        %v5700 = vmul.f32 %v5636, %v5508
        %v5701 = vmul.f32 %v5637, %v5509
        %v5702 = vmul.f32 %v5638, %v5510
        %v5703 = vmul.f32 %v5639, %v5511
        %v5704 = vmul.f32 %v5640, %v5512
        %v5705 = vmul.f32 %v5641, %v5513
        %v5706 = vmul.f32 %v5642, %v5514
        %v5707 = vmul.f32 %v5643, %v5515
        %v5708 = vmul.f32 %v5644, %v5516
        %v5709 = vmul.f32 %v5645, %v5517
        %v5710 = vmul.f32 %v5646, %v5518
        %v5711 = vmul.f32 %v5647, %v5519
        %v5712 = vmul.f32 %v5648, %v5520
        %v5713 = vmul.f32 %v5649, %v5521
        %v5714 = vmul.f32 %v5650, %v5522
        %v5715 = vmul.f32 %v5651, %v5523
        %v5716 = vmul.f32 %v5652, %v5524
        %v5717 = vmul.f32 %v5653, %v5525
        %v5718 = vmul.f32 %v5654, %v5526
        %v5719 = vmul.f32 %v5655, %v5527
        %v5720 = vmul.f32 %v5656, %v5528
        %v5721 = vmul.f32 %v5657, %v5529
        %v5722 = vmul.f32 %v5658, %v5530
        %v5723 = vmul.f32 %v5659, %v5531
        %v5724 = vmul.f32 %v5660, %v5532
        %v5725 = vmul.f32 %v5661, %v5533
        %v5726 = vmul.f32 %v5662, %v5534
        %v5727 = vmul.f32 %v5663, %v5535
        %v5728 = vmul.f32 %v5664, %v5536
        %v5729 = vmul.f32 %v5665, %v5537
        %v5730 = vmul.f32 %v5666, %v5538
        %v5731 = vmul.f32 %v5667, %v5539
        %v5732 = vmul.f32 %v5668, %v5540
        %v5733 = vmul.f32 %v5669, %v5541
        %v5734 = vmul.f32 %v5670, %v5542
        %v5735 = vmul.f32 %v5671, %v5543
        %v5736 = vmul.f32 %v5672, %v5480
        %v5737 = vmul.f32 %v5673, %v5481
        %v5738 = vmul.f32 %v5674, %v5482
        %v5739 = vmul.f32 %v5675, %v5483
        %v5740 = vmul.f32 %v5676, %v5484
        %v5741 = vmul.f32 %v5677, %v5485
        %v5742 = vmul.f32 %v5678, %v5486
        %v5743 = vmul.f32 %v5679, %v5487
        %v5744 = vmul.f32 %v5680, %v5488
        %v5745 = vmul.f32 %v5681, %v5489
        %v5746 = vmul.f32 %v5682, %v5490
        %v5747 = vmul.f32 %v5683, %v5491
        %v5748 = vmul.f32 %v5684, %v5492
        %v5749 = vmul.f32 %v5685, %v5493
        %v5750 = vmul.f32 %v5686, %v5494
        %v5751 = vmul.f32 %v5687, %v5495
        %v5752 = vmul.f32 %v5688, %v5496
        %v5753 = vmul.f32 %v5689, %v5497
        %v5754 = vmul.f32 %v5690, %v5498
        %v5755 = vmul.f32 %v5691, %v5499
        %v5756 = vmul.f32 %v5692, %v5500
        %v5757 = vmul.f32 %v5693, %v5501
        %v5758 = vmul.f32 %v5694, %v5502
        %v5759 = vmul.f32 %v5695, %v5503
        %v5760 = vmul.f32 %v5696, %v5504
        %v5761 = vmul.f32 %v5697, %v5505
        %v5762 = vmul.f32 %v5698, %v5506
        %v5763 = vmul.f32 %v5699, %v5507
        %v5764 = vmul.f32 %v5700, %v5508
        %v5765 = vmul.f32 %v5701, %v5509
        %v5766 = vmul.f32 %v5702, %v5510
        %v5767 = vmul.f32 %v5703, %v5511
        %v5768 = vmul.f32 %v5704, %v5512
        %v5769 = vmul.f32 %v5705, %v5513
        %v5770 = vmul.f32 %v5706, %v5514
        %v5771 = vmul.f32 %v5707, %v5515
        %v5772 = vmul.f32 %v5708, %v5516
        %v5773 = vmul.f32 %v5709, %v5517
        %v5774 = vmul.f32 %v5710, %v5518
        %v5775 = vmul.f32 %v5711, %v5519
        %v5776 = vmul.f32 %v5712, %v5520
        %v5777 = vmul.f32 %v5713, %v5521
        %v5778 = vmul.f32 %v5714, %v5522
        %v5779 = vmul.f32 %v5715, %v5523
        %v5780 = vmul.f32 %v5716, %v5524
        %v5781 = vmul.f32 %v5717, %v5525
        %v5782 = vmul.f32 %v5718, %v5526
        %v5783 = vmul.f32 %v5719, %v5527
        %v5784 = vmul.f32 %v5720, %v5528
        %v5785 = vmul.f32 %v5721, %v5529
        %v5786 = vmul.f32 %v5722, %v5530
        %v5787 = vmul.f32 %v5723, %v5531
        %v5788 = vmul.f32 %v5724, %v5532
        %v5789 = vmul.f32 %v5725, %v5533
        %v5790 = vmul.f32 %v5726, %v5534
        %v5791 = vmul.f32 %v5727, %v5535
        %v5792 = vmul.f32 %v5728, %v5536
        %v5793 = vmul.f32 %v5729, %v5537
        %v5794 = vmul.f32 %v5730, %v5538
        %v5795 = vmul.f32 %v5731, %v5539
        %v5796 = vmul.f32 %v5732, %v5540
        %v5797 = vmul.f32 %v5733, %v5541
        %v5798 = vmul.f32 %v5734, %v5542
        %v5799 = vmul.f32 %v5735, %v5543
        %v5800 = vadd.f32 %v5480, %v5736
        %v5801 = vadd.f32 %v5481, %v5737
        %v5802 = vadd.f32 %v5482, %v5738
        %v5803 = vadd.f32 %v5483, %v5739
        %v5804 = vadd.f32 %v5484, %v5740
        %v5805 = vadd.f32 %v5485, %v5741
        %v5806 = vadd.f32 %v5486, %v5742
        %v5807 = vadd.f32 %v5487, %v5743
        %v5808 = vadd.f32 %v5488, %v5744
        %v5809 = vadd.f32 %v5489, %v5745
        %v5810 = vadd.f32 %v5490, %v5746
        %v5811 = vadd.f32 %v5491, %v5747
        %v5812 = vadd.f32 %v5492, %v5748
        %v5813 = vadd.f32 %v5493, %v5749
        %v5814 = vadd.f32 %v5494, %v5750
        %v5815 = vadd.f32 %v5495, %v5751
        %v5816 = vadd.f32 %v5496, %v5752
        %v5817 = vadd.f32 %v5497, %v5753
        %v5818 = vadd.f32 %v5498, %v5754
        %v5819 = vadd.f32 %v5499, %v5755
        %v5820 = vadd.f32 %v5500, %v5756
        %v5821 = vadd.f32 %v5501, %v5757
        %v5822 = vadd.f32 %v5502, %v5758
        %v5823 = vadd.f32 %v5503, %v5759
        %v5824 = vadd.f32 %v5504, %v5760
        %v5825 = vadd.f32 %v5505, %v5761
        %v5826 = vadd.f32 %v5506, %v5762
        %v5827 = vadd.f32 %v5507, %v5763
        %v5828 = vadd.f32 %v5508, %v5764
        %v5829 = vadd.f32 %v5509, %v5765
        %v5830 = vadd.f32 %v5510, %v5766
        %v5831 = vadd.f32 %v5511, %v5767
        %v5832 = vadd.f32 %v5512, %v5768
        %v5833 = vadd.f32 %v5513, %v5769
        %v5834 = vadd.f32 %v5514, %v5770
        %v5835 = vadd.f32 %v5515, %v5771
        %v5836 = vadd.f32 %v5516, %v5772
        %v5837 = vadd.f32 %v5517, %v5773
        %v5838 = vadd.f32 %v5518, %v5774
        %v5839 = vadd.f32 %v5519, %v5775
        %v5840 = vadd.f32 %v5520, %v5776
        %v5841 = vadd.f32 %v5521, %v5777
        %v5842 = vadd.f32 %v5522, %v5778
        %v5843 = vadd.f32 %v5523, %v5779
        %v5844 = vadd.f32 %v5524, %v5780
        %v5845 = vadd.f32 %v5525, %v5781
        %v5846 = vadd.f32 %v5526, %v5782
        %v5847 = vadd.f32 %v5527, %v5783
        %v5848 = vadd.f32 %v5528, %v5784
        %v5849 = vadd.f32 %v5529, %v5785
        %v5850 = vadd.f32 %v5530, %v5786
        %v5851 = vadd.f32 %v5531, %v5787
        %v5852 = vadd.f32 %v5532, %v5788
        %v5853 = vadd.f32 %v5533, %v5789
        %v5854 = vadd.f32 %v5534, %v5790
        %v5855 = vadd.f32 %v5535, %v5791
        %v5856 = vadd.f32 %v5536, %v5792
        %v5857 = vadd.f32 %v5537, %v5793
        %v5858 = vadd.f32 %v5538, %v5794
        %v5859 = vadd.f32 %v5539, %v5795
        %v5860 = vadd.f32 %v5540, %v5796
        %v5861 = vadd.f32 %v5541, %v5797
        %v5862 = vadd.f32 %v5542, %v5798
        %v5863 = vadd.f32 %v5543, %v5799
        %v5864 = vmul.f32 %v5800, 0.7978846
        %v5865 = vmul.f32 %v5801, 0.7978846
        %v5866 = vmul.f32 %v5802, 0.7978846
        %v5867 = vmul.f32 %v5803, 0.7978846
        %v5868 = vmul.f32 %v5804, 0.7978846
        %v5869 = vmul.f32 %v5805, 0.7978846
        %v5870 = vmul.f32 %v5806, 0.7978846
        %v5871 = vmul.f32 %v5807, 0.7978846
        %v5872 = vmul.f32 %v5808, 0.7978846
        %v5873 = vmul.f32 %v5809, 0.7978846
        %v5874 = vmul.f32 %v5810, 0.7978846
        %v5875 = vmul.f32 %v5811, 0.7978846
        %v5876 = vmul.f32 %v5812, 0.7978846
        %v5877 = vmul.f32 %v5813, 0.7978846
        %v5878 = vmul.f32 %v5814, 0.7978846
        %v5879 = vmul.f32 %v5815, 0.7978846
        %v5880 = vmul.f32 %v5816, 0.7978846
        %v5881 = vmul.f32 %v5817, 0.7978846
        %v5882 = vmul.f32 %v5818, 0.7978846
        %v5883 = vmul.f32 %v5819, 0.7978846
        %v5884 = vmul.f32 %v5820, 0.7978846
        %v5885 = vmul.f32 %v5821, 0.7978846
        %v5886 = vmul.f32 %v5822, 0.7978846
        %v5887 = vmul.f32 %v5823, 0.7978846
        %v5888 = vmul.f32 %v5824, 0.7978846
        %v5889 = vmul.f32 %v5825, 0.7978846
        %v5890 = vmul.f32 %v5826, 0.7978846
        %v5891 = vmul.f32 %v5827, 0.7978846
        %v5892 = vmul.f32 %v5828, 0.7978846
        %v5893 = vmul.f32 %v5829, 0.7978846
        %v5894 = vmul.f32 %v5830, 0.7978846
        %v5895 = vmul.f32 %v5831, 0.7978846
        %v5896 = vmul.f32 %v5832, 0.7978846
        %v5897 = vmul.f32 %v5833, 0.7978846
        %v5898 = vmul.f32 %v5834, 0.7978846
        %v5899 = vmul.f32 %v5835, 0.7978846
        %v5900 = vmul.f32 %v5836, 0.7978846
        %v5901 = vmul.f32 %v5837, 0.7978846
        %v5902 = vmul.f32 %v5838, 0.7978846
        %v5903 = vmul.f32 %v5839, 0.7978846
        %v5904 = vmul.f32 %v5840, 0.7978846
        %v5905 = vmul.f32 %v5841, 0.7978846
        %v5906 = vmul.f32 %v5842, 0.7978846
        %v5907 = vmul.f32 %v5843, 0.7978846
        %v5908 = vmul.f32 %v5844, 0.7978846
        %v5909 = vmul.f32 %v5845, 0.7978846
        %v5910 = vmul.f32 %v5846, 0.7978846
        %v5911 = vmul.f32 %v5847, 0.7978846
        %v5912 = vmul.f32 %v5848, 0.7978846
        %v5913 = vmul.f32 %v5849, 0.7978846
        %v5914 = vmul.f32 %v5850, 0.7978846
        %v5915 = vmul.f32 %v5851, 0.7978846
        %v5916 = vmul.f32 %v5852, 0.7978846
        %v5917 = vmul.f32 %v5853, 0.7978846
        %v5918 = vmul.f32 %v5854, 0.7978846
        %v5919 = vmul.f32 %v5855, 0.7978846
        %v5920 = vmul.f32 %v5856, 0.7978846
        %v5921 = vmul.f32 %v5857, 0.7978846
        %v5922 = vmul.f32 %v5858, 0.7978846
        %v5923 = vmul.f32 %v5859, 0.7978846
        %v5924 = vmul.f32 %v5860, 0.7978846
        %v5925 = vmul.f32 %v5861, 0.7978846
        %v5926 = vmul.f32 %v5862, 0.7978846
        %v5927 = vmul.f32 %v5863, 0.7978846
        %v5928 = vtanh.pop %v5864
        %v5929 = vtanh.pop %v5865
        %v5930 = vtanh.pop %v5866
        %v5931 = vtanh.pop %v5867
        %v5932 = vtanh.pop %v5868
        %v5933 = vtanh.pop %v5869
        %v5934 = vtanh.pop %v5870
        %v5935 = vtanh.pop %v5871
        %v5936 = vtanh.pop %v5872
        %v5937 = vtanh.pop %v5873
        %v5938 = vtanh.pop %v5874
        %v5939 = vtanh.pop %v5875
        %v5940 = vtanh.pop %v5876
        %v5941 = vtanh.pop %v5877
        %v5942 = vtanh.pop %v5878
        %v5943 = vtanh.pop %v5879
        %v5944 = vtanh.pop %v5880
        %v5945 = vtanh.pop %v5881
        %v5946 = vtanh.pop %v5882
        %v5947 = vtanh.pop %v5883
        %v5948 = vtanh.pop %v5884
        %v5949 = vtanh.pop %v5885
        %v5950 = vtanh.pop %v5886
        %v5951 = vtanh.pop %v5887
        %v5952 = vtanh.pop %v5888
        %v5953 = vtanh.pop %v5889
        %v5954 = vtanh.pop %v5890
        %v5955 = vtanh.pop %v5891
        %v5956 = vtanh.pop %v5892
        %v5957 = vtanh.pop %v5893
        %v5958 = vtanh.pop %v5894
        %v5959 = vtanh.pop %v5895
        %v5960 = vtanh.pop %v5896
        %v5961 = vtanh.pop %v5897
        %v5962 = vtanh.pop %v5898
        %v5963 = vtanh.pop %v5899
        %v5964 = vtanh.pop %v5900
        %v5965 = vtanh.pop %v5901
        %v5966 = vtanh.pop %v5902
        %v5967 = vtanh.pop %v5903
        %v5968 = vtanh.pop %v5904
        %v5969 = vtanh.pop %v5905
        %v5970 = vtanh.pop %v5906
        %v5971 = vtanh.pop %v5907
        %v5972 = vtanh.pop %v5908
        %v5973 = vtanh.pop %v5909
        %v5974 = vtanh.pop %v5910
        %v5975 = vtanh.pop %v5911
        %v5976 = vtanh.pop %v5912
        %v5977 = vtanh.pop %v5913
        %v5978 = vtanh.pop %v5914
        %v5979 = vtanh.pop %v5915
        %v5980 = vtanh.pop %v5916
        %v5981 = vtanh.pop %v5917
        %v5982 = vtanh.pop %v5918
        %v5983 = vtanh.pop %v5919
        %v5984 = vtanh.pop %v5920
        %v5985 = vtanh.pop %v5921
        %v5986 = vtanh.pop %v5922
        %v5987 = vtanh.pop %v5923
        %v5988 = vtanh.pop %v5924
        %v5989 = vtanh.pop %v5925
        %v5990 = vtanh.pop %v5926
        %v5991 = vtanh.pop %v5927
        %v5992 = vadd.f32 %v5928, 1.0
        %v5993 = vadd.f32 %v5929, 1.0
        %v5994 = vadd.f32 %v5930, 1.0
        %v5995 = vadd.f32 %v5931, 1.0
        %v5996 = vadd.f32 %v5932, 1.0
        %v5997 = vadd.f32 %v5933, 1.0
        %v5998 = vadd.f32 %v5934, 1.0
        %v5999 = vadd.f32 %v5935, 1.0
        %v6000 = vadd.f32 %v5936, 1.0
        %v6001 = vadd.f32 %v5937, 1.0
        %v6002 = vadd.f32 %v5938, 1.0
        %v6003 = vadd.f32 %v5939, 1.0
        %v6004 = vadd.f32 %v5940, 1.0
        %v6005 = vadd.f32 %v5941, 1.0
        %v6006 = vadd.f32 %v5942, 1.0
        %v6007 = vadd.f32 %v5943, 1.0
        %v6008 = vadd.f32 %v5944, 1.0
        %v6009 = vadd.f32 %v5945, 1.0
        %v6010 = vadd.f32 %v5946, 1.0
        %v6011 = vadd.f32 %v5947, 1.0
        %v6012 = vadd.f32 %v5948, 1.0
        %v6013 = vadd.f32 %v5949, 1.0
        %v6014 = vadd.f32 %v5950, 1.0
        %v6015 = vadd.f32 %v5951, 1.0
        %v6016 = vadd.f32 %v5952, 1.0
        %v6017 = vadd.f32 %v5953, 1.0
        %v6018 = vadd.f32 %v5954, 1.0
        %v6019 = vadd.f32 %v5955, 1.0
        %v6020 = vadd.f32 %v5956, 1.0
        %v6021 = vadd.f32 %v5957, 1.0
        %v6022 = vadd.f32 %v5958, 1.0
        %v6023 = vadd.f32 %v5959, 1.0
        %v6024 = vadd.f32 %v5960, 1.0
        %v6025 = vadd.f32 %v5961, 1.0
        %v6026 = vadd.f32 %v5962, 1.0
        %v6027 = vadd.f32 %v5963, 1.0
        %v6028 = vadd.f32 %v5964, 1.0
        %v6029 = vadd.f32 %v5965, 1.0
        %v6030 = vadd.f32 %v5966, 1.0
        %v6031 = vadd.f32 %v5967, 1.0
        %v6032 = vadd.f32 %v5968, 1.0
        %v6033 = vadd.f32 %v5969, 1.0
        %v6034 = vadd.f32 %v5970, 1.0
        %v6035 = vadd.f32 %v5971, 1.0
        %v6036 = vadd.f32 %v5972, 1.0
        %v6037 = vadd.f32 %v5973, 1.0
        %v6038 = vadd.f32 %v5974, 1.0
        %v6039 = vadd.f32 %v5975, 1.0
        %v6040 = vadd.f32 %v5976, 1.0
        %v6041 = vadd.f32 %v5977, 1.0
        %v6042 = vadd.f32 %v5978, 1.0
        %v6043 = vadd.f32 %v5979, 1.0
        %v6044 = vadd.f32 %v5980, 1.0
        %v6045 = vadd.f32 %v5981, 1.0
        %v6046 = vadd.f32 %v5982, 1.0
        %v6047 = vadd.f32 %v5983, 1.0
        %v6048 = vadd.f32 %v5984, 1.0
        %v6049 = vadd.f32 %v5985, 1.0
        %v6050 = vadd.f32 %v5986, 1.0
        %v6051 = vadd.f32 %v5987, 1.0
        %v6052 = vadd.f32 %v5988, 1.0
        %v6053 = vadd.f32 %v5989, 1.0
        %v6054 = vadd.f32 %v5990, 1.0
        %v6055 = vadd.f32 %v5991, 1.0
        %v6056 = vmul.f32 %v5544, %v5992
        %v6057 = vmul.f32 %v5545, %v5993
        %v6058 = vmul.f32 %v5546, %v5994
        %v6059 = vmul.f32 %v5547, %v5995
        %v6060 = vmul.f32 %v5548, %v5996
        %v6061 = vmul.f32 %v5549, %v5997
        %v6062 = vmul.f32 %v5550, %v5998
        %v6063 = vmul.f32 %v5551, %v5999
        %v6064 = vmul.f32 %v5552, %v6000
        %v6065 = vmul.f32 %v5553, %v6001
        %v6066 = vmul.f32 %v5554, %v6002
        %v6067 = vmul.f32 %v5555, %v6003
        %v6068 = vmul.f32 %v5556, %v6004
        %v6069 = vmul.f32 %v5557, %v6005
        %v6070 = vmul.f32 %v5558, %v6006
        %v6071 = vmul.f32 %v5559, %v6007
        %v6072 = vmul.f32 %v5560, %v6008
        %v6073 = vmul.f32 %v5561, %v6009
        %v6074 = vmul.f32 %v5562, %v6010
        %v6075 = vmul.f32 %v5563, %v6011
        %v6076 = vmul.f32 %v5564, %v6012
        %v6077 = vmul.f32 %v5565, %v6013
        %v6078 = vmul.f32 %v5566, %v6014
        %v6079 = vmul.f32 %v5567, %v6015
        %v6080 = vmul.f32 %v5568, %v6016
        %v6081 = vmul.f32 %v5569, %v6017
        %v6082 = vmul.f32 %v5570, %v6018
        %v6083 = vmul.f32 %v5571, %v6019
        %v6084 = vmul.f32 %v5572, %v6020
        %v6085 = vmul.f32 %v5573, %v6021
        %v6086 = vmul.f32 %v5574, %v6022
        %v6087 = vmul.f32 %v5575, %v6023
        %v6088 = vmul.f32 %v5576, %v6024
        %v6089 = vmul.f32 %v5577, %v6025
        %v6090 = vmul.f32 %v5578, %v6026
        %v6091 = vmul.f32 %v5579, %v6027
        %v6092 = vmul.f32 %v5580, %v6028
        %v6093 = vmul.f32 %v5581, %v6029
        %v6094 = vmul.f32 %v5582, %v6030
        %v6095 = vmul.f32 %v5583, %v6031
        %v6096 = vmul.f32 %v5584, %v6032
        %v6097 = vmul.f32 %v5585, %v6033
        %v6098 = vmul.f32 %v5586, %v6034
        %v6099 = vmul.f32 %v5587, %v6035
        %v6100 = vmul.f32 %v5588, %v6036
        %v6101 = vmul.f32 %v5589, %v6037
        %v6102 = vmul.f32 %v5590, %v6038
        %v6103 = vmul.f32 %v5591, %v6039
        %v6104 = vmul.f32 %v5592, %v6040
        %v6105 = vmul.f32 %v5593, %v6041
        %v6106 = vmul.f32 %v5594, %v6042
        %v6107 = vmul.f32 %v5595, %v6043
        %v6108 = vmul.f32 %v5596, %v6044
        %v6109 = vmul.f32 %v5597, %v6045
        %v6110 = vmul.f32 %v5598, %v6046
        %v6111 = vmul.f32 %v5599, %v6047
        %v6112 = vmul.f32 %v5600, %v6048
        %v6113 = vmul.f32 %v5601, %v6049
        %v6114 = vmul.f32 %v5602, %v6050
        %v6115 = vmul.f32 %v5603, %v6051
        %v6116 = vmul.f32 %v5604, %v6052
        %v6117 = vmul.f32 %v5605, %v6053
        %v6118 = vmul.f32 %v5606, %v6054
        %v6119 = vmul.f32 %v5607, %v6055
        %6120 = vst [vmem:[#allocation2] sm:$0xff] %v6056
        %6121 = vst [vmem:[#allocation2 + $0x8] sm:$0xff] %v6057
        %6122 = vst [vmem:[#allocation2 + $0x10] sm:$0xff] %v6058
        %6123 = vst [vmem:[#allocation2 + $0x18] sm:$0xff] %v6059
        %6124 = vst [vmem:[#allocation2 + $0x20] sm:$0xff] %v6060
        %6125 = vst [vmem:[#allocation2 + $0x28] sm:$0xff] %v6061
        %6126 = vst [vmem:[#allocation2 + $0x30] sm:$0xff] %v6062
        %6127 = vst [vmem:[#allocation2 + $0x38] sm:$0xff] %v6063
        %6128 = vst [vmem:[#allocation2 + $0x40] sm:$0xff] %v6064
        %6129 = vst [vmem:[#allocation2 + $0x48] sm:$0xff] %v6065
        %6130 = vst [vmem:[#allocation2 + $0x50] sm:$0xff] %v6066
        %6131 = vst [vmem:[#allocation2 + $0x58] sm:$0xff] %v6067
        %6132 = vst [vmem:[#allocation2 + $0x60] sm:$0xff] %v6068
        %6133 = vst [vmem:[#allocation2 + $0x68] sm:$0xff] %v6069
        %6134 = vst [vmem:[#allocation2 + $0x70] sm:$0xff] %v6070
        %6135 = vst [vmem:[#allocation2 + $0x78] sm:$0xff] %v6071
        %6136 = vst [vmem:[#allocation2 + $0x80] sm:$0xff] %v6072
        %6137 = vst [vmem:[#allocation2 + $0x88] sm:$0xff] %v6073
        %6138 = vst [vmem:[#allocation2 + $0x90] sm:$0xff] %v6074
        %6139 = vst [vmem:[#allocation2 + $0x98] sm:$0xff] %v6075
        %6140 = vst [vmem:[#allocation2 + $0xa0] sm:$0xff] %v6076
        %6141 = vst [vmem:[#allocation2 + $0xa8] sm:$0xff] %v6077
        %6142 = vst [vmem:[#allocation2 + $0xb0] sm:$0xff] %v6078
        %6143 = vst [vmem:[#allocation2 + $0xb8] sm:$0xff] %v6079
        %6144 = vst [vmem:[#allocation2 + $0xc0] sm:$0xff] %v6080
        %6145 = vst [vmem:[#allocation2 + $0xc8] sm:$0xff] %v6081
        %6146 = vst [vmem:[#allocation2 + $0xd0] sm:$0xff] %v6082
        %6147 = vst [vmem:[#allocation2 + $0xd8] sm:$0xff] %v6083
        %6148 = vst [vmem:[#allocation2 + $0xe0] sm:$0xff] %v6084
        %6149 = vst [vmem:[#allocation2 + $0xe8] sm:$0xff] %v6085
        %6150 = vst [vmem:[#allocation2 + $0xf0] sm:$0xff] %v6086
        %6151 = vst [vmem:[#allocation2 + $0xf8] sm:$0xff] %v6087
        %6152 = vst [vmem:[#allocation2 + $0x100] sm:$0xff] %v6088
        %6153 = vst [vmem:[#allocation2 + $0x108] sm:$0xff] %v6089
        %6154 = vst [vmem:[#allocation2 + $0x110] sm:$0xff] %v6090
        %6155 = vst [vmem:[#allocation2 + $0x118] sm:$0xff] %v6091
        %6156 = vst [vmem:[#allocation2 + $0x120] sm:$0xff] %v6092
        %6157 = vst [vmem:[#allocation2 + $0x128] sm:$0xff] %v6093
        %6158 = vst [vmem:[#allocation2 + $0x130] sm:$0xff] %v6094
        %6159 = vst [vmem:[#allocation2 + $0x138] sm:$0xff] %v6095
        %6160 = vst [vmem:[#allocation2 + $0x140] sm:$0xff] %v6096
        %6161 = vst [vmem:[#allocation2 + $0x148] sm:$0xff] %v6097
        %6162 = vst [vmem:[#allocation2 + $0x150] sm:$0xff] %v6098
        %6163 = vst [vmem:[#allocation2 + $0x158] sm:$0xff] %v6099
        %6164 = vst [vmem:[#allocation2 + $0x160] sm:$0xff] %v6100
        %6165 = vst [vmem:[#allocation2 + $0x168] sm:$0xff] %v6101
        %6166 = vst [vmem:[#allocation2 + $0x170] sm:$0xff] %v6102
        %6167 = vst [vmem:[#allocation2 + $0x178] sm:$0xff] %v6103
        %6168 = vst [vmem:[#allocation2 + $0x180] sm:$0xff] %v6104
        %6169 = vst [vmem:[#allocation2 + $0x188] sm:$0xff] %v6105
        %6170 = vst [vmem:[#allocation2 + $0x190] sm:$0xff] %v6106
        %6171 = vst [vmem:[#allocation2 + $0x198] sm:$0xff] %v6107
        %6172 = vst [vmem:[#allocation2 + $0x1a0] sm:$0xff] %v6108
        %6173 = vst [vmem:[#allocation2 + $0x1a8] sm:$0xff] %v6109
        %6174 = vst [vmem:[#allocation2 + $0x1b0] sm:$0xff] %v6110
        %6175 = vst [vmem:[#allocation2 + $0x1b8] sm:$0xff] %v6111
        %6176 = vst [vmem:[#allocation2 + $0x1c0] sm:$0xff] %v6112
        %6177 = vst [vmem:[#allocation2 + $0x1c8] sm:$0xff] %v6113
        %6178 = vst [vmem:[#allocation2 + $0x1d0] sm:$0xff] %v6114
        %6179 = vst [vmem:[#allocation2 + $0x1d8] sm:$0xff] %v6115
        %6180 = vst [vmem:[#allocation2 + $0x1e0] sm:$0xff] %v6116
        %6181 = vst [vmem:[#allocation2 + $0x1e8] sm:$0xff] %v6117
        %6182 = vst [vmem:[#allocation2 + $0x1f0] sm:$0xff] %v6118
        %6183 = vst [vmem:[#allocation2 + $0x1f8] sm:$0xff] %v6119
        %p6184 = scmp.eq.s32.totalorder %s36, 1
        // Predicated region
        $region85: #{tpu_custom_call.1} parent=71 // pred_check
          %p6185 = pneg %p6184
        $region86: #{tpu_custom_call.1} parent=71 // pred_check_branch
          %6187 = sbr.rel (%p6185) target = $region88
        $region87: #{tpu_custom_call.1} parent=71 // pred_region
          %v6188 = vld [vmem:[%s11] sm:$0xf]
          %v6189 = vld [vmem:[%s11 + $0x4] sm:$0xf]
          %v6190 = vld [vmem:[%s11 + $0x8] sm:$0xf]
          %v6191 = vld [vmem:[%s11 + $0xc] sm:$0xf]
          %v6192 = vld [vmem:[%s11 + $0x10] sm:$0xf]
          %v6193 = vld [vmem:[%s11 + $0x14] sm:$0xf]
          %v6194 = vld [vmem:[%s11 + $0x18] sm:$0xf]
          %v6195 = vld [vmem:[%s11 + $0x1c] sm:$0xf]
          %v6196 = vld [vmem:[%s11 + $0x20] sm:$0xf]
          %v6197 = vld [vmem:[%s11 + $0x24] sm:$0xf]
          %v6198 = vld [vmem:[%s11 + $0x28] sm:$0xf]
          %v6199 = vld [vmem:[%s11 + $0x2c] sm:$0xf]
          %v6200 = vld [vmem:[%s11 + $0x30] sm:$0xf]
          %v6201 = vld [vmem:[%s11 + $0x34] sm:$0xf]
          %v6202 = vld [vmem:[%s11 + $0x38] sm:$0xf]
          %v6203 = vld [vmem:[%s11 + $0x3c] sm:$0xf]
          %v6204 = vpack.c.bf16 %v6057, %v6056
          %v6205 = vpack.c.bf16 %v6059, %v6058
          %v6206 = vpack.c.bf16 %v6061, %v6060
          %v6207 = vpack.c.bf16 %v6063, %v6062
          %v6208 = vpack.c.bf16 %v6065, %v6064
          %v6209 = vpack.c.bf16 %v6067, %v6066
          %v6210 = vpack.c.bf16 %v6069, %v6068
          %v6211 = vpack.c.bf16 %v6071, %v6070
          %v6212 = vpack.c.bf16 %v6073, %v6072
          %v6213 = vpack.c.bf16 %v6075, %v6074
          %v6214 = vpack.c.bf16 %v6077, %v6076
          %v6215 = vpack.c.bf16 %v6079, %v6078
          %v6216 = vpack.c.bf16 %v6081, %v6080
          %v6217 = vpack.c.bf16 %v6083, %v6082
          %v6218 = vpack.c.bf16 %v6085, %v6084
          %v6219 = vpack.c.bf16 %v6087, %v6086
          %v6220 = vpack.c.bf16 %v6089, %v6088
          %v6221 = vpack.c.bf16 %v6091, %v6090
          %v6222 = vpack.c.bf16 %v6093, %v6092
          %v6223 = vpack.c.bf16 %v6095, %v6094
          %v6224 = vpack.c.bf16 %v6097, %v6096
          %v6225 = vpack.c.bf16 %v6099, %v6098
          %v6226 = vpack.c.bf16 %v6101, %v6100
          %v6227 = vpack.c.bf16 %v6103, %v6102
          %v6228 = vpack.c.bf16 %v6105, %v6104
          %v6229 = vpack.c.bf16 %v6107, %v6106
          %v6230 = vpack.c.bf16 %v6109, %v6108
          %v6231 = vpack.c.bf16 %v6111, %v6110
          %v6232 = vpack.c.bf16 %v6113, %v6112
          %v6233 = vpack.c.bf16 %v6115, %v6114
          %v6234 = vpack.c.bf16 %v6117, %v6116
          %v6235 = vpack.c.bf16 %v6119, %v6118
          %v6236 = vld [vmem:[%s12] sm:$0x1]
          %v6238 = vlaneseq
          %v6239 = vshrl.u32 %v6238, 7
          %v6240 = vsub.s32 0, %v6239
          %v6241 = vrot.slane %v6236, %v6240
          %v6259 = vunpack.c.l.b16 %v6188
          %v6260 = vunpack.c.l.b16 %v6189
          %v6261 = vunpack.c.l.b16 %v6190
          %v6262 = vunpack.c.l.b16 %v6191
          %v6263 = vunpack.c.l.b16 %v6192
          %v6264 = vunpack.c.l.b16 %v6193
          %v6265 = vunpack.c.l.b16 %v6194
          %v6266 = vunpack.c.l.b16 %v6195
          %v6267 = vunpack.c.l.b16 %v6196
          %v6268 = vunpack.c.l.b16 %v6197
          %v6269 = vunpack.c.l.b16 %v6198
          %v6270 = vunpack.c.l.b16 %v6199
          %v6271 = vunpack.c.l.b16 %v6200
          %v6272 = vunpack.c.l.b16 %v6201
          %v6273 = vunpack.c.l.b16 %v6202
          %v6274 = vunpack.c.l.b16 %v6203
          %v6275 = vpack.c.b16 %v6260, %v6259
          %v6276 = vpack.c.b16 %v6262, %v6261
          %v6277 = vpack.c.b16 %v6264, %v6263
          %v6278 = vpack.c.b16 %v6266, %v6265
          %v6279 = vpack.c.b16 %v6268, %v6267
          %v6280 = vpack.c.b16 %v6270, %v6269
          %v6281 = vpack.c.b16 %v6272, %v6271
          %v6282 = vpack.c.b16 %v6274, %v6273
          %6291 = vmatprep.subr.bf16.mxu0 0
          %6292 = vmatpush1.bf16.msra.mxu0 %v6282
          %6293 = vmatprep.subr.bf16.mxu0 0
          %6294 = vmatpush1.bf16.msra.mxu0 %v6281
          %6295 = vmatprep.subr.bf16.mxu0 0
          %6296 = vmatpush1.bf16.msra.mxu0 %v6280
          %6297 = vmatprep.subr.bf16.mxu0 0
          %6298 = vmatpush1.bf16.msra.mxu0 %v6279
          %6299 = vmatprep.subr.bf16.mxu0 0
          %6300 = vmatpush1.bf16.msra.mxu0 %v6278
          %6301 = vmatprep.subr.bf16.mxu0 0
          %6302 = vmatpush1.bf16.msra.mxu0 %v6277
          %6303 = vmatprep.subr.bf16.mxu0 0
          %6304 = vmatpush1.bf16.msra.mxu0 %v6276
          %6305 = vmatprep.subr.bf16.mxu0 0
          %6306 = vmatpush1.bf16.msra.mxu0 %v6275
          %6307 = vmatprep.subr.bf16.mxu0 0
          %6308 = vmatpush2.bf16.msra.mxu0 0
          %6309 = vmatprep.subr.bf16.mxu0 0
          %6310 = vmatpush2.bf16.msra.mxu0 0
          %6311 = vmatprep.subr.bf16.mxu0 0
          %6312 = vmatpush2.bf16.msra.mxu0 0
          %6313 = vmatprep.subr.bf16.mxu0 0
          %6314 = vmatpush2.bf16.msra.mxu0 0
          %6315 = vmatprep.subr.bf16.mxu0 0
          %6316 = vmatpush2.bf16.msra.mxu0 0
          %6317 = vmatprep.subr.bf16.mxu0 0
          %6318 = vmatpush2.bf16.msra.mxu0 0
          %6319 = vmatprep.subr.bf16.mxu0 0
          %6320 = vmatpush2.bf16.msra.mxu0 0
          %6321 = vmatprep.subr.bf16.mxu0 0
          %6322 = vmatpush2.bf16.msra.mxu0 0
          %6323 = vmatprep.mubr.bf16.mxu0 0
          %6324 = vmatmul.mubr.bf16.gmra.mxu0 %v6204
          %v6325 = vpop.f32.mrf.mxu0
          %v6326 = vadd.f32 %v6241, %v6325
          %v6327 = vpop.f32.mrf.mxu0
          %v6328 = vpop.f32.mrf.mxu0
          %v6329 = vadd.f32 %v6241, %v6328
          %v6330 = vpop.f32.mrf.mxu0
          %6331 = vmatprep.mubr.bf16.mxu0 0
          %6332 = vmatmul.mubr.bf16.gmra.mxu0 %v6205
          %v6333 = vpop.f32.mrf.mxu0
          %v6334 = vadd.f32 %v6241, %v6333
          %v6335 = vpop.f32.mrf.mxu0
          %v6336 = vpop.f32.mrf.mxu0
          %v6337 = vadd.f32 %v6241, %v6336
          %v6338 = vpop.f32.mrf.mxu0
          %6339 = vmatprep.mubr.bf16.mxu0 0
          %6340 = vmatmul.mubr.bf16.gmra.mxu0 %v6206
          %v6341 = vpop.f32.mrf.mxu0
          %v6342 = vadd.f32 %v6241, %v6341
          %v6343 = vpop.f32.mrf.mxu0
          %v6344 = vpop.f32.mrf.mxu0
          %v6345 = vadd.f32 %v6241, %v6344
          %v6346 = vpop.f32.mrf.mxu0
          %6347 = vmatprep.mubr.bf16.mxu0 0
          %6348 = vmatmul.mubr.bf16.gmra.mxu0 %v6207
          %v6349 = vpop.f32.mrf.mxu0
          %v6350 = vadd.f32 %v6241, %v6349
          %v6351 = vpop.f32.mrf.mxu0
          %v6352 = vpop.f32.mrf.mxu0
          %v6353 = vadd.f32 %v6241, %v6352
          %v6354 = vpop.f32.mrf.mxu0
          %6355 = vmatprep.mubr.bf16.mxu0 0
          %6356 = vmatmul.mubr.bf16.gmra.mxu0 %v6208
          %v6357 = vpop.f32.mrf.mxu0
          %v6358 = vadd.f32 %v6241, %v6357
          %v6359 = vpop.f32.mrf.mxu0
          %v6360 = vpop.f32.mrf.mxu0
          %v6361 = vadd.f32 %v6241, %v6360
          %v6362 = vpop.f32.mrf.mxu0
          %6363 = vmatprep.mubr.bf16.mxu0 0
          %6364 = vmatmul.mubr.bf16.gmra.mxu0 %v6209
          %v6365 = vpop.f32.mrf.mxu0
          %v6366 = vadd.f32 %v6241, %v6365
          %v6367 = vpop.f32.mrf.mxu0
          %v6368 = vpop.f32.mrf.mxu0
          %v6369 = vadd.f32 %v6241, %v6368
          %v6370 = vpop.f32.mrf.mxu0
          %6371 = vmatprep.mubr.bf16.mxu0 0
          %6372 = vmatmul.mubr.bf16.gmra.mxu0 %v6210
          %v6373 = vpop.f32.mrf.mxu0
          %v6374 = vadd.f32 %v6241, %v6373
          %v6375 = vpop.f32.mrf.mxu0
          %v6376 = vpop.f32.mrf.mxu0
          %v6377 = vadd.f32 %v6241, %v6376
          %v6378 = vpop.f32.mrf.mxu0
          %6379 = vmatprep.mubr.bf16.mxu0 0
          %6380 = vmatmul.mubr.bf16.gmra.mxu0 %v6211
          %v6381 = vpop.f32.mrf.mxu0
          %v6382 = vadd.f32 %v6241, %v6381
          %v6383 = vpop.f32.mrf.mxu0
          %v6384 = vpop.f32.mrf.mxu0
          %v6385 = vadd.f32 %v6241, %v6384
          %v6386 = vpop.f32.mrf.mxu0
          %6387 = vmatprep.mubr.bf16.mxu0 0
          %6388 = vmatmul.mubr.bf16.gmra.mxu0 %v6212
          %v6389 = vpop.f32.mrf.mxu0
          %v6390 = vadd.f32 %v6241, %v6389
          %v6391 = vpop.f32.mrf.mxu0
          %v6392 = vpop.f32.mrf.mxu0
          %v6393 = vadd.f32 %v6241, %v6392
          %v6394 = vpop.f32.mrf.mxu0
          %6395 = vmatprep.mubr.bf16.mxu0 0
          %6396 = vmatmul.mubr.bf16.gmra.mxu0 %v6213
          %v6397 = vpop.f32.mrf.mxu0
          %v6398 = vadd.f32 %v6241, %v6397
          %v6399 = vpop.f32.mrf.mxu0
          %v6400 = vpop.f32.mrf.mxu0
          %v6401 = vadd.f32 %v6241, %v6400
          %v6402 = vpop.f32.mrf.mxu0
          %6403 = vmatprep.mubr.bf16.mxu0 0
          %6404 = vmatmul.mubr.bf16.gmra.mxu0 %v6214
          %v6405 = vpop.f32.mrf.mxu0
          %v6406 = vadd.f32 %v6241, %v6405
          %v6407 = vpop.f32.mrf.mxu0
          %v6408 = vpop.f32.mrf.mxu0
          %v6409 = vadd.f32 %v6241, %v6408
          %v6410 = vpop.f32.mrf.mxu0
          %6411 = vmatprep.mubr.bf16.mxu0 0
          %6412 = vmatmul.mubr.bf16.gmra.mxu0 %v6215
          %v6413 = vpop.f32.mrf.mxu0
          %v6414 = vadd.f32 %v6241, %v6413
          %v6415 = vpop.f32.mrf.mxu0
          %v6416 = vpop.f32.mrf.mxu0
          %v6417 = vadd.f32 %v6241, %v6416
          %v6418 = vpop.f32.mrf.mxu0
          %6419 = vmatprep.mubr.bf16.mxu0 0
          %6420 = vmatmul.mubr.bf16.gmra.mxu0 %v6216
          %v6421 = vpop.f32.mrf.mxu0
          %v6422 = vadd.f32 %v6241, %v6421
          %v6423 = vpop.f32.mrf.mxu0
          %v6424 = vpop.f32.mrf.mxu0
          %v6425 = vadd.f32 %v6241, %v6424
          %v6426 = vpop.f32.mrf.mxu0
          %6427 = vmatprep.mubr.bf16.mxu0 0
          %6428 = vmatmul.mubr.bf16.gmra.mxu0 %v6217
          %v6429 = vpop.f32.mrf.mxu0
          %v6430 = vadd.f32 %v6241, %v6429
          %v6431 = vpop.f32.mrf.mxu0
          %v6432 = vpop.f32.mrf.mxu0
          %v6433 = vadd.f32 %v6241, %v6432
          %v6434 = vpop.f32.mrf.mxu0
          %6435 = vmatprep.mubr.bf16.mxu0 0
          %6436 = vmatmul.mubr.bf16.gmra.mxu0 %v6218
          %v6437 = vpop.f32.mrf.mxu0
          %v6438 = vadd.f32 %v6241, %v6437
          %v6439 = vpop.f32.mrf.mxu0
          %v6440 = vpop.f32.mrf.mxu0
          %v6441 = vadd.f32 %v6241, %v6440
          %v6442 = vpop.f32.mrf.mxu0
          %6443 = vmatprep.mubr.bf16.mxu0 0
          %6444 = vmatmul.mubr.bf16.gmra.mxu0 %v6219
          %v6445 = vpop.f32.mrf.mxu0
          %v6446 = vadd.f32 %v6241, %v6445
          %v6447 = vpop.f32.mrf.mxu0
          %v6448 = vpop.f32.mrf.mxu0
          %v6449 = vadd.f32 %v6241, %v6448
          %v6450 = vpop.f32.mrf.mxu0
          %6451 = vmatprep.mubr.bf16.mxu0 0
          %6452 = vmatmul.mubr.bf16.gmra.mxu0 %v6220
          %v6453 = vpop.f32.mrf.mxu0
          %v6454 = vadd.f32 %v6241, %v6453
          %v6455 = vpop.f32.mrf.mxu0
          %v6456 = vpop.f32.mrf.mxu0
          %v6457 = vadd.f32 %v6241, %v6456
          %v6458 = vpop.f32.mrf.mxu0
          %6459 = vmatprep.mubr.bf16.mxu0 0
          %6460 = vmatmul.mubr.bf16.gmra.mxu0 %v6221
          %v6461 = vpop.f32.mrf.mxu0
          %v6462 = vadd.f32 %v6241, %v6461
          %v6463 = vpop.f32.mrf.mxu0
          %v6464 = vpop.f32.mrf.mxu0
          %v6465 = vadd.f32 %v6241, %v6464
          %v6466 = vpop.f32.mrf.mxu0
          %6467 = vmatprep.mubr.bf16.mxu0 0
          %6468 = vmatmul.mubr.bf16.gmra.mxu0 %v6222
          %v6469 = vpop.f32.mrf.mxu0
          %v6470 = vadd.f32 %v6241, %v6469
          %v6471 = vpop.f32.mrf.mxu0
          %v6472 = vpop.f32.mrf.mxu0
          %v6473 = vadd.f32 %v6241, %v6472
          %v6474 = vpop.f32.mrf.mxu0
          %6475 = vmatprep.mubr.bf16.mxu0 0
          %6476 = vmatmul.mubr.bf16.gmra.mxu0 %v6223
          %v6477 = vpop.f32.mrf.mxu0
          %v6478 = vadd.f32 %v6241, %v6477
          %v6479 = vpop.f32.mrf.mxu0
          %v6480 = vpop.f32.mrf.mxu0
          %v6481 = vadd.f32 %v6241, %v6480
          %v6482 = vpop.f32.mrf.mxu0
          %6483 = vmatprep.mubr.bf16.mxu0 0
          %6484 = vmatmul.mubr.bf16.gmra.mxu0 %v6224
          %v6485 = vpop.f32.mrf.mxu0
          %v6486 = vadd.f32 %v6241, %v6485
          %v6487 = vpop.f32.mrf.mxu0
          %v6488 = vpop.f32.mrf.mxu0
          %v6489 = vadd.f32 %v6241, %v6488
          %v6490 = vpop.f32.mrf.mxu0
          %6491 = vmatprep.mubr.bf16.mxu0 0
          %6492 = vmatmul.mubr.bf16.gmra.mxu0 %v6225
          %v6493 = vpop.f32.mrf.mxu0
          %v6494 = vadd.f32 %v6241, %v6493
          %v6495 = vpop.f32.mrf.mxu0
          %v6496 = vpop.f32.mrf.mxu0
          %v6497 = vadd.f32 %v6241, %v6496
          %v6498 = vpop.f32.mrf.mxu0
          %6499 = vmatprep.mubr.bf16.mxu0 0
          %6500 = vmatmul.mubr.bf16.gmra.mxu0 %v6226
          %v6501 = vpop.f32.mrf.mxu0
          %v6502 = vadd.f32 %v6241, %v6501
          %v6503 = vpop.f32.mrf.mxu0
          %v6504 = vpop.f32.mrf.mxu0
          %v6505 = vadd.f32 %v6241, %v6504
          %v6506 = vpop.f32.mrf.mxu0
          %6507 = vmatprep.mubr.bf16.mxu0 0
          %6508 = vmatmul.mubr.bf16.gmra.mxu0 %v6227
          %v6509 = vpop.f32.mrf.mxu0
          %v6510 = vadd.f32 %v6241, %v6509
          %v6511 = vpop.f32.mrf.mxu0
          %v6512 = vpop.f32.mrf.mxu0
          %v6513 = vadd.f32 %v6241, %v6512
          %v6514 = vpop.f32.mrf.mxu0
          %6515 = vmatprep.mubr.bf16.mxu0 0
          %6516 = vmatmul.mubr.bf16.gmra.mxu0 %v6228
          %v6517 = vpop.f32.mrf.mxu0
          %v6518 = vadd.f32 %v6241, %v6517
          %v6519 = vpop.f32.mrf.mxu0
          %v6520 = vpop.f32.mrf.mxu0
          %v6521 = vadd.f32 %v6241, %v6520
          %v6522 = vpop.f32.mrf.mxu0
          %6523 = vmatprep.mubr.bf16.mxu0 0
          %6524 = vmatmul.mubr.bf16.gmra.mxu0 %v6229
          %v6525 = vpop.f32.mrf.mxu0
          %v6526 = vadd.f32 %v6241, %v6525
          %v6527 = vpop.f32.mrf.mxu0
          %v6528 = vpop.f32.mrf.mxu0
          %v6529 = vadd.f32 %v6241, %v6528
          %v6530 = vpop.f32.mrf.mxu0
          %6531 = vmatprep.mubr.bf16.mxu0 0
          %6532 = vmatmul.mubr.bf16.gmra.mxu0 %v6230
          %v6533 = vpop.f32.mrf.mxu0
          %v6534 = vadd.f32 %v6241, %v6533
          %v6535 = vpop.f32.mrf.mxu0
          %v6536 = vpop.f32.mrf.mxu0
          %v6537 = vadd.f32 %v6241, %v6536
          %v6538 = vpop.f32.mrf.mxu0
          %6539 = vmatprep.mubr.bf16.mxu0 0
          %6540 = vmatmul.mubr.bf16.gmra.mxu0 %v6231
          %v6541 = vpop.f32.mrf.mxu0
          %v6542 = vadd.f32 %v6241, %v6541
          %v6543 = vpop.f32.mrf.mxu0
          %v6544 = vpop.f32.mrf.mxu0
          %v6545 = vadd.f32 %v6241, %v6544
          %v6546 = vpop.f32.mrf.mxu0
          %6547 = vmatprep.mubr.bf16.mxu0 0
          %6548 = vmatmul.mubr.bf16.gmra.mxu0 %v6232
          %v6549 = vpop.f32.mrf.mxu0
          %v6550 = vadd.f32 %v6241, %v6549
          %v6551 = vpop.f32.mrf.mxu0
          %v6552 = vpop.f32.mrf.mxu0
          %v6553 = vadd.f32 %v6241, %v6552
          %v6554 = vpop.f32.mrf.mxu0
          %6555 = vmatprep.mubr.bf16.mxu0 0
          %6556 = vmatmul.mubr.bf16.gmra.mxu0 %v6233
          %v6557 = vpop.f32.mrf.mxu0
          %v6558 = vadd.f32 %v6241, %v6557
          %v6559 = vpop.f32.mrf.mxu0
          %v6560 = vpop.f32.mrf.mxu0
          %v6561 = vadd.f32 %v6241, %v6560
          %v6562 = vpop.f32.mrf.mxu0
          %6563 = vmatprep.mubr.bf16.mxu0 0
          %6564 = vmatmul.mubr.bf16.gmra.mxu0 %v6234
          %v6565 = vpop.f32.mrf.mxu0
          %v6566 = vadd.f32 %v6241, %v6565
          %v6567 = vpop.f32.mrf.mxu0
          %v6568 = vpop.f32.mrf.mxu0
          %v6569 = vadd.f32 %v6241, %v6568
          %v6570 = vpop.f32.mrf.mxu0
          %6571 = vmatprep.mubr.bf16.mxu0 0
          %6572 = vmatmul.mubr.bf16.gmra.mxu0 %v6235
          %v6573 = vpop.f32.mrf.mxu0
          %v6574 = vadd.f32 %v6241, %v6573
          %v6575 = vpop.f32.mrf.mxu0
          %v6576 = vpop.f32.mrf.mxu0
          %v6577 = vadd.f32 %v6241, %v6576
          %v6578 = vpop.f32.mrf.mxu0
          %6579 = vdwg.mxu0
          %v6580 = vpack.c.bf16 %v6329, %v6326
          %v6581 = vpack.c.bf16 %v6337, %v6334
          %v6582 = vpack.c.bf16 %v6345, %v6342
          %v6583 = vpack.c.bf16 %v6353, %v6350
          %v6584 = vpack.c.bf16 %v6361, %v6358
          %v6585 = vpack.c.bf16 %v6369, %v6366
          %v6586 = vpack.c.bf16 %v6377, %v6374
          %v6587 = vpack.c.bf16 %v6385, %v6382
          %v6588 = vpack.c.bf16 %v6393, %v6390
          %v6589 = vpack.c.bf16 %v6401, %v6398
          %v6590 = vpack.c.bf16 %v6409, %v6406
          %v6591 = vpack.c.bf16 %v6417, %v6414
          %v6592 = vpack.c.bf16 %v6425, %v6422
          %v6593 = vpack.c.bf16 %v6433, %v6430
          %v6594 = vpack.c.bf16 %v6441, %v6438
          %v6595 = vpack.c.bf16 %v6449, %v6446
          %v6596 = vpack.c.bf16 %v6457, %v6454
          %v6597 = vpack.c.bf16 %v6465, %v6462
          %v6598 = vpack.c.bf16 %v6473, %v6470
          %v6599 = vpack.c.bf16 %v6481, %v6478
          %v6600 = vpack.c.bf16 %v6489, %v6486
          %v6601 = vpack.c.bf16 %v6497, %v6494
          %v6602 = vpack.c.bf16 %v6505, %v6502
          %v6603 = vpack.c.bf16 %v6513, %v6510
          %v6604 = vpack.c.bf16 %v6521, %v6518
          %v6605 = vpack.c.bf16 %v6529, %v6526
          %v6606 = vpack.c.bf16 %v6537, %v6534
          %v6607 = vpack.c.bf16 %v6545, %v6542
          %v6608 = vpack.c.bf16 %v6553, %v6550
          %v6609 = vpack.c.bf16 %v6561, %v6558
          %v6610 = vpack.c.bf16 %v6569, %v6566
          %v6611 = vpack.c.bf16 %v6577, %v6574
          %v6612 = vmul.bf16 %v6580, 1056980736
          %v6613 = vmul.bf16 %v6581, 1056980736
          %v6614 = vmul.bf16 %v6582, 1056980736
          %v6615 = vmul.bf16 %v6583, 1056980736
          %v6616 = vmul.bf16 %v6584, 1056980736
          %v6617 = vmul.bf16 %v6585, 1056980736
          %v6618 = vmul.bf16 %v6586, 1056980736
          %v6619 = vmul.bf16 %v6587, 1056980736
          %v6620 = vmul.bf16 %v6588, 1056980736
          %v6621 = vmul.bf16 %v6589, 1056980736
          %v6622 = vmul.bf16 %v6590, 1056980736
          %v6623 = vmul.bf16 %v6591, 1056980736
          %v6624 = vmul.bf16 %v6592, 1056980736
          %v6625 = vmul.bf16 %v6593, 1056980736
          %v6626 = vmul.bf16 %v6594, 1056980736
          %v6627 = vmul.bf16 %v6595, 1056980736
          %v6628 = vmul.bf16 %v6596, 1056980736
          %v6629 = vmul.bf16 %v6597, 1056980736
          %v6630 = vmul.bf16 %v6598, 1056980736
          %v6631 = vmul.bf16 %v6599, 1056980736
          %v6632 = vmul.bf16 %v6600, 1056980736
          %v6633 = vmul.bf16 %v6601, 1056980736
          %v6634 = vmul.bf16 %v6602, 1056980736
          %v6635 = vmul.bf16 %v6603, 1056980736
          %v6636 = vmul.bf16 %v6604, 1056980736
          %v6637 = vmul.bf16 %v6605, 1056980736
          %v6638 = vmul.bf16 %v6606, 1056980736
          %v6639 = vmul.bf16 %v6607, 1056980736
          %v6640 = vmul.bf16 %v6608, 1056980736
          %v6641 = vmul.bf16 %v6609, 1056980736
          %v6642 = vmul.bf16 %v6610, 1056980736
          %v6643 = vmul.bf16 %v6611, 1056980736
          %v6644 = vmul.bf16 %v6580, 1027030327
          %v6645 = vmul.bf16 %v6581, 1027030327
          %v6646 = vmul.bf16 %v6582, 1027030327
          %v6647 = vmul.bf16 %v6583, 1027030327
          %v6648 = vmul.bf16 %v6584, 1027030327
          %v6649 = vmul.bf16 %v6585, 1027030327
          %v6650 = vmul.bf16 %v6586, 1027030327
          %v6651 = vmul.bf16 %v6587, 1027030327
          %v6652 = vmul.bf16 %v6588, 1027030327
          %v6653 = vmul.bf16 %v6589, 1027030327
          %v6654 = vmul.bf16 %v6590, 1027030327
          %v6655 = vmul.bf16 %v6591, 1027030327
          %v6656 = vmul.bf16 %v6592, 1027030327
          %v6657 = vmul.bf16 %v6593, 1027030327
          %v6658 = vmul.bf16 %v6594, 1027030327
          %v6659 = vmul.bf16 %v6595, 1027030327
          %v6660 = vmul.bf16 %v6596, 1027030327
          %v6661 = vmul.bf16 %v6597, 1027030327
          %v6662 = vmul.bf16 %v6598, 1027030327
          %v6663 = vmul.bf16 %v6599, 1027030327
          %v6664 = vmul.bf16 %v6600, 1027030327
          %v6665 = vmul.bf16 %v6601, 1027030327
          %v6666 = vmul.bf16 %v6602, 1027030327
          %v6667 = vmul.bf16 %v6603, 1027030327
          %v6668 = vmul.bf16 %v6604, 1027030327
          %v6669 = vmul.bf16 %v6605, 1027030327
          %v6670 = vmul.bf16 %v6606, 1027030327
          %v6671 = vmul.bf16 %v6607, 1027030327
          %v6672 = vmul.bf16 %v6608, 1027030327
          %v6673 = vmul.bf16 %v6609, 1027030327
          %v6674 = vmul.bf16 %v6610, 1027030327
          %v6675 = vmul.bf16 %v6611, 1027030327
          %v6676 = vmul.bf16 %v6644, %v6580
          %v6677 = vmul.bf16 %v6645, %v6581
          %v6678 = vmul.bf16 %v6646, %v6582
          %v6679 = vmul.bf16 %v6647, %v6583
          %v6680 = vmul.bf16 %v6648, %v6584
          %v6681 = vmul.bf16 %v6649, %v6585
          %v6682 = vmul.bf16 %v6650, %v6586
          %v6683 = vmul.bf16 %v6651, %v6587
          %v6684 = vmul.bf16 %v6652, %v6588
          %v6685 = vmul.bf16 %v6653, %v6589
          %v6686 = vmul.bf16 %v6654, %v6590
          %v6687 = vmul.bf16 %v6655, %v6591
          %v6688 = vmul.bf16 %v6656, %v6592
          %v6689 = vmul.bf16 %v6657, %v6593
          %v6690 = vmul.bf16 %v6658, %v6594
          %v6691 = vmul.bf16 %v6659, %v6595
          %v6692 = vmul.bf16 %v6660, %v6596
          %v6693 = vmul.bf16 %v6661, %v6597
          %v6694 = vmul.bf16 %v6662, %v6598
          %v6695 = vmul.bf16 %v6663, %v6599
          %v6696 = vmul.bf16 %v6664, %v6600
          %v6697 = vmul.bf16 %v6665, %v6601
          %v6698 = vmul.bf16 %v6666, %v6602
          %v6699 = vmul.bf16 %v6667, %v6603
          %v6700 = vmul.bf16 %v6668, %v6604
          %v6701 = vmul.bf16 %v6669, %v6605
          %v6702 = vmul.bf16 %v6670, %v6606
          %v6703 = vmul.bf16 %v6671, %v6607
          %v6704 = vmul.bf16 %v6672, %v6608
          %v6705 = vmul.bf16 %v6673, %v6609
          %v6706 = vmul.bf16 %v6674, %v6610
          %v6707 = vmul.bf16 %v6675, %v6611
          %v6708 = vmul.bf16 %v6676, %v6580
          %v6709 = vmul.bf16 %v6677, %v6581
          %v6710 = vmul.bf16 %v6678, %v6582
          %v6711 = vmul.bf16 %v6679, %v6583
          %v6712 = vmul.bf16 %v6680, %v6584
          %v6713 = vmul.bf16 %v6681, %v6585
          %v6714 = vmul.bf16 %v6682, %v6586
          %v6715 = vmul.bf16 %v6683, %v6587
          %v6716 = vmul.bf16 %v6684, %v6588
          %v6717 = vmul.bf16 %v6685, %v6589
          %v6718 = vmul.bf16 %v6686, %v6590
          %v6719 = vmul.bf16 %v6687, %v6591
          %v6720 = vmul.bf16 %v6688, %v6592
          %v6721 = vmul.bf16 %v6689, %v6593
          %v6722 = vmul.bf16 %v6690, %v6594
          %v6723 = vmul.bf16 %v6691, %v6595
          %v6724 = vmul.bf16 %v6692, %v6596
          %v6725 = vmul.bf16 %v6693, %v6597
          %v6726 = vmul.bf16 %v6694, %v6598
          %v6727 = vmul.bf16 %v6695, %v6599
          %v6728 = vmul.bf16 %v6696, %v6600
          %v6729 = vmul.bf16 %v6697, %v6601
          %v6730 = vmul.bf16 %v6698, %v6602
          %v6731 = vmul.bf16 %v6699, %v6603
          %v6732 = vmul.bf16 %v6700, %v6604
          %v6733 = vmul.bf16 %v6701, %v6605
          %v6734 = vmul.bf16 %v6702, %v6606
          %v6735 = vmul.bf16 %v6703, %v6607
          %v6736 = vmul.bf16 %v6704, %v6608
          %v6737 = vmul.bf16 %v6705, %v6609
          %v6738 = vmul.bf16 %v6706, %v6610
          %v6739 = vmul.bf16 %v6707, %v6611
          %v6740 = vadd.bf16 %v6580, %v6708
          %v6741 = vadd.bf16 %v6581, %v6709
          %v6742 = vadd.bf16 %v6582, %v6710
          %v6743 = vadd.bf16 %v6583, %v6711
          %v6744 = vadd.bf16 %v6584, %v6712
          %v6745 = vadd.bf16 %v6585, %v6713
          %v6746 = vadd.bf16 %v6586, %v6714
          %v6747 = vadd.bf16 %v6587, %v6715
          %v6748 = vadd.bf16 %v6588, %v6716
          %v6749 = vadd.bf16 %v6589, %v6717
          %v6750 = vadd.bf16 %v6590, %v6718
          %v6751 = vadd.bf16 %v6591, %v6719
          %v6752 = vadd.bf16 %v6592, %v6720
          %v6753 = vadd.bf16 %v6593, %v6721
          %v6754 = vadd.bf16 %v6594, %v6722
          %v6755 = vadd.bf16 %v6595, %v6723
          %v6756 = vadd.bf16 %v6596, %v6724
          %v6757 = vadd.bf16 %v6597, %v6725
          %v6758 = vadd.bf16 %v6598, %v6726
          %v6759 = vadd.bf16 %v6599, %v6727
          %v6760 = vadd.bf16 %v6600, %v6728
          %v6761 = vadd.bf16 %v6601, %v6729
          %v6762 = vadd.bf16 %v6602, %v6730
          %v6763 = vadd.bf16 %v6603, %v6731
          %v6764 = vadd.bf16 %v6604, %v6732
          %v6765 = vadd.bf16 %v6605, %v6733
          %v6766 = vadd.bf16 %v6606, %v6734
          %v6767 = vadd.bf16 %v6607, %v6735
          %v6768 = vadd.bf16 %v6608, %v6736
          %v6769 = vadd.bf16 %v6609, %v6737
          %v6770 = vadd.bf16 %v6610, %v6738
          %v6771 = vadd.bf16 %v6611, %v6739
          %v6772 = vmul.bf16 %v6740, 1061961548
          %v6773 = vmul.bf16 %v6741, 1061961548
          %v6774 = vmul.bf16 %v6742, 1061961548
          %v6775 = vmul.bf16 %v6743, 1061961548
          %v6776 = vmul.bf16 %v6744, 1061961548
          %v6777 = vmul.bf16 %v6745, 1061961548
          %v6778 = vmul.bf16 %v6746, 1061961548
          %v6779 = vmul.bf16 %v6747, 1061961548
          %v6780 = vmul.bf16 %v6748, 1061961548
          %v6781 = vmul.bf16 %v6749, 1061961548
          %v6782 = vmul.bf16 %v6750, 1061961548
          %v6783 = vmul.bf16 %v6751, 1061961548
          %v6784 = vmul.bf16 %v6752, 1061961548
          %v6785 = vmul.bf16 %v6753, 1061961548
          %v6786 = vmul.bf16 %v6754, 1061961548
          %v6787 = vmul.bf16 %v6755, 1061961548
          %v6788 = vmul.bf16 %v6756, 1061961548
          %v6789 = vmul.bf16 %v6757, 1061961548
          %v6790 = vmul.bf16 %v6758, 1061961548
          %v6791 = vmul.bf16 %v6759, 1061961548
          %v6792 = vmul.bf16 %v6760, 1061961548
          %v6793 = vmul.bf16 %v6761, 1061961548
          %v6794 = vmul.bf16 %v6762, 1061961548
          %v6795 = vmul.bf16 %v6763, 1061961548
          %v6796 = vmul.bf16 %v6764, 1061961548
          %v6797 = vmul.bf16 %v6765, 1061961548
          %v6798 = vmul.bf16 %v6766, 1061961548
          %v6799 = vmul.bf16 %v6767, 1061961548
          %v6800 = vmul.bf16 %v6768, 1061961548
          %v6801 = vmul.bf16 %v6769, 1061961548
          %v6802 = vmul.bf16 %v6770, 1061961548
          %v6803 = vmul.bf16 %v6771, 1061961548
          %v6804 = vtanh.bf16.pop %v6772
          %v6805 = vtanh.bf16.pop %v6773
          %v6806 = vtanh.bf16.pop %v6774
          %v6807 = vtanh.bf16.pop %v6775
          %v6808 = vtanh.bf16.pop %v6776
          %v6809 = vtanh.bf16.pop %v6777
          %v6810 = vtanh.bf16.pop %v6778
          %v6811 = vtanh.bf16.pop %v6779
          %v6812 = vtanh.bf16.pop %v6780
          %v6813 = vtanh.bf16.pop %v6781
          %v6814 = vtanh.bf16.pop %v6782
          %v6815 = vtanh.bf16.pop %v6783
          %v6816 = vtanh.bf16.pop %v6784
          %v6817 = vtanh.bf16.pop %v6785
          %v6818 = vtanh.bf16.pop %v6786
          %v6819 = vtanh.bf16.pop %v6787
          %v6820 = vtanh.bf16.pop %v6788
          %v6821 = vtanh.bf16.pop %v6789
          %v6822 = vtanh.bf16.pop %v6790
          %v6823 = vtanh.bf16.pop %v6791
          %v6824 = vtanh.bf16.pop %v6792
          %v6825 = vtanh.bf16.pop %v6793
          %v6826 = vtanh.bf16.pop %v6794
          %v6827 = vtanh.bf16.pop %v6795
          %v6828 = vtanh.bf16.pop %v6796
          %v6829 = vtanh.bf16.pop %v6797
          %v6830 = vtanh.bf16.pop %v6798
          %v6831 = vtanh.bf16.pop %v6799
          %v6832 = vtanh.bf16.pop %v6800
          %v6833 = vtanh.bf16.pop %v6801
          %v6834 = vtanh.bf16.pop %v6802
          %v6835 = vtanh.bf16.pop %v6803
          %v6836 = vadd.bf16 %v6804, 1065369472
          %v6837 = vadd.bf16 %v6805, 1065369472
          %v6838 = vadd.bf16 %v6806, 1065369472
          %v6839 = vadd.bf16 %v6807, 1065369472
          %v6840 = vadd.bf16 %v6808, 1065369472
          %v6841 = vadd.bf16 %v6809, 1065369472
          %v6842 = vadd.bf16 %v6810, 1065369472
          %v6843 = vadd.bf16 %v6811, 1065369472
          %v6844 = vadd.bf16 %v6812, 1065369472
          %v6845 = vadd.bf16 %v6813, 1065369472
          %v6846 = vadd.bf16 %v6814, 1065369472
          %v6847 = vadd.bf16 %v6815, 1065369472
          %v6848 = vadd.bf16 %v6816, 1065369472
          %v6849 = vadd.bf16 %v6817, 1065369472
          %v6850 = vadd.bf16 %v6818, 1065369472
          %v6851 = vadd.bf16 %v6819, 1065369472
          %v6852 = vadd.bf16 %v6820, 1065369472
          %v6853 = vadd.bf16 %v6821, 1065369472
          %v6854 = vadd.bf16 %v6822, 1065369472
          %v6855 = vadd.bf16 %v6823, 1065369472
          %v6856 = vadd.bf16 %v6824, 1065369472
          %v6857 = vadd.bf16 %v6825, 1065369472
          %v6858 = vadd.bf16 %v6826, 1065369472
          %v6859 = vadd.bf16 %v6827, 1065369472
          %v6860 = vadd.bf16 %v6828, 1065369472
          %v6861 = vadd.bf16 %v6829, 1065369472
          %v6862 = vadd.bf16 %v6830, 1065369472
          %v6863 = vadd.bf16 %v6831, 1065369472
          %v6864 = vadd.bf16 %v6832, 1065369472
          %v6865 = vadd.bf16 %v6833, 1065369472
          %v6866 = vadd.bf16 %v6834, 1065369472
          %v6867 = vadd.bf16 %v6835, 1065369472
          %v6868 = vmul.bf16 %v6612, %v6836
          %v6869 = vmul.bf16 %v6613, %v6837
          %v6870 = vmul.bf16 %v6614, %v6838
          %v6871 = vmul.bf16 %v6615, %v6839
          %v6872 = vmul.bf16 %v6616, %v6840
          %v6873 = vmul.bf16 %v6617, %v6841
          %v6874 = vmul.bf16 %v6618, %v6842
          %v6875 = vmul.bf16 %v6619, %v6843
          %v6876 = vmul.bf16 %v6620, %v6844
          %v6877 = vmul.bf16 %v6621, %v6845
          %v6878 = vmul.bf16 %v6622, %v6846
          %v6879 = vmul.bf16 %v6623, %v6847
          %v6880 = vmul.bf16 %v6624, %v6848
          %v6881 = vmul.bf16 %v6625, %v6849
          %v6882 = vmul.bf16 %v6626, %v6850
          %v6883 = vmul.bf16 %v6627, %v6851
          %v6884 = vmul.bf16 %v6628, %v6852
          %v6885 = vmul.bf16 %v6629, %v6853
          %v6886 = vmul.bf16 %v6630, %v6854
          %v6887 = vmul.bf16 %v6631, %v6855
          %v6888 = vmul.bf16 %v6632, %v6856
          %v6889 = vmul.bf16 %v6633, %v6857
          %v6890 = vmul.bf16 %v6634, %v6858
          %v6891 = vmul.bf16 %v6635, %v6859
          %v6892 = vmul.bf16 %v6636, %v6860
          %v6893 = vmul.bf16 %v6637, %v6861
          %v6894 = vmul.bf16 %v6638, %v6862
          %v6895 = vmul.bf16 %v6639, %v6863
          %v6896 = vmul.bf16 %v6640, %v6864
          %v6897 = vmul.bf16 %v6641, %v6865
          %v6898 = vmul.bf16 %v6642, %v6866
          %v6899 = vmul.bf16 %v6643, %v6867
          %v6932 = vunpack.c.l.b16 %v6868
          %v6933 = vunpack.c.h.b16 %v6868
          %v6934 = vunpack.c.l.b16 %v6869
          %v6935 = vunpack.c.h.b16 %v6869
          %v6936 = vunpack.c.l.b16 %v6870
          %v6937 = vunpack.c.h.b16 %v6870
          %v6938 = vunpack.c.l.b16 %v6871
          %v6939 = vunpack.c.h.b16 %v6871
          %v6940 = vunpack.c.l.b16 %v6872
          %v6941 = vunpack.c.h.b16 %v6872
          %v6942 = vunpack.c.l.b16 %v6873
          %v6943 = vunpack.c.h.b16 %v6873
          %v6944 = vunpack.c.l.b16 %v6874
          %v6945 = vunpack.c.h.b16 %v6874
          %v6946 = vunpack.c.l.b16 %v6875
          %v6947 = vunpack.c.h.b16 %v6875
          %v6948 = vunpack.c.l.b16 %v6876
          %v6949 = vunpack.c.h.b16 %v6876
          %v6950 = vunpack.c.l.b16 %v6877
          %v6951 = vunpack.c.h.b16 %v6877
          %v6952 = vunpack.c.l.b16 %v6878
          %v6953 = vunpack.c.h.b16 %v6878
          %v6954 = vunpack.c.l.b16 %v6879
          %v6955 = vunpack.c.h.b16 %v6879
          %v6956 = vunpack.c.l.b16 %v6880
          %v6957 = vunpack.c.h.b16 %v6880
          %v6958 = vunpack.c.l.b16 %v6881
          %v6959 = vunpack.c.h.b16 %v6881
          %v6960 = vunpack.c.l.b16 %v6882
          %v6961 = vunpack.c.h.b16 %v6882
          %v6962 = vunpack.c.l.b16 %v6883
          %v6963 = vunpack.c.h.b16 %v6883
          %v6964 = vunpack.c.l.b16 %v6884
          %v6965 = vunpack.c.h.b16 %v6884
          %v6966 = vunpack.c.l.b16 %v6885
          %v6967 = vunpack.c.h.b16 %v6885
          %v6968 = vunpack.c.l.b16 %v6886
          %v6969 = vunpack.c.h.b16 %v6886
          %v6970 = vunpack.c.l.b16 %v6887
          %v6971 = vunpack.c.h.b16 %v6887
          %v6972 = vunpack.c.l.b16 %v6888
          %v6973 = vunpack.c.h.b16 %v6888
          %v6974 = vunpack.c.l.b16 %v6889
          %v6975 = vunpack.c.h.b16 %v6889
          %v6976 = vunpack.c.l.b16 %v6890
          %v6977 = vunpack.c.h.b16 %v6890
          %v6978 = vunpack.c.l.b16 %v6891
          %v6979 = vunpack.c.h.b16 %v6891
          %v6980 = vunpack.c.l.b16 %v6892
          %v6981 = vunpack.c.h.b16 %v6892
          %v6982 = vunpack.c.l.b16 %v6893
          %v6983 = vunpack.c.h.b16 %v6893
          %v6984 = vunpack.c.l.b16 %v6894
          %v6985 = vunpack.c.h.b16 %v6894
          %v6986 = vunpack.c.l.b16 %v6895
          %v6987 = vunpack.c.h.b16 %v6895
          %v6988 = vunpack.c.l.b16 %v6896
          %v6989 = vunpack.c.h.b16 %v6896
          %v6990 = vunpack.c.l.b16 %v6897
          %v6991 = vunpack.c.h.b16 %v6897
          %v6992 = vunpack.c.l.b16 %v6898
          %v6993 = vunpack.c.h.b16 %v6898
          %v6994 = vunpack.c.l.b16 %v6899
          %v6995 = vunpack.c.h.b16 %v6899
          %v6996 = vpack.c.b16 %v6932, %v6932
          %v6997 = vpack.c.b16 %v6933, %v6933
          %v6998 = vpack.c.b16 %v6934, %v6934
          %v6999 = vpack.c.b16 %v6935, %v6935
          %v7000 = vpack.c.b16 %v6936, %v6936
          %v7001 = vpack.c.b16 %v6937, %v6937
          %v7002 = vpack.c.b16 %v6938, %v6938
          %v7003 = vpack.c.b16 %v6939, %v6939
          %v7004 = vpack.c.b16 %v6940, %v6940
          %v7005 = vpack.c.b16 %v6941, %v6941
          %v7006 = vpack.c.b16 %v6942, %v6942
          %v7007 = vpack.c.b16 %v6943, %v6943
          %v7008 = vpack.c.b16 %v6944, %v6944
          %v7009 = vpack.c.b16 %v6945, %v6945
          %v7010 = vpack.c.b16 %v6946, %v6946
          %v7011 = vpack.c.b16 %v6947, %v6947
          %v7012 = vpack.c.b16 %v6948, %v6948
          %v7013 = vpack.c.b16 %v6949, %v6949
          %v7014 = vpack.c.b16 %v6950, %v6950
          %v7015 = vpack.c.b16 %v6951, %v6951
          %v7016 = vpack.c.b16 %v6952, %v6952
          %v7017 = vpack.c.b16 %v6953, %v6953
          %v7018 = vpack.c.b16 %v6954, %v6954
          %v7019 = vpack.c.b16 %v6955, %v6955
          %v7020 = vpack.c.b16 %v6956, %v6956
          %v7021 = vpack.c.b16 %v6957, %v6957
          %v7022 = vpack.c.b16 %v6958, %v6958
          %v7023 = vpack.c.b16 %v6959, %v6959
          %v7024 = vpack.c.b16 %v6960, %v6960
          %v7025 = vpack.c.b16 %v6961, %v6961
          %v7026 = vpack.c.b16 %v6962, %v6962
          %v7027 = vpack.c.b16 %v6963, %v6963
          %v7028 = vpack.c.b16 %v6964, %v6964
          %v7029 = vpack.c.b16 %v6965, %v6965
          %v7030 = vpack.c.b16 %v6966, %v6966
          %v7031 = vpack.c.b16 %v6967, %v6967
          %v7032 = vpack.c.b16 %v6968, %v6968
          %v7033 = vpack.c.b16 %v6969, %v6969
          %v7034 = vpack.c.b16 %v6970, %v6970
          %v7035 = vpack.c.b16 %v6971, %v6971
          %v7036 = vpack.c.b16 %v6972, %v6972
          %v7037 = vpack.c.b16 %v6973, %v6973
          %v7038 = vpack.c.b16 %v6974, %v6974
          %v7039 = vpack.c.b16 %v6975, %v6975
          %v7040 = vpack.c.b16 %v6976, %v6976
          %v7041 = vpack.c.b16 %v6977, %v6977
          %v7042 = vpack.c.b16 %v6978, %v6978
          %v7043 = vpack.c.b16 %v6979, %v6979
          %v7044 = vpack.c.b16 %v6980, %v6980
          %v7045 = vpack.c.b16 %v6981, %v6981
          %v7046 = vpack.c.b16 %v6982, %v6982
          %v7047 = vpack.c.b16 %v6983, %v6983
          %v7048 = vpack.c.b16 %v6984, %v6984
          %v7049 = vpack.c.b16 %v6985, %v6985
          %v7050 = vpack.c.b16 %v6986, %v6986
          %v7051 = vpack.c.b16 %v6987, %v6987
          %v7052 = vpack.c.b16 %v6988, %v6988
          %v7053 = vpack.c.b16 %v6989, %v6989
          %v7054 = vpack.c.b16 %v6990, %v6990
          %v7055 = vpack.c.b16 %v6991, %v6991
          %v7056 = vpack.c.b16 %v6992, %v6992
          %v7057 = vpack.c.b16 %v6993, %v6993
          %v7058 = vpack.c.b16 %v6994, %v6994
          %v7059 = vpack.c.b16 %v6995, %v6995
          %7124 = vst [vmem:[#allocation8] sm:$0xf] %v6996
          %7125 = vst [vmem:[#allocation8 + $0x4] sm:$0xf] %v6997
          %7126 = vst [vmem:[#allocation8 + $0x8] sm:$0xf] %v6998
          %7127 = vst [vmem:[#allocation8 + $0xc] sm:$0xf] %v6999
          %7128 = vst [vmem:[#allocation8 + $0x10] sm:$0xf] %v7000
          %7129 = vst [vmem:[#allocation8 + $0x14] sm:$0xf] %v7001
          %7130 = vst [vmem:[#allocation8 + $0x18] sm:$0xf] %v7002
          %7131 = vst [vmem:[#allocation8 + $0x1c] sm:$0xf] %v7003
          %7132 = vst [vmem:[#allocation8 + $0x20] sm:$0xf] %v7004
          %7133 = vst [vmem:[#allocation8 + $0x24] sm:$0xf] %v7005
          %7134 = vst [vmem:[#allocation8 + $0x28] sm:$0xf] %v7006
          %7135 = vst [vmem:[#allocation8 + $0x2c] sm:$0xf] %v7007
          %7136 = vst [vmem:[#allocation8 + $0x30] sm:$0xf] %v7008
          %7137 = vst [vmem:[#allocation8 + $0x34] sm:$0xf] %v7009
          %7138 = vst [vmem:[#allocation8 + $0x38] sm:$0xf] %v7010
          %7139 = vst [vmem:[#allocation8 + $0x3c] sm:$0xf] %v7011
          %7140 = vst [vmem:[#allocation8 + $0x40] sm:$0xf] %v7012
          %7141 = vst [vmem:[#allocation8 + $0x44] sm:$0xf] %v7013
          %7142 = vst [vmem:[#allocation8 + $0x48] sm:$0xf] %v7014
          %7143 = vst [vmem:[#allocation8 + $0x4c] sm:$0xf] %v7015
          %7144 = vst [vmem:[#allocation8 + $0x50] sm:$0xf] %v7016
          %7145 = vst [vmem:[#allocation8 + $0x54] sm:$0xf] %v7017
          %7146 = vst [vmem:[#allocation8 + $0x58] sm:$0xf] %v7018
          %7147 = vst [vmem:[#allocation8 + $0x5c] sm:$0xf] %v7019
          %7148 = vst [vmem:[#allocation8 + $0x60] sm:$0xf] %v7020
          %7149 = vst [vmem:[#allocation8 + $0x64] sm:$0xf] %v7021
          %7150 = vst [vmem:[#allocation8 + $0x68] sm:$0xf] %v7022
          %7151 = vst [vmem:[#allocation8 + $0x6c] sm:$0xf] %v7023
          %7152 = vst [vmem:[#allocation8 + $0x70] sm:$0xf] %v7024
          %7153 = vst [vmem:[#allocation8 + $0x74] sm:$0xf] %v7025
          %7154 = vst [vmem:[#allocation8 + $0x78] sm:$0xf] %v7026
          %7155 = vst [vmem:[#allocation8 + $0x7c] sm:$0xf] %v7027
          %7156 = vst [vmem:[#allocation8 + $0x80] sm:$0xf] %v7028
          %7157 = vst [vmem:[#allocation8 + $0x84] sm:$0xf] %v7029
          %7158 = vst [vmem:[#allocation8 + $0x88] sm:$0xf] %v7030
          %7159 = vst [vmem:[#allocation8 + $0x8c] sm:$0xf] %v7031
          %7160 = vst [vmem:[#allocation8 + $0x90] sm:$0xf] %v7032
          %7161 = vst [vmem:[#allocation8 + $0x94] sm:$0xf] %v7033
          %7162 = vst [vmem:[#allocation8 + $0x98] sm:$0xf] %v7034
          %7163 = vst [vmem:[#allocation8 + $0x9c] sm:$0xf] %v7035
          %7164 = vst [vmem:[#allocation8 + $0xa0] sm:$0xf] %v7036
          %7165 = vst [vmem:[#allocation8 + $0xa4] sm:$0xf] %v7037
          %7166 = vst [vmem:[#allocation8 + $0xa8] sm:$0xf] %v7038
          %7167 = vst [vmem:[#allocation8 + $0xac] sm:$0xf] %v7039
          %7168 = vst [vmem:[#allocation8 + $0xb0] sm:$0xf] %v7040
          %7169 = vst [vmem:[#allocation8 + $0xb4] sm:$0xf] %v7041
          %7170 = vst [vmem:[#allocation8 + $0xb8] sm:$0xf] %v7042
          %7171 = vst [vmem:[#allocation8 + $0xbc] sm:$0xf] %v7043
          %7172 = vst [vmem:[#allocation8 + $0xc0] sm:$0xf] %v7044
          %7173 = vst [vmem:[#allocation8 + $0xc4] sm:$0xf] %v7045
          %7174 = vst [vmem:[#allocation8 + $0xc8] sm:$0xf] %v7046
          %7175 = vst [vmem:[#allocation8 + $0xcc] sm:$0xf] %v7047
          %7176 = vst [vmem:[#allocation8 + $0xd0] sm:$0xf] %v7048
          %7177 = vst [vmem:[#allocation8 + $0xd4] sm:$0xf] %v7049
          %7178 = vst [vmem:[#allocation8 + $0xd8] sm:$0xf] %v7050
          %7179 = vst [vmem:[#allocation8 + $0xdc] sm:$0xf] %v7051
          %7180 = vst [vmem:[#allocation8 + $0xe0] sm:$0xf] %v7052
          %7181 = vst [vmem:[#allocation8 + $0xe4] sm:$0xf] %v7053
          %7182 = vst [vmem:[#allocation8 + $0xe8] sm:$0xf] %v7054
          %7183 = vst [vmem:[#allocation8 + $0xec] sm:$0xf] %v7055
          %7184 = vst [vmem:[#allocation8 + $0xf0] sm:$0xf] %v7056
          %7185 = vst [vmem:[#allocation8 + $0xf4] sm:$0xf] %v7057
          %7186 = vst [vmem:[#allocation8 + $0xf8] sm:$0xf] %v7058
          %7187 = vst [vmem:[#allocation8 + $0xfc] sm:$0xf] %v7059
        $region88: #{tpu_custom_call.1} parent=71 // pred_fallthru
          _
        // Predicated region
        $region89: #{tpu_custom_call.1} parent=71 // pred_check
          %p7188 = pneg %p389
        $region90: #{tpu_custom_call.1} parent=71 // pred_check_branch
          %7190 = sbr.rel (%p7188) target = $region92
        $region91: #{tpu_custom_call.1} parent=71 // pred_region
          %s7191 = smul.u32 64, %s35
          %s7193 = ssub.s32 4096, 4096
          %7194 = vsyncadd [#allocation5], %s7193
          %s7195 = smul.addr %s7191, 64
          %s7196 = scalar_lea.hbm %s13, %s7195
          %s7197 = sshll.u32 [#allocation8], 4
          %s7198 = int_to_ptr.vmem [resolvable:$true] %s7197
          %7203 = dma.vmem_to_hbm [thread:$0]  %s7198, 4096, %s7196, [#allocation5], 64, 64, 4
        $region92: #{tpu_custom_call.1} parent=71 // pred_fallthru
          _
        // Predicated region
        $region93: #{tpu_custom_call.1} parent=71 // pred_check
          %p7204 = pneg %p389
        $region94: #{tpu_custom_call.1} parent=71 // pred_check_branch
          %7206 = sbr.rel (%p7204) target = $region96
        $region95: #{tpu_custom_call.1} parent=71 // pred_region
          %7207 = dma.done [#allocation5], 4096
        $region96: #{tpu_custom_call.1} parent=71 // pred_fallthru
          _
      $region72: #{tpu_custom_call.1} parent=5 // pred_fallthru
        _
      %p7208 = scmp.le.s32.totalorder 2, %s26
      // Predicated region
      $region97: #{tpu_custom_call.1} parent=5 // pred_check
        %p7209 = pneg %p7208
      $region98: #{tpu_custom_call.1} parent=5 // pred_check_branch
        %7211 = sbr.rel (%p7209) target = $region100
      $region99: #{tpu_custom_call.1} parent=5 // pred_region
        %s7212 = ssub.s32 %s26, 2
      $region100: #{tpu_custom_call.1} parent=5 // pred_fallthru
        _
    $region6: #{tpu_custom_call.1} parent=1 // loop_footer
      %s30 = sadd.s32 1, %s26
    $region7: #{tpu_custom_call.1} parent=1 // loop_footer_branch
      %25 = sbr.rel target = $region3
    $region8: #{tpu_custom_call.1} parent=1 // loop_exit
      _
    %7213 = vsyncpa [#allocation4], 1
    %s7214 = scalar_lea.sflag [#allocation4], 1
    %7215 = vsyncpa %s7214, 1
    %7216 = vsyncpa [#allocation7], 1
    %s7217 = scalar_lea.sflag [#allocation7], 1
    %7218 = vsyncpa %s7217, 1
    %7219 = vsyncpa [#allocation5], 1
    %s7220 = scalar_lea.sflag [#allocation5], 1
    %7221 = vsyncpa %s7220, 1

</llo_original>
